<compile_context>
chip_gen: v6e
topology: v6e:2x2x1
jax: 0.10.0
libtpu: 0.0.40
codegen_flags: <defaults>
</compile_context>

<pallas_src>
import functools
import math

import jax
import jax.numpy as jnp
from jax.experimental import pallas as pl
from jax.experimental.pallas import tpu as pltpu

LN_EPS = 1e-5  # PyTorch LayerNorm / Transformer layer_norm_eps default


# ---------------------------------------------------------------------------
# Elementwise helpers (Mosaic-safe)
# ---------------------------------------------------------------------------
def _gelu_tanh(y):
    # tanh-approx GELU: transcendental lands on the EUP instead of an erf polynomial on the VPU.
    # Deviation from exact erf-GELU is ~6.6e-4*x^3 near 0 -> negligible at these activation scales.
    c = math.sqrt(2.0 / math.pi)
    return 0.5 * y * (1.0 + jnp.tanh(c * (y + 0.044715 * y * y * y)))


def _mish(y):
    sp = jnp.where(y > 20.0, y, jnp.log(1.0 + jnp.exp(jnp.minimum(y, 20.0))))
    return y * jnp.tanh(sp)


def _ln(x, g, b):
    mean = jnp.mean(x, axis=-1, keepdims=True)
    xc = x - mean
    var = jnp.mean(xc * xc, axis=-1, keepdims=True)
    return xc * jax.lax.rsqrt(var + LN_EPS) * g + b


def _dotf(a, b):
    return jnp.dot(a, b, preferred_element_type=jnp.float32)


# ---------------------------------------------------------------------------
# In-kernel multi-head attention: head-batched einsums, no lane slicing.
#   y:(Tq,E) kv:(Tk,E); wq/wk/wv/wo:(H,dh,E); bq/bk/bv:(H,1,dh); bo:(1,E).
#   1/sqrt(dh) is folded into wq/bq host-side.
# ---------------------------------------------------------------------------
def _attention(y, kv, wq, bq, wk, bk, wv, bv, wo, bo, *, H):
    Tq, E = y.shape
    Tk = kv.shape[0]
    yb = jnp.broadcast_to(y[None], (H, Tq, E))
    kvb = jnp.broadcast_to(kv[None], (H, Tk, E))
    q = jnp.einsum("hte,hde->htd", yb, wq, preferred_element_type=jnp.float32) + bq   # (H,Tq,dh)
    k = jnp.einsum("hse,hde->hsd", kvb, wk, preferred_element_type=jnp.float32) + bk  # (H,Tk,dh)
    v = jnp.einsum("hse,hde->hsd", kvb, wv, preferred_element_type=jnp.float32) + bv  # (H,Tk,dh)
    s = jnp.einsum("htd,hsd->hts", q, k, preferred_element_type=jnp.float32)          # (H,Tq,Tk)
    s = s - jnp.max(s, axis=-1, keepdims=True)
    p = jnp.exp(s)
    # approx reciprocal (EUP); ~1e-3-level relative error on the softmax normalization,
    # well inside the test tolerance (documented deviation from the exact reference).
    p = p * pl.reciprocal(jnp.sum(p, axis=-1, keepdims=True), approx=True)
    o = jnp.einsum("hts,hsd->htd", p, v, preferred_element_type=jnp.float32)          # (H,Tq,dh)
    o = jnp.einsum("htd,hde->hte", o, wo, preferred_element_type=jnp.float32)         # (H,Tq,E)
    return jnp.sum(o, axis=0) + bo                                                     # (Tq,E)


# ---------------------------------------------------------------------------
# The fused kernel: one batch element per grid step; everything in values/vregs.
# ---------------------------------------------------------------------------
def _fused_kernel(time_ref, sample_ref, cond_ref, slab32_ref, slab128_ref,
                  attn_w_ref, attn_b_ref, o_ref, *, offs32, offs128, L, H):
    def g32(name):
        off, rows = offs32[name]
        return slab32_ref[off:off + rows, :]

    def g128(name):
        off, rows = offs128[name]
        return slab128_ref[off:off + rows, :]

    def aw(l, a, i):        # (H, dh, E)
        return attn_w_ref[(l * 2 + a) * 4 + i]

    def ab(l, a, i):        # (H, 1, dh)
        return attn_b_ref[(l * 2 + a) * 3 + i]

    # ---- conditioning tokens: [time_emb ; cond_obs_emb(cond)] + cond_pos_emb (dropout=id, eval)
    cond_obs = _dotf(cond_ref[0], g32("cond_obs_w")) + g32("cond_obs_b")               # (To,E)
    ct = jnp.concatenate([time_ref[0], cond_obs], axis=0) + g32("cond_pos_emb")        # (Tc,E)

    # ---- cond encoder MLP (n_cond_layers=0): Linear -> Mish -> Linear
    # TODO(synk): the n_cond_layers>0 TransformerEncoder cond branch is not implemented.
    henc = _mish(_dotf(ct, g128("enc1_w")) + g128("enc1_b"))
    memory = _dotf(henc, g32("enc2_w")) + g32("enc2_b")                                # (Tc,E)

    # ---- decoder input: input_emb(sample) + pos_emb (dropout = identity)
    x = _dotf(sample_ref[0], g32("input_emb_w")) + g32("input_emb_b") + g32("pos_emb")  # (T,E)

    # ---- decoder layers (norm_first, gelu FFN, eval, no masks)
    # TODO(synk): the causal_attn=True tgt/memory mask path is not implemented (config is False).
    for l in range(L):
        pre = f"l{l}_"
        y = _ln(x, g32(pre + "ln1_g"), g32(pre + "ln1_b"))
        x = x + _attention(y, y,
                           aw(l, 0, 0), ab(l, 0, 0),
                           aw(l, 0, 1), ab(l, 0, 1),
                           aw(l, 0, 2), ab(l, 0, 2),
                           aw(l, 0, 3), g32(pre + "sa_out_b"), H=H)
        y = _ln(x, g32(pre + "ln2_g"), g32(pre + "ln2_b"))
        x = x + _attention(y, memory,
                           aw(l, 1, 0), ab(l, 1, 0),
                           aw(l, 1, 1), ab(l, 1, 1),
                           aw(l, 1, 2), ab(l, 1, 2),
                           aw(l, 1, 3), g32(pre + "ca_out_b"), H=H)
        y = _ln(x, g32(pre + "ln3_g"), g32(pre + "ln3_b"))
        hff = _gelu_tanh(_dotf(y, g128(pre + "ff1_w")) + g128(pre + "ff1_b"))
        x = x + _dotf(hff, g32(pre + "ff2_w")) + g32(pre + "ff2_b")

    # ---- final LayerNorm + head (head weights zero-padded to E lanes; wrapper slices to Dout)
    y = _ln(x, g32("ln_f_g"), g32("ln_f_b"))
    o_ref[0] = _dotf(y, g32("head_w")) + g32("head_b")


# ---------------------------------------------------------------------------
# Host-side parameter packing (one-time transform; constant-folded under jit)
# ---------------------------------------------------------------------------
def _pack_rows(pieces):
    """Stack 2-D pieces (same #cols) along rows; every piece starts at an 8-row-aligned offset."""
    offs, parts, cur = {}, [], 0
    for name, a in pieces:
        rows = a.shape[0]
        offs[name] = (cur, rows)
        pad = (-rows) % 8
        if pad:
            a = jnp.concatenate([a, jnp.zeros((pad, a.shape[1]), a.dtype)], axis=0)
        parts.append(a)
        cur += rows + pad
    return jnp.concatenate(parts, axis=0), offs


def pack_params(params, *, n_head):
    E = params["pos_emb"].shape[-1]
    H = n_head
    dh = E // H
    scale = 1.0 / math.sqrt(dh)
    L = len(params["layers"])
    Dout = params["head_w"].shape[-1]

    # head padded to E output lanes (zero-filled); wrapper slices back to Dout.
    head_w = jnp.zeros((E, E), jnp.float32).at[:, :Dout].set(params["head_w"])
    head_b = jnp.zeros((1, E), jnp.float32).at[:, :Dout].set(params["head_b"])

    p32 = [("input_emb_w", params["input_emb_w"]), ("input_emb_b", params["input_emb_b"]),
           ("cond_obs_w", params["cond_obs_w"]), ("cond_obs_b", params["cond_obs_b"]),
           ("pos_emb", params["pos_emb"]), ("cond_pos_emb", params["cond_pos_emb"]),
           ("enc2_w", params["enc2_w"]), ("enc2_b", params["enc2_b"]),
           ("ln_f_g", params["ln_f_g"]), ("ln_f_b", params["ln_f_b"]),
           ("head_w", head_w), ("head_b", head_b)]
    p128 = [("enc1_w", params["enc1_w"]), ("enc1_b", params["enc1_b"])]

    def split_in(w, b, do_scale):
        s = scale if do_scale else 1.0
        w3 = (w * s).reshape(E, H, dh).transpose(1, 2, 0)   # (H, dh, E)
        b3 = (b * s).reshape(1, H, dh).transpose(1, 0, 2)   # (H, 1, dh)
        return w3, b3

    attn_w, attn_b = [], []
    for li, lp in enumerate(params["layers"]):
        pre = f"l{li}_"
        for nm in ("ln1_g", "ln1_b", "ln2_g", "ln2_b", "ln3_g", "ln3_b",
                   "sa_out_b", "ca_out_b", "ff2_b"):
            p32.append((pre + nm, lp[nm]))
        p32.append((pre + "ff2_w", lp["ff2_w"]))
        p128.append((pre + "ff1_w", lp["ff1_w"]))
        p128.append((pre + "ff1_b", lp["ff1_b"]))
        for in_w, in_b, out_w in ((lp["sa_in_w"], lp["sa_in_b"], lp["sa_out_w"]),
                                  (lp["ca_in_w"], lp["ca_in_b"], lp["ca_out_w"])):
            wq, bq = split_in(in_w[:, :E], in_b[:, :E], True)
            wk, bk = split_in(in_w[:, E:2 * E], in_b[:, E:2 * E], False)
            wv, bv = split_in(in_w[:, 2 * E:], in_b[:, 2 * E:], False)
            wo = out_w.reshape(H, dh, E)
            attn_w.append(jnp.stack([wq, wk, wv, wo], axis=0))   # (4,H,dh,E)
            attn_b.append(jnp.stack([bq, bk, bv], axis=0))       # (3,H,1,dh)

    slab32, offs32 = _pack_rows(p32)
    slab128, offs128 = _pack_rows(p128)
    packed = dict(slab32=slab32, slab128=slab128,
                  attn_w=jnp.concatenate(attn_w, axis=0),   # (L*2*4, H, dh, E)
                  attn_b=jnp.concatenate(attn_b, axis=0))   # (L*2*3, H, 1, dh)
    meta = dict(offs32=offs32, offs128=offs128, L=L, H=H, E=E, Dout=Dout)
    return packed, meta


# ---------------------------------------------------------------------------
# Wrapper
# ---------------------------------------------------------------------------
def transformer_forward(params, sample, timestep, cond, *, n_head):
    """sample:(B,T,input_dim), timestep:int, cond:(B,n_obs_steps,cond_dim) -> (B,T,output_dim)."""
    B, T, Din = sample.shape
    To, Dc = cond.shape[1], cond.shape[2]
    packed, meta = pack_params(params, n_head=n_head)
    E, Dout, L, H = meta["E"], meta["Dout"], meta["L"], meta["H"]

    # SinusoidalPosEmb(n_emb)(timesteps): tiny scalar math, kept outside the kernel.
    timesteps = jnp.full((B,), float(timestep), jnp.float32)
    half = E // 2
    freqs = jnp.exp(jnp.arange(half, dtype=jnp.float32) * (-math.log(10000.0) / (half - 1)))
    te = timesteps[:, None] * freqs[None, :]
    time_emb = jnp.concatenate([jnp.sin(te), jnp.cos(te)], axis=-1)[:, None, :]        # (B,1,E)

    slab32, slab128 = packed["slab32"], packed["slab128"]
    attn_w, attn_b = packed["attn_w"], packed["attn_b"]

    kernel = functools.partial(_fused_kernel, offs32=meta["offs32"],
                               offs128=meta["offs128"], L=L, H=H)

    out = pl.pallas_call(
        kernel,
        grid=(B,),
        in_specs=[
            pl.BlockSpec((1, 1, E), lambda b: (b, 0, 0)),            # time embedding
            pl.BlockSpec((1, T, Din), lambda b: (b, 0, 0)),          # sample
            pl.BlockSpec((1, To, Dc), lambda b: (b, 0, 0)),          # cond
            pl.BlockSpec(slab32.shape, lambda b: (0, 0)),            # packed E-lane weights
            pl.BlockSpec(slab128.shape, lambda b: (0, 0)),           # packed 4E-lane weights
            pl.BlockSpec(attn_w.shape, lambda b: (0, 0, 0, 0)),      # per-head attn weights
            pl.BlockSpec(attn_b.shape, lambda b: (0, 0, 0, 0)),      # per-head attn biases
        ],
        out_specs=pl.BlockSpec((1, T, E), lambda b: (b, 0, 0)),
        out_shape=jax.ShapeDtypeStruct((B, T, E), jnp.float32),      # head padded to E lanes
        compiler_params=pltpu.CompilerParams(
            dimension_semantics=("parallel",),                       # shard batch over TCs (v7x)
            vmem_limit_bytes=32 * 1024 * 1024),
    )(time_emb, sample, cond, slab32, slab128, attn_w, attn_b)
    return out[..., :Dout]


# ---------------------------------------------------------------------------
# Pure-jnp reference (independent numerics check, HIGHEST precision, exact GELU)
# ---------------------------------------------------------------------------
def reference_forward(params, sample, timestep, cond, *, n_head):
    HIGH = jax.lax.Precision.HIGHEST
    lin = lambda x, w, b: jnp.dot(x, w, precision=HIGH) + b
    B, T, _ = sample.shape
    E = params["pos_emb"].shape[-1]

    timesteps = jnp.full((B,), float(timestep), jnp.float32)
    half = E // 2
    freqs = jnp.exp(jnp.arange(half, dtype=jnp.float32) * (-math.log(10000.0) / (half - 1)))
    te = timesteps[:, None] * freqs[None, :]
    time_emb = jnp.concatenate([jnp.sin(te), jnp.cos(te)], axis=-1)[:, None, :]        # (B,1,E)

    def ln(x, g, b):
        m = x.mean(-1, keepdims=True)
        v = ((x - m) ** 2).mean(-1, keepdims=True)
        return (x - m) / jnp.sqrt(v + LN_EPS) * g + b

    def mha(q_in, kv_in, w_in, b_in, w_out, b_out):
        B_, Tq, E_ = q_in.shape
        Tk = kv_in.shape[1]
        dh = E_ // n_head
        q = lin(q_in, w_in[:, :E_], b_in[:, :E_])
        k = lin(kv_in, w_in[:, E_:2 * E_], b_in[:, E_:2 * E_])
        v = lin(kv_in, w_in[:, 2 * E_:], b_in[:, 2 * E_:])
        q = q.reshape(B_, Tq, n_head, dh).transpose(0, 2, 1, 3)
        k = k.reshape(B_, Tk, n_head, dh).transpose(0, 2, 1, 3)
        v = v.reshape(B_, Tk, n_head, dh).transpose(0, 2, 1, 3)
        s = jnp.einsum("bhqd,bhkd->bhqk", q, k, precision=HIGH) / math.sqrt(dh)
        pr = jax.nn.softmax(s, axis=-1)
        o = jnp.einsum("bhqk,bhkd->bhqd", pr, v, precision=HIGH)
        o = o.transpose(0, 2, 1, 3).reshape(B_, Tq, E_)
        return lin(o, w_out, b_out)

    input_emb = lin(sample, params["input_emb_w"], params["input_emb_b"])
    cond_obs = lin(cond, params["cond_obs_w"], params["cond_obs_b"])
    cond_emb = jnp.concatenate([time_emb, cond_obs], axis=1) + params["cond_pos_emb"][None]
    henc = cond_emb @ params["enc1_w"] + params["enc1_b"]
    henc = henc * jnp.tanh(jax.nn.softplus(henc))                                      # Mish
    memory = lin(henc, params["enc2_w"], params["enc2_b"])

    x = input_emb + params["pos_emb"][None]
    for lp in params["layers"]:
        y = ln(x, lp["ln1_g"], lp["ln1_b"])
        x = x + mha(y, y, lp["sa_in_w"], lp["sa_in_b"], lp["sa_out_w"], lp["sa_out_b"])
        y = ln(x, lp["ln2_g"], lp["ln2_b"])
        x = x + mha(y, memory, lp["ca_in_w"], lp["ca_in_b"], lp["ca_out_w"], lp["ca_out_b"])
        y = ln(x, lp["ln3_g"], lp["ln3_b"])
        h = jax.nn.gelu(lin(y, lp["ff1_w"], lp["ff1_b"]), approximate=False)
        x = x + lin(h, lp["ff2_w"], lp["ff2_b"])
    y = ln(x, params["ln_f_g"], params["ln_f_b"])
    return lin(y, params["head_w"], params["head_b"])


# ---------------------------------------------------------------------------
# Deterministic parameter init (weights stored pre-transposed: (in, out))
# ---------------------------------------------------------------------------
def init_params(key, cfg):
    E, L = cfg["n_emb"], cfg["n_layer"]
    T, T_cond = cfg["horizon"], 1 + cfg["n_obs_steps"]
    keys = iter(jax.random.split(key, 256))

    def w(shape):
        return 0.02 * jax.random.normal(next(keys), shape, jnp.float32)

    ones2 = lambda n: jnp.ones((1, n), jnp.float32)
    zeros2 = lambda n: jnp.zeros((1, n), jnp.float32)

    p = {
        "input_emb_w": w((cfg["input_dim"], E)), "input_emb_b": w((1, E)),
        "cond_obs_w": w((cfg["cond_dim"], E)), "cond_obs_b": w((1, E)),
        "pos_emb": w((T, E)), "cond_pos_emb": w((T_cond, E)),
        "enc1_w": w((E, 4 * E)), "enc1_b": w((1, 4 * E)),
        "enc2_w": w((4 * E, E)), "enc2_b": w((1, E)),
        "ln_f_g": ones2(E), "ln_f_b": zeros2(E),
        "head_w": w((E, cfg["output_dim"])), "head_b": w((1, cfg["output_dim"])),
        "layers": [],
    }
    for _ in range(L):
        p["layers"].append({
            "ln1_g": ones2(E), "ln1_b": zeros2(E),
            "ln2_g": ones2(E), "ln2_b": zeros2(E),
            "ln3_g": ones2(E), "ln3_b": zeros2(E),
            "sa_in_w": w((E, 3 * E)), "sa_in_b": w((1, 3 * E)),
            "sa_out_w": w((E, E)), "sa_out_b": w((1, E)),
            "ca_in_w": w((E, 3 * E)), "ca_in_b": w((1, 3 * E)),
            "ca_out_w": w((E, E)), "ca_out_b": w((1, E)),
            "ff1_w": w((E, 4 * E)), "ff1_b": w((1, 4 * E)),
            "ff2_w": w((4 * E, E)), "ff2_b": w((1, E)),
        })
    return p


if __name__ == "__main__":
    cfg = dict(input_dim=4, output_dim=4, horizon=8, n_obs_steps=4, cond_dim=6,
               n_layer=2, n_head=4, n_emb=32)
    B, T = 2, cfg["horizon"]
    timestep = 10

    key = jax.random.PRNGKey(0)
    pkey, skey, ckey = jax.random.split(key, 3)
    params = init_params(pkey, cfg)
    sample = jax.random.normal(skey, (B, T, cfg["input_dim"]), jnp.float32)
    cond = jax.random.normal(ckey, (B, cfg["n_obs_steps"], cfg["cond_dim"]), jnp.float32)

    run = jax.jit(lambda p, s, c: transformer_forward(p, s, timestep, c, n_head=cfg["n_head"]))
    out = jax.block_until_ready(run(params, sample, cond))

    ref = jax.block_until_ready(
        reference_forward(params, sample, timestep, cond, n_head=cfg["n_head"]))

    assert out.shape == (B, T, cfg["output_dim"]), out.shape
    assert bool(jnp.all(jnp.isfinite(out)))
    max_err = float(jnp.max(jnp.abs(out - ref)))
    assert bool(jnp.allclose(out, ref, atol=3e-3, rtol=2e-2)), max_err
    print("KERNEL_OK")
</pallas_src>

<mosaic_0001>
module attributes {stable_mosaic.version = 11 : i64} {
  func.func @_fused_kernel(%arg0: i32, %arg1: memref<1x1x32xf32, #tpu.memory_space<vmem>>, %arg2: memref<1x8x4xf32, #tpu.memory_space<vmem>>, %arg3: memref<1x4x6xf32, #tpu.memory_space<vmem>>, %arg4: memref<640x32xf32, #tpu.memory_space<vmem>>, %arg5: memref<120x128xf32, #tpu.memory_space<vmem>>, %arg6: memref<16x4x8x32xf32, #tpu.memory_space<vmem>>, %arg7: memref<12x4x1x8xf32, #tpu.memory_space<vmem>>, %arg8: memref<1x8x32xf32, #tpu.memory_space<vmem>>) attributes {dimension_semantics = [#tpu.dimension_semantics<parallel>], iteration_bounds = array<i64: 2>, scalar_prefetch = 0 : i64, scratch_operands = 0 : i64, tpu.core_type = #tpu.core_type<tc>, window_params = [{transform_indices = @transform_0, window_bounds = array<i64: 1, 1, 32>}, {transform_indices = @transform_1, window_bounds = array<i64: 1, 8, 4>}, {transform_indices = @transform_2, window_bounds = array<i64: 1, 4, 6>}, {pipeline_mode = #tpu.pipeline_mode<synchronous>, transform_indices = @transform_3, window_bounds = array<i64: 640, 32>}, {pipeline_mode = #tpu.pipeline_mode<synchronous>, transform_indices = @transform_4, window_bounds = array<i64: 120, 128>}, {pipeline_mode = #tpu.pipeline_mode<synchronous>, transform_indices = @transform_5, window_bounds = array<i64: 16, 4, 8, 32>}, {pipeline_mode = #tpu.pipeline_mode<synchronous>, transform_indices = @transform_6, window_bounds = array<i64: 12, 4, 1, 8>}, {transform_indices = @transform_7, window_bounds = array<i64: 1, 8, 32>}]} {
    %c0 = arith.constant 0 : index
    %c0_0 = arith.constant 0 : index
    %c0_1 = arith.constant 0 : index
    %0 = vector.load %arg3[%c0, %c0_0, %c0_1] : memref<1x4x6xf32, #tpu.memory_space<vmem>>, vector<1x4x6xf32>
    %1 = vector.shape_cast %0 : vector<1x4x6xf32> to vector<4x6xf32>
    %c16 = arith.constant 16 : index
    %c0_2 = arith.constant 0 : index
    %2 = vector.load %arg4[%c16, %c0_2] : memref<640x32xf32, #tpu.memory_space<vmem>>, vector<6x32xf32>
    %cst = arith.constant dense<0.000000e+00> : vector<4x32xf32>
    %3 = tpu.matmul %1, %2, %cst {dimension_numbers = #tpu.dot_dimension_numbers<[1], [0], [0], [1], [0, 0, 1, 1], [], []>} : vector<4x6xf32>, vector<6x32xf32>, vector<4x32xf32> -> vector<4x32xf32>
    %c24 = arith.constant 24 : index
    %c0_3 = arith.constant 0 : index
    %4 = vector.load %arg4[%c24, %c0_3] : memref<640x32xf32, #tpu.memory_space<vmem>>, vector<1x32xf32>
    %5 = vector.broadcast %4 : vector<1x32xf32> to vector<4x32xf32>
    %6 = arith.addf %3, %5 : vector<4x32xf32>
    %c0_4 = arith.constant 0 : index
    %c0_5 = arith.constant 0 : index
    %c0_6 = arith.constant 0 : index
    %7 = vector.load %arg1[%c0_4, %c0_5, %c0_6] : memref<1x1x32xf32, #tpu.memory_space<vmem>>, vector<1x1x32xf32>
    %8 = vector.shape_cast %7 : vector<1x1x32xf32> to vector<1x32xf32>
    %9 = tpu.concatenate %8, %6 in 0 : vector<1x32xf32>, vector<4x32xf32> -> vector<5x32xf32>
    %c40 = arith.constant 40 : index
    %c0_7 = arith.constant 0 : index
    %10 = vector.load %arg4[%c40, %c0_7] : memref<640x32xf32, #tpu.memory_space<vmem>>, vector<5x32xf32>
    %11 = arith.addf %9, %10 : vector<5x32xf32>
    %c0_8 = arith.constant 0 : index
    %c0_9 = arith.constant 0 : index
    %12 = vector.load %arg5[%c0_8, %c0_9] : memref<120x128xf32, #tpu.memory_space<vmem>>, vector<32x128xf32>
    %cst_10 = arith.constant dense<0.000000e+00> : vector<5x128xf32>
    %13 = tpu.matmul %11, %12, %cst_10 {dimension_numbers = #tpu.dot_dimension_numbers<[1], [0], [0], [1], [0, 0, 1, 1], [], []>} : vector<5x32xf32>, vector<32x128xf32>, vector<5x128xf32> -> vector<5x128xf32>
    %c32 = arith.constant 32 : index
    %c0_11 = arith.constant 0 : index
    %14 = vector.load %arg5[%c32, %c0_11] : memref<120x128xf32, #tpu.memory_space<vmem>>, vector<1x128xf32>
    %15 = vector.broadcast %14 : vector<1x128xf32> to vector<5x128xf32>
    %16 = arith.addf %13, %15 : vector<5x128xf32>
    %cst_12 = arith.constant 2.000000e+01 : f32
    %17 = vector.broadcast %cst_12 : f32 to vector<5x128xf32>
    %18 = arith.cmpf ogt, %16, %17 : vector<5x128xf32>
    %cst_13 = arith.constant 2.000000e+01 : f32
    %19 = vector.broadcast %cst_13 : f32 to vector<5x128xf32>
    %20 = arith.minimumf %16, %19 : vector<5x128xf32>
    %21 = math.exp %20 : vector<5x128xf32>
    %cst_14 = arith.constant 1.000000e+00 : f32
    %22 = vector.broadcast %cst_14 : f32 to vector<5x128xf32>
    %23 = arith.addf %22, %21 : vector<5x128xf32>
    %24 = math.log %23 : vector<5x128xf32>
    %25 = arith.select %18, %16, %24 : vector<5x128xi1>, vector<5x128xf32>
    %26 = math.tanh %25 : vector<5x128xf32>
    %27 = arith.mulf %16, %26 : vector<5x128xf32>
    %c48 = arith.constant 48 : index
    %c0_15 = arith.constant 0 : index
    %28 = vector.load %arg4[%c48, %c0_15] : memref<640x32xf32, #tpu.memory_space<vmem>>, vector<128x32xf32>
    %cst_16 = arith.constant dense<0.000000e+00> : vector<5x32xf32>
    %29 = tpu.matmul %27, %28, %cst_16 {dimension_numbers = #tpu.dot_dimension_numbers<[1], [0], [0], [1], [0, 0, 1, 1], [], []>} : vector<5x128xf32>, vector<128x32xf32>, vector<5x32xf32> -> vector<5x32xf32>
    %c176 = arith.constant 176 : index
    %c0_17 = arith.constant 0 : index
    %30 = vector.load %arg4[%c176, %c0_17] : memref<640x32xf32, #tpu.memory_space<vmem>>, vector<1x32xf32>
    %31 = vector.broadcast %30 : vector<1x32xf32> to vector<5x32xf32>
    %32 = arith.addf %29, %31 : vector<5x32xf32>
    %c0_18 = arith.constant 0 : index
    %c0_19 = arith.constant 0 : index
    %c0_20 = arith.constant 0 : index
    %33 = vector.load %arg2[%c0_18, %c0_19, %c0_20] : memref<1x8x4xf32, #tpu.memory_space<vmem>>, vector<1x8x4xf32>
    %34 = vector.shape_cast %33 : vector<1x8x4xf32> to vector<8x4xf32>
    %c0_21 = arith.constant 0 : index
    %c0_22 = arith.constant 0 : index
    %35 = vector.load %arg4[%c0_21, %c0_22] : memref<640x32xf32, #tpu.memory_space<vmem>>, vector<4x32xf32>
    %cst_23 = arith.constant dense<0.000000e+00> : vector<8x32xf32>
    %36 = tpu.matmul %34, %35, %cst_23 {dimension_numbers = #tpu.dot_dimension_numbers<[1], [0], [0], [1], [0, 0, 1, 1], [], []>} : vector<8x4xf32>, vector<4x32xf32>, vector<8x32xf32> -> vector<8x32xf32>
    %c8 = arith.constant 8 : index
    %c0_24 = arith.constant 0 : index
    %37 = vector.load %arg4[%c8, %c0_24] : memref<640x32xf32, #tpu.memory_space<vmem>>, vector<1x32xf32>
    %38 = vector.broadcast %37 : vector<1x32xf32> to vector<8x32xf32>
    %39 = arith.addf %36, %38 : vector<8x32xf32>
    %c32_25 = arith.constant 32 : index
    %c0_26 = arith.constant 0 : index
    %40 = vector.load %arg4[%c32_25, %c0_26] : memref<640x32xf32, #tpu.memory_space<vmem>>, vector<8x32xf32>
    %41 = arith.addf %39, %40 : vector<8x32xf32>
    %c240 = arith.constant 240 : index
    %c0_27 = arith.constant 0 : index
    %42 = vector.load %arg4[%c240, %c0_27] : memref<640x32xf32, #tpu.memory_space<vmem>>, vector<1x32xf32>
    %c248 = arith.constant 248 : index
    %c0_28 = arith.constant 0 : index
    %43 = vector.load %arg4[%c248, %c0_28] : memref<640x32xf32, #tpu.memory_space<vmem>>, vector<1x32xf32>
    %cst_29 = arith.constant dense<0.000000e+00> : vector<8xf32>
    %44 = vector.multi_reduction <add>, %41, %cst_29 [1] : vector<8x32xf32> to vector<8xf32>
    %45 = vector.shape_cast %44 : vector<8xf32> to vector<8x1xf32>
    %cst_30 = arith.constant 3.200000e+01 : f32
    %46 = vector.broadcast %cst_30 : f32 to vector<8x1xf32>
    %47 = arith.divf %45, %46 : vector<8x1xf32>
    %48 = vector.broadcast %47 : vector<8x1xf32> to vector<8x32xf32>
    %49 = arith.subf %41, %48 : vector<8x32xf32>
    %50 = arith.mulf %49, %49 : vector<8x32xf32>
    %cst_31 = arith.constant dense<0.000000e+00> : vector<8xf32>
    %51 = vector.multi_reduction <add>, %50, %cst_31 [1] : vector<8x32xf32> to vector<8xf32>
    %52 = vector.shape_cast %51 : vector<8xf32> to vector<8x1xf32>
    %cst_32 = arith.constant 3.200000e+01 : f32
    %53 = vector.broadcast %cst_32 : f32 to vector<8x1xf32>
    %54 = arith.divf %52, %53 : vector<8x1xf32>
    %cst_33 = arith.constant 9.99999974E-6 : f32
    %55 = vector.broadcast %cst_33 : f32 to vector<8x1xf32>
    %56 = arith.addf %54, %55 : vector<8x1xf32>
    %57 = math.rsqrt %56 : vector<8x1xf32>
    %58 = vector.broadcast %57 : vector<8x1xf32> to vector<8x32xf32>
    %59 = arith.mulf %49, %58 : vector<8x32xf32>
    %60 = vector.broadcast %42 : vector<1x32xf32> to vector<8x32xf32>
    %61 = arith.mulf %59, %60 : vector<8x32xf32>
    %62 = vector.broadcast %43 : vector<1x32xf32> to vector<8x32xf32>
    %63 = arith.addf %61, %62 : vector<8x32xf32>
    %c0_34 = arith.constant 0 : index
    %c0_35 = arith.constant 0 : index
    %c0_36 = arith.constant 0 : index
    %c0_37 = arith.constant 0 : index
    %64 = vector.load %arg6[%c0_34, %c0_35, %c0_36, %c0_37] : memref<16x4x8x32xf32, #tpu.memory_space<vmem>>, vector<1x4x8x32xf32>
    %65 = vector.shape_cast %64 : vector<1x4x8x32xf32> to vector<4x8x32xf32>
    %c0_38 = arith.constant 0 : index
    %c0_39 = arith.constant 0 : index
    %c0_40 = arith.constant 0 : index
    %c0_41 = arith.constant 0 : index
    %66 = vector.load %arg7[%c0_38, %c0_39, %c0_40, %c0_41] : memref<12x4x1x8xf32, #tpu.memory_space<vmem>>, vector<1x4x1x8xf32>
    %67 = vector.shape_cast %66 : vector<1x4x1x8xf32> to vector<4x1x8xf32>
    %c1 = arith.constant 1 : index
    %c0_42 = arith.constant 0 : index
    %c0_43 = arith.constant 0 : index
    %c0_44 = arith.constant 0 : index
    %68 = vector.load %arg6[%c1, %c0_42, %c0_43, %c0_44] : memref<16x4x8x32xf32, #tpu.memory_space<vmem>>, vector<1x4x8x32xf32>
    %69 = vector.shape_cast %68 : vector<1x4x8x32xf32> to vector<4x8x32xf32>
    %c1_45 = arith.constant 1 : index
    %c0_46 = arith.constant 0 : index
    %c0_47 = arith.constant 0 : index
    %c0_48 = arith.constant 0 : index
    %70 = vector.load %arg7[%c1_45, %c0_46, %c0_47, %c0_48] : memref<12x4x1x8xf32, #tpu.memory_space<vmem>>, vector<1x4x1x8xf32>
    %71 = vector.shape_cast %70 : vector<1x4x1x8xf32> to vector<4x1x8xf32>
    %c2 = arith.constant 2 : index
    %c0_49 = arith.constant 0 : index
    %c0_50 = arith.constant 0 : index
    %c0_51 = arith.constant 0 : index
    %72 = vector.load %arg6[%c2, %c0_49, %c0_50, %c0_51] : memref<16x4x8x32xf32, #tpu.memory_space<vmem>>, vector<1x4x8x32xf32>
    %73 = vector.shape_cast %72 : vector<1x4x8x32xf32> to vector<4x8x32xf32>
    %c2_52 = arith.constant 2 : index
    %c0_53 = arith.constant 0 : index
    %c0_54 = arith.constant 0 : index
    %c0_55 = arith.constant 0 : index
    %74 = vector.load %arg7[%c2_52, %c0_53, %c0_54, %c0_55] : memref<12x4x1x8xf32, #tpu.memory_space<vmem>>, vector<1x4x1x8xf32>
    %75 = vector.shape_cast %74 : vector<1x4x1x8xf32> to vector<4x1x8xf32>
    %c3 = arith.constant 3 : index
    %c0_56 = arith.constant 0 : index
    %c0_57 = arith.constant 0 : index
    %c0_58 = arith.constant 0 : index
    %76 = vector.load %arg6[%c3, %c0_56, %c0_57, %c0_58] : memref<16x4x8x32xf32, #tpu.memory_space<vmem>>, vector<1x4x8x32xf32>
    %77 = vector.shape_cast %76 : vector<1x4x8x32xf32> to vector<4x8x32xf32>
    %c288 = arith.constant 288 : index
    %c0_59 = arith.constant 0 : index
    %78 = vector.load %arg4[%c288, %c0_59] : memref<640x32xf32, #tpu.memory_space<vmem>>, vector<1x32xf32>
    %79 = vector.shape_cast %63 : vector<8x32xf32> to vector<1x8x32xf32>
    %80 = vector.shape_cast %79 : vector<1x8x32xf32> to vector<1x8x32xf32>
    %81 = vector.broadcast %80 : vector<1x8x32xf32> to vector<4x8x32xf32>
    %82 = vector.shape_cast %63 : vector<8x32xf32> to vector<1x8x32xf32>
    %83 = vector.shape_cast %82 : vector<1x8x32xf32> to vector<1x8x32xf32>
    %84 = vector.broadcast %83 : vector<1x8x32xf32> to vector<4x8x32xf32>
    "tpu.trace_start"() <{level = 10 : i32, message = "hte,hde->htd"}> : () -> ()
    %cst_60 = arith.constant dense<0.000000e+00> : vector<4x8x8xf32>
    %85 = tpu.matmul %81, %65, %cst_60 {dimension_numbers = #tpu.dot_dimension_numbers<[2], [2], [1], [1], [0, 0, 0, 1, 1, 1], [0], [0]>} : vector<4x8x32xf32>, vector<4x8x32xf32>, vector<4x8x8xf32> -> vector<4x8x8xf32>
    "tpu.trace_stop"() : () -> ()
    %86 = vector.broadcast %67 : vector<4x1x8xf32> to vector<4x8x8xf32>
    %87 = arith.addf %85, %86 : vector<4x8x8xf32>
    "tpu.trace_start"() <{level = 10 : i32, message = "hse,hde->hsd"}> : () -> ()
    %cst_61 = arith.constant dense<0.000000e+00> : vector<4x8x8xf32>
    %88 = tpu.matmul %84, %69, %cst_61 {dimension_numbers = #tpu.dot_dimension_numbers<[2], [2], [1], [1], [0, 0, 0, 1, 1, 1], [0], [0]>} : vector<4x8x32xf32>, vector<4x8x32xf32>, vector<4x8x8xf32> -> vector<4x8x8xf32>
    "tpu.trace_stop"() : () -> ()
    %89 = vector.broadcast %71 : vector<4x1x8xf32> to vector<4x8x8xf32>
    %90 = arith.addf %88, %89 : vector<4x8x8xf32>
    "tpu.trace_start"() <{level = 10 : i32, message = "hse,hde->hsd"}> : () -> ()
    %cst_62 = arith.constant dense<0.000000e+00> : vector<4x8x8xf32>
    %91 = tpu.matmul %84, %73, %cst_62 {dimension_numbers = #tpu.dot_dimension_numbers<[2], [2], [1], [1], [0, 0, 0, 1, 1, 1], [0], [0]>} : vector<4x8x32xf32>, vector<4x8x32xf32>, vector<4x8x8xf32> -> vector<4x8x8xf32>
    "tpu.trace_stop"() : () -> ()
    %92 = vector.broadcast %75 : vector<4x1x8xf32> to vector<4x8x8xf32>
    %93 = arith.addf %91, %92 : vector<4x8x8xf32>
    "tpu.trace_start"() <{level = 10 : i32, message = "htd,hsd->hts"}> : () -> ()
    %cst_63 = arith.constant dense<0.000000e+00> : vector<4x8x8xf32>
    %94 = tpu.matmul %87, %90, %cst_63 {dimension_numbers = #tpu.dot_dimension_numbers<[2], [2], [1], [1], [0, 0, 0, 1, 1, 1], [0], [0]>} : vector<4x8x8xf32>, vector<4x8x8xf32>, vector<4x8x8xf32> -> vector<4x8x8xf32>
    "tpu.trace_stop"() : () -> ()
    %cst_64 = arith.constant dense<0xFF800000> : vector<4x8xf32>
    %95 = vector.multi_reduction <maximumf>, %94, %cst_64 [2] : vector<4x8x8xf32> to vector<4x8xf32>
    %96 = vector.shape_cast %95 : vector<4x8xf32> to vector<4x8x1xf32>
    %97 = vector.broadcast %96 : vector<4x8x1xf32> to vector<4x8x8xf32>
    %98 = arith.subf %94, %97 : vector<4x8x8xf32>
    %99 = math.exp %98 : vector<4x8x8xf32>
    %cst_65 = arith.constant dense<0.000000e+00> : vector<4x8xf32>
    %100 = vector.multi_reduction <add>, %99, %cst_65 [2] : vector<4x8x8xf32> to vector<4x8xf32>
    %101 = vector.shape_cast %100 : vector<4x8xf32> to vector<4x8x1xf32>
    %102 = tpu.reciprocal %101 {approx = true} : vector<4x8x1xf32> -> vector<4x8x1xf32>
    %103 = vector.broadcast %102 : vector<4x8x1xf32> to vector<4x8x8xf32>
    %104 = arith.mulf %99, %103 : vector<4x8x8xf32>
    "tpu.trace_start"() <{level = 10 : i32, message = "hts,hsd->htd"}> : () -> ()
    %cst_66 = arith.constant dense<0.000000e+00> : vector<4x8x8xf32>
    %105 = tpu.matmul %104, %93, %cst_66 {dimension_numbers = #tpu.dot_dimension_numbers<[2], [1], [1], [2], [0, 0, 0, 1, 1, 2], [0], [0]>} : vector<4x8x8xf32>, vector<4x8x8xf32>, vector<4x8x8xf32> -> vector<4x8x8xf32>
    "tpu.trace_stop"() : () -> ()
    "tpu.trace_start"() <{level = 10 : i32, message = "htd,hde->hte"}> : () -> ()
    %cst_67 = arith.constant dense<0.000000e+00> : vector<4x8x32xf32>
    %106 = tpu.matmul %105, %77, %cst_67 {dimension_numbers = #tpu.dot_dimension_numbers<[2], [1], [1], [2], [0, 0, 0, 1, 1, 2], [0], [0]>} : vector<4x8x8xf32>, vector<4x8x32xf32>, vector<4x8x32xf32> -> vector<4x8x32xf32>
    "tpu.trace_stop"() : () -> ()
    %cst_68 = arith.constant dense<0.000000e+00> : vector<8x32xf32>
    %107 = vector.multi_reduction <add>, %106, %cst_68 [0] : vector<4x8x32xf32> to vector<8x32xf32>
    %108 = vector.broadcast %78 : vector<1x32xf32> to vector<8x32xf32>
    %109 = arith.addf %107, %108 : vector<8x32xf32>
    %110 = arith.addf %41, %109 : vector<8x32xf32>
    %c256 = arith.constant 256 : index
    %c0_69 = arith.constant 0 : index
    %111 = vector.load %arg4[%c256, %c0_69] : memref<640x32xf32, #tpu.memory_space<vmem>>, vector<1x32xf32>
    %c264 = arith.constant 264 : index
    %c0_70 = arith.constant 0 : index
    %112 = vector.load %arg4[%c264, %c0_70] : memref<640x32xf32, #tpu.memory_space<vmem>>, vector<1x32xf32>
    %cst_71 = arith.constant dense<0.000000e+00> : vector<8xf32>
    %113 = vector.multi_reduction <add>, %110, %cst_71 [1] : vector<8x32xf32> to vector<8xf32>
    %114 = vector.shape_cast %113 : vector<8xf32> to vector<8x1xf32>
    %cst_72 = arith.constant 3.200000e+01 : f32
    %115 = vector.broadcast %cst_72 : f32 to vector<8x1xf32>
    %116 = arith.divf %114, %115 : vector<8x1xf32>
    %117 = vector.broadcast %116 : vector<8x1xf32> to vector<8x32xf32>
    %118 = arith.subf %110, %117 : vector<8x32xf32>
    %119 = arith.mulf %118, %118 : vector<8x32xf32>
    %cst_73 = arith.constant dense<0.000000e+00> : vector<8xf32>
    %120 = vector.multi_reduction <add>, %119, %cst_73 [1] : vector<8x32xf32> to vector<8xf32>
    %121 = vector.shape_cast %120 : vector<8xf32> to vector<8x1xf32>
    %cst_74 = arith.constant 3.200000e+01 : f32
    %122 = vector.broadcast %cst_74 : f32 to vector<8x1xf32>
    %123 = arith.divf %121, %122 : vector<8x1xf32>
    %cst_75 = arith.constant 9.99999974E-6 : f32
    %124 = vector.broadcast %cst_75 : f32 to vector<8x1xf32>
    %125 = arith.addf %123, %124 : vector<8x1xf32>
    %126 = math.rsqrt %125 : vector<8x1xf32>
    %127 = vector.broadcast %126 : vector<8x1xf32> to vector<8x32xf32>
    %128 = arith.mulf %118, %127 : vector<8x32xf32>
    %129 = vector.broadcast %111 : vector<1x32xf32> to vector<8x32xf32>
    %130 = arith.mulf %128, %129 : vector<8x32xf32>
    %131 = vector.broadcast %112 : vector<1x32xf32> to vector<8x32xf32>
    %132 = arith.addf %130, %131 : vector<8x32xf32>
    %c4 = arith.constant 4 : index
    %c0_76 = arith.constant 0 : index
    %c0_77 = arith.constant 0 : index
    %c0_78 = arith.constant 0 : index
    %133 = vector.load %arg6[%c4, %c0_76, %c0_77, %c0_78] : memref<16x4x8x32xf32, #tpu.memory_space<vmem>>, vector<1x4x8x32xf32>
    %134 = vector.shape_cast %133 : vector<1x4x8x32xf32> to vector<4x8x32xf32>
    %c3_79 = arith.constant 3 : index
    %c0_80 = arith.constant 0 : index
    %c0_81 = arith.constant 0 : index
    %c0_82 = arith.constant 0 : index
    %135 = vector.load %arg7[%c3_79, %c0_80, %c0_81, %c0_82] : memref<12x4x1x8xf32, #tpu.memory_space<vmem>>, vector<1x4x1x8xf32>
    %136 = vector.shape_cast %135 : vector<1x4x1x8xf32> to vector<4x1x8xf32>
    %c5 = arith.constant 5 : index
    %c0_83 = arith.constant 0 : index
    %c0_84 = arith.constant 0 : index
    %c0_85 = arith.constant 0 : index
    %137 = vector.load %arg6[%c5, %c0_83, %c0_84, %c0_85] : memref<16x4x8x32xf32, #tpu.memory_space<vmem>>, vector<1x4x8x32xf32>
    %138 = vector.shape_cast %137 : vector<1x4x8x32xf32> to vector<4x8x32xf32>
    %c4_86 = arith.constant 4 : index
    %c0_87 = arith.constant 0 : index
    %c0_88 = arith.constant 0 : index
    %c0_89 = arith.constant 0 : index
    %139 = vector.load %arg7[%c4_86, %c0_87, %c0_88, %c0_89] : memref<12x4x1x8xf32, #tpu.memory_space<vmem>>, vector<1x4x1x8xf32>
    %140 = vector.shape_cast %139 : vector<1x4x1x8xf32> to vector<4x1x8xf32>
    %c6 = arith.constant 6 : index
    %c0_90 = arith.constant 0 : index
    %c0_91 = arith.constant 0 : index
    %c0_92 = arith.constant 0 : index
    %141 = vector.load %arg6[%c6, %c0_90, %c0_91, %c0_92] : memref<16x4x8x32xf32, #tpu.memory_space<vmem>>, vector<1x4x8x32xf32>
    %142 = vector.shape_cast %141 : vector<1x4x8x32xf32> to vector<4x8x32xf32>
    %c5_93 = arith.constant 5 : index
    %c0_94 = arith.constant 0 : index
    %c0_95 = arith.constant 0 : index
    %c0_96 = arith.constant 0 : index
    %143 = vector.load %arg7[%c5_93, %c0_94, %c0_95, %c0_96] : memref<12x4x1x8xf32, #tpu.memory_space<vmem>>, vector<1x4x1x8xf32>
    %144 = vector.shape_cast %143 : vector<1x4x1x8xf32> to vector<4x1x8xf32>
    %c7 = arith.constant 7 : index
    %c0_97 = arith.constant 0 : index
    %c0_98 = arith.constant 0 : index
    %c0_99 = arith.constant 0 : index
    %145 = vector.load %arg6[%c7, %c0_97, %c0_98, %c0_99] : memref<16x4x8x32xf32, #tpu.memory_space<vmem>>, vector<1x4x8x32xf32>
    %146 = vector.shape_cast %145 : vector<1x4x8x32xf32> to vector<4x8x32xf32>
    %c296 = arith.constant 296 : index
    %c0_100 = arith.constant 0 : index
    %147 = vector.load %arg4[%c296, %c0_100] : memref<640x32xf32, #tpu.memory_space<vmem>>, vector<1x32xf32>
    %148 = vector.shape_cast %132 : vector<8x32xf32> to vector<1x8x32xf32>
    %149 = vector.shape_cast %148 : vector<1x8x32xf32> to vector<1x8x32xf32>
    %150 = vector.broadcast %149 : vector<1x8x32xf32> to vector<4x8x32xf32>
    %151 = vector.shape_cast %32 : vector<5x32xf32> to vector<1x5x32xf32>
    %152 = vector.shape_cast %151 : vector<1x5x32xf32> to vector<1x5x32xf32>
    %153 = vector.broadcast %152 : vector<1x5x32xf32> to vector<4x5x32xf32>
    "tpu.trace_start"() <{level = 10 : i32, message = "hte,hde->htd"}> : () -> ()
    %cst_101 = arith.constant dense<0.000000e+00> : vector<4x8x8xf32>
    %154 = tpu.matmul %150, %134, %cst_101 {dimension_numbers = #tpu.dot_dimension_numbers<[2], [2], [1], [1], [0, 0, 0, 1, 1, 1], [0], [0]>} : vector<4x8x32xf32>, vector<4x8x32xf32>, vector<4x8x8xf32> -> vector<4x8x8xf32>
    "tpu.trace_stop"() : () -> ()
    %155 = vector.broadcast %136 : vector<4x1x8xf32> to vector<4x8x8xf32>
    %156 = arith.addf %154, %155 : vector<4x8x8xf32>
    "tpu.trace_start"() <{level = 10 : i32, message = "hse,hde->hsd"}> : () -> ()
    %cst_102 = arith.constant dense<0.000000e+00> : vector<4x5x8xf32>
    %157 = tpu.matmul %153, %138, %cst_102 {dimension_numbers = #tpu.dot_dimension_numbers<[2], [2], [1], [1], [0, 0, 0, 1, 1, 1], [0], [0]>} : vector<4x5x32xf32>, vector<4x8x32xf32>, vector<4x5x8xf32> -> vector<4x5x8xf32>
    "tpu.trace_stop"() : () -> ()
    %158 = vector.broadcast %140 : vector<4x1x8xf32> to vector<4x5x8xf32>
    %159 = arith.addf %157, %158 : vector<4x5x8xf32>
    "tpu.trace_start"() <{level = 10 : i32, message = "hse,hde->hsd"}> : () -> ()
    %cst_103 = arith.constant dense<0.000000e+00> : vector<4x5x8xf32>
    %160 = tpu.matmul %153, %142, %cst_103 {dimension_numbers = #tpu.dot_dimension_numbers<[2], [2], [1], [1], [0, 0, 0, 1, 1, 1], [0], [0]>} : vector<4x5x32xf32>, vector<4x8x32xf32>, vector<4x5x8xf32> -> vector<4x5x8xf32>
    "tpu.trace_stop"() : () -> ()
    %161 = vector.broadcast %144 : vector<4x1x8xf32> to vector<4x5x8xf32>
    %162 = arith.addf %160, %161 : vector<4x5x8xf32>
    "tpu.trace_start"() <{level = 10 : i32, message = "htd,hsd->hts"}> : () -> ()
    %cst_104 = arith.constant dense<0.000000e+00> : vector<4x8x5xf32>
    %163 = tpu.matmul %156, %159, %cst_104 {dimension_numbers = #tpu.dot_dimension_numbers<[2], [2], [1], [1], [0, 0, 0, 1, 1, 1], [0], [0]>} : vector<4x8x8xf32>, vector<4x5x8xf32>, vector<4x8x5xf32> -> vector<4x8x5xf32>
    "tpu.trace_stop"() : () -> ()
    %cst_105 = arith.constant dense<0xFF800000> : vector<4x8xf32>
    %164 = vector.multi_reduction <maximumf>, %163, %cst_105 [2] : vector<4x8x5xf32> to vector<4x8xf32>
    %165 = vector.shape_cast %164 : vector<4x8xf32> to vector<4x8x1xf32>
    %166 = vector.broadcast %165 : vector<4x8x1xf32> to vector<4x8x5xf32>
    %167 = arith.subf %163, %166 : vector<4x8x5xf32>
    %168 = math.exp %167 : vector<4x8x5xf32>
    %cst_106 = arith.constant dense<0.000000e+00> : vector<4x8xf32>
    %169 = vector.multi_reduction <add>, %168, %cst_106 [2] : vector<4x8x5xf32> to vector<4x8xf32>
    %170 = vector.shape_cast %169 : vector<4x8xf32> to vector<4x8x1xf32>
    %171 = tpu.reciprocal %170 {approx = true} : vector<4x8x1xf32> -> vector<4x8x1xf32>
    %172 = vector.broadcast %171 : vector<4x8x1xf32> to vector<4x8x5xf32>
    %173 = arith.mulf %168, %172 : vector<4x8x5xf32>
    "tpu.trace_start"() <{level = 10 : i32, message = "hts,hsd->htd"}> : () -> ()
    %cst_107 = arith.constant dense<0.000000e+00> : vector<4x8x8xf32>
    %174 = tpu.matmul %173, %162, %cst_107 {dimension_numbers = #tpu.dot_dimension_numbers<[2], [1], [1], [2], [0, 0, 0, 1, 1, 2], [0], [0]>} : vector<4x8x5xf32>, vector<4x5x8xf32>, vector<4x8x8xf32> -> vector<4x8x8xf32>
    "tpu.trace_stop"() : () -> ()
    "tpu.trace_start"() <{level = 10 : i32, message = "htd,hde->hte"}> : () -> ()
    %cst_108 = arith.constant dense<0.000000e+00> : vector<4x8x32xf32>
    %175 = tpu.matmul %174, %146, %cst_108 {dimension_numbers = #tpu.dot_dimension_numbers<[2], [1], [1], [2], [0, 0, 0, 1, 1, 2], [0], [0]>} : vector<4x8x8xf32>, vector<4x8x32xf32>, vector<4x8x32xf32> -> vector<4x8x32xf32>
    "tpu.trace_stop"() : () -> ()
    %cst_109 = arith.constant dense<0.000000e+00> : vector<8x32xf32>
    %176 = vector.multi_reduction <add>, %175, %cst_109 [0] : vector<4x8x32xf32> to vector<8x32xf32>
    %177 = vector.broadcast %147 : vector<1x32xf32> to vector<8x32xf32>
    %178 = arith.addf %176, %177 : vector<8x32xf32>
    %179 = arith.addf %110, %178 : vector<8x32xf32>
    %c272 = arith.constant 272 : index
    %c0_110 = arith.constant 0 : index
    %180 = vector.load %arg4[%c272, %c0_110] : memref<640x32xf32, #tpu.memory_space<vmem>>, vector<1x32xf32>
    %c280 = arith.constant 280 : index
    %c0_111 = arith.constant 0 : index
    %181 = vector.load %arg4[%c280, %c0_111] : memref<640x32xf32, #tpu.memory_space<vmem>>, vector<1x32xf32>
    %cst_112 = arith.constant dense<0.000000e+00> : vector<8xf32>
    %182 = vector.multi_reduction <add>, %179, %cst_112 [1] : vector<8x32xf32> to vector<8xf32>
    %183 = vector.shape_cast %182 : vector<8xf32> to vector<8x1xf32>
    %cst_113 = arith.constant 3.200000e+01 : f32
    %184 = vector.broadcast %cst_113 : f32 to vector<8x1xf32>
    %185 = arith.divf %183, %184 : vector<8x1xf32>
    %186 = vector.broadcast %185 : vector<8x1xf32> to vector<8x32xf32>
    %187 = arith.subf %179, %186 : vector<8x32xf32>
    %188 = arith.mulf %187, %187 : vector<8x32xf32>
    %cst_114 = arith.constant dense<0.000000e+00> : vector<8xf32>
    %189 = vector.multi_reduction <add>, %188, %cst_114 [1] : vector<8x32xf32> to vector<8xf32>
    %190 = vector.shape_cast %189 : vector<8xf32> to vector<8x1xf32>
    %cst_115 = arith.constant 3.200000e+01 : f32
    %191 = vector.broadcast %cst_115 : f32 to vector<8x1xf32>
    %192 = arith.divf %190, %191 : vector<8x1xf32>
    %cst_116 = arith.constant 9.99999974E-6 : f32
    %193 = vector.broadcast %cst_116 : f32 to vector<8x1xf32>
    %194 = arith.addf %192, %193 : vector<8x1xf32>
    %195 = math.rsqrt %194 : vector<8x1xf32>
    %196 = vector.broadcast %195 : vector<8x1xf32> to vector<8x32xf32>
    %197 = arith.mulf %187, %196 : vector<8x32xf32>
    %198 = vector.broadcast %180 : vector<1x32xf32> to vector<8x32xf32>
    %199 = arith.mulf %197, %198 : vector<8x32xf32>
    %200 = vector.broadcast %181 : vector<1x32xf32> to vector<8x32xf32>
    %201 = arith.addf %199, %200 : vector<8x32xf32>
    %c40_117 = arith.constant 40 : index
    %c0_118 = arith.constant 0 : index
    %202 = vector.load %arg5[%c40_117, %c0_118] : memref<120x128xf32, #tpu.memory_space<vmem>>, vector<32x128xf32>
    %cst_119 = arith.constant dense<0.000000e+00> : vector<8x128xf32>
    %203 = tpu.matmul %201, %202, %cst_119 {dimension_numbers = #tpu.dot_dimension_numbers<[1], [0], [0], [1], [0, 0, 1, 1], [], []>} : vector<8x32xf32>, vector<32x128xf32>, vector<8x128xf32> -> vector<8x128xf32>
    %c72 = arith.constant 72 : index
    %c0_120 = arith.constant 0 : index
    %204 = vector.load %arg5[%c72, %c0_120] : memref<120x128xf32, #tpu.memory_space<vmem>>, vector<1x128xf32>
    %205 = vector.broadcast %204 : vector<1x128xf32> to vector<8x128xf32>
    %206 = arith.addf %203, %205 : vector<8x128xf32>
    %cst_121 = arith.constant 5.000000e-01 : f32
    %207 = vector.broadcast %cst_121 : f32 to vector<8x128xf32>
    %208 = arith.mulf %207, %206 : vector<8x128xf32>
    %cst_122 = arith.constant 4.471500e-02 : f32
    %209 = vector.broadcast %cst_122 : f32 to vector<8x128xf32>
    %210 = arith.mulf %209, %206 : vector<8x128xf32>
    %211 = arith.mulf %210, %206 : vector<8x128xf32>
    %212 = arith.mulf %211, %206 : vector<8x128xf32>
    %213 = arith.addf %206, %212 : vector<8x128xf32>
    %cst_123 = arith.constant 0.797884583 : f32
    %214 = vector.broadcast %cst_123 : f32 to vector<8x128xf32>
    %215 = arith.mulf %214, %213 : vector<8x128xf32>
    %216 = math.tanh %215 : vector<8x128xf32>
    %cst_124 = arith.constant 1.000000e+00 : f32
    %217 = vector.broadcast %cst_124 : f32 to vector<8x128xf32>
    %218 = arith.addf %217, %216 : vector<8x128xf32>
    %219 = arith.mulf %208, %218 : vector<8x128xf32>
    %c312 = arith.constant 312 : index
    %c0_125 = arith.constant 0 : index
    %220 = vector.load %arg4[%c312, %c0_125] : memref<640x32xf32, #tpu.memory_space<vmem>>, vector<128x32xf32>
    %cst_126 = arith.constant dense<0.000000e+00> : vector<8x32xf32>
    %221 = tpu.matmul %219, %220, %cst_126 {dimension_numbers = #tpu.dot_dimension_numbers<[1], [0], [0], [1], [0, 0, 1, 1], [], []>} : vector<8x128xf32>, vector<128x32xf32>, vector<8x32xf32> -> vector<8x32xf32>
    %222 = arith.addf %179, %221 : vector<8x32xf32>
    %c304 = arith.constant 304 : index
    %c0_127 = arith.constant 0 : index
    %223 = vector.load %arg4[%c304, %c0_127] : memref<640x32xf32, #tpu.memory_space<vmem>>, vector<1x32xf32>
    %224 = vector.broadcast %223 : vector<1x32xf32> to vector<8x32xf32>
    %225 = arith.addf %222, %224 : vector<8x32xf32>
    %c440 = arith.constant 440 : index
    %c0_128 = arith.constant 0 : index
    %226 = vector.load %arg4[%c440, %c0_128] : memref<640x32xf32, #tpu.memory_space<vmem>>, vector<1x32xf32>
    %c448 = arith.constant 448 : index
    %c0_129 = arith.constant 0 : index
    %227 = vector.load %arg4[%c448, %c0_129] : memref<640x32xf32, #tpu.memory_space<vmem>>, vector<1x32xf32>
    %cst_130 = arith.constant dense<0.000000e+00> : vector<8xf32>
    %228 = vector.multi_reduction <add>, %225, %cst_130 [1] : vector<8x32xf32> to vector<8xf32>
    %229 = vector.shape_cast %228 : vector<8xf32> to vector<8x1xf32>
    %cst_131 = arith.constant 3.200000e+01 : f32
    %230 = vector.broadcast %cst_131 : f32 to vector<8x1xf32>
    %231 = arith.divf %229, %230 : vector<8x1xf32>
    %232 = vector.broadcast %231 : vector<8x1xf32> to vector<8x32xf32>
    %233 = arith.subf %225, %232 : vector<8x32xf32>
    %234 = arith.mulf %233, %233 : vector<8x32xf32>
    %cst_132 = arith.constant dense<0.000000e+00> : vector<8xf32>
    %235 = vector.multi_reduction <add>, %234, %cst_132 [1] : vector<8x32xf32> to vector<8xf32>
    %236 = vector.shape_cast %235 : vector<8xf32> to vector<8x1xf32>
    %cst_133 = arith.constant 3.200000e+01 : f32
    %237 = vector.broadcast %cst_133 : f32 to vector<8x1xf32>
    %238 = arith.divf %236, %237 : vector<8x1xf32>
    %cst_134 = arith.constant 9.99999974E-6 : f32
    %239 = vector.broadcast %cst_134 : f32 to vector<8x1xf32>
    %240 = arith.addf %238, %239 : vector<8x1xf32>
    %241 = math.rsqrt %240 : vector<8x1xf32>
    %242 = vector.broadcast %241 : vector<8x1xf32> to vector<8x32xf32>
    %243 = arith.mulf %233, %242 : vector<8x32xf32>
    %244 = vector.broadcast %226 : vector<1x32xf32> to vector<8x32xf32>
    %245 = arith.mulf %243, %244 : vector<8x32xf32>
    %246 = vector.broadcast %227 : vector<1x32xf32> to vector<8x32xf32>
    %247 = arith.addf %245, %246 : vector<8x32xf32>
    %c8_135 = arith.constant 8 : index
    %c0_136 = arith.constant 0 : index
    %c0_137 = arith.constant 0 : index
    %c0_138 = arith.constant 0 : index
    %248 = vector.load %arg6[%c8_135, %c0_136, %c0_137, %c0_138] : memref<16x4x8x32xf32, #tpu.memory_space<vmem>>, vector<1x4x8x32xf32>
    %249 = vector.shape_cast %248 : vector<1x4x8x32xf32> to vector<4x8x32xf32>
    %c6_139 = arith.constant 6 : index
    %c0_140 = arith.constant 0 : index
    %c0_141 = arith.constant 0 : index
    %c0_142 = arith.constant 0 : index
    %250 = vector.load %arg7[%c6_139, %c0_140, %c0_141, %c0_142] : memref<12x4x1x8xf32, #tpu.memory_space<vmem>>, vector<1x4x1x8xf32>
    %251 = vector.shape_cast %250 : vector<1x4x1x8xf32> to vector<4x1x8xf32>
    %c9 = arith.constant 9 : index
    %c0_143 = arith.constant 0 : index
    %c0_144 = arith.constant 0 : index
    %c0_145 = arith.constant 0 : index
    %252 = vector.load %arg6[%c9, %c0_143, %c0_144, %c0_145] : memref<16x4x8x32xf32, #tpu.memory_space<vmem>>, vector<1x4x8x32xf32>
    %253 = vector.shape_cast %252 : vector<1x4x8x32xf32> to vector<4x8x32xf32>
    %c7_146 = arith.constant 7 : index
    %c0_147 = arith.constant 0 : index
    %c0_148 = arith.constant 0 : index
    %c0_149 = arith.constant 0 : index
    %254 = vector.load %arg7[%c7_146, %c0_147, %c0_148, %c0_149] : memref<12x4x1x8xf32, #tpu.memory_space<vmem>>, vector<1x4x1x8xf32>
    %255 = vector.shape_cast %254 : vector<1x4x1x8xf32> to vector<4x1x8xf32>
    %c10 = arith.constant 10 : index
    %c0_150 = arith.constant 0 : index
    %c0_151 = arith.constant 0 : index
    %c0_152 = arith.constant 0 : index
    %256 = vector.load %arg6[%c10, %c0_150, %c0_151, %c0_152] : memref<16x4x8x32xf32, #tpu.memory_space<vmem>>, vector<1x4x8x32xf32>
    %257 = vector.shape_cast %256 : vector<1x4x8x32xf32> to vector<4x8x32xf32>
    %c8_153 = arith.constant 8 : index
    %c0_154 = arith.constant 0 : index
    %c0_155 = arith.constant 0 : index
    %c0_156 = arith.constant 0 : index
    %258 = vector.load %arg7[%c8_153, %c0_154, %c0_155, %c0_156] : memref<12x4x1x8xf32, #tpu.memory_space<vmem>>, vector<1x4x1x8xf32>
    %259 = vector.shape_cast %258 : vector<1x4x1x8xf32> to vector<4x1x8xf32>
    %c11 = arith.constant 11 : index
    %c0_157 = arith.constant 0 : index
    %c0_158 = arith.constant 0 : index
    %c0_159 = arith.constant 0 : index
    %260 = vector.load %arg6[%c11, %c0_157, %c0_158, %c0_159] : memref<16x4x8x32xf32, #tpu.memory_space<vmem>>, vector<1x4x8x32xf32>
    %261 = vector.shape_cast %260 : vector<1x4x8x32xf32> to vector<4x8x32xf32>
    %c488 = arith.constant 488 : index
    %c0_160 = arith.constant 0 : index
    %262 = vector.load %arg4[%c488, %c0_160] : memref<640x32xf32, #tpu.memory_space<vmem>>, vector<1x32xf32>
    %263 = vector.shape_cast %247 : vector<8x32xf32> to vector<1x8x32xf32>
    %264 = vector.shape_cast %263 : vector<1x8x32xf32> to vector<1x8x32xf32>
    %265 = vector.broadcast %264 : vector<1x8x32xf32> to vector<4x8x32xf32>
    %266 = vector.shape_cast %247 : vector<8x32xf32> to vector<1x8x32xf32>
    %267 = vector.shape_cast %266 : vector<1x8x32xf32> to vector<1x8x32xf32>
    %268 = vector.broadcast %267 : vector<1x8x32xf32> to vector<4x8x32xf32>
    "tpu.trace_start"() <{level = 10 : i32, message = "hte,hde->htd"}> : () -> ()
    %cst_161 = arith.constant dense<0.000000e+00> : vector<4x8x8xf32>
    %269 = tpu.matmul %265, %249, %cst_161 {dimension_numbers = #tpu.dot_dimension_numbers<[2], [2], [1], [1], [0, 0, 0, 1, 1, 1], [0], [0]>} : vector<4x8x32xf32>, vector<4x8x32xf32>, vector<4x8x8xf32> -> vector<4x8x8xf32>
    "tpu.trace_stop"() : () -> ()
    %270 = vector.broadcast %251 : vector<4x1x8xf32> to vector<4x8x8xf32>
    %271 = arith.addf %269, %270 : vector<4x8x8xf32>
    "tpu.trace_start"() <{level = 10 : i32, message = "hse,hde->hsd"}> : () -> ()
    %cst_162 = arith.constant dense<0.000000e+00> : vector<4x8x8xf32>
    %272 = tpu.matmul %268, %253, %cst_162 {dimension_numbers = #tpu.dot_dimension_numbers<[2], [2], [1], [1], [0, 0, 0, 1, 1, 1], [0], [0]>} : vector<4x8x32xf32>, vector<4x8x32xf32>, vector<4x8x8xf32> -> vector<4x8x8xf32>
    "tpu.trace_stop"() : () -> ()
    %273 = vector.broadcast %255 : vector<4x1x8xf32> to vector<4x8x8xf32>
    %274 = arith.addf %272, %273 : vector<4x8x8xf32>
    "tpu.trace_start"() <{level = 10 : i32, message = "hse,hde->hsd"}> : () -> ()
    %cst_163 = arith.constant dense<0.000000e+00> : vector<4x8x8xf32>
    %275 = tpu.matmul %268, %257, %cst_163 {dimension_numbers = #tpu.dot_dimension_numbers<[2], [2], [1], [1], [0, 0, 0, 1, 1, 1], [0], [0]>} : vector<4x8x32xf32>, vector<4x8x32xf32>, vector<4x8x8xf32> -> vector<4x8x8xf32>
    "tpu.trace_stop"() : () -> ()
    %276 = vector.broadcast %259 : vector<4x1x8xf32> to vector<4x8x8xf32>
    %277 = arith.addf %275, %276 : vector<4x8x8xf32>
    "tpu.trace_start"() <{level = 10 : i32, message = "htd,hsd->hts"}> : () -> ()
    %cst_164 = arith.constant dense<0.000000e+00> : vector<4x8x8xf32>
    %278 = tpu.matmul %271, %274, %cst_164 {dimension_numbers = #tpu.dot_dimension_numbers<[2], [2], [1], [1], [0, 0, 0, 1, 1, 1], [0], [0]>} : vector<4x8x8xf32>, vector<4x8x8xf32>, vector<4x8x8xf32> -> vector<4x8x8xf32>
    "tpu.trace_stop"() : () -> ()
    %cst_165 = arith.constant dense<0xFF800000> : vector<4x8xf32>
    %279 = vector.multi_reduction <maximumf>, %278, %cst_165 [2] : vector<4x8x8xf32> to vector<4x8xf32>
    %280 = vector.shape_cast %279 : vector<4x8xf32> to vector<4x8x1xf32>
    %281 = vector.broadcast %280 : vector<4x8x1xf32> to vector<4x8x8xf32>
    %282 = arith.subf %278, %281 : vector<4x8x8xf32>
    %283 = math.exp %282 : vector<4x8x8xf32>
    %cst_166 = arith.constant dense<0.000000e+00> : vector<4x8xf32>
    %284 = vector.multi_reduction <add>, %283, %cst_166 [2] : vector<4x8x8xf32> to vector<4x8xf32>
    %285 = vector.shape_cast %284 : vector<4x8xf32> to vector<4x8x1xf32>
    %286 = tpu.reciprocal %285 {approx = true} : vector<4x8x1xf32> -> vector<4x8x1xf32>
    %287 = vector.broadcast %286 : vector<4x8x1xf32> to vector<4x8x8xf32>
    %288 = arith.mulf %283, %287 : vector<4x8x8xf32>
    "tpu.trace_start"() <{level = 10 : i32, message = "hts,hsd->htd"}> : () -> ()
    %cst_167 = arith.constant dense<0.000000e+00> : vector<4x8x8xf32>
    %289 = tpu.matmul %288, %277, %cst_167 {dimension_numbers = #tpu.dot_dimension_numbers<[2], [1], [1], [2], [0, 0, 0, 1, 1, 2], [0], [0]>} : vector<4x8x8xf32>, vector<4x8x8xf32>, vector<4x8x8xf32> -> vector<4x8x8xf32>
    "tpu.trace_stop"() : () -> ()
    "tpu.trace_start"() <{level = 10 : i32, message = "htd,hde->hte"}> : () -> ()
    %cst_168 = arith.constant dense<0.000000e+00> : vector<4x8x32xf32>
    %290 = tpu.matmul %289, %261, %cst_168 {dimension_numbers = #tpu.dot_dimension_numbers<[2], [1], [1], [2], [0, 0, 0, 1, 1, 2], [0], [0]>} : vector<4x8x8xf32>, vector<4x8x32xf32>, vector<4x8x32xf32> -> vector<4x8x32xf32>
    "tpu.trace_stop"() : () -> ()
    %cst_169 = arith.constant dense<0.000000e+00> : vector<8x32xf32>
    %291 = vector.multi_reduction <add>, %290, %cst_169 [0] : vector<4x8x32xf32> to vector<8x32xf32>
    %292 = vector.broadcast %262 : vector<1x32xf32> to vector<8x32xf32>
    %293 = arith.addf %291, %292 : vector<8x32xf32>
    %294 = arith.addf %225, %293 : vector<8x32xf32>
    %c456 = arith.constant 456 : index
    %c0_170 = arith.constant 0 : index
    %295 = vector.load %arg4[%c456, %c0_170] : memref<640x32xf32, #tpu.memory_space<vmem>>, vector<1x32xf32>
    %c464 = arith.constant 464 : index
    %c0_171 = arith.constant 0 : index
    %296 = vector.load %arg4[%c464, %c0_171] : memref<640x32xf32, #tpu.memory_space<vmem>>, vector<1x32xf32>
    %cst_172 = arith.constant dense<0.000000e+00> : vector<8xf32>
    %297 = vector.multi_reduction <add>, %294, %cst_172 [1] : vector<8x32xf32> to vector<8xf32>
    %298 = vector.shape_cast %297 : vector<8xf32> to vector<8x1xf32>
    %cst_173 = arith.constant 3.200000e+01 : f32
    %299 = vector.broadcast %cst_173 : f32 to vector<8x1xf32>
    %300 = arith.divf %298, %299 : vector<8x1xf32>
    %301 = vector.broadcast %300 : vector<8x1xf32> to vector<8x32xf32>
    %302 = arith.subf %294, %301 : vector<8x32xf32>
    %303 = arith.mulf %302, %302 : vector<8x32xf32>
    %cst_174 = arith.constant dense<0.000000e+00> : vector<8xf32>
    %304 = vector.multi_reduction <add>, %303, %cst_174 [1] : vector<8x32xf32> to vector<8xf32>
    %305 = vector.shape_cast %304 : vector<8xf32> to vector<8x1xf32>
    %cst_175 = arith.constant 3.200000e+01 : f32
    %306 = vector.broadcast %cst_175 : f32 to vector<8x1xf32>
    %307 = arith.divf %305, %306 : vector<8x1xf32>
    %cst_176 = arith.constant 9.99999974E-6 : f32
    %308 = vector.broadcast %cst_176 : f32 to vector<8x1xf32>
    %309 = arith.addf %307, %308 : vector<8x1xf32>
    %310 = math.rsqrt %309 : vector<8x1xf32>
    %311 = vector.broadcast %310 : vector<8x1xf32> to vector<8x32xf32>
    %312 = arith.mulf %302, %311 : vector<8x32xf32>
    %313 = vector.broadcast %295 : vector<1x32xf32> to vector<8x32xf32>
    %314 = arith.mulf %312, %313 : vector<8x32xf32>
    %315 = vector.broadcast %296 : vector<1x32xf32> to vector<8x32xf32>
    %316 = arith.addf %314, %315 : vector<8x32xf32>
    %c12 = arith.constant 12 : index
    %c0_177 = arith.constant 0 : index
    %c0_178 = arith.constant 0 : index
    %c0_179 = arith.constant 0 : index
    %317 = vector.load %arg6[%c12, %c0_177, %c0_178, %c0_179] : memref<16x4x8x32xf32, #tpu.memory_space<vmem>>, vector<1x4x8x32xf32>
    %318 = vector.shape_cast %317 : vector<1x4x8x32xf32> to vector<4x8x32xf32>
    %c9_180 = arith.constant 9 : index
    %c0_181 = arith.constant 0 : index
    %c0_182 = arith.constant 0 : index
    %c0_183 = arith.constant 0 : index
    %319 = vector.load %arg7[%c9_180, %c0_181, %c0_182, %c0_183] : memref<12x4x1x8xf32, #tpu.memory_space<vmem>>, vector<1x4x1x8xf32>
    %320 = vector.shape_cast %319 : vector<1x4x1x8xf32> to vector<4x1x8xf32>
    %c13 = arith.constant 13 : index
    %c0_184 = arith.constant 0 : index
    %c0_185 = arith.constant 0 : index
    %c0_186 = arith.constant 0 : index
    %321 = vector.load %arg6[%c13, %c0_184, %c0_185, %c0_186] : memref<16x4x8x32xf32, #tpu.memory_space<vmem>>, vector<1x4x8x32xf32>
    %322 = vector.shape_cast %321 : vector<1x4x8x32xf32> to vector<4x8x32xf32>
    %c10_187 = arith.constant 10 : index
    %c0_188 = arith.constant 0 : index
    %c0_189 = arith.constant 0 : index
    %c0_190 = arith.constant 0 : index
    %323 = vector.load %arg7[%c10_187, %c0_188, %c0_189, %c0_190] : memref<12x4x1x8xf32, #tpu.memory_space<vmem>>, vector<1x4x1x8xf32>
    %324 = vector.shape_cast %323 : vector<1x4x1x8xf32> to vector<4x1x8xf32>
    %c14 = arith.constant 14 : index
    %c0_191 = arith.constant 0 : index
    %c0_192 = arith.constant 0 : index
    %c0_193 = arith.constant 0 : index
    %325 = vector.load %arg6[%c14, %c0_191, %c0_192, %c0_193] : memref<16x4x8x32xf32, #tpu.memory_space<vmem>>, vector<1x4x8x32xf32>
    %326 = vector.shape_cast %325 : vector<1x4x8x32xf32> to vector<4x8x32xf32>
    %c11_194 = arith.constant 11 : index
    %c0_195 = arith.constant 0 : index
    %c0_196 = arith.constant 0 : index
    %c0_197 = arith.constant 0 : index
    %327 = vector.load %arg7[%c11_194, %c0_195, %c0_196, %c0_197] : memref<12x4x1x8xf32, #tpu.memory_space<vmem>>, vector<1x4x1x8xf32>
    %328 = vector.shape_cast %327 : vector<1x4x1x8xf32> to vector<4x1x8xf32>
    %c15 = arith.constant 15 : index
    %c0_198 = arith.constant 0 : index
    %c0_199 = arith.constant 0 : index
    %c0_200 = arith.constant 0 : index
    %329 = vector.load %arg6[%c15, %c0_198, %c0_199, %c0_200] : memref<16x4x8x32xf32, #tpu.memory_space<vmem>>, vector<1x4x8x32xf32>
    %330 = vector.shape_cast %329 : vector<1x4x8x32xf32> to vector<4x8x32xf32>
    %c496 = arith.constant 496 : index
    %c0_201 = arith.constant 0 : index
    %331 = vector.load %arg4[%c496, %c0_201] : memref<640x32xf32, #tpu.memory_space<vmem>>, vector<1x32xf32>
    %332 = vector.shape_cast %316 : vector<8x32xf32> to vector<1x8x32xf32>
    %333 = vector.shape_cast %332 : vector<1x8x32xf32> to vector<1x8x32xf32>
    %334 = vector.broadcast %333 : vector<1x8x32xf32> to vector<4x8x32xf32>
    %335 = vector.shape_cast %32 : vector<5x32xf32> to vector<1x5x32xf32>
    %336 = vector.shape_cast %335 : vector<1x5x32xf32> to vector<1x5x32xf32>
    %337 = vector.broadcast %336 : vector<1x5x32xf32> to vector<4x5x32xf32>
    "tpu.trace_start"() <{level = 10 : i32, message = "hte,hde->htd"}> : () -> ()
    %cst_202 = arith.constant dense<0.000000e+00> : vector<4x8x8xf32>
    %338 = tpu.matmul %334, %318, %cst_202 {dimension_numbers = #tpu.dot_dimension_numbers<[2], [2], [1], [1], [0, 0, 0, 1, 1, 1], [0], [0]>} : vector<4x8x32xf32>, vector<4x8x32xf32>, vector<4x8x8xf32> -> vector<4x8x8xf32>
    "tpu.trace_stop"() : () -> ()
    %339 = vector.broadcast %320 : vector<4x1x8xf32> to vector<4x8x8xf32>
    %340 = arith.addf %338, %339 : vector<4x8x8xf32>
    "tpu.trace_start"() <{level = 10 : i32, message = "hse,hde->hsd"}> : () -> ()
    %cst_203 = arith.constant dense<0.000000e+00> : vector<4x5x8xf32>
    %341 = tpu.matmul %337, %322, %cst_203 {dimension_numbers = #tpu.dot_dimension_numbers<[2], [2], [1], [1], [0, 0, 0, 1, 1, 1], [0], [0]>} : vector<4x5x32xf32>, vector<4x8x32xf32>, vector<4x5x8xf32> -> vector<4x5x8xf32>
    "tpu.trace_stop"() : () -> ()
    %342 = vector.broadcast %324 : vector<4x1x8xf32> to vector<4x5x8xf32>
    %343 = arith.addf %341, %342 : vector<4x5x8xf32>
    "tpu.trace_start"() <{level = 10 : i32, message = "hse,hde->hsd"}> : () -> ()
    %cst_204 = arith.constant dense<0.000000e+00> : vector<4x5x8xf32>
    %344 = tpu.matmul %337, %326, %cst_204 {dimension_numbers = #tpu.dot_dimension_numbers<[2], [2], [1], [1], [0, 0, 0, 1, 1, 1], [0], [0]>} : vector<4x5x32xf32>, vector<4x8x32xf32>, vector<4x5x8xf32> -> vector<4x5x8xf32>
    "tpu.trace_stop"() : () -> ()
    %345 = vector.broadcast %328 : vector<4x1x8xf32> to vector<4x5x8xf32>
    %346 = arith.addf %344, %345 : vector<4x5x8xf32>
    "tpu.trace_start"() <{level = 10 : i32, message = "htd,hsd->hts"}> : () -> ()
    %cst_205 = arith.constant dense<0.000000e+00> : vector<4x8x5xf32>
    %347 = tpu.matmul %340, %343, %cst_205 {dimension_numbers = #tpu.dot_dimension_numbers<[2], [2], [1], [1], [0, 0, 0, 1, 1, 1], [0], [0]>} : vector<4x8x8xf32>, vector<4x5x8xf32>, vector<4x8x5xf32> -> vector<4x8x5xf32>
    "tpu.trace_stop"() : () -> ()
    %cst_206 = arith.constant dense<0xFF800000> : vector<4x8xf32>
    %348 = vector.multi_reduction <maximumf>, %347, %cst_206 [2] : vector<4x8x5xf32> to vector<4x8xf32>
    %349 = vector.shape_cast %348 : vector<4x8xf32> to vector<4x8x1xf32>
    %350 = vector.broadcast %349 : vector<4x8x1xf32> to vector<4x8x5xf32>
    %351 = arith.subf %347, %350 : vector<4x8x5xf32>
    %352 = math.exp %351 : vector<4x8x5xf32>
    %cst_207 = arith.constant dense<0.000000e+00> : vector<4x8xf32>
    %353 = vector.multi_reduction <add>, %352, %cst_207 [2] : vector<4x8x5xf32> to vector<4x8xf32>
    %354 = vector.shape_cast %353 : vector<4x8xf32> to vector<4x8x1xf32>
    %355 = tpu.reciprocal %354 {approx = true} : vector<4x8x1xf32> -> vector<4x8x1xf32>
    %356 = vector.broadcast %355 : vector<4x8x1xf32> to vector<4x8x5xf32>
    %357 = arith.mulf %352, %356 : vector<4x8x5xf32>
    "tpu.trace_start"() <{level = 10 : i32, message = "hts,hsd->htd"}> : () -> ()
    %cst_208 = arith.constant dense<0.000000e+00> : vector<4x8x8xf32>
    %358 = tpu.matmul %357, %346, %cst_208 {dimension_numbers = #tpu.dot_dimension_numbers<[2], [1], [1], [2], [0, 0, 0, 1, 1, 2], [0], [0]>} : vector<4x8x5xf32>, vector<4x5x8xf32>, vector<4x8x8xf32> -> vector<4x8x8xf32>
    "tpu.trace_stop"() : () -> ()
    "tpu.trace_start"() <{level = 10 : i32, message = "htd,hde->hte"}> : () -> ()
    %cst_209 = arith.constant dense<0.000000e+00> : vector<4x8x32xf32>
    %359 = tpu.matmul %358, %330, %cst_209 {dimension_numbers = #tpu.dot_dimension_numbers<[2], [1], [1], [2], [0, 0, 0, 1, 1, 2], [0], [0]>} : vector<4x8x8xf32>, vector<4x8x32xf32>, vector<4x8x32xf32> -> vector<4x8x32xf32>
    "tpu.trace_stop"() : () -> ()
    %cst_210 = arith.constant dense<0.000000e+00> : vector<8x32xf32>
    %360 = vector.multi_reduction <add>, %359, %cst_210 [0] : vector<4x8x32xf32> to vector<8x32xf32>
    %361 = vector.broadcast %331 : vector<1x32xf32> to vector<8x32xf32>
    %362 = arith.addf %360, %361 : vector<8x32xf32>
    %363 = arith.addf %294, %362 : vector<8x32xf32>
    %c472 = arith.constant 472 : index
    %c0_211 = arith.constant 0 : index
    %364 = vector.load %arg4[%c472, %c0_211] : memref<640x32xf32, #tpu.memory_space<vmem>>, vector<1x32xf32>
    %c480 = arith.constant 480 : index
    %c0_212 = arith.constant 0 : index
    %365 = vector.load %arg4[%c480, %c0_212] : memref<640x32xf32, #tpu.memory_space<vmem>>, vector<1x32xf32>
    %cst_213 = arith.constant dense<0.000000e+00> : vector<8xf32>
    %366 = vector.multi_reduction <add>, %363, %cst_213 [1] : vector<8x32xf32> to vector<8xf32>
    %367 = vector.shape_cast %366 : vector<8xf32> to vector<8x1xf32>
    %cst_214 = arith.constant 3.200000e+01 : f32
    %368 = vector.broadcast %cst_214 : f32 to vector<8x1xf32>
    %369 = arith.divf %367, %368 : vector<8x1xf32>
    %370 = vector.broadcast %369 : vector<8x1xf32> to vector<8x32xf32>
    %371 = arith.subf %363, %370 : vector<8x32xf32>
    %372 = arith.mulf %371, %371 : vector<8x32xf32>
    %cst_215 = arith.constant dense<0.000000e+00> : vector<8xf32>
    %373 = vector.multi_reduction <add>, %372, %cst_215 [1] : vector<8x32xf32> to vector<8xf32>
    %374 = vector.shape_cast %373 : vector<8xf32> to vector<8x1xf32>
    %cst_216 = arith.constant 3.200000e+01 : f32
    %375 = vector.broadcast %cst_216 : f32 to vector<8x1xf32>
    %376 = arith.divf %374, %375 : vector<8x1xf32>
    %cst_217 = arith.constant 9.99999974E-6 : f32
    %377 = vector.broadcast %cst_217 : f32 to vector<8x1xf32>
    %378 = arith.addf %376, %377 : vector<8x1xf32>
    %379 = math.rsqrt %378 : vector<8x1xf32>
    %380 = vector.broadcast %379 : vector<8x1xf32> to vector<8x32xf32>
    %381 = arith.mulf %371, %380 : vector<8x32xf32>
    %382 = vector.broadcast %364 : vector<1x32xf32> to vector<8x32xf32>
    %383 = arith.mulf %381, %382 : vector<8x32xf32>
    %384 = vector.broadcast %365 : vector<1x32xf32> to vector<8x32xf32>
    %385 = arith.addf %383, %384 : vector<8x32xf32>
    %c80 = arith.constant 80 : index
    %c0_218 = arith.constant 0 : index
    %386 = vector.load %arg5[%c80, %c0_218] : memref<120x128xf32, #tpu.memory_space<vmem>>, vector<32x128xf32>
    %cst_219 = arith.constant dense<0.000000e+00> : vector<8x128xf32>
    %387 = tpu.matmul %385, %386, %cst_219 {dimension_numbers = #tpu.dot_dimension_numbers<[1], [0], [0], [1], [0, 0, 1, 1], [], []>} : vector<8x32xf32>, vector<32x128xf32>, vector<8x128xf32> -> vector<8x128xf32>
    %c112 = arith.constant 112 : index
    %c0_220 = arith.constant 0 : index
    %388 = vector.load %arg5[%c112, %c0_220] : memref<120x128xf32, #tpu.memory_space<vmem>>, vector<1x128xf32>
    %389 = vector.broadcast %388 : vector<1x128xf32> to vector<8x128xf32>
    %390 = arith.addf %387, %389 : vector<8x128xf32>
    %cst_221 = arith.constant 5.000000e-01 : f32
    %391 = vector.broadcast %cst_221 : f32 to vector<8x128xf32>
    %392 = arith.mulf %391, %390 : vector<8x128xf32>
    %cst_222 = arith.constant 4.471500e-02 : f32
    %393 = vector.broadcast %cst_222 : f32 to vector<8x128xf32>
    %394 = arith.mulf %393, %390 : vector<8x128xf32>
    %395 = arith.mulf %394, %390 : vector<8x128xf32>
    %396 = arith.mulf %395, %390 : vector<8x128xf32>
    %397 = arith.addf %390, %396 : vector<8x128xf32>
    %cst_223 = arith.constant 0.797884583 : f32
    %398 = vector.broadcast %cst_223 : f32 to vector<8x128xf32>
    %399 = arith.mulf %398, %397 : vector<8x128xf32>
    %400 = math.tanh %399 : vector<8x128xf32>
    %cst_224 = arith.constant 1.000000e+00 : f32
    %401 = vector.broadcast %cst_224 : f32 to vector<8x128xf32>
    %402 = arith.addf %401, %400 : vector<8x128xf32>
    %403 = arith.mulf %392, %402 : vector<8x128xf32>
    %c512 = arith.constant 512 : index
    %c0_225 = arith.constant 0 : index
    %404 = vector.load %arg4[%c512, %c0_225] : memref<640x32xf32, #tpu.memory_space<vmem>>, vector<128x32xf32>
    %cst_226 = arith.constant dense<0.000000e+00> : vector<8x32xf32>
    %405 = tpu.matmul %403, %404, %cst_226 {dimension_numbers = #tpu.dot_dimension_numbers<[1], [0], [0], [1], [0, 0, 1, 1], [], []>} : vector<8x128xf32>, vector<128x32xf32>, vector<8x32xf32> -> vector<8x32xf32>
    %406 = arith.addf %363, %405 : vector<8x32xf32>
    %c504 = arith.constant 504 : index
    %c0_227 = arith.constant 0 : index
    %407 = vector.load %arg4[%c504, %c0_227] : memref<640x32xf32, #tpu.memory_space<vmem>>, vector<1x32xf32>
    %408 = vector.broadcast %407 : vector<1x32xf32> to vector<8x32xf32>
    %409 = arith.addf %406, %408 : vector<8x32xf32>
    %c184 = arith.constant 184 : index
    %c0_228 = arith.constant 0 : index
    %410 = vector.load %arg4[%c184, %c0_228] : memref<640x32xf32, #tpu.memory_space<vmem>>, vector<1x32xf32>
    %c192 = arith.constant 192 : index
    %c0_229 = arith.constant 0 : index
    %411 = vector.load %arg4[%c192, %c0_229] : memref<640x32xf32, #tpu.memory_space<vmem>>, vector<1x32xf32>
    %cst_230 = arith.constant dense<0.000000e+00> : vector<8xf32>
    %412 = vector.multi_reduction <add>, %409, %cst_230 [1] : vector<8x32xf32> to vector<8xf32>
    %413 = vector.shape_cast %412 : vector<8xf32> to vector<8x1xf32>
    %cst_231 = arith.constant 3.200000e+01 : f32
    %414 = vector.broadcast %cst_231 : f32 to vector<8x1xf32>
    %415 = arith.divf %413, %414 : vector<8x1xf32>
    %416 = vector.broadcast %415 : vector<8x1xf32> to vector<8x32xf32>
    %417 = arith.subf %409, %416 : vector<8x32xf32>
    %418 = arith.mulf %417, %417 : vector<8x32xf32>
    %cst_232 = arith.constant dense<0.000000e+00> : vector<8xf32>
    %419 = vector.multi_reduction <add>, %418, %cst_232 [1] : vector<8x32xf32> to vector<8xf32>
    %420 = vector.shape_cast %419 : vector<8xf32> to vector<8x1xf32>
    %cst_233 = arith.constant 3.200000e+01 : f32
    %421 = vector.broadcast %cst_233 : f32 to vector<8x1xf32>
    %422 = arith.divf %420, %421 : vector<8x1xf32>
    %cst_234 = arith.constant 9.99999974E-6 : f32
    %423 = vector.broadcast %cst_234 : f32 to vector<8x1xf32>
    %424 = arith.addf %422, %423 : vector<8x1xf32>
    %425 = math.rsqrt %424 : vector<8x1xf32>
    %426 = vector.broadcast %425 : vector<8x1xf32> to vector<8x32xf32>
    %427 = arith.mulf %417, %426 : vector<8x32xf32>
    %428 = vector.broadcast %410 : vector<1x32xf32> to vector<8x32xf32>
    %429 = arith.mulf %427, %428 : vector<8x32xf32>
    %430 = vector.broadcast %411 : vector<1x32xf32> to vector<8x32xf32>
    %431 = arith.addf %429, %430 : vector<8x32xf32>
    %c200 = arith.constant 200 : index
    %c0_235 = arith.constant 0 : index
    %432 = vector.load %arg4[%c200, %c0_235] : memref<640x32xf32, #tpu.memory_space<vmem>>, vector<32x32xf32>
    %cst_236 = arith.constant dense<0.000000e+00> : vector<8x32xf32>
    %433 = tpu.matmul %431, %432, %cst_236 {dimension_numbers = #tpu.dot_dimension_numbers<[1], [0], [0], [1], [0, 0, 1, 1], [], []>} : vector<8x32xf32>, vector<32x32xf32>, vector<8x32xf32> -> vector<8x32xf32>
    %c232 = arith.constant 232 : index
    %c0_237 = arith.constant 0 : index
    %434 = vector.load %arg4[%c232, %c0_237] : memref<640x32xf32, #tpu.memory_space<vmem>>, vector<1x32xf32>
    %435 = vector.broadcast %434 : vector<1x32xf32> to vector<8x32xf32>
    %436 = arith.addf %433, %435 : vector<8x32xf32>
    %c0_238 = arith.constant 0 : index
    %c0_239 = arith.constant 0 : index
    %c0_240 = arith.constant 0 : index
    %437 = vector.load %arg8[%c0_238, %c0_239, %c0_240] : memref<1x8x32xf32, #tpu.memory_space<vmem>>, vector<1x8x32xf32>
    %438 = vector.shape_cast %437 : vector<1x8x32xf32> to vector<8x32xf32>
    %439 = vector.shape_cast %436 : vector<8x32xf32> to vector<1x8x32xf32>
    tpu.vector_store %arg8[%c0_238, %c0_239, %c0_240], %439 {strides = array<i32>} : memref<1x8x32xf32, #tpu.memory_space<vmem>>, vector<1x8x32xf32>,
    return
  }
  func.func @transform_0(%arg0: i32) -> (i32, i32, i32) {
    %c0_i32 = arith.constant 0 : i32
    %c0_i32_0 = arith.constant 0 : i32
    %c0_i32_1 = arith.constant 0 : i32
    return %arg0, %c0_i32, %c0_i32_0 : i32, i32, i32
  }
  func.func @transform_1(%arg0: i32) -> (i32, i32, i32) {
    %c0_i32 = arith.constant 0 : i32
    %c0_i32_0 = arith.constant 0 : i32
    %c0_i32_1 = arith.constant 0 : i32
    return %arg0, %c0_i32, %c0_i32_0 : i32, i32, i32
  }
  func.func @transform_2(%arg0: i32) -> (i32, i32, i32) {
    %c0_i32 = arith.constant 0 : i32
    %c0_i32_0 = arith.constant 0 : i32
    %c0_i32_1 = arith.constant 0 : i32
    return %arg0, %c0_i32, %c0_i32_0 : i32, i32, i32
  }
  func.func @transform_3(%arg0: i32) -> (i32, i32) {
    %c0_i32 = arith.constant 0 : i32
    %c0_i32_0 = arith.constant 0 : i32
    %c0_i32_1 = arith.constant 0 : i32
    return %c0_i32, %c0_i32_0 : i32, i32
  }
  func.func @transform_4(%arg0: i32) -> (i32, i32) {
    %c0_i32 = arith.constant 0 : i32
    %c0_i32_0 = arith.constant 0 : i32
    %c0_i32_1 = arith.constant 0 : i32
    return %c0_i32, %c0_i32_0 : i32, i32
  }
  func.func @transform_5(%arg0: i32) -> (i32, i32, i32, i32) {
    %c0_i32 = arith.constant 0 : i32
    %c0_i32_0 = arith.constant 0 : i32
    %c0_i32_1 = arith.constant 0 : i32
    %c0_i32_2 = arith.constant 0 : i32
    %c0_i32_3 = arith.constant 0 : i32
    return %c0_i32, %c0_i32_0, %c0_i32_1, %c0_i32_2 : i32, i32, i32, i32
  }
  func.func @transform_6(%arg0: i32) -> (i32, i32, i32, i32) {
    %c0_i32 = arith.constant 0 : i32
    %c0_i32_0 = arith.constant 0 : i32
    %c0_i32_1 = arith.constant 0 : i32
    %c0_i32_2 = arith.constant 0 : i32
    %c0_i32_3 = arith.constant 0 : i32
    return %c0_i32, %c0_i32_0, %c0_i32_1, %c0_i32_2 : i32, i32, i32, i32
  }
  func.func @transform_7(%arg0: i32) -> (i32, i32, i32) {
    %c0_i32 = arith.constant 0 : i32
    %c0_i32_0 = arith.constant 0 : i32
    %c0_i32_1 = arith.constant 0 : i32
    return %arg0, %c0_i32, %c0_i32_0 : i32, i32, i32
  }
}

</mosaic_0001>

<llo_original>
// kernel: _lambda_.1
$region0: #{_lambda_.1}
  #allocation0 [shape = 'u32[]', space=smem, size = 0x4, offset = 0x4, fixed_abs, tag = 'smem constant byte address 0x4 - core index']
  #allocation1 [shape = 'u32[144,128]{1,0:T(1,128)}', space=vmem, size = 0x12000, scoped, tag = 'internal scratch']
  %s0 = inlined_call_operand.vmem [shape: f32[2,1,32], index: 0, kind: input, shape index: {}]
  %s1 = inlined_call_operand.vmem [shape: f32[2,8,4], index: 1, kind: input, shape index: {}]
  %s2 = inlined_call_operand.vmem [shape: f32[2,4,6], index: 2, kind: input, shape index: {}]
  %s3 = inlined_call_operand.vmem [shape: f32[640,32], index: 3, kind: input, shape index: {}]
  %s4 = inlined_call_operand.vmem [shape: f32[120,128], index: 4, kind: input, shape index: {}]
  %s5 = inlined_call_operand.vmem [shape: f32[16,4,8,32], index: 5, kind: input, shape index: {}]
  %s6 = inlined_call_operand.vmem [shape: f32[12,4,1,8], index: 6, kind: input, shape index: {}]
  %s7 = inlined_call_operand.vmem [shape: f32[2,8,32], index: 7, kind: output, shape index: {}]
  %s8 = sld [smem:[#allocation0]]
  $region61: #{_lambda_.1} parent=0
    _
  %s10 = ssub.s32 1, %s8
  %s11 = scalar_select 0, %s10, %s8
  loop: start=0, step=1, limit=4
  $region2: #{_lambda_.1} parent=0 // loop_pre_header
    _
  $region3: #{_lambda_.1} parent=0 // loop_header
    %s13 = sphi 0, %s17
    %p14 = scmp.ge.s32.totalorder %s13, 4
    %s23 = sphi 0, %s25
    %s26 = sphi 0, %s23
    %s27 = sphi 0, %s26
    %s43 = sphi 0, %s27
    %s49 = sphi 0, %s51
    %s52 = sphi 0, %s49
    %s53 = sphi 0, %s52
    %s69 = sphi 0, %s53
    %s75 = sphi 0, %s77
    %s78 = sphi 0, %s75
    %s79 = sphi 0, %s78
    %s95 = sphi 0, %s79
    %s99 = sphi 0, %s99
    %s101 = sphi 0, %s99
    %s102 = sphi 0, %s101
    %s116 = sphi 0, %s102
    %s120 = sphi 0, %s120
    %s122 = sphi 0, %s120
    %s123 = sphi 0, %s122
    %s137 = sphi 0, %s123
    %s141 = sphi 0, %s141
    %s143 = sphi 0, %s141
    %s144 = sphi 0, %s143
    %s158 = sphi 0, %s144
    %s162 = sphi 0, %s162
    %s164 = sphi 0, %s162
    %s165 = sphi 0, %s164
    %s179 = sphi 0, %s165
    %s185 = sphi 0, %s187
    %s188 = sphi 0, %s185
    %s189 = sphi 0, %s188
    %s205 = sphi 0, %s189
  $region4: #{_lambda_.1} parent=0 // loop_header_branch
    %16 = sbr.rel (%p14) target = $region8
  $region5: #{_lambda_.1} parent=0 // loop_body
    %s18 = ssub.s32 %s13, 1
    %s19 = ssub.s32 %s13, 2
    %s20 = sadd.s32 %s13, 1
    %s21 = ssub.s32 %s13, %s20
    %p22 = scmp.eq.s32.totalorder %s21, 0
    %s24 = sadd.s32 %s23, 1
    %s25 = scalar_select %p22, %s23, %s24
    %p28 = pneg %p22
    %p29 = scmp.eq.s32.totalorder %s13, 1
    %p30 = por %p28, %p29
    %p31 = scmp.ne.s32.totalorder %s23, %s26
    %p32 = scmp.eq.s32.totalorder %s13, 0
    %p33 = por %p31, %p32
    %p34 = scmp.ne.s32.totalorder %s23, %s26
    %p35 = scmp.eq.s32.totalorder %s18, 1
    %p36 = por %p34, %p35
    %p37 = scmp.ne.s32.totalorder %s26, %s27
    %p38 = scmp.eq.s32.totalorder %s18, 0
    %p39 = por %p37, %p38
    %p40 = scmp.ne.s32.totalorder %s26, %s27
    %p41 = scmp.eq.s32.totalorder %s19, 1
    %p42 = por %p40, %p41
    %p44 = scmp.ne.s32.totalorder %s27, %s43
    %p45 = scmp.eq.s32.totalorder %s19, 0
    %p46 = por %p44, %p45
    %s47 = ssub.s32 %s13, %s20
    %p48 = scmp.eq.s32.totalorder %s47, 0
    %s50 = sadd.s32 %s49, 1
    %s51 = scalar_select %p48, %s49, %s50
    %p54 = pneg %p48
    %p55 = scmp.eq.s32.totalorder %s13, 1
    %p56 = por %p54, %p55
    %p57 = scmp.ne.s32.totalorder %s49, %s52
    %p58 = scmp.eq.s32.totalorder %s13, 0
    %p59 = por %p57, %p58
    %p60 = scmp.ne.s32.totalorder %s49, %s52
    %p61 = scmp.eq.s32.totalorder %s18, 1
    %p62 = por %p60, %p61
    %p63 = scmp.ne.s32.totalorder %s52, %s53
    %p64 = scmp.eq.s32.totalorder %s18, 0
    %p65 = por %p63, %p64
    %p66 = scmp.ne.s32.totalorder %s52, %s53
    %p67 = scmp.eq.s32.totalorder %s19, 1
    %p68 = por %p66, %p67
    %p70 = scmp.ne.s32.totalorder %s53, %s69
    %p71 = scmp.eq.s32.totalorder %s19, 0
    %p72 = por %p70, %p71
    %s73 = ssub.s32 %s13, %s20
    %p74 = scmp.eq.s32.totalorder %s73, 0
    %s76 = sadd.s32 %s75, 1
    %s77 = scalar_select %p74, %s75, %s76
    %p80 = pneg %p74
    %p81 = scmp.eq.s32.totalorder %s13, 1
    %p82 = por %p80, %p81
    %p83 = scmp.ne.s32.totalorder %s75, %s78
    %p84 = scmp.eq.s32.totalorder %s13, 0
    %p85 = por %p83, %p84
    %p86 = scmp.ne.s32.totalorder %s75, %s78
    %p87 = scmp.eq.s32.totalorder %s18, 1
    %p88 = por %p86, %p87
    %p89 = scmp.ne.s32.totalorder %s78, %s79
    %p90 = scmp.eq.s32.totalorder %s18, 0
    %p91 = por %p89, %p90
    %p92 = scmp.ne.s32.totalorder %s78, %s79
    %p93 = scmp.eq.s32.totalorder %s19, 1
    %p94 = por %p92, %p93
    %p96 = scmp.ne.s32.totalorder %s79, %s95
    %p97 = scmp.eq.s32.totalorder %s19, 0
    %p98 = por %p96, %p97
    %s100 = sadd.s32 %s99, 1
    %p103 = scmp.eq.s32.totalorder %s13, 1
    %p104 = scmp.ne.s32.totalorder %s99, %s101
    %p105 = scmp.eq.s32.totalorder %s13, 0
    %p106 = por %p104, %p105
    %p107 = scmp.ne.s32.totalorder %s99, %s101
    %p108 = scmp.eq.s32.totalorder %s18, 1
    %p109 = por %p107, %p108
    %p110 = scmp.ne.s32.totalorder %s101, %s102
    %p111 = scmp.eq.s32.totalorder %s18, 0
    %p112 = por %p110, %p111
    %p113 = scmp.ne.s32.totalorder %s101, %s102
    %p114 = scmp.eq.s32.totalorder %s19, 1
    %p115 = por %p113, %p114
    %p117 = scmp.ne.s32.totalorder %s102, %s116
    %p118 = scmp.eq.s32.totalorder %s19, 0
    %p119 = por %p117, %p118
    %s121 = sadd.s32 %s120, 1
    %p124 = scmp.eq.s32.totalorder %s13, 1
    %p125 = scmp.ne.s32.totalorder %s120, %s122
    %p126 = scmp.eq.s32.totalorder %s13, 0
    %p127 = por %p125, %p126
    %p128 = scmp.ne.s32.totalorder %s120, %s122
    %p129 = scmp.eq.s32.totalorder %s18, 1
    %p130 = por %p128, %p129
    %p131 = scmp.ne.s32.totalorder %s122, %s123
    %p132 = scmp.eq.s32.totalorder %s18, 0
    %p133 = por %p131, %p132
    %p134 = scmp.ne.s32.totalorder %s122, %s123
    %p135 = scmp.eq.s32.totalorder %s19, 1
    %p136 = por %p134, %p135
    %p138 = scmp.ne.s32.totalorder %s123, %s137
    %p139 = scmp.eq.s32.totalorder %s19, 0
    %p140 = por %p138, %p139
    %s142 = sadd.s32 %s141, 1
    %p145 = scmp.eq.s32.totalorder %s13, 1
    %p146 = scmp.ne.s32.totalorder %s141, %s143
    %p147 = scmp.eq.s32.totalorder %s13, 0
    %p148 = por %p146, %p147
    %p149 = scmp.ne.s32.totalorder %s141, %s143
    %p150 = scmp.eq.s32.totalorder %s18, 1
    %p151 = por %p149, %p150
    %p152 = scmp.ne.s32.totalorder %s143, %s144
    %p153 = scmp.eq.s32.totalorder %s18, 0
    %p154 = por %p152, %p153
    %p155 = scmp.ne.s32.totalorder %s143, %s144
    %p156 = scmp.eq.s32.totalorder %s19, 1
    %p157 = por %p155, %p156
    %p159 = scmp.ne.s32.totalorder %s144, %s158
    %p160 = scmp.eq.s32.totalorder %s19, 0
    %p161 = por %p159, %p160
    %s163 = sadd.s32 %s162, 1
    %p166 = scmp.eq.s32.totalorder %s13, 1
    %p167 = scmp.ne.s32.totalorder %s162, %s164
    %p168 = scmp.eq.s32.totalorder %s13, 0
    %p169 = por %p167, %p168
    %p170 = scmp.ne.s32.totalorder %s162, %s164
    %p171 = scmp.eq.s32.totalorder %s18, 1
    %p172 = por %p170, %p171
    %p173 = scmp.ne.s32.totalorder %s164, %s165
    %p174 = scmp.eq.s32.totalorder %s18, 0
    %p175 = por %p173, %p174
    %p176 = scmp.ne.s32.totalorder %s164, %s165
    %p177 = scmp.eq.s32.totalorder %s19, 1
    %p178 = por %p176, %p177
    %p180 = scmp.ne.s32.totalorder %s165, %s179
    %p181 = scmp.eq.s32.totalorder %s19, 0
    %p182 = por %p180, %p181
    %s183 = ssub.s32 %s13, %s20
    %p184 = scmp.eq.s32.totalorder %s183, 0
    %s186 = sadd.s32 %s185, 1
    %s187 = scalar_select %p184, %s185, %s186
    %p190 = pneg %p184
    %p191 = scmp.eq.s32.totalorder %s13, 1
    %p192 = por %p190, %p191
    %p193 = scmp.ne.s32.totalorder %s185, %s188
    %p194 = scmp.eq.s32.totalorder %s13, 0
    %p195 = por %p193, %p194
    %p196 = scmp.ne.s32.totalorder %s185, %s188
    %p197 = scmp.eq.s32.totalorder %s18, 1
    %p198 = por %p196, %p197
    %p199 = scmp.ne.s32.totalorder %s188, %s189
    %p200 = scmp.eq.s32.totalorder %s18, 0
    %p201 = por %p199, %p200
    %p202 = scmp.ne.s32.totalorder %s188, %s189
    %p203 = scmp.eq.s32.totalorder %s19, 1
    %p204 = por %p202, %p203
    %p206 = scmp.ne.s32.totalorder %s189, %s205
    %p207 = scmp.eq.s32.totalorder %s19, 0
    %p208 = por %p206, %p207
    %p209 = scmp.le.s32.totalorder 1, %s13
    %p210 = scmp.lt.s32.totalorder %s13, 3
    %p211 = pnand %p209, %p210
    %p212 = pneg %p211
    // Predicated region
    $region9: #{_lambda_.1} parent=5 // pred_check
      _
    $region10: #{_lambda_.1} parent=5 // pred_check_branch
      %214 = sbr.rel (%p211) target = $region12
    $region11: #{_lambda_.1} parent=5 // pred_region
      %s215 = ssub.s32 %s13, 1
      // Predicated region
      $region13: #{_lambda_.1} parent=11 // pred_check
        %p216 = pneg %p112
      $region14: #{_lambda_.1} parent=11 // pred_check_branch
        %218 = sbr.rel (%p216) target = $region16
      $region15: #{_lambda_.1} parent=11 // pred_region
        _
      $region16: #{_lambda_.1} parent=11 // pred_fallthru
        _
      // Predicated region
      $region17: #{_lambda_.1} parent=11 // pred_check
        %p219 = pneg %p133
      $region18: #{_lambda_.1} parent=11 // pred_check_branch
        %221 = sbr.rel (%p219) target = $region20
      $region19: #{_lambda_.1} parent=11 // pred_region
        _
      $region20: #{_lambda_.1} parent=11 // pred_fallthru
        _
      // Predicated region
      $region21: #{_lambda_.1} parent=11 // pred_check
        %p222 = pneg %p154
      $region22: #{_lambda_.1} parent=11 // pred_check_branch
        %224 = sbr.rel (%p222) target = $region24
      $region23: #{_lambda_.1} parent=11 // pred_region
        _
      $region24: #{_lambda_.1} parent=11 // pred_fallthru
        _
      // Predicated region
      $region25: #{_lambda_.1} parent=11 // pred_check
        %p225 = pneg %p175
      $region26: #{_lambda_.1} parent=11 // pred_check_branch
        %227 = sbr.rel (%p225) target = $region28
      $region27: #{_lambda_.1} parent=11 // pred_region
        _
      $region28: #{_lambda_.1} parent=11 // pred_fallthru
        _
    $region12: #{_lambda_.1} parent=5 // pred_fallthru
      _
    %p228 = scmp.lt.s32.totalorder %s13, 2
    // Predicated region
    $region29: #{_lambda_.1} parent=5 // pred_check
      %p229 = pneg %p228
    $region30: #{_lambda_.1} parent=5 // pred_check_branch
      %231 = sbr.rel (%p229) target = $region32
    $region31: #{_lambda_.1} parent=5 // pred_region
      // Predicated region
      $region33: #{_lambda_.1} parent=31 // pred_check
        %p232 = pneg %p33
      $region34: #{_lambda_.1} parent=31 // pred_check_branch
        %234 = sbr.rel (%p232) target = $region36
      $region35: #{_lambda_.1} parent=31 // pred_region
        %p235 = scmp.lt.s32.totalorder %s13, 1
        %s236 = scalar_select %p235, %s13, 1
        %s237 = scalar_lea.vmem %s0, %s236
      $region36: #{_lambda_.1} parent=31 // pred_fallthru
        _
      // Predicated region
      $region37: #{_lambda_.1} parent=31 // pred_check
        %p238 = pneg %p59
      $region38: #{_lambda_.1} parent=31 // pred_check_branch
        %240 = sbr.rel (%p238) target = $region40
      $region39: #{_lambda_.1} parent=31 // pred_region
        %p241 = scmp.lt.s32.totalorder %s13, 1
        %s242 = scalar_select %p241, %s13, 1
        %s243 = smul.addr %s242, 8
        %s244 = scalar_lea.vmem %s1, %s243
      $region40: #{_lambda_.1} parent=31 // pred_fallthru
        _
      // Predicated region
      $region41: #{_lambda_.1} parent=31 // pred_check
        %p245 = pneg %p85
      $region42: #{_lambda_.1} parent=31 // pred_check_branch
        %247 = sbr.rel (%p245) target = $region44
      $region43: #{_lambda_.1} parent=31 // pred_region
        %p248 = scmp.lt.s32.totalorder %s13, 1
        %s249 = scalar_select %p248, %s13, 1
        %s250 = smul.addr %s249, 4
        %s251 = scalar_lea.vmem %s2, %s250
      $region44: #{_lambda_.1} parent=31 // pred_fallthru
        _
    $region32: #{_lambda_.1} parent=5 // pred_fallthru
      _
    %p252 = scmp.le.s32.totalorder 1, %s13
    %p253 = scmp.lt.s32.totalorder %s13, 3
    %p254 = pnand %p252, %p253
    %p255 = pneg %p254
    // Predicated region
    $region45: #{_lambda_.1} parent=5 // pred_check
      _
    $region46: #{_lambda_.1} parent=5 // pred_check_branch
      %257 = sbr.rel (%p254) target = $region48
    $region47: #{_lambda_.1} parent=5 // pred_region
      %s258 = ssub.s32 %s13, 1
      %p259 = scmp.lt.s32.totalorder %s18, 1
      %s260 = scalar_select %p259, %s18, 1
      %s261 = scalar_lea.vmem %s0, %s260
      %p262 = pneg %p39
      %p263 = pneg %p36
      %p264 = scmp.lt.s32.totalorder %s18, 1
      %s265 = scalar_select %p264, %s18, 1
      %s266 = smul.addr %s265, 8
      %s267 = scalar_lea.vmem %s1, %s266
      %p268 = pneg %p65
      %p269 = pneg %p62
      %p270 = scmp.lt.s32.totalorder %s18, 1
      %s271 = scalar_select %p270, %s18, 1
      %s272 = smul.addr %s271, 4
      %s273 = scalar_lea.vmem %s2, %s272
      %p274 = pneg %p91
      %p275 = pneg %p88
      %p276 = pneg %p112
      %p277 = pneg %p109
      %p278 = pneg %p133
      %p279 = pneg %p130
      %p280 = pneg %p154
      %p281 = pneg %p151
      %p282 = pneg %p175
      %p283 = pneg %p172
      %p284 = pneg %p201
      %p285 = pneg %p198
      %p286 = scmp.lt.s32.totalorder %s18, 1
      %s287 = scalar_select %p286, %s18, 1
      %s288 = smul.addr %s287, 8
      %s289 = scalar_lea.vmem %s7, %s288
      %p290 = scmp.lt.s32.totalorder %s18, 1
      %s291 = scalar_select %p290, %s18, 1
      %s292 = scalar_lea.vmem %s0, %s291
      %p293 = scmp.lt.s32.totalorder %s18, 1
      %s294 = scalar_select %p293, %s18, 1
      %s295 = smul.addr %s294, 8
      %s296 = scalar_lea.vmem %s1, %s295
      %p297 = scmp.lt.s32.totalorder %s18, 1
      %s298 = scalar_select %p297, %s18, 1
      %s299 = smul.addr %s298, 4
      %s300 = scalar_lea.vmem %s2, %s299
      %p301 = scmp.lt.s32.totalorder %s18, 1
      %s302 = scalar_select %p301, %s18, 1
      %s303 = smul.addr %s302, 8
      %s304 = scalar_lea.vmem %s7, %s303
      %v305 = vld [vmem:[%s300] sm:$0xf]
      %v306 = vld [vmem:[%s3 + $0x10] sm:$0x3f]
      %v307 = vld [vmem:[%s3 + $0x18] sm:$0x1]
      %v308 = vlaneseq
      %v309 = vshrl.u32 %v308, 7
      %v310 = vsub.s32 0, %v309
      %v311 = vrot.slane %v307, %v310
      %vm312 = vcmask 48128
      %v314 = vsel %vm312, %v305, 0
      %vm316 = vcmask 1045504
      %v318 = vsel %vm316, %v306, 0
      %320 = vmatprep.subr.mxu0 0.0
      %321 = vmatpush1.msra.mxu0 0.0
      %322 = vmatprep.subr.mxu0 0.0
      %323 = vmatpush1.msra.mxu0 0.0
      %324 = vmatprep.subr.mxu0 0.0
      %325 = vmatpush1.msra.mxu0 0.0
      %326 = vmatprep.subr.mxu0 0.0
      %327 = vmatpush1.msra.mxu0 0.0
      %328 = vmatprep.subr.mxu0 0.0
      %329 = vmatpush1.msra.mxu0 0.0
      %330 = vmatprep.subr.mxu0 0.0
      %331 = vmatpush1.msra.mxu0 0.0
      %332 = vmatprep.subr.mxu0 0.0
      %333 = vmatpush1.msra.mxu0 0.0
      %334 = vmatprep.subr.mxu0 0.0
      %335 = vmatpush1.msra.mxu0 0.0
      %336 = vmatprep.subr.mxu0 0.0
      %337 = vmatpush1.msra.mxu0 0.0
      %338 = vmatprep.subr.mxu0 0.0
      %339 = vmatpush1.msra.mxu0 0.0
      %340 = vmatprep.subr.mxu0 0.0
      %341 = vmatpush1.msra.mxu0 0.0
      %342 = vmatprep.subr.mxu0 0.0
      %343 = vmatpush1.msra.mxu0 0.0
      %344 = vmatprep.subr.mxu0 0.0
      %345 = vmatpush1.msra.mxu0 0.0
      %346 = vmatprep.subr.mxu0 0.0
      %347 = vmatpush1.msra.mxu0 0.0
      %348 = vmatprep.subr.mxu0 0.0
      %349 = vmatpush1.msra.mxu0 0.0
      %350 = vmatprep.subr.mxu0 0.0
      %351 = vmatpush1.msra.mxu0 %v318
      %352 = vmatprep.subr.mxu0 0.0
      %353 = vmatpush2.msra.mxu0 0.0
      %354 = vmatprep.subr.mxu0 0.0
      %355 = vmatpush2.msra.mxu0 0.0
      %356 = vmatprep.subr.mxu0 0.0
      %357 = vmatpush2.msra.mxu0 0.0
      %358 = vmatprep.subr.mxu0 0.0
      %359 = vmatpush2.msra.mxu0 0.0
      %360 = vmatprep.subr.mxu0 0.0
      %361 = vmatpush2.msra.mxu0 0.0
      %362 = vmatprep.subr.mxu0 0.0
      %363 = vmatpush2.msra.mxu0 0.0
      %364 = vmatprep.subr.mxu0 0.0
      %365 = vmatpush2.msra.mxu0 0.0
      %366 = vmatprep.subr.mxu0 0.0
      %367 = vmatpush2.msra.mxu0 0.0
      %368 = vmatprep.subr.mxu0 0.0
      %369 = vmatpush2.msra.mxu0 0.0
      %370 = vmatprep.subr.mxu0 0.0
      %371 = vmatpush2.msra.mxu0 0.0
      %372 = vmatprep.subr.mxu0 0.0
      %373 = vmatpush2.msra.mxu0 0.0
      %374 = vmatprep.subr.mxu0 0.0
      %375 = vmatpush2.msra.mxu0 0.0
      %376 = vmatprep.subr.mxu0 0.0
      %377 = vmatpush2.msra.mxu0 0.0
      %378 = vmatprep.subr.mxu0 0.0
      %379 = vmatpush2.msra.mxu0 0.0
      %380 = vmatprep.subr.mxu0 0.0
      %381 = vmatpush2.msra.mxu0 0.0
      %382 = vmatprep.subr.mxu0 0.0
      %383 = vmatpush2.msra.mxu0 0.0
      %384 = vmatprep.mubr.f32.mxu0 0.0
      %385 = vmatmul.mubr.f32.gmra.mxu0 %v314
      %v386 = vpop.f32.mrf.mxu0
      %v387 = vadd.f32 %v311, %v386
      %v388 = vpop.f32.mrf.mxu0
      %389 = vdwg.mxu0
      %v390 = vld [vmem:[%s292] sm:$0x1]
      %v392 = vrot.slane %v387, 7
      %vm394 = vcmask 1040384
      %v395 = vsel %vm394, %v390, %v392
      %v396 = vld [vmem:[%s3 + $0x28] sm:$0x1f]
      %v397 = vadd.f32 %v395, %v396
      %v398 = vld [vmem:[%s4] sm:$0xff]
      %v399 = vld [vmem:[%s4 + $0x8] sm:$0xff]
      %v400 = vld [vmem:[%s4 + $0x10] sm:$0xff]
      %v401 = vld [vmem:[%s4 + $0x18] sm:$0xff]
      %v402 = vld [vmem:[%s4 + $0x20] sm:$0x1]
      %v403 = vlaneseq
      %v404 = vshrl.u32 %v403, 7
      %v405 = vsub.s32 0, %v404
      %v406 = vrot.slane %v402, %v405
      %vm407 = vcmask 261120
      %v409 = vsel %vm407, %v397, 0
      %411 = vmatprep.subr.mxu0 0.0
      %412 = vmatpush1.msra.mxu0 0.0
      %413 = vmatprep.subr.mxu0 0.0
      %414 = vmatpush1.msra.mxu0 0.0
      %415 = vmatprep.subr.mxu0 0.0
      %416 = vmatpush1.msra.mxu0 0.0
      %417 = vmatprep.subr.mxu0 0.0
      %418 = vmatpush1.msra.mxu0 0.0
      %419 = vmatprep.subr.mxu0 0.0
      %420 = vmatpush1.msra.mxu0 0.0
      %421 = vmatprep.subr.mxu0 0.0
      %422 = vmatpush1.msra.mxu0 0.0
      %423 = vmatprep.subr.mxu0 0.0
      %424 = vmatpush1.msra.mxu0 0.0
      %425 = vmatprep.subr.mxu0 0.0
      %426 = vmatpush1.msra.mxu0 0.0
      %427 = vmatprep.subr.mxu0 0.0
      %428 = vmatpush1.msra.mxu0 0.0
      %429 = vmatprep.subr.mxu0 0.0
      %430 = vmatpush1.msra.mxu0 0.0
      %431 = vmatprep.subr.mxu0 0.0
      %432 = vmatpush1.msra.mxu0 0.0
      %433 = vmatprep.subr.mxu0 0.0
      %434 = vmatpush1.msra.mxu0 0.0
      %435 = vmatprep.subr.mxu0 0.0
      %436 = vmatpush1.msra.mxu0 %v401
      %437 = vmatprep.subr.mxu0 0.0
      %438 = vmatpush1.msra.mxu0 %v400
      %439 = vmatprep.subr.mxu0 0.0
      %440 = vmatpush1.msra.mxu0 %v399
      %441 = vmatprep.subr.mxu0 0.0
      %442 = vmatpush1.msra.mxu0 %v398
      %443 = vmatprep.subr.mxu0 0.0
      %444 = vmatpush2.msra.mxu0 0.0
      %445 = vmatprep.subr.mxu0 0.0
      %446 = vmatpush2.msra.mxu0 0.0
      %447 = vmatprep.subr.mxu0 0.0
      %448 = vmatpush2.msra.mxu0 0.0
      %449 = vmatprep.subr.mxu0 0.0
      %450 = vmatpush2.msra.mxu0 0.0
      %451 = vmatprep.subr.mxu0 0.0
      %452 = vmatpush2.msra.mxu0 0.0
      %453 = vmatprep.subr.mxu0 0.0
      %454 = vmatpush2.msra.mxu0 0.0
      %455 = vmatprep.subr.mxu0 0.0
      %456 = vmatpush2.msra.mxu0 0.0
      %457 = vmatprep.subr.mxu0 0.0
      %458 = vmatpush2.msra.mxu0 0.0
      %459 = vmatprep.subr.mxu0 0.0
      %460 = vmatpush2.msra.mxu0 0.0
      %461 = vmatprep.subr.mxu0 0.0
      %462 = vmatpush2.msra.mxu0 0.0
      %463 = vmatprep.subr.mxu0 0.0
      %464 = vmatpush2.msra.mxu0 0.0
      %465 = vmatprep.subr.mxu0 0.0
      %466 = vmatpush2.msra.mxu0 0.0
      %467 = vmatprep.subr.mxu0 0.0
      %468 = vmatpush2.msra.mxu0 0.0
      %469 = vmatprep.subr.mxu0 0.0
      %470 = vmatpush2.msra.mxu0 0.0
      %471 = vmatprep.subr.mxu0 0.0
      %472 = vmatpush2.msra.mxu0 0.0
      %473 = vmatprep.subr.mxu0 0.0
      %474 = vmatpush2.msra.mxu0 0.0
      %475 = vmatprep.mubr.f32.mxu0 0.0
      %476 = vmatmul.mubr.f32.gmra.mxu0 %v409
      %v477 = vpop.f32.mrf.mxu0
      %v478 = vadd.f32 %v406, %v477
      %v479 = vpop.f32.mrf.mxu0
      %480 = vdwg.mxu0
      %vm481 = vcmp.gt.f32.partialorder %v478, 20.0
      %v482 = vmin.f32 %v478, 20.0
      %v483 = vmul.f32 %v482, 1.442695
      %v484 = vpow.pop %v483
      %v485 = vadd.f32 %v484, 1.0
      %v486 = vlog2.pop %v485
      %v487 = vmul.f32 %v486, 0.6931472
      %v488 = vsel %vm481, %v478, %v487
      %v489 = vtanh.pop %v488
      %v490 = vmul.f32 %v478, %v489
      %v491 = vld [vmem:[%s3 + $0x30] sm:$0xff]
      %v492 = vld [vmem:[%s3 + $0x38] sm:$0xff]
      %v493 = vld [vmem:[%s3 + $0x40] sm:$0xff]
      %v494 = vld [vmem:[%s3 + $0x48] sm:$0xff]
      %v495 = vld [vmem:[%s3 + $0x50] sm:$0xff]
      %v496 = vld [vmem:[%s3 + $0x58] sm:$0xff]
      %v497 = vld [vmem:[%s3 + $0x60] sm:$0xff]
      %v498 = vld [vmem:[%s3 + $0x68] sm:$0xff]
      %v499 = vld [vmem:[%s3 + $0x70] sm:$0xff]
      %v500 = vld [vmem:[%s3 + $0x78] sm:$0xff]
      %v501 = vld [vmem:[%s3 + $0x80] sm:$0xff]
      %v502 = vld [vmem:[%s3 + $0x88] sm:$0xff]
      %v503 = vld [vmem:[%s3 + $0x90] sm:$0xff]
      %v504 = vld [vmem:[%s3 + $0x98] sm:$0xff]
      %v505 = vld [vmem:[%s3 + $0xa0] sm:$0xff]
      %v506 = vld [vmem:[%s3 + $0xa8] sm:$0xff]
      %v507 = vld [vmem:[%s3 + $0xb0] sm:$0x1]
      %v508 = vlaneseq
      %v509 = vshrl.u32 %v508, 7
      %v510 = vsub.s32 0, %v509
      %v511 = vrot.slane %v507, %v510
      %512 = vmatprep.subr.mxu0 0.0
      %513 = vmatpush1.msra.mxu0 %v506
      %514 = vmatprep.subr.mxu0 0.0
      %515 = vmatpush1.msra.mxu0 %v505
      %516 = vmatprep.subr.mxu0 0.0
      %517 = vmatpush1.msra.mxu0 %v504
      %518 = vmatprep.subr.mxu0 0.0
      %519 = vmatpush1.msra.mxu0 %v503
      %520 = vmatprep.subr.mxu0 0.0
      %521 = vmatpush1.msra.mxu0 %v502
      %522 = vmatprep.subr.mxu0 0.0
      %523 = vmatpush1.msra.mxu0 %v501
      %524 = vmatprep.subr.mxu0 0.0
      %525 = vmatpush1.msra.mxu0 %v500
      %526 = vmatprep.subr.mxu0 0.0
      %527 = vmatpush1.msra.mxu0 %v499
      %528 = vmatprep.subr.mxu0 0.0
      %529 = vmatpush1.msra.mxu0 %v498
      %530 = vmatprep.subr.mxu0 0.0
      %531 = vmatpush1.msra.mxu0 %v497
      %532 = vmatprep.subr.mxu0 0.0
      %533 = vmatpush1.msra.mxu0 %v496
      %534 = vmatprep.subr.mxu0 0.0
      %535 = vmatpush1.msra.mxu0 %v495
      %536 = vmatprep.subr.mxu0 0.0
      %537 = vmatpush1.msra.mxu0 %v494
      %538 = vmatprep.subr.mxu0 0.0
      %539 = vmatpush1.msra.mxu0 %v493
      %540 = vmatprep.subr.mxu0 0.0
      %541 = vmatpush1.msra.mxu0 %v492
      %542 = vmatprep.subr.mxu0 0.0
      %543 = vmatpush1.msra.mxu0 %v491
      %544 = vmatprep.subr.mxu0 0.0
      %545 = vmatpush2.msra.mxu0 0.0
      %546 = vmatprep.subr.mxu0 0.0
      %547 = vmatpush2.msra.mxu0 0.0
      %548 = vmatprep.subr.mxu0 0.0
      %549 = vmatpush2.msra.mxu0 0.0
      %550 = vmatprep.subr.mxu0 0.0
      %551 = vmatpush2.msra.mxu0 0.0
      %552 = vmatprep.subr.mxu0 0.0
      %553 = vmatpush2.msra.mxu0 0.0
      %554 = vmatprep.subr.mxu0 0.0
      %555 = vmatpush2.msra.mxu0 0.0
      %556 = vmatprep.subr.mxu0 0.0
      %557 = vmatpush2.msra.mxu0 0.0
      %558 = vmatprep.subr.mxu0 0.0
      %559 = vmatpush2.msra.mxu0 0.0
      %560 = vmatprep.subr.mxu0 0.0
      %561 = vmatpush2.msra.mxu0 0.0
      %562 = vmatprep.subr.mxu0 0.0
      %563 = vmatpush2.msra.mxu0 0.0
      %564 = vmatprep.subr.mxu0 0.0
      %565 = vmatpush2.msra.mxu0 0.0
      %566 = vmatprep.subr.mxu0 0.0
      %567 = vmatpush2.msra.mxu0 0.0
      %568 = vmatprep.subr.mxu0 0.0
      %569 = vmatpush2.msra.mxu0 0.0
      %570 = vmatprep.subr.mxu0 0.0
      %571 = vmatpush2.msra.mxu0 0.0
      %572 = vmatprep.subr.mxu0 0.0
      %573 = vmatpush2.msra.mxu0 0.0
      %574 = vmatprep.subr.mxu0 0.0
      %575 = vmatpush2.msra.mxu0 0.0
      %576 = vmatprep.mubr.f32.mxu0 0.0
      %577 = vmatmul.mubr.f32.gmra.mxu0 %v490
      %v578 = vpop.f32.mrf.mxu0
      %v579 = vadd.f32 %v511, %v578
      %v580 = vpop.f32.mrf.mxu0
      %581 = vdwg.mxu0
      %v582 = vld [vmem:[%s296] sm:$0xff]
      %v583 = vld [vmem:[%s3] sm:$0xf]
      %v584 = vld [vmem:[%s3 + $0x8] sm:$0x1]
      %v585 = vlaneseq
      %v586 = vshrl.u32 %v585, 7
      %v587 = vsub.s32 0, %v586
      %v588 = vrot.slane %v584, %v587
      %vm589 = vcmask 31744
      %v591 = vsel %vm589, %v582, 0
      %vm593 = vcmask 1043456
      %v595 = vsel %vm593, %v583, 0
      %597 = vmatprep.subr.mxu0 0.0
      %598 = vmatpush1.msra.mxu0 0.0
      %599 = vmatprep.subr.mxu0 0.0
      %600 = vmatpush1.msra.mxu0 0.0
      %601 = vmatprep.subr.mxu0 0.0
      %602 = vmatpush1.msra.mxu0 0.0
      %603 = vmatprep.subr.mxu0 0.0
      %604 = vmatpush1.msra.mxu0 0.0
      %605 = vmatprep.subr.mxu0 0.0
      %606 = vmatpush1.msra.mxu0 0.0
      %607 = vmatprep.subr.mxu0 0.0
      %608 = vmatpush1.msra.mxu0 0.0
      %609 = vmatprep.subr.mxu0 0.0
      %610 = vmatpush1.msra.mxu0 0.0
      %611 = vmatprep.subr.mxu0 0.0
      %612 = vmatpush1.msra.mxu0 0.0
      %613 = vmatprep.subr.mxu0 0.0
      %614 = vmatpush1.msra.mxu0 0.0
      %615 = vmatprep.subr.mxu0 0.0
      %616 = vmatpush1.msra.mxu0 0.0
      %617 = vmatprep.subr.mxu0 0.0
      %618 = vmatpush1.msra.mxu0 0.0
      %619 = vmatprep.subr.mxu0 0.0
      %620 = vmatpush1.msra.mxu0 0.0
      %621 = vmatprep.subr.mxu0 0.0
      %622 = vmatpush1.msra.mxu0 0.0
      %623 = vmatprep.subr.mxu0 0.0
      %624 = vmatpush1.msra.mxu0 0.0
      %625 = vmatprep.subr.mxu0 0.0
      %626 = vmatpush1.msra.mxu0 0.0
      %627 = vmatprep.subr.mxu0 0.0
      %628 = vmatpush1.msra.mxu0 %v595
      %629 = vmatprep.subr.mxu0 0.0
      %630 = vmatpush2.msra.mxu0 0.0
      %631 = vmatprep.subr.mxu0 0.0
      %632 = vmatpush2.msra.mxu0 0.0
      %633 = vmatprep.subr.mxu0 0.0
      %634 = vmatpush2.msra.mxu0 0.0
      %635 = vmatprep.subr.mxu0 0.0
      %636 = vmatpush2.msra.mxu0 0.0
      %637 = vmatprep.subr.mxu0 0.0
      %638 = vmatpush2.msra.mxu0 0.0
      %639 = vmatprep.subr.mxu0 0.0
      %640 = vmatpush2.msra.mxu0 0.0
      %641 = vmatprep.subr.mxu0 0.0
      %642 = vmatpush2.msra.mxu0 0.0
      %643 = vmatprep.subr.mxu0 0.0
      %644 = vmatpush2.msra.mxu0 0.0
      %645 = vmatprep.subr.mxu0 0.0
      %646 = vmatpush2.msra.mxu0 0.0
      %647 = vmatprep.subr.mxu0 0.0
      %648 = vmatpush2.msra.mxu0 0.0
      %649 = vmatprep.subr.mxu0 0.0
      %650 = vmatpush2.msra.mxu0 0.0
      %651 = vmatprep.subr.mxu0 0.0
      %652 = vmatpush2.msra.mxu0 0.0
      %653 = vmatprep.subr.mxu0 0.0
      %654 = vmatpush2.msra.mxu0 0.0
      %655 = vmatprep.subr.mxu0 0.0
      %656 = vmatpush2.msra.mxu0 0.0
      %657 = vmatprep.subr.mxu0 0.0
      %658 = vmatpush2.msra.mxu0 0.0
      %659 = vmatprep.subr.mxu0 0.0
      %660 = vmatpush2.msra.mxu0 0.0
      %661 = vmatprep.mubr.f32.mxu0 0.0
      %662 = vmatmul.mubr.f32.gmra.mxu0 %v591
      %v663 = vpop.f32.mrf.mxu0
      %v664 = vadd.f32 %v588, %v663
      %v665 = vpop.f32.mrf.mxu0
      %666 = vdwg.mxu0
      %v667 = vld [vmem:[%s3 + $0x20] sm:$0xff]
      %v668 = vadd.f32 %v664, %v667
      %v669 = vld [vmem:[%s3 + $0xf0] sm:$0x1]
      %v670 = vld [vmem:[%s3 + $0xf8] sm:$0x1]
      %v671 = vsel %vm407, %v668, 0.0
      %672 = vadd.xlane.f32.xlu0 %v671
      %v673 = vpop.xlane.xlu0 %672
      %v674 = vrcp.pop 32.0
      %v675 = vmul.f32 %v673, %v674
      %v676 = vsub.f32 %v668, %v675
      %v677 = vmul.f32 %v676, %v676
      %v678 = vsel %vm407, %v677, 0.0
      %679 = vadd.xlane.f32.xlu0 %v678
      %v680 = vpop.xlane.xlu0 %679
      %v681 = vmul.f32 %v680, %v674
      %v682 = vadd.f32 %v681, 1e-05
      %v683 = vrsqrt.pop %v682
      %v684 = vmul.f32 %v676, %v683
      %v685 = vlaneseq
      %v686 = vshrl.u32 %v685, 7
      %v687 = vsub.s32 0, %v686
      %v688 = vrot.slane %v669, %v687
      %v689 = vmul.f32 %v684, %v688
      %v690 = vlaneseq
      %v691 = vshrl.u32 %v690, 7
      %v692 = vsub.s32 0, %v691
      %v693 = vrot.slane %v670, %v692
      %v694 = vadd.f32 %v689, %v693
      %v695 = vld [vmem:[%s5] sm:$0xff]
      %v696 = vld [vmem:[%s5 + $0x8] sm:$0xff]
      %v697 = vld [vmem:[%s5 + $0x10] sm:$0xff]
      %v698 = vld [vmem:[%s5 + $0x18] sm:$0xff]
      %v699 = vld [vmem:[%s6] sm:$0x1]
      %v700 = vld [vmem:[%s6 + $0x1] sm:$0x1]
      %v701 = vld [vmem:[%s6 + $0x2] sm:$0x1]
      %v702 = vld [vmem:[%s6 + $0x3] sm:$0x1]
      %s703 = scalar_lea.vmem %s5, 32
      %v704 = vld [vmem:[%s703] sm:$0xff]
      %v705 = vld [vmem:[%s703 + $0x8] sm:$0xff]
      %v706 = vld [vmem:[%s703 + $0x10] sm:$0xff]
      %v707 = vld [vmem:[%s703 + $0x18] sm:$0xff]
      %s708 = scalar_lea.vmem %s6, 4
      %v709 = vld [vmem:[%s708] sm:$0x1]
      %v710 = vld [vmem:[%s708 + $0x1] sm:$0x1]
      %v711 = vld [vmem:[%s708 + $0x2] sm:$0x1]
      %v712 = vld [vmem:[%s708 + $0x3] sm:$0x1]
      %s713 = scalar_lea.vmem %s5, 64
      %v714 = vld [vmem:[%s713] sm:$0xff]
      %v715 = vld [vmem:[%s713 + $0x8] sm:$0xff]
      %v716 = vld [vmem:[%s713 + $0x10] sm:$0xff]
      %v717 = vld [vmem:[%s713 + $0x18] sm:$0xff]
      %s718 = scalar_lea.vmem %s6, 8
      %v719 = vld [vmem:[%s718] sm:$0x1]
      %v720 = vld [vmem:[%s718 + $0x1] sm:$0x1]
      %v721 = vld [vmem:[%s718 + $0x2] sm:$0x1]
      %v722 = vld [vmem:[%s718 + $0x3] sm:$0x1]
      %s723 = scalar_lea.vmem %s5, 96
      %v724 = vld [vmem:[%s723] sm:$0xff]
      %v725 = vld [vmem:[%s723 + $0x8] sm:$0xff]
      %v726 = vld [vmem:[%s723 + $0x10] sm:$0xff]
      %v727 = vld [vmem:[%s723 + $0x18] sm:$0xff]
      %v728 = vld [vmem:[%s3 + $0x120] sm:$0x1]
      %v733 = vlaneseq
      %v734 = vshrl.u32 %v733, 7
      %v735 = vsub.s32 0, %v734
      %v736 = vrot.slane %v699, %v735
      %v737 = vlaneseq
      %v738 = vshrl.u32 %v737, 7
      %v739 = vsub.s32 0, %v738
      %v740 = vrot.slane %v700, %v739
      %v741 = vlaneseq
      %v742 = vshrl.u32 %v741, 7
      %v743 = vsub.s32 0, %v742
      %v744 = vrot.slane %v701, %v743
      %v745 = vlaneseq
      %v746 = vshrl.u32 %v745, 7
      %v747 = vsub.s32 0, %v746
      %v748 = vrot.slane %v702, %v747
      %v754 = vsel %vm407, %v694, 0
      %v757 = vsel %vm407, %v695, 0
      %759 = vmatprep.subr.mxu0 0.0
      %760 = vmatpush1.xpose.msra.mxu0 0.0
      %761 = vmatprep.subr.mxu0 0.0
      %762 = vmatpush1.xpose.msra.mxu0 0.0
      %763 = vmatprep.subr.mxu0 0.0
      %764 = vmatpush1.xpose.msra.mxu0 0.0
      %765 = vmatprep.subr.mxu0 0.0
      %766 = vmatpush1.xpose.msra.mxu0 0.0
      %767 = vmatprep.subr.mxu0 0.0
      %768 = vmatpush1.xpose.msra.mxu0 0.0
      %769 = vmatprep.subr.mxu0 0.0
      %770 = vmatpush1.xpose.msra.mxu0 0.0
      %771 = vmatprep.subr.mxu0 0.0
      %772 = vmatpush1.xpose.msra.mxu0 0.0
      %773 = vmatprep.subr.mxu0 0.0
      %774 = vmatpush1.xpose.msra.mxu0 0.0
      %775 = vmatprep.subr.mxu0 0.0
      %776 = vmatpush1.xpose.msra.mxu0 0.0
      %777 = vmatprep.subr.mxu0 0.0
      %778 = vmatpush1.xpose.msra.mxu0 0.0
      %779 = vmatprep.subr.mxu0 0.0
      %780 = vmatpush1.xpose.msra.mxu0 0.0
      %781 = vmatprep.subr.mxu0 0.0
      %782 = vmatpush1.xpose.msra.mxu0 0.0
      %783 = vmatprep.subr.mxu0 0.0
      %784 = vmatpush1.xpose.msra.mxu0 0.0
      %785 = vmatprep.subr.mxu0 0.0
      %786 = vmatpush1.xpose.msra.mxu0 0.0
      %787 = vmatprep.subr.mxu0 0.0
      %788 = vmatpush1.xpose.msra.mxu0 0.0
      %789 = vmatprep.subr.mxu0 0.0
      %790 = vmatpush1.xpose.msra.mxu0 %v757
      %791 = vmatprep.subr.mxu0 0.0
      %792 = vmatpush2.xpose.msra.mxu0 0.0
      %793 = vmatprep.subr.mxu0 0.0
      %794 = vmatpush2.xpose.msra.mxu0 0.0
      %795 = vmatprep.subr.mxu0 0.0
      %796 = vmatpush2.xpose.msra.mxu0 0.0
      %797 = vmatprep.subr.mxu0 0.0
      %798 = vmatpush2.xpose.msra.mxu0 0.0
      %799 = vmatprep.subr.mxu0 0.0
      %800 = vmatpush2.xpose.msra.mxu0 0.0
      %801 = vmatprep.subr.mxu0 0.0
      %802 = vmatpush2.xpose.msra.mxu0 0.0
      %803 = vmatprep.subr.mxu0 0.0
      %804 = vmatpush2.xpose.msra.mxu0 0.0
      %805 = vmatprep.subr.mxu0 0.0
      %806 = vmatpush2.xpose.msra.mxu0 0.0
      %807 = vmatprep.subr.mxu0 0.0
      %808 = vmatpush2.xpose.msra.mxu0 0.0
      %809 = vmatprep.subr.mxu0 0.0
      %810 = vmatpush2.xpose.msra.mxu0 0.0
      %811 = vmatprep.subr.mxu0 0.0
      %812 = vmatpush2.xpose.msra.mxu0 0.0
      %813 = vmatprep.subr.mxu0 0.0
      %814 = vmatpush2.xpose.msra.mxu0 0.0
      %815 = vmatprep.subr.mxu0 0.0
      %816 = vmatpush2.xpose.msra.mxu0 0.0
      %817 = vmatprep.subr.mxu0 0.0
      %818 = vmatpush2.xpose.msra.mxu0 0.0
      %819 = vmatprep.subr.mxu0 0.0
      %820 = vmatpush2.xpose.msra.mxu0 0.0
      %821 = vmatprep.subr.mxu0 0.0
      %822 = vmatpush2.xpose.msra.mxu0 0.0
      %823 = vmatprep.mubr.f32.mxu0 0.0
      %824 = vmatmul.mubr.f32.gmra.mxu0 %v754
      %v825 = vpop.f32.mrf.mxu0
      %v826 = vadd.f32 %v736, %v825
      %v827 = vpop.f32.mrf.mxu0
      %828 = vdwg.mxu0
      %v830 = vsel %vm407, %v696, 0
      %832 = vmatprep.subr.mxu0 0.0
      %833 = vmatpush1.xpose.msra.mxu0 0.0
      %834 = vmatprep.subr.mxu0 0.0
      %835 = vmatpush1.xpose.msra.mxu0 0.0
      %836 = vmatprep.subr.mxu0 0.0
      %837 = vmatpush1.xpose.msra.mxu0 0.0
      %838 = vmatprep.subr.mxu0 0.0
      %839 = vmatpush1.xpose.msra.mxu0 0.0
      %840 = vmatprep.subr.mxu0 0.0
      %841 = vmatpush1.xpose.msra.mxu0 0.0
      %842 = vmatprep.subr.mxu0 0.0
      %843 = vmatpush1.xpose.msra.mxu0 0.0
      %844 = vmatprep.subr.mxu0 0.0
      %845 = vmatpush1.xpose.msra.mxu0 0.0
      %846 = vmatprep.subr.mxu0 0.0
      %847 = vmatpush1.xpose.msra.mxu0 0.0
      %848 = vmatprep.subr.mxu0 0.0
      %849 = vmatpush1.xpose.msra.mxu0 0.0
      %850 = vmatprep.subr.mxu0 0.0
      %851 = vmatpush1.xpose.msra.mxu0 0.0
      %852 = vmatprep.subr.mxu0 0.0
      %853 = vmatpush1.xpose.msra.mxu0 0.0
      %854 = vmatprep.subr.mxu0 0.0
      %855 = vmatpush1.xpose.msra.mxu0 0.0
      %856 = vmatprep.subr.mxu0 0.0
      %857 = vmatpush1.xpose.msra.mxu0 0.0
      %858 = vmatprep.subr.mxu0 0.0
      %859 = vmatpush1.xpose.msra.mxu0 0.0
      %860 = vmatprep.subr.mxu0 0.0
      %861 = vmatpush1.xpose.msra.mxu0 0.0
      %862 = vmatprep.subr.mxu0 0.0
      %863 = vmatpush1.xpose.msra.mxu0 %v830
      %864 = vmatprep.subr.mxu0 0.0
      %865 = vmatpush2.xpose.msra.mxu0 0.0
      %866 = vmatprep.subr.mxu0 0.0
      %867 = vmatpush2.xpose.msra.mxu0 0.0
      %868 = vmatprep.subr.mxu0 0.0
      %869 = vmatpush2.xpose.msra.mxu0 0.0
      %870 = vmatprep.subr.mxu0 0.0
      %871 = vmatpush2.xpose.msra.mxu0 0.0
      %872 = vmatprep.subr.mxu0 0.0
      %873 = vmatpush2.xpose.msra.mxu0 0.0
      %874 = vmatprep.subr.mxu0 0.0
      %875 = vmatpush2.xpose.msra.mxu0 0.0
      %876 = vmatprep.subr.mxu0 0.0
      %877 = vmatpush2.xpose.msra.mxu0 0.0
      %878 = vmatprep.subr.mxu0 0.0
      %879 = vmatpush2.xpose.msra.mxu0 0.0
      %880 = vmatprep.subr.mxu0 0.0
      %881 = vmatpush2.xpose.msra.mxu0 0.0
      %882 = vmatprep.subr.mxu0 0.0
      %883 = vmatpush2.xpose.msra.mxu0 0.0
      %884 = vmatprep.subr.mxu0 0.0
      %885 = vmatpush2.xpose.msra.mxu0 0.0
      %886 = vmatprep.subr.mxu0 0.0
      %887 = vmatpush2.xpose.msra.mxu0 0.0
      %888 = vmatprep.subr.mxu0 0.0
      %889 = vmatpush2.xpose.msra.mxu0 0.0
      %890 = vmatprep.subr.mxu0 0.0
      %891 = vmatpush2.xpose.msra.mxu0 0.0
      %892 = vmatprep.subr.mxu0 0.0
      %893 = vmatpush2.xpose.msra.mxu0 0.0
      %894 = vmatprep.subr.mxu0 0.0
      %895 = vmatpush2.xpose.msra.mxu0 0.0
      %896 = vmatprep.mubr.f32.mxu0 0.0
      %897 = vmatmul.mubr.f32.gmra.mxu0 %v754
      %v898 = vpop.f32.mrf.mxu0
      %v899 = vadd.f32 %v740, %v898
      %v900 = vpop.f32.mrf.mxu0
      %901 = vdwg.mxu0
      %v903 = vsel %vm407, %v697, 0
      %905 = vmatprep.subr.mxu0 0.0
      %906 = vmatpush1.xpose.msra.mxu0 0.0
      %907 = vmatprep.subr.mxu0 0.0
      %908 = vmatpush1.xpose.msra.mxu0 0.0
      %909 = vmatprep.subr.mxu0 0.0
      %910 = vmatpush1.xpose.msra.mxu0 0.0
      %911 = vmatprep.subr.mxu0 0.0
      %912 = vmatpush1.xpose.msra.mxu0 0.0
      %913 = vmatprep.subr.mxu0 0.0
      %914 = vmatpush1.xpose.msra.mxu0 0.0
      %915 = vmatprep.subr.mxu0 0.0
      %916 = vmatpush1.xpose.msra.mxu0 0.0
      %917 = vmatprep.subr.mxu0 0.0
      %918 = vmatpush1.xpose.msra.mxu0 0.0
      %919 = vmatprep.subr.mxu0 0.0
      %920 = vmatpush1.xpose.msra.mxu0 0.0
      %921 = vmatprep.subr.mxu0 0.0
      %922 = vmatpush1.xpose.msra.mxu0 0.0
      %923 = vmatprep.subr.mxu0 0.0
      %924 = vmatpush1.xpose.msra.mxu0 0.0
      %925 = vmatprep.subr.mxu0 0.0
      %926 = vmatpush1.xpose.msra.mxu0 0.0
      %927 = vmatprep.subr.mxu0 0.0
      %928 = vmatpush1.xpose.msra.mxu0 0.0
      %929 = vmatprep.subr.mxu0 0.0
      %930 = vmatpush1.xpose.msra.mxu0 0.0
      %931 = vmatprep.subr.mxu0 0.0
      %932 = vmatpush1.xpose.msra.mxu0 0.0
      %933 = vmatprep.subr.mxu0 0.0
      %934 = vmatpush1.xpose.msra.mxu0 0.0
      %935 = vmatprep.subr.mxu0 0.0
      %936 = vmatpush1.xpose.msra.mxu0 %v903
      %937 = vmatprep.subr.mxu0 0.0
      %938 = vmatpush2.xpose.msra.mxu0 0.0
      %939 = vmatprep.subr.mxu0 0.0
      %940 = vmatpush2.xpose.msra.mxu0 0.0
      %941 = vmatprep.subr.mxu0 0.0
      %942 = vmatpush2.xpose.msra.mxu0 0.0
      %943 = vmatprep.subr.mxu0 0.0
      %944 = vmatpush2.xpose.msra.mxu0 0.0
      %945 = vmatprep.subr.mxu0 0.0
      %946 = vmatpush2.xpose.msra.mxu0 0.0
      %947 = vmatprep.subr.mxu0 0.0
      %948 = vmatpush2.xpose.msra.mxu0 0.0
      %949 = vmatprep.subr.mxu0 0.0
      %950 = vmatpush2.xpose.msra.mxu0 0.0
      %951 = vmatprep.subr.mxu0 0.0
      %952 = vmatpush2.xpose.msra.mxu0 0.0
      %953 = vmatprep.subr.mxu0 0.0
      %954 = vmatpush2.xpose.msra.mxu0 0.0
      %955 = vmatprep.subr.mxu0 0.0
      %956 = vmatpush2.xpose.msra.mxu0 0.0
      %957 = vmatprep.subr.mxu0 0.0
      %958 = vmatpush2.xpose.msra.mxu0 0.0
      %959 = vmatprep.subr.mxu0 0.0
      %960 = vmatpush2.xpose.msra.mxu0 0.0
      %961 = vmatprep.subr.mxu0 0.0
      %962 = vmatpush2.xpose.msra.mxu0 0.0
      %963 = vmatprep.subr.mxu0 0.0
      %964 = vmatpush2.xpose.msra.mxu0 0.0
      %965 = vmatprep.subr.mxu0 0.0
      %966 = vmatpush2.xpose.msra.mxu0 0.0
      %967 = vmatprep.subr.mxu0 0.0
      %968 = vmatpush2.xpose.msra.mxu0 0.0
      %969 = vmatprep.mubr.f32.mxu0 0.0
      %970 = vmatmul.mubr.f32.gmra.mxu0 %v754
      %v971 = vpop.f32.mrf.mxu0
      %v972 = vadd.f32 %v744, %v971
      %v973 = vpop.f32.mrf.mxu0
      %974 = vdwg.mxu0
      %v976 = vsel %vm407, %v698, 0
      %978 = vmatprep.subr.mxu0 0.0
      %979 = vmatpush1.xpose.msra.mxu0 0.0
      %980 = vmatprep.subr.mxu0 0.0
      %981 = vmatpush1.xpose.msra.mxu0 0.0
      %982 = vmatprep.subr.mxu0 0.0
      %983 = vmatpush1.xpose.msra.mxu0 0.0
      %984 = vmatprep.subr.mxu0 0.0
      %985 = vmatpush1.xpose.msra.mxu0 0.0
      %986 = vmatprep.subr.mxu0 0.0
      %987 = vmatpush1.xpose.msra.mxu0 0.0
      %988 = vmatprep.subr.mxu0 0.0
      %989 = vmatpush1.xpose.msra.mxu0 0.0
      %990 = vmatprep.subr.mxu0 0.0
      %991 = vmatpush1.xpose.msra.mxu0 0.0
      %992 = vmatprep.subr.mxu0 0.0
      %993 = vmatpush1.xpose.msra.mxu0 0.0
      %994 = vmatprep.subr.mxu0 0.0
      %995 = vmatpush1.xpose.msra.mxu0 0.0
      %996 = vmatprep.subr.mxu0 0.0
      %997 = vmatpush1.xpose.msra.mxu0 0.0
      %998 = vmatprep.subr.mxu0 0.0
      %999 = vmatpush1.xpose.msra.mxu0 0.0
      %1000 = vmatprep.subr.mxu0 0.0
      %1001 = vmatpush1.xpose.msra.mxu0 0.0
      %1002 = vmatprep.subr.mxu0 0.0
      %1003 = vmatpush1.xpose.msra.mxu0 0.0
      %1004 = vmatprep.subr.mxu0 0.0
      %1005 = vmatpush1.xpose.msra.mxu0 0.0
      %1006 = vmatprep.subr.mxu0 0.0
      %1007 = vmatpush1.xpose.msra.mxu0 0.0
      %1008 = vmatprep.subr.mxu0 0.0
      %1009 = vmatpush1.xpose.msra.mxu0 %v976
      %1010 = vmatprep.subr.mxu0 0.0
      %1011 = vmatpush2.xpose.msra.mxu0 0.0
      %1012 = vmatprep.subr.mxu0 0.0
      %1013 = vmatpush2.xpose.msra.mxu0 0.0
      %1014 = vmatprep.subr.mxu0 0.0
      %1015 = vmatpush2.xpose.msra.mxu0 0.0
      %1016 = vmatprep.subr.mxu0 0.0
      %1017 = vmatpush2.xpose.msra.mxu0 0.0
      %1018 = vmatprep.subr.mxu0 0.0
      %1019 = vmatpush2.xpose.msra.mxu0 0.0
      %1020 = vmatprep.subr.mxu0 0.0
      %1021 = vmatpush2.xpose.msra.mxu0 0.0
      %1022 = vmatprep.subr.mxu0 0.0
      %1023 = vmatpush2.xpose.msra.mxu0 0.0
      %1024 = vmatprep.subr.mxu0 0.0
      %1025 = vmatpush2.xpose.msra.mxu0 0.0
      %1026 = vmatprep.subr.mxu0 0.0
      %1027 = vmatpush2.xpose.msra.mxu0 0.0
      %1028 = vmatprep.subr.mxu0 0.0
      %1029 = vmatpush2.xpose.msra.mxu0 0.0
      %1030 = vmatprep.subr.mxu0 0.0
      %1031 = vmatpush2.xpose.msra.mxu0 0.0
      %1032 = vmatprep.subr.mxu0 0.0
      %1033 = vmatpush2.xpose.msra.mxu0 0.0
      %1034 = vmatprep.subr.mxu0 0.0
      %1035 = vmatpush2.xpose.msra.mxu0 0.0
      %1036 = vmatprep.subr.mxu0 0.0
      %1037 = vmatpush2.xpose.msra.mxu0 0.0
      %1038 = vmatprep.subr.mxu0 0.0
      %1039 = vmatpush2.xpose.msra.mxu0 0.0
      %1040 = vmatprep.subr.mxu0 0.0
      %1041 = vmatpush2.xpose.msra.mxu0 0.0
      %1042 = vmatprep.mubr.f32.mxu0 0.0
      %1043 = vmatmul.mubr.f32.gmra.mxu0 %v754
      %v1044 = vpop.f32.mrf.mxu0
      %v1045 = vadd.f32 %v748, %v1044
      %v1046 = vpop.f32.mrf.mxu0
      %1047 = vdwg.mxu0
      %v1052 = vlaneseq
      %v1053 = vshrl.u32 %v1052, 7
      %v1054 = vsub.s32 0, %v1053
      %v1055 = vrot.slane %v709, %v1054
      %v1056 = vlaneseq
      %v1057 = vshrl.u32 %v1056, 7
      %v1058 = vsub.s32 0, %v1057
      %v1059 = vrot.slane %v710, %v1058
      %v1060 = vlaneseq
      %v1061 = vshrl.u32 %v1060, 7
      %v1062 = vsub.s32 0, %v1061
      %v1063 = vrot.slane %v711, %v1062
      %v1064 = vlaneseq
      %v1065 = vshrl.u32 %v1064, 7
      %v1066 = vsub.s32 0, %v1065
      %v1067 = vrot.slane %v712, %v1066
      %v1073 = vsel %vm407, %v704, 0
      %1075 = vmatprep.subr.mxu0 0.0
      %1076 = vmatpush1.xpose.msra.mxu0 0.0
      %1077 = vmatprep.subr.mxu0 0.0
      %1078 = vmatpush1.xpose.msra.mxu0 0.0
      %1079 = vmatprep.subr.mxu0 0.0
      %1080 = vmatpush1.xpose.msra.mxu0 0.0
      %1081 = vmatprep.subr.mxu0 0.0
      %1082 = vmatpush1.xpose.msra.mxu0 0.0
      %1083 = vmatprep.subr.mxu0 0.0
      %1084 = vmatpush1.xpose.msra.mxu0 0.0
      %1085 = vmatprep.subr.mxu0 0.0
      %1086 = vmatpush1.xpose.msra.mxu0 0.0
      %1087 = vmatprep.subr.mxu0 0.0
      %1088 = vmatpush1.xpose.msra.mxu0 0.0
      %1089 = vmatprep.subr.mxu0 0.0
      %1090 = vmatpush1.xpose.msra.mxu0 0.0
      %1091 = vmatprep.subr.mxu0 0.0
      %1092 = vmatpush1.xpose.msra.mxu0 0.0
      %1093 = vmatprep.subr.mxu0 0.0
      %1094 = vmatpush1.xpose.msra.mxu0 0.0
      %1095 = vmatprep.subr.mxu0 0.0
      %1096 = vmatpush1.xpose.msra.mxu0 0.0
      %1097 = vmatprep.subr.mxu0 0.0
      %1098 = vmatpush1.xpose.msra.mxu0 0.0
      %1099 = vmatprep.subr.mxu0 0.0
      %1100 = vmatpush1.xpose.msra.mxu0 0.0
      %1101 = vmatprep.subr.mxu0 0.0
      %1102 = vmatpush1.xpose.msra.mxu0 0.0
      %1103 = vmatprep.subr.mxu0 0.0
      %1104 = vmatpush1.xpose.msra.mxu0 0.0
      %1105 = vmatprep.subr.mxu0 0.0
      %1106 = vmatpush1.xpose.msra.mxu0 %v1073
      %1107 = vmatprep.subr.mxu0 0.0
      %1108 = vmatpush2.xpose.msra.mxu0 0.0
      %1109 = vmatprep.subr.mxu0 0.0
      %1110 = vmatpush2.xpose.msra.mxu0 0.0
      %1111 = vmatprep.subr.mxu0 0.0
      %1112 = vmatpush2.xpose.msra.mxu0 0.0
      %1113 = vmatprep.subr.mxu0 0.0
      %1114 = vmatpush2.xpose.msra.mxu0 0.0
      %1115 = vmatprep.subr.mxu0 0.0
      %1116 = vmatpush2.xpose.msra.mxu0 0.0
      %1117 = vmatprep.subr.mxu0 0.0
      %1118 = vmatpush2.xpose.msra.mxu0 0.0
      %1119 = vmatprep.subr.mxu0 0.0
      %1120 = vmatpush2.xpose.msra.mxu0 0.0
      %1121 = vmatprep.subr.mxu0 0.0
      %1122 = vmatpush2.xpose.msra.mxu0 0.0
      %1123 = vmatprep.subr.mxu0 0.0
      %1124 = vmatpush2.xpose.msra.mxu0 0.0
      %1125 = vmatprep.subr.mxu0 0.0
      %1126 = vmatpush2.xpose.msra.mxu0 0.0
      %1127 = vmatprep.subr.mxu0 0.0
      %1128 = vmatpush2.xpose.msra.mxu0 0.0
      %1129 = vmatprep.subr.mxu0 0.0
      %1130 = vmatpush2.xpose.msra.mxu0 0.0
      %1131 = vmatprep.subr.mxu0 0.0
      %1132 = vmatpush2.xpose.msra.mxu0 0.0
      %1133 = vmatprep.subr.mxu0 0.0
      %1134 = vmatpush2.xpose.msra.mxu0 0.0
      %1135 = vmatprep.subr.mxu0 0.0
      %1136 = vmatpush2.xpose.msra.mxu0 0.0
      %1137 = vmatprep.subr.mxu0 0.0
      %1138 = vmatpush2.xpose.msra.mxu0 0.0
      %1139 = vmatprep.mubr.f32.mxu0 0.0
      %1140 = vmatmul.mubr.f32.gmra.mxu0 %v754
      %v1141 = vpop.f32.mrf.mxu0
      %v1142 = vadd.f32 %v1055, %v1141
      %v1143 = vpop.f32.mrf.mxu0
      %1144 = vdwg.mxu0
      %v1146 = vsel %vm407, %v705, 0
      %1148 = vmatprep.subr.mxu0 0.0
      %1149 = vmatpush1.xpose.msra.mxu0 0.0
      %1150 = vmatprep.subr.mxu0 0.0
      %1151 = vmatpush1.xpose.msra.mxu0 0.0
      %1152 = vmatprep.subr.mxu0 0.0
      %1153 = vmatpush1.xpose.msra.mxu0 0.0
      %1154 = vmatprep.subr.mxu0 0.0
      %1155 = vmatpush1.xpose.msra.mxu0 0.0
      %1156 = vmatprep.subr.mxu0 0.0
      %1157 = vmatpush1.xpose.msra.mxu0 0.0
      %1158 = vmatprep.subr.mxu0 0.0
      %1159 = vmatpush1.xpose.msra.mxu0 0.0
      %1160 = vmatprep.subr.mxu0 0.0
      %1161 = vmatpush1.xpose.msra.mxu0 0.0
      %1162 = vmatprep.subr.mxu0 0.0
      %1163 = vmatpush1.xpose.msra.mxu0 0.0
      %1164 = vmatprep.subr.mxu0 0.0
      %1165 = vmatpush1.xpose.msra.mxu0 0.0
      %1166 = vmatprep.subr.mxu0 0.0
      %1167 = vmatpush1.xpose.msra.mxu0 0.0
      %1168 = vmatprep.subr.mxu0 0.0
      %1169 = vmatpush1.xpose.msra.mxu0 0.0
      %1170 = vmatprep.subr.mxu0 0.0
      %1171 = vmatpush1.xpose.msra.mxu0 0.0
      %1172 = vmatprep.subr.mxu0 0.0
      %1173 = vmatpush1.xpose.msra.mxu0 0.0
      %1174 = vmatprep.subr.mxu0 0.0
      %1175 = vmatpush1.xpose.msra.mxu0 0.0
      %1176 = vmatprep.subr.mxu0 0.0
      %1177 = vmatpush1.xpose.msra.mxu0 0.0
      %1178 = vmatprep.subr.mxu0 0.0
      %1179 = vmatpush1.xpose.msra.mxu0 %v1146
      %1180 = vmatprep.subr.mxu0 0.0
      %1181 = vmatpush2.xpose.msra.mxu0 0.0
      %1182 = vmatprep.subr.mxu0 0.0
      %1183 = vmatpush2.xpose.msra.mxu0 0.0
      %1184 = vmatprep.subr.mxu0 0.0
      %1185 = vmatpush2.xpose.msra.mxu0 0.0
      %1186 = vmatprep.subr.mxu0 0.0
      %1187 = vmatpush2.xpose.msra.mxu0 0.0
      %1188 = vmatprep.subr.mxu0 0.0
      %1189 = vmatpush2.xpose.msra.mxu0 0.0
      %1190 = vmatprep.subr.mxu0 0.0
      %1191 = vmatpush2.xpose.msra.mxu0 0.0
      %1192 = vmatprep.subr.mxu0 0.0
      %1193 = vmatpush2.xpose.msra.mxu0 0.0
      %1194 = vmatprep.subr.mxu0 0.0
      %1195 = vmatpush2.xpose.msra.mxu0 0.0
      %1196 = vmatprep.subr.mxu0 0.0
      %1197 = vmatpush2.xpose.msra.mxu0 0.0
      %1198 = vmatprep.subr.mxu0 0.0
      %1199 = vmatpush2.xpose.msra.mxu0 0.0
      %1200 = vmatprep.subr.mxu0 0.0
      %1201 = vmatpush2.xpose.msra.mxu0 0.0
      %1202 = vmatprep.subr.mxu0 0.0
      %1203 = vmatpush2.xpose.msra.mxu0 0.0
      %1204 = vmatprep.subr.mxu0 0.0
      %1205 = vmatpush2.xpose.msra.mxu0 0.0
      %1206 = vmatprep.subr.mxu0 0.0
      %1207 = vmatpush2.xpose.msra.mxu0 0.0
      %1208 = vmatprep.subr.mxu0 0.0
      %1209 = vmatpush2.xpose.msra.mxu0 0.0
      %1210 = vmatprep.subr.mxu0 0.0
      %1211 = vmatpush2.xpose.msra.mxu0 0.0
      %1212 = vmatprep.mubr.f32.mxu0 0.0
      %1213 = vmatmul.mubr.f32.gmra.mxu0 %v754
      %v1214 = vpop.f32.mrf.mxu0
      %v1215 = vadd.f32 %v1059, %v1214
      %v1216 = vpop.f32.mrf.mxu0
      %1217 = vdwg.mxu0
      %v1219 = vsel %vm407, %v706, 0
      %1221 = vmatprep.subr.mxu0 0.0
      %1222 = vmatpush1.xpose.msra.mxu0 0.0
      %1223 = vmatprep.subr.mxu0 0.0
      %1224 = vmatpush1.xpose.msra.mxu0 0.0
      %1225 = vmatprep.subr.mxu0 0.0
      %1226 = vmatpush1.xpose.msra.mxu0 0.0
      %1227 = vmatprep.subr.mxu0 0.0
      %1228 = vmatpush1.xpose.msra.mxu0 0.0
      %1229 = vmatprep.subr.mxu0 0.0
      %1230 = vmatpush1.xpose.msra.mxu0 0.0
      %1231 = vmatprep.subr.mxu0 0.0
      %1232 = vmatpush1.xpose.msra.mxu0 0.0
      %1233 = vmatprep.subr.mxu0 0.0
      %1234 = vmatpush1.xpose.msra.mxu0 0.0
      %1235 = vmatprep.subr.mxu0 0.0
      %1236 = vmatpush1.xpose.msra.mxu0 0.0
      %1237 = vmatprep.subr.mxu0 0.0
      %1238 = vmatpush1.xpose.msra.mxu0 0.0
      %1239 = vmatprep.subr.mxu0 0.0
      %1240 = vmatpush1.xpose.msra.mxu0 0.0
      %1241 = vmatprep.subr.mxu0 0.0
      %1242 = vmatpush1.xpose.msra.mxu0 0.0
      %1243 = vmatprep.subr.mxu0 0.0
      %1244 = vmatpush1.xpose.msra.mxu0 0.0
      %1245 = vmatprep.subr.mxu0 0.0
      %1246 = vmatpush1.xpose.msra.mxu0 0.0
      %1247 = vmatprep.subr.mxu0 0.0
      %1248 = vmatpush1.xpose.msra.mxu0 0.0
      %1249 = vmatprep.subr.mxu0 0.0
      %1250 = vmatpush1.xpose.msra.mxu0 0.0
      %1251 = vmatprep.subr.mxu0 0.0
      %1252 = vmatpush1.xpose.msra.mxu0 %v1219
      %1253 = vmatprep.subr.mxu0 0.0
      %1254 = vmatpush2.xpose.msra.mxu0 0.0
      %1255 = vmatprep.subr.mxu0 0.0
      %1256 = vmatpush2.xpose.msra.mxu0 0.0
      %1257 = vmatprep.subr.mxu0 0.0
      %1258 = vmatpush2.xpose.msra.mxu0 0.0
      %1259 = vmatprep.subr.mxu0 0.0
      %1260 = vmatpush2.xpose.msra.mxu0 0.0
      %1261 = vmatprep.subr.mxu0 0.0
      %1262 = vmatpush2.xpose.msra.mxu0 0.0
      %1263 = vmatprep.subr.mxu0 0.0
      %1264 = vmatpush2.xpose.msra.mxu0 0.0
      %1265 = vmatprep.subr.mxu0 0.0
      %1266 = vmatpush2.xpose.msra.mxu0 0.0
      %1267 = vmatprep.subr.mxu0 0.0
      %1268 = vmatpush2.xpose.msra.mxu0 0.0
      %1269 = vmatprep.subr.mxu0 0.0
      %1270 = vmatpush2.xpose.msra.mxu0 0.0
      %1271 = vmatprep.subr.mxu0 0.0
      %1272 = vmatpush2.xpose.msra.mxu0 0.0
      %1273 = vmatprep.subr.mxu0 0.0
      %1274 = vmatpush2.xpose.msra.mxu0 0.0
      %1275 = vmatprep.subr.mxu0 0.0
      %1276 = vmatpush2.xpose.msra.mxu0 0.0
      %1277 = vmatprep.subr.mxu0 0.0
      %1278 = vmatpush2.xpose.msra.mxu0 0.0
      %1279 = vmatprep.subr.mxu0 0.0
      %1280 = vmatpush2.xpose.msra.mxu0 0.0
      %1281 = vmatprep.subr.mxu0 0.0
      %1282 = vmatpush2.xpose.msra.mxu0 0.0
      %1283 = vmatprep.subr.mxu0 0.0
      %1284 = vmatpush2.xpose.msra.mxu0 0.0
      %1285 = vmatprep.mubr.f32.mxu0 0.0
      %1286 = vmatmul.mubr.f32.gmra.mxu0 %v754
      %v1287 = vpop.f32.mrf.mxu0
      %v1288 = vadd.f32 %v1063, %v1287
      %v1289 = vpop.f32.mrf.mxu0
      %1290 = vdwg.mxu0
      %v1292 = vsel %vm407, %v707, 0
      %1294 = vmatprep.subr.mxu0 0.0
      %1295 = vmatpush1.xpose.msra.mxu0 0.0
      %1296 = vmatprep.subr.mxu0 0.0
      %1297 = vmatpush1.xpose.msra.mxu0 0.0
      %1298 = vmatprep.subr.mxu0 0.0
      %1299 = vmatpush1.xpose.msra.mxu0 0.0
      %1300 = vmatprep.subr.mxu0 0.0
      %1301 = vmatpush1.xpose.msra.mxu0 0.0
      %1302 = vmatprep.subr.mxu0 0.0
      %1303 = vmatpush1.xpose.msra.mxu0 0.0
      %1304 = vmatprep.subr.mxu0 0.0
      %1305 = vmatpush1.xpose.msra.mxu0 0.0
      %1306 = vmatprep.subr.mxu0 0.0
      %1307 = vmatpush1.xpose.msra.mxu0 0.0
      %1308 = vmatprep.subr.mxu0 0.0
      %1309 = vmatpush1.xpose.msra.mxu0 0.0
      %1310 = vmatprep.subr.mxu0 0.0
      %1311 = vmatpush1.xpose.msra.mxu0 0.0
      %1312 = vmatprep.subr.mxu0 0.0
      %1313 = vmatpush1.xpose.msra.mxu0 0.0
      %1314 = vmatprep.subr.mxu0 0.0
      %1315 = vmatpush1.xpose.msra.mxu0 0.0
      %1316 = vmatprep.subr.mxu0 0.0
      %1317 = vmatpush1.xpose.msra.mxu0 0.0
      %1318 = vmatprep.subr.mxu0 0.0
      %1319 = vmatpush1.xpose.msra.mxu0 0.0
      %1320 = vmatprep.subr.mxu0 0.0
      %1321 = vmatpush1.xpose.msra.mxu0 0.0
      %1322 = vmatprep.subr.mxu0 0.0
      %1323 = vmatpush1.xpose.msra.mxu0 0.0
      %1324 = vmatprep.subr.mxu0 0.0
      %1325 = vmatpush1.xpose.msra.mxu0 %v1292
      %1326 = vmatprep.subr.mxu0 0.0
      %1327 = vmatpush2.xpose.msra.mxu0 0.0
      %1328 = vmatprep.subr.mxu0 0.0
      %1329 = vmatpush2.xpose.msra.mxu0 0.0
      %1330 = vmatprep.subr.mxu0 0.0
      %1331 = vmatpush2.xpose.msra.mxu0 0.0
      %1332 = vmatprep.subr.mxu0 0.0
      %1333 = vmatpush2.xpose.msra.mxu0 0.0
      %1334 = vmatprep.subr.mxu0 0.0
      %1335 = vmatpush2.xpose.msra.mxu0 0.0
      %1336 = vmatprep.subr.mxu0 0.0
      %1337 = vmatpush2.xpose.msra.mxu0 0.0
      %1338 = vmatprep.subr.mxu0 0.0
      %1339 = vmatpush2.xpose.msra.mxu0 0.0
      %1340 = vmatprep.subr.mxu0 0.0
      %1341 = vmatpush2.xpose.msra.mxu0 0.0
      %1342 = vmatprep.subr.mxu0 0.0
      %1343 = vmatpush2.xpose.msra.mxu0 0.0
      %1344 = vmatprep.subr.mxu0 0.0
      %1345 = vmatpush2.xpose.msra.mxu0 0.0
      %1346 = vmatprep.subr.mxu0 0.0
      %1347 = vmatpush2.xpose.msra.mxu0 0.0
      %1348 = vmatprep.subr.mxu0 0.0
      %1349 = vmatpush2.xpose.msra.mxu0 0.0
      %1350 = vmatprep.subr.mxu0 0.0
      %1351 = vmatpush2.xpose.msra.mxu0 0.0
      %1352 = vmatprep.subr.mxu0 0.0
      %1353 = vmatpush2.xpose.msra.mxu0 0.0
      %1354 = vmatprep.subr.mxu0 0.0
      %1355 = vmatpush2.xpose.msra.mxu0 0.0
      %1356 = vmatprep.subr.mxu0 0.0
      %1357 = vmatpush2.xpose.msra.mxu0 0.0
      %1358 = vmatprep.mubr.f32.mxu0 0.0
      %1359 = vmatmul.mubr.f32.gmra.mxu0 %v754
      %v1360 = vpop.f32.mrf.mxu0
      %v1361 = vadd.f32 %v1067, %v1360
      %v1362 = vpop.f32.mrf.mxu0
      %1363 = vdwg.mxu0
      %v1368 = vlaneseq
      %v1369 = vshrl.u32 %v1368, 7
      %v1370 = vsub.s32 0, %v1369
      %v1371 = vrot.slane %v719, %v1370
      %v1372 = vlaneseq
      %v1373 = vshrl.u32 %v1372, 7
      %v1374 = vsub.s32 0, %v1373
      %v1375 = vrot.slane %v720, %v1374
      %v1376 = vlaneseq
      %v1377 = vshrl.u32 %v1376, 7
      %v1378 = vsub.s32 0, %v1377
      %v1379 = vrot.slane %v721, %v1378
      %v1380 = vlaneseq
      %v1381 = vshrl.u32 %v1380, 7
      %v1382 = vsub.s32 0, %v1381
      %v1383 = vrot.slane %v722, %v1382
      %v1389 = vsel %vm407, %v714, 0
      %1391 = vmatprep.subr.mxu0 0.0
      %1392 = vmatpush1.xpose.msra.mxu0 0.0
      %1393 = vmatprep.subr.mxu0 0.0
      %1394 = vmatpush1.xpose.msra.mxu0 0.0
      %1395 = vmatprep.subr.mxu0 0.0
      %1396 = vmatpush1.xpose.msra.mxu0 0.0
      %1397 = vmatprep.subr.mxu0 0.0
      %1398 = vmatpush1.xpose.msra.mxu0 0.0
      %1399 = vmatprep.subr.mxu0 0.0
      %1400 = vmatpush1.xpose.msra.mxu0 0.0
      %1401 = vmatprep.subr.mxu0 0.0
      %1402 = vmatpush1.xpose.msra.mxu0 0.0
      %1403 = vmatprep.subr.mxu0 0.0
      %1404 = vmatpush1.xpose.msra.mxu0 0.0
      %1405 = vmatprep.subr.mxu0 0.0
      %1406 = vmatpush1.xpose.msra.mxu0 0.0
      %1407 = vmatprep.subr.mxu0 0.0
      %1408 = vmatpush1.xpose.msra.mxu0 0.0
      %1409 = vmatprep.subr.mxu0 0.0
      %1410 = vmatpush1.xpose.msra.mxu0 0.0
      %1411 = vmatprep.subr.mxu0 0.0
      %1412 = vmatpush1.xpose.msra.mxu0 0.0
      %1413 = vmatprep.subr.mxu0 0.0
      %1414 = vmatpush1.xpose.msra.mxu0 0.0
      %1415 = vmatprep.subr.mxu0 0.0
      %1416 = vmatpush1.xpose.msra.mxu0 0.0
      %1417 = vmatprep.subr.mxu0 0.0
      %1418 = vmatpush1.xpose.msra.mxu0 0.0
      %1419 = vmatprep.subr.mxu0 0.0
      %1420 = vmatpush1.xpose.msra.mxu0 0.0
      %1421 = vmatprep.subr.mxu0 0.0
      %1422 = vmatpush1.xpose.msra.mxu0 %v1389
      %1423 = vmatprep.subr.mxu0 0.0
      %1424 = vmatpush2.xpose.msra.mxu0 0.0
      %1425 = vmatprep.subr.mxu0 0.0
      %1426 = vmatpush2.xpose.msra.mxu0 0.0
      %1427 = vmatprep.subr.mxu0 0.0
      %1428 = vmatpush2.xpose.msra.mxu0 0.0
      %1429 = vmatprep.subr.mxu0 0.0
      %1430 = vmatpush2.xpose.msra.mxu0 0.0
      %1431 = vmatprep.subr.mxu0 0.0
      %1432 = vmatpush2.xpose.msra.mxu0 0.0
      %1433 = vmatprep.subr.mxu0 0.0
      %1434 = vmatpush2.xpose.msra.mxu0 0.0
      %1435 = vmatprep.subr.mxu0 0.0
      %1436 = vmatpush2.xpose.msra.mxu0 0.0
      %1437 = vmatprep.subr.mxu0 0.0
      %1438 = vmatpush2.xpose.msra.mxu0 0.0
      %1439 = vmatprep.subr.mxu0 0.0
      %1440 = vmatpush2.xpose.msra.mxu0 0.0
      %1441 = vmatprep.subr.mxu0 0.0
      %1442 = vmatpush2.xpose.msra.mxu0 0.0
      %1443 = vmatprep.subr.mxu0 0.0
      %1444 = vmatpush2.xpose.msra.mxu0 0.0
      %1445 = vmatprep.subr.mxu0 0.0
      %1446 = vmatpush2.xpose.msra.mxu0 0.0
      %1447 = vmatprep.subr.mxu0 0.0
      %1448 = vmatpush2.xpose.msra.mxu0 0.0
      %1449 = vmatprep.subr.mxu0 0.0
      %1450 = vmatpush2.xpose.msra.mxu0 0.0
      %1451 = vmatprep.subr.mxu0 0.0
      %1452 = vmatpush2.xpose.msra.mxu0 0.0
      %1453 = vmatprep.subr.mxu0 0.0
      %1454 = vmatpush2.xpose.msra.mxu0 0.0
      %1455 = vmatprep.mubr.f32.mxu0 0.0
      %1456 = vmatmul.mubr.f32.gmra.mxu0 %v754
      %v1457 = vpop.f32.mrf.mxu0
      %v1458 = vadd.f32 %v1371, %v1457
      %v1459 = vpop.f32.mrf.mxu0
      %1460 = vdwg.mxu0
      %v1462 = vsel %vm407, %v715, 0
      %1464 = vmatprep.subr.mxu0 0.0
      %1465 = vmatpush1.xpose.msra.mxu0 0.0
      %1466 = vmatprep.subr.mxu0 0.0
      %1467 = vmatpush1.xpose.msra.mxu0 0.0
      %1468 = vmatprep.subr.mxu0 0.0
      %1469 = vmatpush1.xpose.msra.mxu0 0.0
      %1470 = vmatprep.subr.mxu0 0.0
      %1471 = vmatpush1.xpose.msra.mxu0 0.0
      %1472 = vmatprep.subr.mxu0 0.0
      %1473 = vmatpush1.xpose.msra.mxu0 0.0
      %1474 = vmatprep.subr.mxu0 0.0
      %1475 = vmatpush1.xpose.msra.mxu0 0.0
      %1476 = vmatprep.subr.mxu0 0.0
      %1477 = vmatpush1.xpose.msra.mxu0 0.0
      %1478 = vmatprep.subr.mxu0 0.0
      %1479 = vmatpush1.xpose.msra.mxu0 0.0
      %1480 = vmatprep.subr.mxu0 0.0
      %1481 = vmatpush1.xpose.msra.mxu0 0.0
      %1482 = vmatprep.subr.mxu0 0.0
      %1483 = vmatpush1.xpose.msra.mxu0 0.0
      %1484 = vmatprep.subr.mxu0 0.0
      %1485 = vmatpush1.xpose.msra.mxu0 0.0
      %1486 = vmatprep.subr.mxu0 0.0
      %1487 = vmatpush1.xpose.msra.mxu0 0.0
      %1488 = vmatprep.subr.mxu0 0.0
      %1489 = vmatpush1.xpose.msra.mxu0 0.0
      %1490 = vmatprep.subr.mxu0 0.0
      %1491 = vmatpush1.xpose.msra.mxu0 0.0
      %1492 = vmatprep.subr.mxu0 0.0
      %1493 = vmatpush1.xpose.msra.mxu0 0.0
      %1494 = vmatprep.subr.mxu0 0.0
      %1495 = vmatpush1.xpose.msra.mxu0 %v1462
      %1496 = vmatprep.subr.mxu0 0.0
      %1497 = vmatpush2.xpose.msra.mxu0 0.0
      %1498 = vmatprep.subr.mxu0 0.0
      %1499 = vmatpush2.xpose.msra.mxu0 0.0
      %1500 = vmatprep.subr.mxu0 0.0
      %1501 = vmatpush2.xpose.msra.mxu0 0.0
      %1502 = vmatprep.subr.mxu0 0.0
      %1503 = vmatpush2.xpose.msra.mxu0 0.0
      %1504 = vmatprep.subr.mxu0 0.0
      %1505 = vmatpush2.xpose.msra.mxu0 0.0
      %1506 = vmatprep.subr.mxu0 0.0
      %1507 = vmatpush2.xpose.msra.mxu0 0.0
      %1508 = vmatprep.subr.mxu0 0.0
      %1509 = vmatpush2.xpose.msra.mxu0 0.0
      %1510 = vmatprep.subr.mxu0 0.0
      %1511 = vmatpush2.xpose.msra.mxu0 0.0
      %1512 = vmatprep.subr.mxu0 0.0
      %1513 = vmatpush2.xpose.msra.mxu0 0.0
      %1514 = vmatprep.subr.mxu0 0.0
      %1515 = vmatpush2.xpose.msra.mxu0 0.0
      %1516 = vmatprep.subr.mxu0 0.0
      %1517 = vmatpush2.xpose.msra.mxu0 0.0
      %1518 = vmatprep.subr.mxu0 0.0
      %1519 = vmatpush2.xpose.msra.mxu0 0.0
      %1520 = vmatprep.subr.mxu0 0.0
      %1521 = vmatpush2.xpose.msra.mxu0 0.0
      %1522 = vmatprep.subr.mxu0 0.0
      %1523 = vmatpush2.xpose.msra.mxu0 0.0
      %1524 = vmatprep.subr.mxu0 0.0
      %1525 = vmatpush2.xpose.msra.mxu0 0.0
      %1526 = vmatprep.subr.mxu0 0.0
      %1527 = vmatpush2.xpose.msra.mxu0 0.0
      %1528 = vmatprep.mubr.f32.mxu0 0.0
      %1529 = vmatmul.mubr.f32.gmra.mxu0 %v754
      %v1530 = vpop.f32.mrf.mxu0
      %v1531 = vadd.f32 %v1375, %v1530
      %v1532 = vpop.f32.mrf.mxu0
      %1533 = vdwg.mxu0
      %v1535 = vsel %vm407, %v716, 0
      %1537 = vmatprep.subr.mxu0 0.0
      %1538 = vmatpush1.xpose.msra.mxu0 0.0
      %1539 = vmatprep.subr.mxu0 0.0
      %1540 = vmatpush1.xpose.msra.mxu0 0.0
      %1541 = vmatprep.subr.mxu0 0.0
      %1542 = vmatpush1.xpose.msra.mxu0 0.0
      %1543 = vmatprep.subr.mxu0 0.0
      %1544 = vmatpush1.xpose.msra.mxu0 0.0
      %1545 = vmatprep.subr.mxu0 0.0
      %1546 = vmatpush1.xpose.msra.mxu0 0.0
      %1547 = vmatprep.subr.mxu0 0.0
      %1548 = vmatpush1.xpose.msra.mxu0 0.0
      %1549 = vmatprep.subr.mxu0 0.0
      %1550 = vmatpush1.xpose.msra.mxu0 0.0
      %1551 = vmatprep.subr.mxu0 0.0
      %1552 = vmatpush1.xpose.msra.mxu0 0.0
      %1553 = vmatprep.subr.mxu0 0.0
      %1554 = vmatpush1.xpose.msra.mxu0 0.0
      %1555 = vmatprep.subr.mxu0 0.0
      %1556 = vmatpush1.xpose.msra.mxu0 0.0
      %1557 = vmatprep.subr.mxu0 0.0
      %1558 = vmatpush1.xpose.msra.mxu0 0.0
      %1559 = vmatprep.subr.mxu0 0.0
      %1560 = vmatpush1.xpose.msra.mxu0 0.0
      %1561 = vmatprep.subr.mxu0 0.0
      %1562 = vmatpush1.xpose.msra.mxu0 0.0
      %1563 = vmatprep.subr.mxu0 0.0
      %1564 = vmatpush1.xpose.msra.mxu0 0.0
      %1565 = vmatprep.subr.mxu0 0.0
      %1566 = vmatpush1.xpose.msra.mxu0 0.0
      %1567 = vmatprep.subr.mxu0 0.0
      %1568 = vmatpush1.xpose.msra.mxu0 %v1535
      %1569 = vmatprep.subr.mxu0 0.0
      %1570 = vmatpush2.xpose.msra.mxu0 0.0
      %1571 = vmatprep.subr.mxu0 0.0
      %1572 = vmatpush2.xpose.msra.mxu0 0.0
      %1573 = vmatprep.subr.mxu0 0.0
      %1574 = vmatpush2.xpose.msra.mxu0 0.0
      %1575 = vmatprep.subr.mxu0 0.0
      %1576 = vmatpush2.xpose.msra.mxu0 0.0
      %1577 = vmatprep.subr.mxu0 0.0
      %1578 = vmatpush2.xpose.msra.mxu0 0.0
      %1579 = vmatprep.subr.mxu0 0.0
      %1580 = vmatpush2.xpose.msra.mxu0 0.0
      %1581 = vmatprep.subr.mxu0 0.0
      %1582 = vmatpush2.xpose.msra.mxu0 0.0
      %1583 = vmatprep.subr.mxu0 0.0
      %1584 = vmatpush2.xpose.msra.mxu0 0.0
      %1585 = vmatprep.subr.mxu0 0.0
      %1586 = vmatpush2.xpose.msra.mxu0 0.0
      %1587 = vmatprep.subr.mxu0 0.0
      %1588 = vmatpush2.xpose.msra.mxu0 0.0
      %1589 = vmatprep.subr.mxu0 0.0
      %1590 = vmatpush2.xpose.msra.mxu0 0.0
      %1591 = vmatprep.subr.mxu0 0.0
      %1592 = vmatpush2.xpose.msra.mxu0 0.0
      %1593 = vmatprep.subr.mxu0 0.0
      %1594 = vmatpush2.xpose.msra.mxu0 0.0
      %1595 = vmatprep.subr.mxu0 0.0
      %1596 = vmatpush2.xpose.msra.mxu0 0.0
      %1597 = vmatprep.subr.mxu0 0.0
      %1598 = vmatpush2.xpose.msra.mxu0 0.0
      %1599 = vmatprep.subr.mxu0 0.0
      %1600 = vmatpush2.xpose.msra.mxu0 0.0
      %1601 = vmatprep.mubr.f32.mxu0 0.0
      %1602 = vmatmul.mubr.f32.gmra.mxu0 %v754
      %v1603 = vpop.f32.mrf.mxu0
      %v1604 = vadd.f32 %v1379, %v1603
      %v1605 = vpop.f32.mrf.mxu0
      %1606 = vdwg.mxu0
      %v1608 = vsel %vm407, %v717, 0
      %1610 = vmatprep.subr.mxu0 0.0
      %1611 = vmatpush1.xpose.msra.mxu0 0.0
      %1612 = vmatprep.subr.mxu0 0.0
      %1613 = vmatpush1.xpose.msra.mxu0 0.0
      %1614 = vmatprep.subr.mxu0 0.0
      %1615 = vmatpush1.xpose.msra.mxu0 0.0
      %1616 = vmatprep.subr.mxu0 0.0
      %1617 = vmatpush1.xpose.msra.mxu0 0.0
      %1618 = vmatprep.subr.mxu0 0.0
      %1619 = vmatpush1.xpose.msra.mxu0 0.0
      %1620 = vmatprep.subr.mxu0 0.0
      %1621 = vmatpush1.xpose.msra.mxu0 0.0
      %1622 = vmatprep.subr.mxu0 0.0
      %1623 = vmatpush1.xpose.msra.mxu0 0.0
      %1624 = vmatprep.subr.mxu0 0.0
      %1625 = vmatpush1.xpose.msra.mxu0 0.0
      %1626 = vmatprep.subr.mxu0 0.0
      %1627 = vmatpush1.xpose.msra.mxu0 0.0
      %1628 = vmatprep.subr.mxu0 0.0
      %1629 = vmatpush1.xpose.msra.mxu0 0.0
      %1630 = vmatprep.subr.mxu0 0.0
      %1631 = vmatpush1.xpose.msra.mxu0 0.0
      %1632 = vmatprep.subr.mxu0 0.0
      %1633 = vmatpush1.xpose.msra.mxu0 0.0
      %1634 = vmatprep.subr.mxu0 0.0
      %1635 = vmatpush1.xpose.msra.mxu0 0.0
      %1636 = vmatprep.subr.mxu0 0.0
      %1637 = vmatpush1.xpose.msra.mxu0 0.0
      %1638 = vmatprep.subr.mxu0 0.0
      %1639 = vmatpush1.xpose.msra.mxu0 0.0
      %1640 = vmatprep.subr.mxu0 0.0
      %1641 = vmatpush1.xpose.msra.mxu0 %v1608
      %1642 = vmatprep.subr.mxu0 0.0
      %1643 = vmatpush2.xpose.msra.mxu0 0.0
      %1644 = vmatprep.subr.mxu0 0.0
      %1645 = vmatpush2.xpose.msra.mxu0 0.0
      %1646 = vmatprep.subr.mxu0 0.0
      %1647 = vmatpush2.xpose.msra.mxu0 0.0
      %1648 = vmatprep.subr.mxu0 0.0
      %1649 = vmatpush2.xpose.msra.mxu0 0.0
      %1650 = vmatprep.subr.mxu0 0.0
      %1651 = vmatpush2.xpose.msra.mxu0 0.0
      %1652 = vmatprep.subr.mxu0 0.0
      %1653 = vmatpush2.xpose.msra.mxu0 0.0
      %1654 = vmatprep.subr.mxu0 0.0
      %1655 = vmatpush2.xpose.msra.mxu0 0.0
      %1656 = vmatprep.subr.mxu0 0.0
      %1657 = vmatpush2.xpose.msra.mxu0 0.0
      %1658 = vmatprep.subr.mxu0 0.0
      %1659 = vmatpush2.xpose.msra.mxu0 0.0
      %1660 = vmatprep.subr.mxu0 0.0
      %1661 = vmatpush2.xpose.msra.mxu0 0.0
      %1662 = vmatprep.subr.mxu0 0.0
      %1663 = vmatpush2.xpose.msra.mxu0 0.0
      %1664 = vmatprep.subr.mxu0 0.0
      %1665 = vmatpush2.xpose.msra.mxu0 0.0
      %1666 = vmatprep.subr.mxu0 0.0
      %1667 = vmatpush2.xpose.msra.mxu0 0.0
      %1668 = vmatprep.subr.mxu0 0.0
      %1669 = vmatpush2.xpose.msra.mxu0 0.0
      %1670 = vmatprep.subr.mxu0 0.0
      %1671 = vmatpush2.xpose.msra.mxu0 0.0
      %1672 = vmatprep.subr.mxu0 0.0
      %1673 = vmatpush2.xpose.msra.mxu0 0.0
      %1674 = vmatprep.mubr.f32.mxu0 0.0
      %1675 = vmatmul.mubr.f32.gmra.mxu0 %v754
      %v1676 = vpop.f32.mrf.mxu0
      %v1677 = vadd.f32 %v1383, %v1676
      %v1678 = vpop.f32.mrf.mxu0
      %1679 = vdwg.mxu0
      %vm1680 = vcmask 64512
      %v1682 = vsel %vm1680, %v826, 0
      %v1685 = vsel %vm1680, %v1142, 0
      %1687 = vmatprep.subr.mxu0 0.0
      %1688 = vmatpush1.xpose.msra.mxu0 0.0
      %1689 = vmatprep.subr.mxu0 0.0
      %1690 = vmatpush1.xpose.msra.mxu0 0.0
      %1691 = vmatprep.subr.mxu0 0.0
      %1692 = vmatpush1.xpose.msra.mxu0 0.0
      %1693 = vmatprep.subr.mxu0 0.0
      %1694 = vmatpush1.xpose.msra.mxu0 0.0
      %1695 = vmatprep.subr.mxu0 0.0
      %1696 = vmatpush1.xpose.msra.mxu0 0.0
      %1697 = vmatprep.subr.mxu0 0.0
      %1698 = vmatpush1.xpose.msra.mxu0 0.0
      %1699 = vmatprep.subr.mxu0 0.0
      %1700 = vmatpush1.xpose.msra.mxu0 0.0
      %1701 = vmatprep.subr.mxu0 0.0
      %1702 = vmatpush1.xpose.msra.mxu0 0.0
      %1703 = vmatprep.subr.mxu0 0.0
      %1704 = vmatpush1.xpose.msra.mxu0 0.0
      %1705 = vmatprep.subr.mxu0 0.0
      %1706 = vmatpush1.xpose.msra.mxu0 0.0
      %1707 = vmatprep.subr.mxu0 0.0
      %1708 = vmatpush1.xpose.msra.mxu0 0.0
      %1709 = vmatprep.subr.mxu0 0.0
      %1710 = vmatpush1.xpose.msra.mxu0 0.0
      %1711 = vmatprep.subr.mxu0 0.0
      %1712 = vmatpush1.xpose.msra.mxu0 0.0
      %1713 = vmatprep.subr.mxu0 0.0
      %1714 = vmatpush1.xpose.msra.mxu0 0.0
      %1715 = vmatprep.subr.mxu0 0.0
      %1716 = vmatpush1.xpose.msra.mxu0 0.0
      %1717 = vmatprep.subr.mxu0 0.0
      %1718 = vmatpush1.xpose.msra.mxu0 %v1685
      %1719 = vmatprep.subr.mxu0 0.0
      %1720 = vmatpush2.xpose.msra.mxu0 0.0
      %1721 = vmatprep.subr.mxu0 0.0
      %1722 = vmatpush2.xpose.msra.mxu0 0.0
      %1723 = vmatprep.subr.mxu0 0.0
      %1724 = vmatpush2.xpose.msra.mxu0 0.0
      %1725 = vmatprep.subr.mxu0 0.0
      %1726 = vmatpush2.xpose.msra.mxu0 0.0
      %1727 = vmatprep.subr.mxu0 0.0
      %1728 = vmatpush2.xpose.msra.mxu0 0.0
      %1729 = vmatprep.subr.mxu0 0.0
      %1730 = vmatpush2.xpose.msra.mxu0 0.0
      %1731 = vmatprep.subr.mxu0 0.0
      %1732 = vmatpush2.xpose.msra.mxu0 0.0
      %1733 = vmatprep.subr.mxu0 0.0
      %1734 = vmatpush2.xpose.msra.mxu0 0.0
      %1735 = vmatprep.subr.mxu0 0.0
      %1736 = vmatpush2.xpose.msra.mxu0 0.0
      %1737 = vmatprep.subr.mxu0 0.0
      %1738 = vmatpush2.xpose.msra.mxu0 0.0
      %1739 = vmatprep.subr.mxu0 0.0
      %1740 = vmatpush2.xpose.msra.mxu0 0.0
      %1741 = vmatprep.subr.mxu0 0.0
      %1742 = vmatpush2.xpose.msra.mxu0 0.0
      %1743 = vmatprep.subr.mxu0 0.0
      %1744 = vmatpush2.xpose.msra.mxu0 0.0
      %1745 = vmatprep.subr.mxu0 0.0
      %1746 = vmatpush2.xpose.msra.mxu0 0.0
      %1747 = vmatprep.subr.mxu0 0.0
      %1748 = vmatpush2.xpose.msra.mxu0 0.0
      %1749 = vmatprep.subr.mxu0 0.0
      %1750 = vmatpush2.xpose.msra.mxu0 0.0
      %1751 = vmatprep.mubr.f32.mxu0 0.0
      %1752 = vmatmul.mubr.f32.gmra.mxu0 %v1682
      %v1753 = vpop.f32.mrf.mxu0
      %v1754 = vadd.f32 0.0, %v1753
      %v1755 = vpop.f32.mrf.mxu0
      %1756 = vdwg.mxu0
      %v1758 = vsel %vm1680, %v899, 0
      %v1761 = vsel %vm1680, %v1215, 0
      %1763 = vmatprep.subr.mxu0 0.0
      %1764 = vmatpush1.xpose.msra.mxu0 0.0
      %1765 = vmatprep.subr.mxu0 0.0
      %1766 = vmatpush1.xpose.msra.mxu0 0.0
      %1767 = vmatprep.subr.mxu0 0.0
      %1768 = vmatpush1.xpose.msra.mxu0 0.0
      %1769 = vmatprep.subr.mxu0 0.0
      %1770 = vmatpush1.xpose.msra.mxu0 0.0
      %1771 = vmatprep.subr.mxu0 0.0
      %1772 = vmatpush1.xpose.msra.mxu0 0.0
      %1773 = vmatprep.subr.mxu0 0.0
      %1774 = vmatpush1.xpose.msra.mxu0 0.0
      %1775 = vmatprep.subr.mxu0 0.0
      %1776 = vmatpush1.xpose.msra.mxu0 0.0
      %1777 = vmatprep.subr.mxu0 0.0
      %1778 = vmatpush1.xpose.msra.mxu0 0.0
      %1779 = vmatprep.subr.mxu0 0.0
      %1780 = vmatpush1.xpose.msra.mxu0 0.0
      %1781 = vmatprep.subr.mxu0 0.0
      %1782 = vmatpush1.xpose.msra.mxu0 0.0
      %1783 = vmatprep.subr.mxu0 0.0
      %1784 = vmatpush1.xpose.msra.mxu0 0.0
      %1785 = vmatprep.subr.mxu0 0.0
      %1786 = vmatpush1.xpose.msra.mxu0 0.0
      %1787 = vmatprep.subr.mxu0 0.0
      %1788 = vmatpush1.xpose.msra.mxu0 0.0
      %1789 = vmatprep.subr.mxu0 0.0
      %1790 = vmatpush1.xpose.msra.mxu0 0.0
      %1791 = vmatprep.subr.mxu0 0.0
      %1792 = vmatpush1.xpose.msra.mxu0 0.0
      %1793 = vmatprep.subr.mxu0 0.0
      %1794 = vmatpush1.xpose.msra.mxu0 %v1761
      %1795 = vmatprep.subr.mxu0 0.0
      %1796 = vmatpush2.xpose.msra.mxu0 0.0
      %1797 = vmatprep.subr.mxu0 0.0
      %1798 = vmatpush2.xpose.msra.mxu0 0.0
      %1799 = vmatprep.subr.mxu0 0.0
      %1800 = vmatpush2.xpose.msra.mxu0 0.0
      %1801 = vmatprep.subr.mxu0 0.0
      %1802 = vmatpush2.xpose.msra.mxu0 0.0
      %1803 = vmatprep.subr.mxu0 0.0
      %1804 = vmatpush2.xpose.msra.mxu0 0.0
      %1805 = vmatprep.subr.mxu0 0.0
      %1806 = vmatpush2.xpose.msra.mxu0 0.0
      %1807 = vmatprep.subr.mxu0 0.0
      %1808 = vmatpush2.xpose.msra.mxu0 0.0
      %1809 = vmatprep.subr.mxu0 0.0
      %1810 = vmatpush2.xpose.msra.mxu0 0.0
      %1811 = vmatprep.subr.mxu0 0.0
      %1812 = vmatpush2.xpose.msra.mxu0 0.0
      %1813 = vmatprep.subr.mxu0 0.0
      %1814 = vmatpush2.xpose.msra.mxu0 0.0
      %1815 = vmatprep.subr.mxu0 0.0
      %1816 = vmatpush2.xpose.msra.mxu0 0.0
      %1817 = vmatprep.subr.mxu0 0.0
      %1818 = vmatpush2.xpose.msra.mxu0 0.0
      %1819 = vmatprep.subr.mxu0 0.0
      %1820 = vmatpush2.xpose.msra.mxu0 0.0
      %1821 = vmatprep.subr.mxu0 0.0
      %1822 = vmatpush2.xpose.msra.mxu0 0.0
      %1823 = vmatprep.subr.mxu0 0.0
      %1824 = vmatpush2.xpose.msra.mxu0 0.0
      %1825 = vmatprep.subr.mxu0 0.0
      %1826 = vmatpush2.xpose.msra.mxu0 0.0
      %1827 = vmatprep.mubr.f32.mxu0 0.0
      %1828 = vmatmul.mubr.f32.gmra.mxu0 %v1758
      %v1829 = vpop.f32.mrf.mxu0
      %v1830 = vadd.f32 0.0, %v1829
      %v1831 = vpop.f32.mrf.mxu0
      %1832 = vdwg.mxu0
      %v1834 = vsel %vm1680, %v972, 0
      %v1837 = vsel %vm1680, %v1288, 0
      %1839 = vmatprep.subr.mxu0 0.0
      %1840 = vmatpush1.xpose.msra.mxu0 0.0
      %1841 = vmatprep.subr.mxu0 0.0
      %1842 = vmatpush1.xpose.msra.mxu0 0.0
      %1843 = vmatprep.subr.mxu0 0.0
      %1844 = vmatpush1.xpose.msra.mxu0 0.0
      %1845 = vmatprep.subr.mxu0 0.0
      %1846 = vmatpush1.xpose.msra.mxu0 0.0
      %1847 = vmatprep.subr.mxu0 0.0
      %1848 = vmatpush1.xpose.msra.mxu0 0.0
      %1849 = vmatprep.subr.mxu0 0.0
      %1850 = vmatpush1.xpose.msra.mxu0 0.0
      %1851 = vmatprep.subr.mxu0 0.0
      %1852 = vmatpush1.xpose.msra.mxu0 0.0
      %1853 = vmatprep.subr.mxu0 0.0
      %1854 = vmatpush1.xpose.msra.mxu0 0.0
      %1855 = vmatprep.subr.mxu0 0.0
      %1856 = vmatpush1.xpose.msra.mxu0 0.0
      %1857 = vmatprep.subr.mxu0 0.0
      %1858 = vmatpush1.xpose.msra.mxu0 0.0
      %1859 = vmatprep.subr.mxu0 0.0
      %1860 = vmatpush1.xpose.msra.mxu0 0.0
      %1861 = vmatprep.subr.mxu0 0.0
      %1862 = vmatpush1.xpose.msra.mxu0 0.0
      %1863 = vmatprep.subr.mxu0 0.0
      %1864 = vmatpush1.xpose.msra.mxu0 0.0
      %1865 = vmatprep.subr.mxu0 0.0
      %1866 = vmatpush1.xpose.msra.mxu0 0.0
      %1867 = vmatprep.subr.mxu0 0.0
      %1868 = vmatpush1.xpose.msra.mxu0 0.0
      %1869 = vmatprep.subr.mxu0 0.0
      %1870 = vmatpush1.xpose.msra.mxu0 %v1837
      %1871 = vmatprep.subr.mxu0 0.0
      %1872 = vmatpush2.xpose.msra.mxu0 0.0
      %1873 = vmatprep.subr.mxu0 0.0
      %1874 = vmatpush2.xpose.msra.mxu0 0.0
      %1875 = vmatprep.subr.mxu0 0.0
      %1876 = vmatpush2.xpose.msra.mxu0 0.0
      %1877 = vmatprep.subr.mxu0 0.0
      %1878 = vmatpush2.xpose.msra.mxu0 0.0
      %1879 = vmatprep.subr.mxu0 0.0
      %1880 = vmatpush2.xpose.msra.mxu0 0.0
      %1881 = vmatprep.subr.mxu0 0.0
      %1882 = vmatpush2.xpose.msra.mxu0 0.0
      %1883 = vmatprep.subr.mxu0 0.0
      %1884 = vmatpush2.xpose.msra.mxu0 0.0
      %1885 = vmatprep.subr.mxu0 0.0
      %1886 = vmatpush2.xpose.msra.mxu0 0.0
      %1887 = vmatprep.subr.mxu0 0.0
      %1888 = vmatpush2.xpose.msra.mxu0 0.0
      %1889 = vmatprep.subr.mxu0 0.0
      %1890 = vmatpush2.xpose.msra.mxu0 0.0
      %1891 = vmatprep.subr.mxu0 0.0
      %1892 = vmatpush2.xpose.msra.mxu0 0.0
      %1893 = vmatprep.subr.mxu0 0.0
      %1894 = vmatpush2.xpose.msra.mxu0 0.0
      %1895 = vmatprep.subr.mxu0 0.0
      %1896 = vmatpush2.xpose.msra.mxu0 0.0
      %1897 = vmatprep.subr.mxu0 0.0
      %1898 = vmatpush2.xpose.msra.mxu0 0.0
      %1899 = vmatprep.subr.mxu0 0.0
      %1900 = vmatpush2.xpose.msra.mxu0 0.0
      %1901 = vmatprep.subr.mxu0 0.0
      %1902 = vmatpush2.xpose.msra.mxu0 0.0
      %1903 = vmatprep.mubr.f32.mxu0 0.0
      %1904 = vmatmul.mubr.f32.gmra.mxu0 %v1834
      %v1905 = vpop.f32.mrf.mxu0
      %v1906 = vadd.f32 0.0, %v1905
      %v1907 = vpop.f32.mrf.mxu0
      %1908 = vdwg.mxu0
      %v1910 = vsel %vm1680, %v1045, 0
      %v1913 = vsel %vm1680, %v1361, 0
      %1915 = vmatprep.subr.mxu0 0.0
      %1916 = vmatpush1.xpose.msra.mxu0 0.0
      %1917 = vmatprep.subr.mxu0 0.0
      %1918 = vmatpush1.xpose.msra.mxu0 0.0
      %1919 = vmatprep.subr.mxu0 0.0
      %1920 = vmatpush1.xpose.msra.mxu0 0.0
      %1921 = vmatprep.subr.mxu0 0.0
      %1922 = vmatpush1.xpose.msra.mxu0 0.0
      %1923 = vmatprep.subr.mxu0 0.0
      %1924 = vmatpush1.xpose.msra.mxu0 0.0
      %1925 = vmatprep.subr.mxu0 0.0
      %1926 = vmatpush1.xpose.msra.mxu0 0.0
      %1927 = vmatprep.subr.mxu0 0.0
      %1928 = vmatpush1.xpose.msra.mxu0 0.0
      %1929 = vmatprep.subr.mxu0 0.0
      %1930 = vmatpush1.xpose.msra.mxu0 0.0
      %1931 = vmatprep.subr.mxu0 0.0
      %1932 = vmatpush1.xpose.msra.mxu0 0.0
      %1933 = vmatprep.subr.mxu0 0.0
      %1934 = vmatpush1.xpose.msra.mxu0 0.0
      %1935 = vmatprep.subr.mxu0 0.0
      %1936 = vmatpush1.xpose.msra.mxu0 0.0
      %1937 = vmatprep.subr.mxu0 0.0
      %1938 = vmatpush1.xpose.msra.mxu0 0.0
      %1939 = vmatprep.subr.mxu0 0.0
      %1940 = vmatpush1.xpose.msra.mxu0 0.0
      %1941 = vmatprep.subr.mxu0 0.0
      %1942 = vmatpush1.xpose.msra.mxu0 0.0
      %1943 = vmatprep.subr.mxu0 0.0
      %1944 = vmatpush1.xpose.msra.mxu0 0.0
      %1945 = vmatprep.subr.mxu0 0.0
      %1946 = vmatpush1.xpose.msra.mxu0 %v1913
      %1947 = vmatprep.subr.mxu0 0.0
      %1948 = vmatpush2.xpose.msra.mxu0 0.0
      %1949 = vmatprep.subr.mxu0 0.0
      %1950 = vmatpush2.xpose.msra.mxu0 0.0
      %1951 = vmatprep.subr.mxu0 0.0
      %1952 = vmatpush2.xpose.msra.mxu0 0.0
      %1953 = vmatprep.subr.mxu0 0.0
      %1954 = vmatpush2.xpose.msra.mxu0 0.0
      %1955 = vmatprep.subr.mxu0 0.0
      %1956 = vmatpush2.xpose.msra.mxu0 0.0
      %1957 = vmatprep.subr.mxu0 0.0
      %1958 = vmatpush2.xpose.msra.mxu0 0.0
      %1959 = vmatprep.subr.mxu0 0.0
      %1960 = vmatpush2.xpose.msra.mxu0 0.0
      %1961 = vmatprep.subr.mxu0 0.0
      %1962 = vmatpush2.xpose.msra.mxu0 0.0
      %1963 = vmatprep.subr.mxu0 0.0
      %1964 = vmatpush2.xpose.msra.mxu0 0.0
      %1965 = vmatprep.subr.mxu0 0.0
      %1966 = vmatpush2.xpose.msra.mxu0 0.0
      %1967 = vmatprep.subr.mxu0 0.0
      %1968 = vmatpush2.xpose.msra.mxu0 0.0
      %1969 = vmatprep.subr.mxu0 0.0
      %1970 = vmatpush2.xpose.msra.mxu0 0.0
      %1971 = vmatprep.subr.mxu0 0.0
      %1972 = vmatpush2.xpose.msra.mxu0 0.0
      %1973 = vmatprep.subr.mxu0 0.0
      %1974 = vmatpush2.xpose.msra.mxu0 0.0
      %1975 = vmatprep.subr.mxu0 0.0
      %1976 = vmatpush2.xpose.msra.mxu0 0.0
      %1977 = vmatprep.subr.mxu0 0.0
      %1978 = vmatpush2.xpose.msra.mxu0 0.0
      %1979 = vmatprep.mubr.f32.mxu0 0.0
      %1980 = vmatmul.mubr.f32.gmra.mxu0 %v1910
      %v1981 = vpop.f32.mrf.mxu0
      %v1982 = vadd.f32 0.0, %v1981
      %v1983 = vpop.f32.mrf.mxu0
      %1984 = vdwg.mxu0
      %v1985 = vsel %vm1680, %v1754, -inf
      %1986 = vmax.xlane.f32.xlu0 %v1985
      %v1987 = vpop.xlane.xlu0 %1986
      %v1988 = vsel %vm1680, %v1830, -inf
      %1989 = vmax.xlane.f32.xlu0 %v1988
      %v1990 = vpop.xlane.xlu0 %1989
      %v1991 = vsel %vm1680, %v1906, -inf
      %1992 = vmax.xlane.f32.xlu0 %v1991
      %v1993 = vpop.xlane.xlu0 %1992
      %v1994 = vsel %vm1680, %v1982, -inf
      %1995 = vmax.xlane.f32.xlu0 %v1994
      %v1996 = vpop.xlane.xlu0 %1995
      %v1997 = vsub.f32 %v1754, %v1987
      %v1998 = vsub.f32 %v1830, %v1990
      %v1999 = vsub.f32 %v1906, %v1993
      %v2000 = vsub.f32 %v1982, %v1996
      %v2001 = vmul.f32 %v1997, 1.442695
      %v2002 = vpow.pop %v2001
      %v2003 = vmul.f32 %v1998, 1.442695
      %v2004 = vpow.pop %v2003
      %v2005 = vmul.f32 %v1999, 1.442695
      %v2006 = vpow.pop %v2005
      %v2007 = vmul.f32 %v2000, 1.442695
      %v2008 = vpow.pop %v2007
      %v2009 = vsel %vm1680, %v2002, 0.0
      %2010 = vadd.xlane.f32.xlu0 %v2009
      %v2011 = vpop.xlane.xlu0 %2010
      %v2012 = vsel %vm1680, %v2004, 0.0
      %2013 = vadd.xlane.f32.xlu0 %v2012
      %v2014 = vpop.xlane.xlu0 %2013
      %v2015 = vsel %vm1680, %v2006, 0.0
      %2016 = vadd.xlane.f32.xlu0 %v2015
      %v2017 = vpop.xlane.xlu0 %2016
      %v2018 = vsel %vm1680, %v2008, 0.0
      %2019 = vadd.xlane.f32.xlu0 %v2018
      %v2020 = vpop.xlane.xlu0 %2019
      %v2021 = vrcp.pop %v2011
      %v2022 = vrcp.pop %v2014
      %v2023 = vrcp.pop %v2017
      %v2024 = vrcp.pop %v2020
      %v2025 = vmul.f32 %v2002, %v2021
      %v2026 = vmul.f32 %v2004, %v2022
      %v2027 = vmul.f32 %v2006, %v2023
      %v2028 = vmul.f32 %v2008, %v2024
      %v2030 = vsel %vm1680, %v2025, 0
      %2032 = vmatprep.subr.mxu0 0.0
      %2033 = vmatpush1.msra.mxu0 0.0
      %2034 = vmatprep.subr.mxu0 0.0
      %2035 = vmatpush1.msra.mxu0 0.0
      %2036 = vmatprep.subr.mxu0 0.0
      %2037 = vmatpush1.msra.mxu0 0.0
      %2038 = vmatprep.subr.mxu0 0.0
      %2039 = vmatpush1.msra.mxu0 0.0
      %2040 = vmatprep.subr.mxu0 0.0
      %2041 = vmatpush1.msra.mxu0 0.0
      %2042 = vmatprep.subr.mxu0 0.0
      %2043 = vmatpush1.msra.mxu0 0.0
      %2044 = vmatprep.subr.mxu0 0.0
      %2045 = vmatpush1.msra.mxu0 0.0
      %2046 = vmatprep.subr.mxu0 0.0
      %2047 = vmatpush1.msra.mxu0 0.0
      %2048 = vmatprep.subr.mxu0 0.0
      %2049 = vmatpush1.msra.mxu0 0.0
      %2050 = vmatprep.subr.mxu0 0.0
      %2051 = vmatpush1.msra.mxu0 0.0
      %2052 = vmatprep.subr.mxu0 0.0
      %2053 = vmatpush1.msra.mxu0 0.0
      %2054 = vmatprep.subr.mxu0 0.0
      %2055 = vmatpush1.msra.mxu0 0.0
      %2056 = vmatprep.subr.mxu0 0.0
      %2057 = vmatpush1.msra.mxu0 0.0
      %2058 = vmatprep.subr.mxu0 0.0
      %2059 = vmatpush1.msra.mxu0 0.0
      %2060 = vmatprep.subr.mxu0 0.0
      %2061 = vmatpush1.msra.mxu0 0.0
      %2062 = vmatprep.subr.mxu0 0.0
      %2063 = vmatpush1.msra.mxu0 %v1458
      %2064 = vmatprep.subr.mxu0 0.0
      %2065 = vmatpush2.msra.mxu0 0.0
      %2066 = vmatprep.subr.mxu0 0.0
      %2067 = vmatpush2.msra.mxu0 0.0
      %2068 = vmatprep.subr.mxu0 0.0
      %2069 = vmatpush2.msra.mxu0 0.0
      %2070 = vmatprep.subr.mxu0 0.0
      %2071 = vmatpush2.msra.mxu0 0.0
      %2072 = vmatprep.subr.mxu0 0.0
      %2073 = vmatpush2.msra.mxu0 0.0
      %2074 = vmatprep.subr.mxu0 0.0
      %2075 = vmatpush2.msra.mxu0 0.0
      %2076 = vmatprep.subr.mxu0 0.0
      %2077 = vmatpush2.msra.mxu0 0.0
      %2078 = vmatprep.subr.mxu0 0.0
      %2079 = vmatpush2.msra.mxu0 0.0
      %2080 = vmatprep.subr.mxu0 0.0
      %2081 = vmatpush2.msra.mxu0 0.0
      %2082 = vmatprep.subr.mxu0 0.0
      %2083 = vmatpush2.msra.mxu0 0.0
      %2084 = vmatprep.subr.mxu0 0.0
      %2085 = vmatpush2.msra.mxu0 0.0
      %2086 = vmatprep.subr.mxu0 0.0
      %2087 = vmatpush2.msra.mxu0 0.0
      %2088 = vmatprep.subr.mxu0 0.0
      %2089 = vmatpush2.msra.mxu0 0.0
      %2090 = vmatprep.subr.mxu0 0.0
      %2091 = vmatpush2.msra.mxu0 0.0
      %2092 = vmatprep.subr.mxu0 0.0
      %2093 = vmatpush2.msra.mxu0 0.0
      %2094 = vmatprep.subr.mxu0 0.0
      %2095 = vmatpush2.msra.mxu0 0.0
      %2096 = vmatprep.mubr.f32.mxu0 0.0
      %2097 = vmatmul.mubr.f32.gmra.mxu0 %v2030
      %v2098 = vpop.f32.mrf.mxu0
      %v2099 = vadd.f32 0.0, %v2098
      %v2100 = vpop.f32.mrf.mxu0
      %2101 = vdwg.mxu0
      %v2103 = vsel %vm1680, %v2026, 0
      %2105 = vmatprep.subr.mxu0 0.0
      %2106 = vmatpush1.msra.mxu0 0.0
      %2107 = vmatprep.subr.mxu0 0.0
      %2108 = vmatpush1.msra.mxu0 0.0
      %2109 = vmatprep.subr.mxu0 0.0
      %2110 = vmatpush1.msra.mxu0 0.0
      %2111 = vmatprep.subr.mxu0 0.0
      %2112 = vmatpush1.msra.mxu0 0.0
      %2113 = vmatprep.subr.mxu0 0.0
      %2114 = vmatpush1.msra.mxu0 0.0
      %2115 = vmatprep.subr.mxu0 0.0
      %2116 = vmatpush1.msra.mxu0 0.0
      %2117 = vmatprep.subr.mxu0 0.0
      %2118 = vmatpush1.msra.mxu0 0.0
      %2119 = vmatprep.subr.mxu0 0.0
      %2120 = vmatpush1.msra.mxu0 0.0
      %2121 = vmatprep.subr.mxu0 0.0
      %2122 = vmatpush1.msra.mxu0 0.0
      %2123 = vmatprep.subr.mxu0 0.0
      %2124 = vmatpush1.msra.mxu0 0.0
      %2125 = vmatprep.subr.mxu0 0.0
      %2126 = vmatpush1.msra.mxu0 0.0
      %2127 = vmatprep.subr.mxu0 0.0
      %2128 = vmatpush1.msra.mxu0 0.0
      %2129 = vmatprep.subr.mxu0 0.0
      %2130 = vmatpush1.msra.mxu0 0.0
      %2131 = vmatprep.subr.mxu0 0.0
      %2132 = vmatpush1.msra.mxu0 0.0
      %2133 = vmatprep.subr.mxu0 0.0
      %2134 = vmatpush1.msra.mxu0 0.0
      %2135 = vmatprep.subr.mxu0 0.0
      %2136 = vmatpush1.msra.mxu0 %v1531
      %2137 = vmatprep.subr.mxu0 0.0
      %2138 = vmatpush2.msra.mxu0 0.0
      %2139 = vmatprep.subr.mxu0 0.0
      %2140 = vmatpush2.msra.mxu0 0.0
      %2141 = vmatprep.subr.mxu0 0.0
      %2142 = vmatpush2.msra.mxu0 0.0
      %2143 = vmatprep.subr.mxu0 0.0
      %2144 = vmatpush2.msra.mxu0 0.0
      %2145 = vmatprep.subr.mxu0 0.0
      %2146 = vmatpush2.msra.mxu0 0.0
      %2147 = vmatprep.subr.mxu0 0.0
      %2148 = vmatpush2.msra.mxu0 0.0
      %2149 = vmatprep.subr.mxu0 0.0
      %2150 = vmatpush2.msra.mxu0 0.0
      %2151 = vmatprep.subr.mxu0 0.0
      %2152 = vmatpush2.msra.mxu0 0.0
      %2153 = vmatprep.subr.mxu0 0.0
      %2154 = vmatpush2.msra.mxu0 0.0
      %2155 = vmatprep.subr.mxu0 0.0
      %2156 = vmatpush2.msra.mxu0 0.0
      %2157 = vmatprep.subr.mxu0 0.0
      %2158 = vmatpush2.msra.mxu0 0.0
      %2159 = vmatprep.subr.mxu0 0.0
      %2160 = vmatpush2.msra.mxu0 0.0
      %2161 = vmatprep.subr.mxu0 0.0
      %2162 = vmatpush2.msra.mxu0 0.0
      %2163 = vmatprep.subr.mxu0 0.0
      %2164 = vmatpush2.msra.mxu0 0.0
      %2165 = vmatprep.subr.mxu0 0.0
      %2166 = vmatpush2.msra.mxu0 0.0
      %2167 = vmatprep.subr.mxu0 0.0
      %2168 = vmatpush2.msra.mxu0 0.0
      %2169 = vmatprep.mubr.f32.mxu0 0.0
      %2170 = vmatmul.mubr.f32.gmra.mxu0 %v2103
      %v2171 = vpop.f32.mrf.mxu0
      %v2172 = vadd.f32 0.0, %v2171
      %v2173 = vpop.f32.mrf.mxu0
      %2174 = vdwg.mxu0
      %v2176 = vsel %vm1680, %v2027, 0
      %2178 = vmatprep.subr.mxu0 0.0
      %2179 = vmatpush1.msra.mxu0 0.0
      %2180 = vmatprep.subr.mxu0 0.0
      %2181 = vmatpush1.msra.mxu0 0.0
      %2182 = vmatprep.subr.mxu0 0.0
      %2183 = vmatpush1.msra.mxu0 0.0
      %2184 = vmatprep.subr.mxu0 0.0
      %2185 = vmatpush1.msra.mxu0 0.0
      %2186 = vmatprep.subr.mxu0 0.0
      %2187 = vmatpush1.msra.mxu0 0.0
      %2188 = vmatprep.subr.mxu0 0.0
      %2189 = vmatpush1.msra.mxu0 0.0
      %2190 = vmatprep.subr.mxu0 0.0
      %2191 = vmatpush1.msra.mxu0 0.0
      %2192 = vmatprep.subr.mxu0 0.0
      %2193 = vmatpush1.msra.mxu0 0.0
      %2194 = vmatprep.subr.mxu0 0.0
      %2195 = vmatpush1.msra.mxu0 0.0
      %2196 = vmatprep.subr.mxu0 0.0
      %2197 = vmatpush1.msra.mxu0 0.0
      %2198 = vmatprep.subr.mxu0 0.0
      %2199 = vmatpush1.msra.mxu0 0.0
      %2200 = vmatprep.subr.mxu0 0.0
      %2201 = vmatpush1.msra.mxu0 0.0
      %2202 = vmatprep.subr.mxu0 0.0
      %2203 = vmatpush1.msra.mxu0 0.0
      %2204 = vmatprep.subr.mxu0 0.0
      %2205 = vmatpush1.msra.mxu0 0.0
      %2206 = vmatprep.subr.mxu0 0.0
      %2207 = vmatpush1.msra.mxu0 0.0
      %2208 = vmatprep.subr.mxu0 0.0
      %2209 = vmatpush1.msra.mxu0 %v1604
      %2210 = vmatprep.subr.mxu0 0.0
      %2211 = vmatpush2.msra.mxu0 0.0
      %2212 = vmatprep.subr.mxu0 0.0
      %2213 = vmatpush2.msra.mxu0 0.0
      %2214 = vmatprep.subr.mxu0 0.0
      %2215 = vmatpush2.msra.mxu0 0.0
      %2216 = vmatprep.subr.mxu0 0.0
      %2217 = vmatpush2.msra.mxu0 0.0
      %2218 = vmatprep.subr.mxu0 0.0
      %2219 = vmatpush2.msra.mxu0 0.0
      %2220 = vmatprep.subr.mxu0 0.0
      %2221 = vmatpush2.msra.mxu0 0.0
      %2222 = vmatprep.subr.mxu0 0.0
      %2223 = vmatpush2.msra.mxu0 0.0
      %2224 = vmatprep.subr.mxu0 0.0
      %2225 = vmatpush2.msra.mxu0 0.0
      %2226 = vmatprep.subr.mxu0 0.0
      %2227 = vmatpush2.msra.mxu0 0.0
      %2228 = vmatprep.subr.mxu0 0.0
      %2229 = vmatpush2.msra.mxu0 0.0
      %2230 = vmatprep.subr.mxu0 0.0
      %2231 = vmatpush2.msra.mxu0 0.0
      %2232 = vmatprep.subr.mxu0 0.0
      %2233 = vmatpush2.msra.mxu0 0.0
      %2234 = vmatprep.subr.mxu0 0.0
      %2235 = vmatpush2.msra.mxu0 0.0
      %2236 = vmatprep.subr.mxu0 0.0
      %2237 = vmatpush2.msra.mxu0 0.0
      %2238 = vmatprep.subr.mxu0 0.0
      %2239 = vmatpush2.msra.mxu0 0.0
      %2240 = vmatprep.subr.mxu0 0.0
      %2241 = vmatpush2.msra.mxu0 0.0
      %2242 = vmatprep.mubr.f32.mxu0 0.0
      %2243 = vmatmul.mubr.f32.gmra.mxu0 %v2176
      %v2244 = vpop.f32.mrf.mxu0
      %v2245 = vadd.f32 0.0, %v2244
      %v2246 = vpop.f32.mrf.mxu0
      %2247 = vdwg.mxu0
      %v2249 = vsel %vm1680, %v2028, 0
      %2251 = vmatprep.subr.mxu0 0.0
      %2252 = vmatpush1.msra.mxu0 0.0
      %2253 = vmatprep.subr.mxu0 0.0
      %2254 = vmatpush1.msra.mxu0 0.0
      %2255 = vmatprep.subr.mxu0 0.0
      %2256 = vmatpush1.msra.mxu0 0.0
      %2257 = vmatprep.subr.mxu0 0.0
      %2258 = vmatpush1.msra.mxu0 0.0
      %2259 = vmatprep.subr.mxu0 0.0
      %2260 = vmatpush1.msra.mxu0 0.0
      %2261 = vmatprep.subr.mxu0 0.0
      %2262 = vmatpush1.msra.mxu0 0.0
      %2263 = vmatprep.subr.mxu0 0.0
      %2264 = vmatpush1.msra.mxu0 0.0
      %2265 = vmatprep.subr.mxu0 0.0
      %2266 = vmatpush1.msra.mxu0 0.0
      %2267 = vmatprep.subr.mxu0 0.0
      %2268 = vmatpush1.msra.mxu0 0.0
      %2269 = vmatprep.subr.mxu0 0.0
      %2270 = vmatpush1.msra.mxu0 0.0
      %2271 = vmatprep.subr.mxu0 0.0
      %2272 = vmatpush1.msra.mxu0 0.0
      %2273 = vmatprep.subr.mxu0 0.0
      %2274 = vmatpush1.msra.mxu0 0.0
      %2275 = vmatprep.subr.mxu0 0.0
      %2276 = vmatpush1.msra.mxu0 0.0
      %2277 = vmatprep.subr.mxu0 0.0
      %2278 = vmatpush1.msra.mxu0 0.0
      %2279 = vmatprep.subr.mxu0 0.0
      %2280 = vmatpush1.msra.mxu0 0.0
      %2281 = vmatprep.subr.mxu0 0.0
      %2282 = vmatpush1.msra.mxu0 %v1677
      %2283 = vmatprep.subr.mxu0 0.0
      %2284 = vmatpush2.msra.mxu0 0.0
      %2285 = vmatprep.subr.mxu0 0.0
      %2286 = vmatpush2.msra.mxu0 0.0
      %2287 = vmatprep.subr.mxu0 0.0
      %2288 = vmatpush2.msra.mxu0 0.0
      %2289 = vmatprep.subr.mxu0 0.0
      %2290 = vmatpush2.msra.mxu0 0.0
      %2291 = vmatprep.subr.mxu0 0.0
      %2292 = vmatpush2.msra.mxu0 0.0
      %2293 = vmatprep.subr.mxu0 0.0
      %2294 = vmatpush2.msra.mxu0 0.0
      %2295 = vmatprep.subr.mxu0 0.0
      %2296 = vmatpush2.msra.mxu0 0.0
      %2297 = vmatprep.subr.mxu0 0.0
      %2298 = vmatpush2.msra.mxu0 0.0
      %2299 = vmatprep.subr.mxu0 0.0
      %2300 = vmatpush2.msra.mxu0 0.0
      %2301 = vmatprep.subr.mxu0 0.0
      %2302 = vmatpush2.msra.mxu0 0.0
      %2303 = vmatprep.subr.mxu0 0.0
      %2304 = vmatpush2.msra.mxu0 0.0
      %2305 = vmatprep.subr.mxu0 0.0
      %2306 = vmatpush2.msra.mxu0 0.0
      %2307 = vmatprep.subr.mxu0 0.0
      %2308 = vmatpush2.msra.mxu0 0.0
      %2309 = vmatprep.subr.mxu0 0.0
      %2310 = vmatpush2.msra.mxu0 0.0
      %2311 = vmatprep.subr.mxu0 0.0
      %2312 = vmatpush2.msra.mxu0 0.0
      %2313 = vmatprep.subr.mxu0 0.0
      %2314 = vmatpush2.msra.mxu0 0.0
      %2315 = vmatprep.mubr.f32.mxu0 0.0
      %2316 = vmatmul.mubr.f32.gmra.mxu0 %v2249
      %v2317 = vpop.f32.mrf.mxu0
      %v2318 = vadd.f32 0.0, %v2317
      %v2319 = vpop.f32.mrf.mxu0
      %2320 = vdwg.mxu0
      %v2322 = vsel %vm1680, %v2099, 0
      %2324 = vmatprep.subr.mxu0 0.0
      %2325 = vmatpush1.msra.mxu0 0.0
      %2326 = vmatprep.subr.mxu0 0.0
      %2327 = vmatpush1.msra.mxu0 0.0
      %2328 = vmatprep.subr.mxu0 0.0
      %2329 = vmatpush1.msra.mxu0 0.0
      %2330 = vmatprep.subr.mxu0 0.0
      %2331 = vmatpush1.msra.mxu0 0.0
      %2332 = vmatprep.subr.mxu0 0.0
      %2333 = vmatpush1.msra.mxu0 0.0
      %2334 = vmatprep.subr.mxu0 0.0
      %2335 = vmatpush1.msra.mxu0 0.0
      %2336 = vmatprep.subr.mxu0 0.0
      %2337 = vmatpush1.msra.mxu0 0.0
      %2338 = vmatprep.subr.mxu0 0.0
      %2339 = vmatpush1.msra.mxu0 0.0
      %2340 = vmatprep.subr.mxu0 0.0
      %2341 = vmatpush1.msra.mxu0 0.0
      %2342 = vmatprep.subr.mxu0 0.0
      %2343 = vmatpush1.msra.mxu0 0.0
      %2344 = vmatprep.subr.mxu0 0.0
      %2345 = vmatpush1.msra.mxu0 0.0
      %2346 = vmatprep.subr.mxu0 0.0
      %2347 = vmatpush1.msra.mxu0 0.0
      %2348 = vmatprep.subr.mxu0 0.0
      %2349 = vmatpush1.msra.mxu0 0.0
      %2350 = vmatprep.subr.mxu0 0.0
      %2351 = vmatpush1.msra.mxu0 0.0
      %2352 = vmatprep.subr.mxu0 0.0
      %2353 = vmatpush1.msra.mxu0 0.0
      %2354 = vmatprep.subr.mxu0 0.0
      %2355 = vmatpush1.msra.mxu0 %v724
      %2356 = vmatprep.subr.mxu0 0.0
      %2357 = vmatpush2.msra.mxu0 0.0
      %2358 = vmatprep.subr.mxu0 0.0
      %2359 = vmatpush2.msra.mxu0 0.0
      %2360 = vmatprep.subr.mxu0 0.0
      %2361 = vmatpush2.msra.mxu0 0.0
      %2362 = vmatprep.subr.mxu0 0.0
      %2363 = vmatpush2.msra.mxu0 0.0
      %2364 = vmatprep.subr.mxu0 0.0
      %2365 = vmatpush2.msra.mxu0 0.0
      %2366 = vmatprep.subr.mxu0 0.0
      %2367 = vmatpush2.msra.mxu0 0.0
      %2368 = vmatprep.subr.mxu0 0.0
      %2369 = vmatpush2.msra.mxu0 0.0
      %2370 = vmatprep.subr.mxu0 0.0
      %2371 = vmatpush2.msra.mxu0 0.0
      %2372 = vmatprep.subr.mxu0 0.0
      %2373 = vmatpush2.msra.mxu0 0.0
      %2374 = vmatprep.subr.mxu0 0.0
      %2375 = vmatpush2.msra.mxu0 0.0
      %2376 = vmatprep.subr.mxu0 0.0
      %2377 = vmatpush2.msra.mxu0 0.0
      %2378 = vmatprep.subr.mxu0 0.0
      %2379 = vmatpush2.msra.mxu0 0.0
      %2380 = vmatprep.subr.mxu0 0.0
      %2381 = vmatpush2.msra.mxu0 0.0
      %2382 = vmatprep.subr.mxu0 0.0
      %2383 = vmatpush2.msra.mxu0 0.0
      %2384 = vmatprep.subr.mxu0 0.0
      %2385 = vmatpush2.msra.mxu0 0.0
      %2386 = vmatprep.subr.mxu0 0.0
      %2387 = vmatpush2.msra.mxu0 0.0
      %2388 = vmatprep.mubr.f32.mxu0 0.0
      %2389 = vmatmul.mubr.f32.gmra.mxu0 %v2322
      %v2390 = vpop.f32.mrf.mxu0
      %v2391 = vadd.f32 0.0, %v2390
      %v2392 = vpop.f32.mrf.mxu0
      %2393 = vdwg.mxu0
      %v2395 = vsel %vm1680, %v2172, 0
      %2397 = vmatprep.subr.mxu0 0.0
      %2398 = vmatpush1.msra.mxu0 0.0
      %2399 = vmatprep.subr.mxu0 0.0
      %2400 = vmatpush1.msra.mxu0 0.0
      %2401 = vmatprep.subr.mxu0 0.0
      %2402 = vmatpush1.msra.mxu0 0.0
      %2403 = vmatprep.subr.mxu0 0.0
      %2404 = vmatpush1.msra.mxu0 0.0
      %2405 = vmatprep.subr.mxu0 0.0
      %2406 = vmatpush1.msra.mxu0 0.0
      %2407 = vmatprep.subr.mxu0 0.0
      %2408 = vmatpush1.msra.mxu0 0.0
      %2409 = vmatprep.subr.mxu0 0.0
      %2410 = vmatpush1.msra.mxu0 0.0
      %2411 = vmatprep.subr.mxu0 0.0
      %2412 = vmatpush1.msra.mxu0 0.0
      %2413 = vmatprep.subr.mxu0 0.0
      %2414 = vmatpush1.msra.mxu0 0.0
      %2415 = vmatprep.subr.mxu0 0.0
      %2416 = vmatpush1.msra.mxu0 0.0
      %2417 = vmatprep.subr.mxu0 0.0
      %2418 = vmatpush1.msra.mxu0 0.0
      %2419 = vmatprep.subr.mxu0 0.0
      %2420 = vmatpush1.msra.mxu0 0.0
      %2421 = vmatprep.subr.mxu0 0.0
      %2422 = vmatpush1.msra.mxu0 0.0
      %2423 = vmatprep.subr.mxu0 0.0
      %2424 = vmatpush1.msra.mxu0 0.0
      %2425 = vmatprep.subr.mxu0 0.0
      %2426 = vmatpush1.msra.mxu0 0.0
      %2427 = vmatprep.subr.mxu0 0.0
      %2428 = vmatpush1.msra.mxu0 %v725
      %2429 = vmatprep.subr.mxu0 0.0
      %2430 = vmatpush2.msra.mxu0 0.0
      %2431 = vmatprep.subr.mxu0 0.0
      %2432 = vmatpush2.msra.mxu0 0.0
      %2433 = vmatprep.subr.mxu0 0.0
      %2434 = vmatpush2.msra.mxu0 0.0
      %2435 = vmatprep.subr.mxu0 0.0
      %2436 = vmatpush2.msra.mxu0 0.0
      %2437 = vmatprep.subr.mxu0 0.0
      %2438 = vmatpush2.msra.mxu0 0.0
      %2439 = vmatprep.subr.mxu0 0.0
      %2440 = vmatpush2.msra.mxu0 0.0
      %2441 = vmatprep.subr.mxu0 0.0
      %2442 = vmatpush2.msra.mxu0 0.0
      %2443 = vmatprep.subr.mxu0 0.0
      %2444 = vmatpush2.msra.mxu0 0.0
      %2445 = vmatprep.subr.mxu0 0.0
      %2446 = vmatpush2.msra.mxu0 0.0
      %2447 = vmatprep.subr.mxu0 0.0
      %2448 = vmatpush2.msra.mxu0 0.0
      %2449 = vmatprep.subr.mxu0 0.0
      %2450 = vmatpush2.msra.mxu0 0.0
      %2451 = vmatprep.subr.mxu0 0.0
      %2452 = vmatpush2.msra.mxu0 0.0
      %2453 = vmatprep.subr.mxu0 0.0
      %2454 = vmatpush2.msra.mxu0 0.0
      %2455 = vmatprep.subr.mxu0 0.0
      %2456 = vmatpush2.msra.mxu0 0.0
      %2457 = vmatprep.subr.mxu0 0.0
      %2458 = vmatpush2.msra.mxu0 0.0
      %2459 = vmatprep.subr.mxu0 0.0
      %2460 = vmatpush2.msra.mxu0 0.0
      %2461 = vmatprep.mubr.f32.mxu0 0.0
      %2462 = vmatmul.mubr.f32.gmra.mxu0 %v2395
      %v2463 = vpop.f32.mrf.mxu0
      %v2464 = vadd.f32 0.0, %v2463
      %v2465 = vpop.f32.mrf.mxu0
      %2466 = vdwg.mxu0
      %v2468 = vsel %vm1680, %v2245, 0
      %2470 = vmatprep.subr.mxu0 0.0
      %2471 = vmatpush1.msra.mxu0 0.0
      %2472 = vmatprep.subr.mxu0 0.0
      %2473 = vmatpush1.msra.mxu0 0.0
      %2474 = vmatprep.subr.mxu0 0.0
      %2475 = vmatpush1.msra.mxu0 0.0
      %2476 = vmatprep.subr.mxu0 0.0
      %2477 = vmatpush1.msra.mxu0 0.0
      %2478 = vmatprep.subr.mxu0 0.0
      %2479 = vmatpush1.msra.mxu0 0.0
      %2480 = vmatprep.subr.mxu0 0.0
      %2481 = vmatpush1.msra.mxu0 0.0
      %2482 = vmatprep.subr.mxu0 0.0
      %2483 = vmatpush1.msra.mxu0 0.0
      %2484 = vmatprep.subr.mxu0 0.0
      %2485 = vmatpush1.msra.mxu0 0.0
      %2486 = vmatprep.subr.mxu0 0.0
      %2487 = vmatpush1.msra.mxu0 0.0
      %2488 = vmatprep.subr.mxu0 0.0
      %2489 = vmatpush1.msra.mxu0 0.0
      %2490 = vmatprep.subr.mxu0 0.0
      %2491 = vmatpush1.msra.mxu0 0.0
      %2492 = vmatprep.subr.mxu0 0.0
      %2493 = vmatpush1.msra.mxu0 0.0
      %2494 = vmatprep.subr.mxu0 0.0
      %2495 = vmatpush1.msra.mxu0 0.0
      %2496 = vmatprep.subr.mxu0 0.0
      %2497 = vmatpush1.msra.mxu0 0.0
      %2498 = vmatprep.subr.mxu0 0.0
      %2499 = vmatpush1.msra.mxu0 0.0
      %2500 = vmatprep.subr.mxu0 0.0
      %2501 = vmatpush1.msra.mxu0 %v726
      %2502 = vmatprep.subr.mxu0 0.0
      %2503 = vmatpush2.msra.mxu0 0.0
      %2504 = vmatprep.subr.mxu0 0.0
      %2505 = vmatpush2.msra.mxu0 0.0
      %2506 = vmatprep.subr.mxu0 0.0
      %2507 = vmatpush2.msra.mxu0 0.0
      %2508 = vmatprep.subr.mxu0 0.0
      %2509 = vmatpush2.msra.mxu0 0.0
      %2510 = vmatprep.subr.mxu0 0.0
      %2511 = vmatpush2.msra.mxu0 0.0
      %2512 = vmatprep.subr.mxu0 0.0
      %2513 = vmatpush2.msra.mxu0 0.0
      %2514 = vmatprep.subr.mxu0 0.0
      %2515 = vmatpush2.msra.mxu0 0.0
      %2516 = vmatprep.subr.mxu0 0.0
      %2517 = vmatpush2.msra.mxu0 0.0
      %2518 = vmatprep.subr.mxu0 0.0
      %2519 = vmatpush2.msra.mxu0 0.0
      %2520 = vmatprep.subr.mxu0 0.0
      %2521 = vmatpush2.msra.mxu0 0.0
      %2522 = vmatprep.subr.mxu0 0.0
      %2523 = vmatpush2.msra.mxu0 0.0
      %2524 = vmatprep.subr.mxu0 0.0
      %2525 = vmatpush2.msra.mxu0 0.0
      %2526 = vmatprep.subr.mxu0 0.0
      %2527 = vmatpush2.msra.mxu0 0.0
      %2528 = vmatprep.subr.mxu0 0.0
      %2529 = vmatpush2.msra.mxu0 0.0
      %2530 = vmatprep.subr.mxu0 0.0
      %2531 = vmatpush2.msra.mxu0 0.0
      %2532 = vmatprep.subr.mxu0 0.0
      %2533 = vmatpush2.msra.mxu0 0.0
      %2534 = vmatprep.mubr.f32.mxu0 0.0
      %2535 = vmatmul.mubr.f32.gmra.mxu0 %v2468
      %v2536 = vpop.f32.mrf.mxu0
      %v2537 = vadd.f32 0.0, %v2536
      %v2538 = vpop.f32.mrf.mxu0
      %2539 = vdwg.mxu0
      %v2541 = vsel %vm1680, %v2318, 0
      %2543 = vmatprep.subr.mxu0 0.0
      %2544 = vmatpush1.msra.mxu0 0.0
      %2545 = vmatprep.subr.mxu0 0.0
      %2546 = vmatpush1.msra.mxu0 0.0
      %2547 = vmatprep.subr.mxu0 0.0
      %2548 = vmatpush1.msra.mxu0 0.0
      %2549 = vmatprep.subr.mxu0 0.0
      %2550 = vmatpush1.msra.mxu0 0.0
      %2551 = vmatprep.subr.mxu0 0.0
      %2552 = vmatpush1.msra.mxu0 0.0
      %2553 = vmatprep.subr.mxu0 0.0
      %2554 = vmatpush1.msra.mxu0 0.0
      %2555 = vmatprep.subr.mxu0 0.0
      %2556 = vmatpush1.msra.mxu0 0.0
      %2557 = vmatprep.subr.mxu0 0.0
      %2558 = vmatpush1.msra.mxu0 0.0
      %2559 = vmatprep.subr.mxu0 0.0
      %2560 = vmatpush1.msra.mxu0 0.0
      %2561 = vmatprep.subr.mxu0 0.0
      %2562 = vmatpush1.msra.mxu0 0.0
      %2563 = vmatprep.subr.mxu0 0.0
      %2564 = vmatpush1.msra.mxu0 0.0
      %2565 = vmatprep.subr.mxu0 0.0
      %2566 = vmatpush1.msra.mxu0 0.0
      %2567 = vmatprep.subr.mxu0 0.0
      %2568 = vmatpush1.msra.mxu0 0.0
      %2569 = vmatprep.subr.mxu0 0.0
      %2570 = vmatpush1.msra.mxu0 0.0
      %2571 = vmatprep.subr.mxu0 0.0
      %2572 = vmatpush1.msra.mxu0 0.0
      %2573 = vmatprep.subr.mxu0 0.0
      %2574 = vmatpush1.msra.mxu0 %v727
      %2575 = vmatprep.subr.mxu0 0.0
      %2576 = vmatpush2.msra.mxu0 0.0
      %2577 = vmatprep.subr.mxu0 0.0
      %2578 = vmatpush2.msra.mxu0 0.0
      %2579 = vmatprep.subr.mxu0 0.0
      %2580 = vmatpush2.msra.mxu0 0.0
      %2581 = vmatprep.subr.mxu0 0.0
      %2582 = vmatpush2.msra.mxu0 0.0
      %2583 = vmatprep.subr.mxu0 0.0
      %2584 = vmatpush2.msra.mxu0 0.0
      %2585 = vmatprep.subr.mxu0 0.0
      %2586 = vmatpush2.msra.mxu0 0.0
      %2587 = vmatprep.subr.mxu0 0.0
      %2588 = vmatpush2.msra.mxu0 0.0
      %2589 = vmatprep.subr.mxu0 0.0
      %2590 = vmatpush2.msra.mxu0 0.0
      %2591 = vmatprep.subr.mxu0 0.0
      %2592 = vmatpush2.msra.mxu0 0.0
      %2593 = vmatprep.subr.mxu0 0.0
      %2594 = vmatpush2.msra.mxu0 0.0
      %2595 = vmatprep.subr.mxu0 0.0
      %2596 = vmatpush2.msra.mxu0 0.0
      %2597 = vmatprep.subr.mxu0 0.0
      %2598 = vmatpush2.msra.mxu0 0.0
      %2599 = vmatprep.subr.mxu0 0.0
      %2600 = vmatpush2.msra.mxu0 0.0
      %2601 = vmatprep.subr.mxu0 0.0
      %2602 = vmatpush2.msra.mxu0 0.0
      %2603 = vmatprep.subr.mxu0 0.0
      %2604 = vmatpush2.msra.mxu0 0.0
      %2605 = vmatprep.subr.mxu0 0.0
      %2606 = vmatpush2.msra.mxu0 0.0
      %2607 = vmatprep.mubr.f32.mxu0 0.0
      %2608 = vmatmul.mubr.f32.gmra.mxu0 %v2541
      %v2609 = vpop.f32.mrf.mxu0
      %v2610 = vadd.f32 0.0, %v2609
      %v2611 = vpop.f32.mrf.mxu0
      %2612 = vdwg.mxu0
      %v2613 = vsel %vm407, %v2391, 0.0
      %v2614 = vsel %vm407, %v2464, 0.0
      %v2615 = vadd.f32 %v2613, %v2614
      %v2616 = vsel %vm407, %v2537, 0.0
      %v2617 = vadd.f32 %v2615, %v2616
      %v2618 = vsel %vm407, %v2610, 0.0
      %v2619 = vadd.f32 %v2617, %v2618
      %v2620 = vlaneseq
      %v2621 = vshrl.u32 %v2620, 7
      %v2622 = vsub.s32 0, %v2621
      %v2623 = vrot.slane %v728, %v2622
      %v2624 = vadd.f32 %v2619, %v2623
      %v2625 = vadd.f32 %v668, %v2624
      %v2626 = vld [vmem:[%s3 + $0x100] sm:$0x1]
      %v2627 = vld [vmem:[%s3 + $0x108] sm:$0x1]
      %v2628 = vsel %vm407, %v2625, 0.0
      %2629 = vadd.xlane.f32.xlu0 %v2628
      %v2630 = vpop.xlane.xlu0 %2629
      %v2631 = vmul.f32 %v2630, %v674
      %v2632 = vsub.f32 %v2625, %v2631
      %v2633 = vmul.f32 %v2632, %v2632
      %v2634 = vsel %vm407, %v2633, 0.0
      %2635 = vadd.xlane.f32.xlu0 %v2634
      %v2636 = vpop.xlane.xlu0 %2635
      %v2637 = vmul.f32 %v2636, %v674
      %v2638 = vadd.f32 %v2637, 1e-05
      %v2639 = vrsqrt.pop %v2638
      %v2640 = vmul.f32 %v2632, %v2639
      %v2641 = vlaneseq
      %v2642 = vshrl.u32 %v2641, 7
      %v2643 = vsub.s32 0, %v2642
      %v2644 = vrot.slane %v2626, %v2643
      %v2645 = vmul.f32 %v2640, %v2644
      %v2646 = vlaneseq
      %v2647 = vshrl.u32 %v2646, 7
      %v2648 = vsub.s32 0, %v2647
      %v2649 = vrot.slane %v2627, %v2648
      %v2650 = vadd.f32 %v2645, %v2649
      %s2651 = scalar_lea.vmem %s5, 128
      %v2652 = vld [vmem:[%s2651] sm:$0xff]
      %v2653 = vld [vmem:[%s2651 + $0x8] sm:$0xff]
      %v2654 = vld [vmem:[%s2651 + $0x10] sm:$0xff]
      %v2655 = vld [vmem:[%s2651 + $0x18] sm:$0xff]
      %s2656 = scalar_lea.vmem %s6, 12
      %v2657 = vld [vmem:[%s2656] sm:$0x1]
      %v2658 = vld [vmem:[%s2656 + $0x1] sm:$0x1]
      %v2659 = vld [vmem:[%s2656 + $0x2] sm:$0x1]
      %v2660 = vld [vmem:[%s2656 + $0x3] sm:$0x1]
      %s2661 = scalar_lea.vmem %s5, 160
      %v2662 = vld [vmem:[%s2661] sm:$0xff]
      %v2663 = vld [vmem:[%s2661 + $0x8] sm:$0xff]
      %v2664 = vld [vmem:[%s2661 + $0x10] sm:$0xff]
      %v2665 = vld [vmem:[%s2661 + $0x18] sm:$0xff]
      %s2666 = scalar_lea.vmem %s6, 16
      %v2667 = vld [vmem:[%s2666] sm:$0x1]
      %v2668 = vld [vmem:[%s2666 + $0x1] sm:$0x1]
      %v2669 = vld [vmem:[%s2666 + $0x2] sm:$0x1]
      %v2670 = vld [vmem:[%s2666 + $0x3] sm:$0x1]
      %s2671 = scalar_lea.vmem %s5, 192
      %v2672 = vld [vmem:[%s2671] sm:$0xff]
      %v2673 = vld [vmem:[%s2671 + $0x8] sm:$0xff]
      %v2674 = vld [vmem:[%s2671 + $0x10] sm:$0xff]
      %v2675 = vld [vmem:[%s2671 + $0x18] sm:$0xff]
      %s2676 = scalar_lea.vmem %s6, 20
      %v2677 = vld [vmem:[%s2676] sm:$0x1]
      %v2678 = vld [vmem:[%s2676 + $0x1] sm:$0x1]
      %v2679 = vld [vmem:[%s2676 + $0x2] sm:$0x1]
      %v2680 = vld [vmem:[%s2676 + $0x3] sm:$0x1]
      %s2681 = scalar_lea.vmem %s5, 224
      %v2682 = vld [vmem:[%s2681] sm:$0xff]
      %v2683 = vld [vmem:[%s2681 + $0x8] sm:$0xff]
      %v2684 = vld [vmem:[%s2681 + $0x10] sm:$0xff]
      %v2685 = vld [vmem:[%s2681 + $0x18] sm:$0xff]
      %v2686 = vld [vmem:[%s3 + $0x128] sm:$0x1]
      %v2691 = vlaneseq
      %v2692 = vshrl.u32 %v2691, 7
      %v2693 = vsub.s32 0, %v2692
      %v2694 = vrot.slane %v2657, %v2693
      %v2695 = vlaneseq
      %v2696 = vshrl.u32 %v2695, 7
      %v2697 = vsub.s32 0, %v2696
      %v2698 = vrot.slane %v2658, %v2697
      %v2699 = vlaneseq
      %v2700 = vshrl.u32 %v2699, 7
      %v2701 = vsub.s32 0, %v2700
      %v2702 = vrot.slane %v2659, %v2701
      %v2703 = vlaneseq
      %v2704 = vshrl.u32 %v2703, 7
      %v2705 = vsub.s32 0, %v2704
      %v2706 = vrot.slane %v2660, %v2705
      %v2712 = vsel %vm407, %v2650, 0
      %v2715 = vsel %vm407, %v2652, 0
      %2717 = vmatprep.subr.mxu0 0.0
      %2718 = vmatpush1.xpose.msra.mxu0 0.0
      %2719 = vmatprep.subr.mxu0 0.0
      %2720 = vmatpush1.xpose.msra.mxu0 0.0
      %2721 = vmatprep.subr.mxu0 0.0
      %2722 = vmatpush1.xpose.msra.mxu0 0.0
      %2723 = vmatprep.subr.mxu0 0.0
      %2724 = vmatpush1.xpose.msra.mxu0 0.0
      %2725 = vmatprep.subr.mxu0 0.0
      %2726 = vmatpush1.xpose.msra.mxu0 0.0
      %2727 = vmatprep.subr.mxu0 0.0
      %2728 = vmatpush1.xpose.msra.mxu0 0.0
      %2729 = vmatprep.subr.mxu0 0.0
      %2730 = vmatpush1.xpose.msra.mxu0 0.0
      %2731 = vmatprep.subr.mxu0 0.0
      %2732 = vmatpush1.xpose.msra.mxu0 0.0
      %2733 = vmatprep.subr.mxu0 0.0
      %2734 = vmatpush1.xpose.msra.mxu0 0.0
      %2735 = vmatprep.subr.mxu0 0.0
      %2736 = vmatpush1.xpose.msra.mxu0 0.0
      %2737 = vmatprep.subr.mxu0 0.0
      %2738 = vmatpush1.xpose.msra.mxu0 0.0
      %2739 = vmatprep.subr.mxu0 0.0
      %2740 = vmatpush1.xpose.msra.mxu0 0.0
      %2741 = vmatprep.subr.mxu0 0.0
      %2742 = vmatpush1.xpose.msra.mxu0 0.0
      %2743 = vmatprep.subr.mxu0 0.0
      %2744 = vmatpush1.xpose.msra.mxu0 0.0
      %2745 = vmatprep.subr.mxu0 0.0
      %2746 = vmatpush1.xpose.msra.mxu0 0.0
      %2747 = vmatprep.subr.mxu0 0.0
      %2748 = vmatpush1.xpose.msra.mxu0 %v2715
      %2749 = vmatprep.subr.mxu0 0.0
      %2750 = vmatpush2.xpose.msra.mxu0 0.0
      %2751 = vmatprep.subr.mxu0 0.0
      %2752 = vmatpush2.xpose.msra.mxu0 0.0
      %2753 = vmatprep.subr.mxu0 0.0
      %2754 = vmatpush2.xpose.msra.mxu0 0.0
      %2755 = vmatprep.subr.mxu0 0.0
      %2756 = vmatpush2.xpose.msra.mxu0 0.0
      %2757 = vmatprep.subr.mxu0 0.0
      %2758 = vmatpush2.xpose.msra.mxu0 0.0
      %2759 = vmatprep.subr.mxu0 0.0
      %2760 = vmatpush2.xpose.msra.mxu0 0.0
      %2761 = vmatprep.subr.mxu0 0.0
      %2762 = vmatpush2.xpose.msra.mxu0 0.0
      %2763 = vmatprep.subr.mxu0 0.0
      %2764 = vmatpush2.xpose.msra.mxu0 0.0
      %2765 = vmatprep.subr.mxu0 0.0
      %2766 = vmatpush2.xpose.msra.mxu0 0.0
      %2767 = vmatprep.subr.mxu0 0.0
      %2768 = vmatpush2.xpose.msra.mxu0 0.0
      %2769 = vmatprep.subr.mxu0 0.0
      %2770 = vmatpush2.xpose.msra.mxu0 0.0
      %2771 = vmatprep.subr.mxu0 0.0
      %2772 = vmatpush2.xpose.msra.mxu0 0.0
      %2773 = vmatprep.subr.mxu0 0.0
      %2774 = vmatpush2.xpose.msra.mxu0 0.0
      %2775 = vmatprep.subr.mxu0 0.0
      %2776 = vmatpush2.xpose.msra.mxu0 0.0
      %2777 = vmatprep.subr.mxu0 0.0
      %2778 = vmatpush2.xpose.msra.mxu0 0.0
      %2779 = vmatprep.subr.mxu0 0.0
      %2780 = vmatpush2.xpose.msra.mxu0 0.0
      %2781 = vmatprep.mubr.f32.mxu0 0.0
      %2782 = vmatmul.mubr.f32.gmra.mxu0 %v2712
      %v2783 = vpop.f32.mrf.mxu0
      %v2784 = vadd.f32 %v2694, %v2783
      %v2785 = vpop.f32.mrf.mxu0
      %2786 = vdwg.mxu0
      %v2788 = vsel %vm407, %v2653, 0
      %2790 = vmatprep.subr.mxu0 0.0
      %2791 = vmatpush1.xpose.msra.mxu0 0.0
      %2792 = vmatprep.subr.mxu0 0.0
      %2793 = vmatpush1.xpose.msra.mxu0 0.0
      %2794 = vmatprep.subr.mxu0 0.0
      %2795 = vmatpush1.xpose.msra.mxu0 0.0
      %2796 = vmatprep.subr.mxu0 0.0
      %2797 = vmatpush1.xpose.msra.mxu0 0.0
      %2798 = vmatprep.subr.mxu0 0.0
      %2799 = vmatpush1.xpose.msra.mxu0 0.0
      %2800 = vmatprep.subr.mxu0 0.0
      %2801 = vmatpush1.xpose.msra.mxu0 0.0
      %2802 = vmatprep.subr.mxu0 0.0
      %2803 = vmatpush1.xpose.msra.mxu0 0.0
      %2804 = vmatprep.subr.mxu0 0.0
      %2805 = vmatpush1.xpose.msra.mxu0 0.0
      %2806 = vmatprep.subr.mxu0 0.0
      %2807 = vmatpush1.xpose.msra.mxu0 0.0
      %2808 = vmatprep.subr.mxu0 0.0
      %2809 = vmatpush1.xpose.msra.mxu0 0.0
      %2810 = vmatprep.subr.mxu0 0.0
      %2811 = vmatpush1.xpose.msra.mxu0 0.0
      %2812 = vmatprep.subr.mxu0 0.0
      %2813 = vmatpush1.xpose.msra.mxu0 0.0
      %2814 = vmatprep.subr.mxu0 0.0
      %2815 = vmatpush1.xpose.msra.mxu0 0.0
      %2816 = vmatprep.subr.mxu0 0.0
      %2817 = vmatpush1.xpose.msra.mxu0 0.0
      %2818 = vmatprep.subr.mxu0 0.0
      %2819 = vmatpush1.xpose.msra.mxu0 0.0
      %2820 = vmatprep.subr.mxu0 0.0
      %2821 = vmatpush1.xpose.msra.mxu0 %v2788
      %2822 = vmatprep.subr.mxu0 0.0
      %2823 = vmatpush2.xpose.msra.mxu0 0.0
      %2824 = vmatprep.subr.mxu0 0.0
      %2825 = vmatpush2.xpose.msra.mxu0 0.0
      %2826 = vmatprep.subr.mxu0 0.0
      %2827 = vmatpush2.xpose.msra.mxu0 0.0
      %2828 = vmatprep.subr.mxu0 0.0
      %2829 = vmatpush2.xpose.msra.mxu0 0.0
      %2830 = vmatprep.subr.mxu0 0.0
      %2831 = vmatpush2.xpose.msra.mxu0 0.0
      %2832 = vmatprep.subr.mxu0 0.0
      %2833 = vmatpush2.xpose.msra.mxu0 0.0
      %2834 = vmatprep.subr.mxu0 0.0
      %2835 = vmatpush2.xpose.msra.mxu0 0.0
      %2836 = vmatprep.subr.mxu0 0.0
      %2837 = vmatpush2.xpose.msra.mxu0 0.0
      %2838 = vmatprep.subr.mxu0 0.0
      %2839 = vmatpush2.xpose.msra.mxu0 0.0
      %2840 = vmatprep.subr.mxu0 0.0
      %2841 = vmatpush2.xpose.msra.mxu0 0.0
      %2842 = vmatprep.subr.mxu0 0.0
      %2843 = vmatpush2.xpose.msra.mxu0 0.0
      %2844 = vmatprep.subr.mxu0 0.0
      %2845 = vmatpush2.xpose.msra.mxu0 0.0
      %2846 = vmatprep.subr.mxu0 0.0
      %2847 = vmatpush2.xpose.msra.mxu0 0.0
      %2848 = vmatprep.subr.mxu0 0.0
      %2849 = vmatpush2.xpose.msra.mxu0 0.0
      %2850 = vmatprep.subr.mxu0 0.0
      %2851 = vmatpush2.xpose.msra.mxu0 0.0
      %2852 = vmatprep.subr.mxu0 0.0
      %2853 = vmatpush2.xpose.msra.mxu0 0.0
      %2854 = vmatprep.mubr.f32.mxu0 0.0
      %2855 = vmatmul.mubr.f32.gmra.mxu0 %v2712
      %v2856 = vpop.f32.mrf.mxu0
      %v2857 = vadd.f32 %v2698, %v2856
      %v2858 = vpop.f32.mrf.mxu0
      %2859 = vdwg.mxu0
      %v2861 = vsel %vm407, %v2654, 0
      %2863 = vmatprep.subr.mxu0 0.0
      %2864 = vmatpush1.xpose.msra.mxu0 0.0
      %2865 = vmatprep.subr.mxu0 0.0
      %2866 = vmatpush1.xpose.msra.mxu0 0.0
      %2867 = vmatprep.subr.mxu0 0.0
      %2868 = vmatpush1.xpose.msra.mxu0 0.0
      %2869 = vmatprep.subr.mxu0 0.0
      %2870 = vmatpush1.xpose.msra.mxu0 0.0
      %2871 = vmatprep.subr.mxu0 0.0
      %2872 = vmatpush1.xpose.msra.mxu0 0.0
      %2873 = vmatprep.subr.mxu0 0.0
      %2874 = vmatpush1.xpose.msra.mxu0 0.0
      %2875 = vmatprep.subr.mxu0 0.0
      %2876 = vmatpush1.xpose.msra.mxu0 0.0
      %2877 = vmatprep.subr.mxu0 0.0
      %2878 = vmatpush1.xpose.msra.mxu0 0.0
      %2879 = vmatprep.subr.mxu0 0.0
      %2880 = vmatpush1.xpose.msra.mxu0 0.0
      %2881 = vmatprep.subr.mxu0 0.0
      %2882 = vmatpush1.xpose.msra.mxu0 0.0
      %2883 = vmatprep.subr.mxu0 0.0
      %2884 = vmatpush1.xpose.msra.mxu0 0.0
      %2885 = vmatprep.subr.mxu0 0.0
      %2886 = vmatpush1.xpose.msra.mxu0 0.0
      %2887 = vmatprep.subr.mxu0 0.0
      %2888 = vmatpush1.xpose.msra.mxu0 0.0
      %2889 = vmatprep.subr.mxu0 0.0
      %2890 = vmatpush1.xpose.msra.mxu0 0.0
      %2891 = vmatprep.subr.mxu0 0.0
      %2892 = vmatpush1.xpose.msra.mxu0 0.0
      %2893 = vmatprep.subr.mxu0 0.0
      %2894 = vmatpush1.xpose.msra.mxu0 %v2861
      %2895 = vmatprep.subr.mxu0 0.0
      %2896 = vmatpush2.xpose.msra.mxu0 0.0
      %2897 = vmatprep.subr.mxu0 0.0
      %2898 = vmatpush2.xpose.msra.mxu0 0.0
      %2899 = vmatprep.subr.mxu0 0.0
      %2900 = vmatpush2.xpose.msra.mxu0 0.0
      %2901 = vmatprep.subr.mxu0 0.0
      %2902 = vmatpush2.xpose.msra.mxu0 0.0
      %2903 = vmatprep.subr.mxu0 0.0
      %2904 = vmatpush2.xpose.msra.mxu0 0.0
      %2905 = vmatprep.subr.mxu0 0.0
      %2906 = vmatpush2.xpose.msra.mxu0 0.0
      %2907 = vmatprep.subr.mxu0 0.0
      %2908 = vmatpush2.xpose.msra.mxu0 0.0
      %2909 = vmatprep.subr.mxu0 0.0
      %2910 = vmatpush2.xpose.msra.mxu0 0.0
      %2911 = vmatprep.subr.mxu0 0.0
      %2912 = vmatpush2.xpose.msra.mxu0 0.0
      %2913 = vmatprep.subr.mxu0 0.0
      %2914 = vmatpush2.xpose.msra.mxu0 0.0
      %2915 = vmatprep.subr.mxu0 0.0
      %2916 = vmatpush2.xpose.msra.mxu0 0.0
      %2917 = vmatprep.subr.mxu0 0.0
      %2918 = vmatpush2.xpose.msra.mxu0 0.0
      %2919 = vmatprep.subr.mxu0 0.0
      %2920 = vmatpush2.xpose.msra.mxu0 0.0
      %2921 = vmatprep.subr.mxu0 0.0
      %2922 = vmatpush2.xpose.msra.mxu0 0.0
      %2923 = vmatprep.subr.mxu0 0.0
      %2924 = vmatpush2.xpose.msra.mxu0 0.0
      %2925 = vmatprep.subr.mxu0 0.0
      %2926 = vmatpush2.xpose.msra.mxu0 0.0
      %2927 = vmatprep.mubr.f32.mxu0 0.0
      %2928 = vmatmul.mubr.f32.gmra.mxu0 %v2712
      %v2929 = vpop.f32.mrf.mxu0
      %v2930 = vadd.f32 %v2702, %v2929
      %v2931 = vpop.f32.mrf.mxu0
      %2932 = vdwg.mxu0
      %v2934 = vsel %vm407, %v2655, 0
      %2936 = vmatprep.subr.mxu0 0.0
      %2937 = vmatpush1.xpose.msra.mxu0 0.0
      %2938 = vmatprep.subr.mxu0 0.0
      %2939 = vmatpush1.xpose.msra.mxu0 0.0
      %2940 = vmatprep.subr.mxu0 0.0
      %2941 = vmatpush1.xpose.msra.mxu0 0.0
      %2942 = vmatprep.subr.mxu0 0.0
      %2943 = vmatpush1.xpose.msra.mxu0 0.0
      %2944 = vmatprep.subr.mxu0 0.0
      %2945 = vmatpush1.xpose.msra.mxu0 0.0
      %2946 = vmatprep.subr.mxu0 0.0
      %2947 = vmatpush1.xpose.msra.mxu0 0.0
      %2948 = vmatprep.subr.mxu0 0.0
      %2949 = vmatpush1.xpose.msra.mxu0 0.0
      %2950 = vmatprep.subr.mxu0 0.0
      %2951 = vmatpush1.xpose.msra.mxu0 0.0
      %2952 = vmatprep.subr.mxu0 0.0
      %2953 = vmatpush1.xpose.msra.mxu0 0.0
      %2954 = vmatprep.subr.mxu0 0.0
      %2955 = vmatpush1.xpose.msra.mxu0 0.0
      %2956 = vmatprep.subr.mxu0 0.0
      %2957 = vmatpush1.xpose.msra.mxu0 0.0
      %2958 = vmatprep.subr.mxu0 0.0
      %2959 = vmatpush1.xpose.msra.mxu0 0.0
      %2960 = vmatprep.subr.mxu0 0.0
      %2961 = vmatpush1.xpose.msra.mxu0 0.0
      %2962 = vmatprep.subr.mxu0 0.0
      %2963 = vmatpush1.xpose.msra.mxu0 0.0
      %2964 = vmatprep.subr.mxu0 0.0
      %2965 = vmatpush1.xpose.msra.mxu0 0.0
      %2966 = vmatprep.subr.mxu0 0.0
      %2967 = vmatpush1.xpose.msra.mxu0 %v2934
      %2968 = vmatprep.subr.mxu0 0.0
      %2969 = vmatpush2.xpose.msra.mxu0 0.0
      %2970 = vmatprep.subr.mxu0 0.0
      %2971 = vmatpush2.xpose.msra.mxu0 0.0
      %2972 = vmatprep.subr.mxu0 0.0
      %2973 = vmatpush2.xpose.msra.mxu0 0.0
      %2974 = vmatprep.subr.mxu0 0.0
      %2975 = vmatpush2.xpose.msra.mxu0 0.0
      %2976 = vmatprep.subr.mxu0 0.0
      %2977 = vmatpush2.xpose.msra.mxu0 0.0
      %2978 = vmatprep.subr.mxu0 0.0
      %2979 = vmatpush2.xpose.msra.mxu0 0.0
      %2980 = vmatprep.subr.mxu0 0.0
      %2981 = vmatpush2.xpose.msra.mxu0 0.0
      %2982 = vmatprep.subr.mxu0 0.0
      %2983 = vmatpush2.xpose.msra.mxu0 0.0
      %2984 = vmatprep.subr.mxu0 0.0
      %2985 = vmatpush2.xpose.msra.mxu0 0.0
      %2986 = vmatprep.subr.mxu0 0.0
      %2987 = vmatpush2.xpose.msra.mxu0 0.0
      %2988 = vmatprep.subr.mxu0 0.0
      %2989 = vmatpush2.xpose.msra.mxu0 0.0
      %2990 = vmatprep.subr.mxu0 0.0
      %2991 = vmatpush2.xpose.msra.mxu0 0.0
      %2992 = vmatprep.subr.mxu0 0.0
      %2993 = vmatpush2.xpose.msra.mxu0 0.0
      %2994 = vmatprep.subr.mxu0 0.0
      %2995 = vmatpush2.xpose.msra.mxu0 0.0
      %2996 = vmatprep.subr.mxu0 0.0
      %2997 = vmatpush2.xpose.msra.mxu0 0.0
      %2998 = vmatprep.subr.mxu0 0.0
      %2999 = vmatpush2.xpose.msra.mxu0 0.0
      %3000 = vmatprep.mubr.f32.mxu0 0.0
      %3001 = vmatmul.mubr.f32.gmra.mxu0 %v2712
      %v3002 = vpop.f32.mrf.mxu0
      %v3003 = vadd.f32 %v2706, %v3002
      %v3004 = vpop.f32.mrf.mxu0
      %3005 = vdwg.mxu0
      %v3010 = vlaneseq
      %v3011 = vshrl.u32 %v3010, 7
      %v3012 = vsub.s32 0, %v3011
      %v3013 = vrot.slane %v2667, %v3012
      %v3014 = vlaneseq
      %v3015 = vshrl.u32 %v3014, 7
      %v3016 = vsub.s32 0, %v3015
      %v3017 = vrot.slane %v2668, %v3016
      %v3018 = vlaneseq
      %v3019 = vshrl.u32 %v3018, 7
      %v3020 = vsub.s32 0, %v3019
      %v3021 = vrot.slane %v2669, %v3020
      %v3022 = vlaneseq
      %v3023 = vshrl.u32 %v3022, 7
      %v3024 = vsub.s32 0, %v3023
      %v3025 = vrot.slane %v2670, %v3024
      %v3031 = vsel %vm407, %v579, 0
      %v3034 = vsel %vm407, %v2662, 0
      %3036 = vmatprep.subr.mxu0 0.0
      %3037 = vmatpush1.xpose.msra.mxu0 0.0
      %3038 = vmatprep.subr.mxu0 0.0
      %3039 = vmatpush1.xpose.msra.mxu0 0.0
      %3040 = vmatprep.subr.mxu0 0.0
      %3041 = vmatpush1.xpose.msra.mxu0 0.0
      %3042 = vmatprep.subr.mxu0 0.0
      %3043 = vmatpush1.xpose.msra.mxu0 0.0
      %3044 = vmatprep.subr.mxu0 0.0
      %3045 = vmatpush1.xpose.msra.mxu0 0.0
      %3046 = vmatprep.subr.mxu0 0.0
      %3047 = vmatpush1.xpose.msra.mxu0 0.0
      %3048 = vmatprep.subr.mxu0 0.0
      %3049 = vmatpush1.xpose.msra.mxu0 0.0
      %3050 = vmatprep.subr.mxu0 0.0
      %3051 = vmatpush1.xpose.msra.mxu0 0.0
      %3052 = vmatprep.subr.mxu0 0.0
      %3053 = vmatpush1.xpose.msra.mxu0 0.0
      %3054 = vmatprep.subr.mxu0 0.0
      %3055 = vmatpush1.xpose.msra.mxu0 0.0
      %3056 = vmatprep.subr.mxu0 0.0
      %3057 = vmatpush1.xpose.msra.mxu0 0.0
      %3058 = vmatprep.subr.mxu0 0.0
      %3059 = vmatpush1.xpose.msra.mxu0 0.0
      %3060 = vmatprep.subr.mxu0 0.0
      %3061 = vmatpush1.xpose.msra.mxu0 0.0
      %3062 = vmatprep.subr.mxu0 0.0
      %3063 = vmatpush1.xpose.msra.mxu0 0.0
      %3064 = vmatprep.subr.mxu0 0.0
      %3065 = vmatpush1.xpose.msra.mxu0 0.0
      %3066 = vmatprep.subr.mxu0 0.0
      %3067 = vmatpush1.xpose.msra.mxu0 %v3034
      %3068 = vmatprep.subr.mxu0 0.0
      %3069 = vmatpush2.xpose.msra.mxu0 0.0
      %3070 = vmatprep.subr.mxu0 0.0
      %3071 = vmatpush2.xpose.msra.mxu0 0.0
      %3072 = vmatprep.subr.mxu0 0.0
      %3073 = vmatpush2.xpose.msra.mxu0 0.0
      %3074 = vmatprep.subr.mxu0 0.0
      %3075 = vmatpush2.xpose.msra.mxu0 0.0
      %3076 = vmatprep.subr.mxu0 0.0
      %3077 = vmatpush2.xpose.msra.mxu0 0.0
      %3078 = vmatprep.subr.mxu0 0.0
      %3079 = vmatpush2.xpose.msra.mxu0 0.0
      %3080 = vmatprep.subr.mxu0 0.0
      %3081 = vmatpush2.xpose.msra.mxu0 0.0
      %3082 = vmatprep.subr.mxu0 0.0
      %3083 = vmatpush2.xpose.msra.mxu0 0.0
      %3084 = vmatprep.subr.mxu0 0.0
      %3085 = vmatpush2.xpose.msra.mxu0 0.0
      %3086 = vmatprep.subr.mxu0 0.0
      %3087 = vmatpush2.xpose.msra.mxu0 0.0
      %3088 = vmatprep.subr.mxu0 0.0
      %3089 = vmatpush2.xpose.msra.mxu0 0.0
      %3090 = vmatprep.subr.mxu0 0.0
      %3091 = vmatpush2.xpose.msra.mxu0 0.0
      %3092 = vmatprep.subr.mxu0 0.0
      %3093 = vmatpush2.xpose.msra.mxu0 0.0
      %3094 = vmatprep.subr.mxu0 0.0
      %3095 = vmatpush2.xpose.msra.mxu0 0.0
      %3096 = vmatprep.subr.mxu0 0.0
      %3097 = vmatpush2.xpose.msra.mxu0 0.0
      %3098 = vmatprep.subr.mxu0 0.0
      %3099 = vmatpush2.xpose.msra.mxu0 0.0
      %3100 = vmatprep.mubr.f32.mxu0 0.0
      %3101 = vmatmul.mubr.f32.gmra.mxu0 %v3031
      %v3102 = vpop.f32.mrf.mxu0
      %v3103 = vadd.f32 %v3013, %v3102
      %v3104 = vpop.f32.mrf.mxu0
      %3105 = vdwg.mxu0
      %v3107 = vsel %vm407, %v2663, 0
      %3109 = vmatprep.subr.mxu0 0.0
      %3110 = vmatpush1.xpose.msra.mxu0 0.0
      %3111 = vmatprep.subr.mxu0 0.0
      %3112 = vmatpush1.xpose.msra.mxu0 0.0
      %3113 = vmatprep.subr.mxu0 0.0
      %3114 = vmatpush1.xpose.msra.mxu0 0.0
      %3115 = vmatprep.subr.mxu0 0.0
      %3116 = vmatpush1.xpose.msra.mxu0 0.0
      %3117 = vmatprep.subr.mxu0 0.0
      %3118 = vmatpush1.xpose.msra.mxu0 0.0
      %3119 = vmatprep.subr.mxu0 0.0
      %3120 = vmatpush1.xpose.msra.mxu0 0.0
      %3121 = vmatprep.subr.mxu0 0.0
      %3122 = vmatpush1.xpose.msra.mxu0 0.0
      %3123 = vmatprep.subr.mxu0 0.0
      %3124 = vmatpush1.xpose.msra.mxu0 0.0
      %3125 = vmatprep.subr.mxu0 0.0
      %3126 = vmatpush1.xpose.msra.mxu0 0.0
      %3127 = vmatprep.subr.mxu0 0.0
      %3128 = vmatpush1.xpose.msra.mxu0 0.0
      %3129 = vmatprep.subr.mxu0 0.0
      %3130 = vmatpush1.xpose.msra.mxu0 0.0
      %3131 = vmatprep.subr.mxu0 0.0
      %3132 = vmatpush1.xpose.msra.mxu0 0.0
      %3133 = vmatprep.subr.mxu0 0.0
      %3134 = vmatpush1.xpose.msra.mxu0 0.0
      %3135 = vmatprep.subr.mxu0 0.0
      %3136 = vmatpush1.xpose.msra.mxu0 0.0
      %3137 = vmatprep.subr.mxu0 0.0
      %3138 = vmatpush1.xpose.msra.mxu0 0.0
      %3139 = vmatprep.subr.mxu0 0.0
      %3140 = vmatpush1.xpose.msra.mxu0 %v3107
      %3141 = vmatprep.subr.mxu0 0.0
      %3142 = vmatpush2.xpose.msra.mxu0 0.0
      %3143 = vmatprep.subr.mxu0 0.0
      %3144 = vmatpush2.xpose.msra.mxu0 0.0
      %3145 = vmatprep.subr.mxu0 0.0
      %3146 = vmatpush2.xpose.msra.mxu0 0.0
      %3147 = vmatprep.subr.mxu0 0.0
      %3148 = vmatpush2.xpose.msra.mxu0 0.0
      %3149 = vmatprep.subr.mxu0 0.0
      %3150 = vmatpush2.xpose.msra.mxu0 0.0
      %3151 = vmatprep.subr.mxu0 0.0
      %3152 = vmatpush2.xpose.msra.mxu0 0.0
      %3153 = vmatprep.subr.mxu0 0.0
      %3154 = vmatpush2.xpose.msra.mxu0 0.0
      %3155 = vmatprep.subr.mxu0 0.0
      %3156 = vmatpush2.xpose.msra.mxu0 0.0
      %3157 = vmatprep.subr.mxu0 0.0
      %3158 = vmatpush2.xpose.msra.mxu0 0.0
      %3159 = vmatprep.subr.mxu0 0.0
      %3160 = vmatpush2.xpose.msra.mxu0 0.0
      %3161 = vmatprep.subr.mxu0 0.0
      %3162 = vmatpush2.xpose.msra.mxu0 0.0
      %3163 = vmatprep.subr.mxu0 0.0
      %3164 = vmatpush2.xpose.msra.mxu0 0.0
      %3165 = vmatprep.subr.mxu0 0.0
      %3166 = vmatpush2.xpose.msra.mxu0 0.0
      %3167 = vmatprep.subr.mxu0 0.0
      %3168 = vmatpush2.xpose.msra.mxu0 0.0
      %3169 = vmatprep.subr.mxu0 0.0
      %3170 = vmatpush2.xpose.msra.mxu0 0.0
      %3171 = vmatprep.subr.mxu0 0.0
      %3172 = vmatpush2.xpose.msra.mxu0 0.0
      %3173 = vmatprep.mubr.f32.mxu0 0.0
      %3174 = vmatmul.mubr.f32.gmra.mxu0 %v3031
      %v3175 = vpop.f32.mrf.mxu0
      %v3176 = vadd.f32 %v3017, %v3175
      %v3177 = vpop.f32.mrf.mxu0
      %3178 = vdwg.mxu0
      %v3180 = vsel %vm407, %v2664, 0
      %3182 = vmatprep.subr.mxu0 0.0
      %3183 = vmatpush1.xpose.msra.mxu0 0.0
      %3184 = vmatprep.subr.mxu0 0.0
      %3185 = vmatpush1.xpose.msra.mxu0 0.0
      %3186 = vmatprep.subr.mxu0 0.0
      %3187 = vmatpush1.xpose.msra.mxu0 0.0
      %3188 = vmatprep.subr.mxu0 0.0
      %3189 = vmatpush1.xpose.msra.mxu0 0.0
      %3190 = vmatprep.subr.mxu0 0.0
      %3191 = vmatpush1.xpose.msra.mxu0 0.0
      %3192 = vmatprep.subr.mxu0 0.0
      %3193 = vmatpush1.xpose.msra.mxu0 0.0
      %3194 = vmatprep.subr.mxu0 0.0
      %3195 = vmatpush1.xpose.msra.mxu0 0.0
      %3196 = vmatprep.subr.mxu0 0.0
      %3197 = vmatpush1.xpose.msra.mxu0 0.0
      %3198 = vmatprep.subr.mxu0 0.0
      %3199 = vmatpush1.xpose.msra.mxu0 0.0
      %3200 = vmatprep.subr.mxu0 0.0
      %3201 = vmatpush1.xpose.msra.mxu0 0.0
      %3202 = vmatprep.subr.mxu0 0.0
      %3203 = vmatpush1.xpose.msra.mxu0 0.0
      %3204 = vmatprep.subr.mxu0 0.0
      %3205 = vmatpush1.xpose.msra.mxu0 0.0
      %3206 = vmatprep.subr.mxu0 0.0
      %3207 = vmatpush1.xpose.msra.mxu0 0.0
      %3208 = vmatprep.subr.mxu0 0.0
      %3209 = vmatpush1.xpose.msra.mxu0 0.0
      %3210 = vmatprep.subr.mxu0 0.0
      %3211 = vmatpush1.xpose.msra.mxu0 0.0
      %3212 = vmatprep.subr.mxu0 0.0
      %3213 = vmatpush1.xpose.msra.mxu0 %v3180
      %3214 = vmatprep.subr.mxu0 0.0
      %3215 = vmatpush2.xpose.msra.mxu0 0.0
      %3216 = vmatprep.subr.mxu0 0.0
      %3217 = vmatpush2.xpose.msra.mxu0 0.0
      %3218 = vmatprep.subr.mxu0 0.0
      %3219 = vmatpush2.xpose.msra.mxu0 0.0
      %3220 = vmatprep.subr.mxu0 0.0
      %3221 = vmatpush2.xpose.msra.mxu0 0.0
      %3222 = vmatprep.subr.mxu0 0.0
      %3223 = vmatpush2.xpose.msra.mxu0 0.0
      %3224 = vmatprep.subr.mxu0 0.0
      %3225 = vmatpush2.xpose.msra.mxu0 0.0
      %3226 = vmatprep.subr.mxu0 0.0
      %3227 = vmatpush2.xpose.msra.mxu0 0.0
      %3228 = vmatprep.subr.mxu0 0.0
      %3229 = vmatpush2.xpose.msra.mxu0 0.0
      %3230 = vmatprep.subr.mxu0 0.0
      %3231 = vmatpush2.xpose.msra.mxu0 0.0
      %3232 = vmatprep.subr.mxu0 0.0
      %3233 = vmatpush2.xpose.msra.mxu0 0.0
      %3234 = vmatprep.subr.mxu0 0.0
      %3235 = vmatpush2.xpose.msra.mxu0 0.0
      %3236 = vmatprep.subr.mxu0 0.0
      %3237 = vmatpush2.xpose.msra.mxu0 0.0
      %3238 = vmatprep.subr.mxu0 0.0
      %3239 = vmatpush2.xpose.msra.mxu0 0.0
      %3240 = vmatprep.subr.mxu0 0.0
      %3241 = vmatpush2.xpose.msra.mxu0 0.0
      %3242 = vmatprep.subr.mxu0 0.0
      %3243 = vmatpush2.xpose.msra.mxu0 0.0
      %3244 = vmatprep.subr.mxu0 0.0
      %3245 = vmatpush2.xpose.msra.mxu0 0.0
      %3246 = vmatprep.mubr.f32.mxu0 0.0
      %3247 = vmatmul.mubr.f32.gmra.mxu0 %v3031
      %v3248 = vpop.f32.mrf.mxu0
      %v3249 = vadd.f32 %v3021, %v3248
      %v3250 = vpop.f32.mrf.mxu0
      %3251 = vdwg.mxu0
      %v3253 = vsel %vm407, %v2665, 0
      %3255 = vmatprep.subr.mxu0 0.0
      %3256 = vmatpush1.xpose.msra.mxu0 0.0
      %3257 = vmatprep.subr.mxu0 0.0
      %3258 = vmatpush1.xpose.msra.mxu0 0.0
      %3259 = vmatprep.subr.mxu0 0.0
      %3260 = vmatpush1.xpose.msra.mxu0 0.0
      %3261 = vmatprep.subr.mxu0 0.0
      %3262 = vmatpush1.xpose.msra.mxu0 0.0
      %3263 = vmatprep.subr.mxu0 0.0
      %3264 = vmatpush1.xpose.msra.mxu0 0.0
      %3265 = vmatprep.subr.mxu0 0.0
      %3266 = vmatpush1.xpose.msra.mxu0 0.0
      %3267 = vmatprep.subr.mxu0 0.0
      %3268 = vmatpush1.xpose.msra.mxu0 0.0
      %3269 = vmatprep.subr.mxu0 0.0
      %3270 = vmatpush1.xpose.msra.mxu0 0.0
      %3271 = vmatprep.subr.mxu0 0.0
      %3272 = vmatpush1.xpose.msra.mxu0 0.0
      %3273 = vmatprep.subr.mxu0 0.0
      %3274 = vmatpush1.xpose.msra.mxu0 0.0
      %3275 = vmatprep.subr.mxu0 0.0
      %3276 = vmatpush1.xpose.msra.mxu0 0.0
      %3277 = vmatprep.subr.mxu0 0.0
      %3278 = vmatpush1.xpose.msra.mxu0 0.0
      %3279 = vmatprep.subr.mxu0 0.0
      %3280 = vmatpush1.xpose.msra.mxu0 0.0
      %3281 = vmatprep.subr.mxu0 0.0
      %3282 = vmatpush1.xpose.msra.mxu0 0.0
      %3283 = vmatprep.subr.mxu0 0.0
      %3284 = vmatpush1.xpose.msra.mxu0 0.0
      %3285 = vmatprep.subr.mxu0 0.0
      %3286 = vmatpush1.xpose.msra.mxu0 %v3253
      %3287 = vmatprep.subr.mxu0 0.0
      %3288 = vmatpush2.xpose.msra.mxu0 0.0
      %3289 = vmatprep.subr.mxu0 0.0
      %3290 = vmatpush2.xpose.msra.mxu0 0.0
      %3291 = vmatprep.subr.mxu0 0.0
      %3292 = vmatpush2.xpose.msra.mxu0 0.0
      %3293 = vmatprep.subr.mxu0 0.0
      %3294 = vmatpush2.xpose.msra.mxu0 0.0
      %3295 = vmatprep.subr.mxu0 0.0
      %3296 = vmatpush2.xpose.msra.mxu0 0.0
      %3297 = vmatprep.subr.mxu0 0.0
      %3298 = vmatpush2.xpose.msra.mxu0 0.0
      %3299 = vmatprep.subr.mxu0 0.0
      %3300 = vmatpush2.xpose.msra.mxu0 0.0
      %3301 = vmatprep.subr.mxu0 0.0
      %3302 = vmatpush2.xpose.msra.mxu0 0.0
      %3303 = vmatprep.subr.mxu0 0.0
      %3304 = vmatpush2.xpose.msra.mxu0 0.0
      %3305 = vmatprep.subr.mxu0 0.0
      %3306 = vmatpush2.xpose.msra.mxu0 0.0
      %3307 = vmatprep.subr.mxu0 0.0
      %3308 = vmatpush2.xpose.msra.mxu0 0.0
      %3309 = vmatprep.subr.mxu0 0.0
      %3310 = vmatpush2.xpose.msra.mxu0 0.0
      %3311 = vmatprep.subr.mxu0 0.0
      %3312 = vmatpush2.xpose.msra.mxu0 0.0
      %3313 = vmatprep.subr.mxu0 0.0
      %3314 = vmatpush2.xpose.msra.mxu0 0.0
      %3315 = vmatprep.subr.mxu0 0.0
      %3316 = vmatpush2.xpose.msra.mxu0 0.0
      %3317 = vmatprep.subr.mxu0 0.0
      %3318 = vmatpush2.xpose.msra.mxu0 0.0
      %3319 = vmatprep.mubr.f32.mxu0 0.0
      %3320 = vmatmul.mubr.f32.gmra.mxu0 %v3031
      %v3321 = vpop.f32.mrf.mxu0
      %v3322 = vadd.f32 %v3025, %v3321
      %v3323 = vpop.f32.mrf.mxu0
      %3324 = vdwg.mxu0
      %v3329 = vlaneseq
      %v3330 = vshrl.u32 %v3329, 7
      %v3331 = vsub.s32 0, %v3330
      %v3332 = vrot.slane %v2677, %v3331
      %v3333 = vlaneseq
      %v3334 = vshrl.u32 %v3333, 7
      %v3335 = vsub.s32 0, %v3334
      %v3336 = vrot.slane %v2678, %v3335
      %v3337 = vlaneseq
      %v3338 = vshrl.u32 %v3337, 7
      %v3339 = vsub.s32 0, %v3338
      %v3340 = vrot.slane %v2679, %v3339
      %v3341 = vlaneseq
      %v3342 = vshrl.u32 %v3341, 7
      %v3343 = vsub.s32 0, %v3342
      %v3344 = vrot.slane %v2680, %v3343
      %v3350 = vsel %vm407, %v2672, 0
      %3352 = vmatprep.subr.mxu0 0.0
      %3353 = vmatpush1.xpose.msra.mxu0 0.0
      %3354 = vmatprep.subr.mxu0 0.0
      %3355 = vmatpush1.xpose.msra.mxu0 0.0
      %3356 = vmatprep.subr.mxu0 0.0
      %3357 = vmatpush1.xpose.msra.mxu0 0.0
      %3358 = vmatprep.subr.mxu0 0.0
      %3359 = vmatpush1.xpose.msra.mxu0 0.0
      %3360 = vmatprep.subr.mxu0 0.0
      %3361 = vmatpush1.xpose.msra.mxu0 0.0
      %3362 = vmatprep.subr.mxu0 0.0
      %3363 = vmatpush1.xpose.msra.mxu0 0.0
      %3364 = vmatprep.subr.mxu0 0.0
      %3365 = vmatpush1.xpose.msra.mxu0 0.0
      %3366 = vmatprep.subr.mxu0 0.0
      %3367 = vmatpush1.xpose.msra.mxu0 0.0
      %3368 = vmatprep.subr.mxu0 0.0
      %3369 = vmatpush1.xpose.msra.mxu0 0.0
      %3370 = vmatprep.subr.mxu0 0.0
      %3371 = vmatpush1.xpose.msra.mxu0 0.0
      %3372 = vmatprep.subr.mxu0 0.0
      %3373 = vmatpush1.xpose.msra.mxu0 0.0
      %3374 = vmatprep.subr.mxu0 0.0
      %3375 = vmatpush1.xpose.msra.mxu0 0.0
      %3376 = vmatprep.subr.mxu0 0.0
      %3377 = vmatpush1.xpose.msra.mxu0 0.0
      %3378 = vmatprep.subr.mxu0 0.0
      %3379 = vmatpush1.xpose.msra.mxu0 0.0
      %3380 = vmatprep.subr.mxu0 0.0
      %3381 = vmatpush1.xpose.msra.mxu0 0.0
      %3382 = vmatprep.subr.mxu0 0.0
      %3383 = vmatpush1.xpose.msra.mxu0 %v3350
      %3384 = vmatprep.subr.mxu0 0.0
      %3385 = vmatpush2.xpose.msra.mxu0 0.0
      %3386 = vmatprep.subr.mxu0 0.0
      %3387 = vmatpush2.xpose.msra.mxu0 0.0
      %3388 = vmatprep.subr.mxu0 0.0
      %3389 = vmatpush2.xpose.msra.mxu0 0.0
      %3390 = vmatprep.subr.mxu0 0.0
      %3391 = vmatpush2.xpose.msra.mxu0 0.0
      %3392 = vmatprep.subr.mxu0 0.0
      %3393 = vmatpush2.xpose.msra.mxu0 0.0
      %3394 = vmatprep.subr.mxu0 0.0
      %3395 = vmatpush2.xpose.msra.mxu0 0.0
      %3396 = vmatprep.subr.mxu0 0.0
      %3397 = vmatpush2.xpose.msra.mxu0 0.0
      %3398 = vmatprep.subr.mxu0 0.0
      %3399 = vmatpush2.xpose.msra.mxu0 0.0
      %3400 = vmatprep.subr.mxu0 0.0
      %3401 = vmatpush2.xpose.msra.mxu0 0.0
      %3402 = vmatprep.subr.mxu0 0.0
      %3403 = vmatpush2.xpose.msra.mxu0 0.0
      %3404 = vmatprep.subr.mxu0 0.0
      %3405 = vmatpush2.xpose.msra.mxu0 0.0
      %3406 = vmatprep.subr.mxu0 0.0
      %3407 = vmatpush2.xpose.msra.mxu0 0.0
      %3408 = vmatprep.subr.mxu0 0.0
      %3409 = vmatpush2.xpose.msra.mxu0 0.0
      %3410 = vmatprep.subr.mxu0 0.0
      %3411 = vmatpush2.xpose.msra.mxu0 0.0
      %3412 = vmatprep.subr.mxu0 0.0
      %3413 = vmatpush2.xpose.msra.mxu0 0.0
      %3414 = vmatprep.subr.mxu0 0.0
      %3415 = vmatpush2.xpose.msra.mxu0 0.0
      %3416 = vmatprep.mubr.f32.mxu0 0.0
      %3417 = vmatmul.mubr.f32.gmra.mxu0 %v3031
      %v3418 = vpop.f32.mrf.mxu0
      %v3419 = vadd.f32 %v3332, %v3418
      %v3420 = vpop.f32.mrf.mxu0
      %3421 = vdwg.mxu0
      %v3423 = vsel %vm407, %v2673, 0
      %3425 = vmatprep.subr.mxu0 0.0
      %3426 = vmatpush1.xpose.msra.mxu0 0.0
      %3427 = vmatprep.subr.mxu0 0.0
      %3428 = vmatpush1.xpose.msra.mxu0 0.0
      %3429 = vmatprep.subr.mxu0 0.0
      %3430 = vmatpush1.xpose.msra.mxu0 0.0
      %3431 = vmatprep.subr.mxu0 0.0
      %3432 = vmatpush1.xpose.msra.mxu0 0.0
      %3433 = vmatprep.subr.mxu0 0.0
      %3434 = vmatpush1.xpose.msra.mxu0 0.0
      %3435 = vmatprep.subr.mxu0 0.0
      %3436 = vmatpush1.xpose.msra.mxu0 0.0
      %3437 = vmatprep.subr.mxu0 0.0
      %3438 = vmatpush1.xpose.msra.mxu0 0.0
      %3439 = vmatprep.subr.mxu0 0.0
      %3440 = vmatpush1.xpose.msra.mxu0 0.0
      %3441 = vmatprep.subr.mxu0 0.0
      %3442 = vmatpush1.xpose.msra.mxu0 0.0
      %3443 = vmatprep.subr.mxu0 0.0
      %3444 = vmatpush1.xpose.msra.mxu0 0.0
      %3445 = vmatprep.subr.mxu0 0.0
      %3446 = vmatpush1.xpose.msra.mxu0 0.0
      %3447 = vmatprep.subr.mxu0 0.0
      %3448 = vmatpush1.xpose.msra.mxu0 0.0
      %3449 = vmatprep.subr.mxu0 0.0
      %3450 = vmatpush1.xpose.msra.mxu0 0.0
      %3451 = vmatprep.subr.mxu0 0.0
      %3452 = vmatpush1.xpose.msra.mxu0 0.0
      %3453 = vmatprep.subr.mxu0 0.0
      %3454 = vmatpush1.xpose.msra.mxu0 0.0
      %3455 = vmatprep.subr.mxu0 0.0
      %3456 = vmatpush1.xpose.msra.mxu0 %v3423
      %3457 = vmatprep.subr.mxu0 0.0
      %3458 = vmatpush2.xpose.msra.mxu0 0.0
      %3459 = vmatprep.subr.mxu0 0.0
      %3460 = vmatpush2.xpose.msra.mxu0 0.0
      %3461 = vmatprep.subr.mxu0 0.0
      %3462 = vmatpush2.xpose.msra.mxu0 0.0
      %3463 = vmatprep.subr.mxu0 0.0
      %3464 = vmatpush2.xpose.msra.mxu0 0.0
      %3465 = vmatprep.subr.mxu0 0.0
      %3466 = vmatpush2.xpose.msra.mxu0 0.0
      %3467 = vmatprep.subr.mxu0 0.0
      %3468 = vmatpush2.xpose.msra.mxu0 0.0
      %3469 = vmatprep.subr.mxu0 0.0
      %3470 = vmatpush2.xpose.msra.mxu0 0.0
      %3471 = vmatprep.subr.mxu0 0.0
      %3472 = vmatpush2.xpose.msra.mxu0 0.0
      %3473 = vmatprep.subr.mxu0 0.0
      %3474 = vmatpush2.xpose.msra.mxu0 0.0
      %3475 = vmatprep.subr.mxu0 0.0
      %3476 = vmatpush2.xpose.msra.mxu0 0.0
      %3477 = vmatprep.subr.mxu0 0.0
      %3478 = vmatpush2.xpose.msra.mxu0 0.0
      %3479 = vmatprep.subr.mxu0 0.0
      %3480 = vmatpush2.xpose.msra.mxu0 0.0
      %3481 = vmatprep.subr.mxu0 0.0
      %3482 = vmatpush2.xpose.msra.mxu0 0.0
      %3483 = vmatprep.subr.mxu0 0.0
      %3484 = vmatpush2.xpose.msra.mxu0 0.0
      %3485 = vmatprep.subr.mxu0 0.0
      %3486 = vmatpush2.xpose.msra.mxu0 0.0
      %3487 = vmatprep.subr.mxu0 0.0
      %3488 = vmatpush2.xpose.msra.mxu0 0.0
      %3489 = vmatprep.mubr.f32.mxu0 0.0
      %3490 = vmatmul.mubr.f32.gmra.mxu0 %v3031
      %v3491 = vpop.f32.mrf.mxu0
      %v3492 = vadd.f32 %v3336, %v3491
      %v3493 = vpop.f32.mrf.mxu0
      %3494 = vdwg.mxu0
      %v3496 = vsel %vm407, %v2674, 0
      %3498 = vmatprep.subr.mxu0 0.0
      %3499 = vmatpush1.xpose.msra.mxu0 0.0
      %3500 = vmatprep.subr.mxu0 0.0
      %3501 = vmatpush1.xpose.msra.mxu0 0.0
      %3502 = vmatprep.subr.mxu0 0.0
      %3503 = vmatpush1.xpose.msra.mxu0 0.0
      %3504 = vmatprep.subr.mxu0 0.0
      %3505 = vmatpush1.xpose.msra.mxu0 0.0
      %3506 = vmatprep.subr.mxu0 0.0
      %3507 = vmatpush1.xpose.msra.mxu0 0.0
      %3508 = vmatprep.subr.mxu0 0.0
      %3509 = vmatpush1.xpose.msra.mxu0 0.0
      %3510 = vmatprep.subr.mxu0 0.0
      %3511 = vmatpush1.xpose.msra.mxu0 0.0
      %3512 = vmatprep.subr.mxu0 0.0
      %3513 = vmatpush1.xpose.msra.mxu0 0.0
      %3514 = vmatprep.subr.mxu0 0.0
      %3515 = vmatpush1.xpose.msra.mxu0 0.0
      %3516 = vmatprep.subr.mxu0 0.0
      %3517 = vmatpush1.xpose.msra.mxu0 0.0
      %3518 = vmatprep.subr.mxu0 0.0
      %3519 = vmatpush1.xpose.msra.mxu0 0.0
      %3520 = vmatprep.subr.mxu0 0.0
      %3521 = vmatpush1.xpose.msra.mxu0 0.0
      %3522 = vmatprep.subr.mxu0 0.0
      %3523 = vmatpush1.xpose.msra.mxu0 0.0
      %3524 = vmatprep.subr.mxu0 0.0
      %3525 = vmatpush1.xpose.msra.mxu0 0.0
      %3526 = vmatprep.subr.mxu0 0.0
      %3527 = vmatpush1.xpose.msra.mxu0 0.0
      %3528 = vmatprep.subr.mxu0 0.0
      %3529 = vmatpush1.xpose.msra.mxu0 %v3496
      %3530 = vmatprep.subr.mxu0 0.0
      %3531 = vmatpush2.xpose.msra.mxu0 0.0
      %3532 = vmatprep.subr.mxu0 0.0
      %3533 = vmatpush2.xpose.msra.mxu0 0.0
      %3534 = vmatprep.subr.mxu0 0.0
      %3535 = vmatpush2.xpose.msra.mxu0 0.0
      %3536 = vmatprep.subr.mxu0 0.0
      %3537 = vmatpush2.xpose.msra.mxu0 0.0
      %3538 = vmatprep.subr.mxu0 0.0
      %3539 = vmatpush2.xpose.msra.mxu0 0.0
      %3540 = vmatprep.subr.mxu0 0.0
      %3541 = vmatpush2.xpose.msra.mxu0 0.0
      %3542 = vmatprep.subr.mxu0 0.0
      %3543 = vmatpush2.xpose.msra.mxu0 0.0
      %3544 = vmatprep.subr.mxu0 0.0
      %3545 = vmatpush2.xpose.msra.mxu0 0.0
      %3546 = vmatprep.subr.mxu0 0.0
      %3547 = vmatpush2.xpose.msra.mxu0 0.0
      %3548 = vmatprep.subr.mxu0 0.0
      %3549 = vmatpush2.xpose.msra.mxu0 0.0
      %3550 = vmatprep.subr.mxu0 0.0
      %3551 = vmatpush2.xpose.msra.mxu0 0.0
      %3552 = vmatprep.subr.mxu0 0.0
      %3553 = vmatpush2.xpose.msra.mxu0 0.0
      %3554 = vmatprep.subr.mxu0 0.0
      %3555 = vmatpush2.xpose.msra.mxu0 0.0
      %3556 = vmatprep.subr.mxu0 0.0
      %3557 = vmatpush2.xpose.msra.mxu0 0.0
      %3558 = vmatprep.subr.mxu0 0.0
      %3559 = vmatpush2.xpose.msra.mxu0 0.0
      %3560 = vmatprep.subr.mxu0 0.0
      %3561 = vmatpush2.xpose.msra.mxu0 0.0
      %3562 = vmatprep.mubr.f32.mxu0 0.0
      %3563 = vmatmul.mubr.f32.gmra.mxu0 %v3031
      %v3564 = vpop.f32.mrf.mxu0
      %v3565 = vadd.f32 %v3340, %v3564
      %v3566 = vpop.f32.mrf.mxu0
      %3567 = vdwg.mxu0
      %v3569 = vsel %vm407, %v2675, 0
      %3571 = vmatprep.subr.mxu0 0.0
      %3572 = vmatpush1.xpose.msra.mxu0 0.0
      %3573 = vmatprep.subr.mxu0 0.0
      %3574 = vmatpush1.xpose.msra.mxu0 0.0
      %3575 = vmatprep.subr.mxu0 0.0
      %3576 = vmatpush1.xpose.msra.mxu0 0.0
      %3577 = vmatprep.subr.mxu0 0.0
      %3578 = vmatpush1.xpose.msra.mxu0 0.0
      %3579 = vmatprep.subr.mxu0 0.0
      %3580 = vmatpush1.xpose.msra.mxu0 0.0
      %3581 = vmatprep.subr.mxu0 0.0
      %3582 = vmatpush1.xpose.msra.mxu0 0.0
      %3583 = vmatprep.subr.mxu0 0.0
      %3584 = vmatpush1.xpose.msra.mxu0 0.0
      %3585 = vmatprep.subr.mxu0 0.0
      %3586 = vmatpush1.xpose.msra.mxu0 0.0
      %3587 = vmatprep.subr.mxu0 0.0
      %3588 = vmatpush1.xpose.msra.mxu0 0.0
      %3589 = vmatprep.subr.mxu0 0.0
      %3590 = vmatpush1.xpose.msra.mxu0 0.0
      %3591 = vmatprep.subr.mxu0 0.0
      %3592 = vmatpush1.xpose.msra.mxu0 0.0
      %3593 = vmatprep.subr.mxu0 0.0
      %3594 = vmatpush1.xpose.msra.mxu0 0.0
      %3595 = vmatprep.subr.mxu0 0.0
      %3596 = vmatpush1.xpose.msra.mxu0 0.0
      %3597 = vmatprep.subr.mxu0 0.0
      %3598 = vmatpush1.xpose.msra.mxu0 0.0
      %3599 = vmatprep.subr.mxu0 0.0
      %3600 = vmatpush1.xpose.msra.mxu0 0.0
      %3601 = vmatprep.subr.mxu0 0.0
      %3602 = vmatpush1.xpose.msra.mxu0 %v3569
      %3603 = vmatprep.subr.mxu0 0.0
      %3604 = vmatpush2.xpose.msra.mxu0 0.0
      %3605 = vmatprep.subr.mxu0 0.0
      %3606 = vmatpush2.xpose.msra.mxu0 0.0
      %3607 = vmatprep.subr.mxu0 0.0
      %3608 = vmatpush2.xpose.msra.mxu0 0.0
      %3609 = vmatprep.subr.mxu0 0.0
      %3610 = vmatpush2.xpose.msra.mxu0 0.0
      %3611 = vmatprep.subr.mxu0 0.0
      %3612 = vmatpush2.xpose.msra.mxu0 0.0
      %3613 = vmatprep.subr.mxu0 0.0
      %3614 = vmatpush2.xpose.msra.mxu0 0.0
      %3615 = vmatprep.subr.mxu0 0.0
      %3616 = vmatpush2.xpose.msra.mxu0 0.0
      %3617 = vmatprep.subr.mxu0 0.0
      %3618 = vmatpush2.xpose.msra.mxu0 0.0
      %3619 = vmatprep.subr.mxu0 0.0
      %3620 = vmatpush2.xpose.msra.mxu0 0.0
      %3621 = vmatprep.subr.mxu0 0.0
      %3622 = vmatpush2.xpose.msra.mxu0 0.0
      %3623 = vmatprep.subr.mxu0 0.0
      %3624 = vmatpush2.xpose.msra.mxu0 0.0
      %3625 = vmatprep.subr.mxu0 0.0
      %3626 = vmatpush2.xpose.msra.mxu0 0.0
      %3627 = vmatprep.subr.mxu0 0.0
      %3628 = vmatpush2.xpose.msra.mxu0 0.0
      %3629 = vmatprep.subr.mxu0 0.0
      %3630 = vmatpush2.xpose.msra.mxu0 0.0
      %3631 = vmatprep.subr.mxu0 0.0
      %3632 = vmatpush2.xpose.msra.mxu0 0.0
      %3633 = vmatprep.subr.mxu0 0.0
      %3634 = vmatpush2.xpose.msra.mxu0 0.0
      %3635 = vmatprep.mubr.f32.mxu0 0.0
      %3636 = vmatmul.mubr.f32.gmra.mxu0 %v3031
      %v3637 = vpop.f32.mrf.mxu0
      %v3638 = vadd.f32 %v3344, %v3637
      %v3639 = vpop.f32.mrf.mxu0
      %3640 = vdwg.mxu0
      %v3642 = vsel %vm1680, %v2784, 0
      %v3645 = vsel %vm1680, %v3103, 0
      %3647 = vmatprep.subr.mxu0 0.0
      %3648 = vmatpush1.xpose.msra.mxu0 0.0
      %3649 = vmatprep.subr.mxu0 0.0
      %3650 = vmatpush1.xpose.msra.mxu0 0.0
      %3651 = vmatprep.subr.mxu0 0.0
      %3652 = vmatpush1.xpose.msra.mxu0 0.0
      %3653 = vmatprep.subr.mxu0 0.0
      %3654 = vmatpush1.xpose.msra.mxu0 0.0
      %3655 = vmatprep.subr.mxu0 0.0
      %3656 = vmatpush1.xpose.msra.mxu0 0.0
      %3657 = vmatprep.subr.mxu0 0.0
      %3658 = vmatpush1.xpose.msra.mxu0 0.0
      %3659 = vmatprep.subr.mxu0 0.0
      %3660 = vmatpush1.xpose.msra.mxu0 0.0
      %3661 = vmatprep.subr.mxu0 0.0
      %3662 = vmatpush1.xpose.msra.mxu0 0.0
      %3663 = vmatprep.subr.mxu0 0.0
      %3664 = vmatpush1.xpose.msra.mxu0 0.0
      %3665 = vmatprep.subr.mxu0 0.0
      %3666 = vmatpush1.xpose.msra.mxu0 0.0
      %3667 = vmatprep.subr.mxu0 0.0
      %3668 = vmatpush1.xpose.msra.mxu0 0.0
      %3669 = vmatprep.subr.mxu0 0.0
      %3670 = vmatpush1.xpose.msra.mxu0 0.0
      %3671 = vmatprep.subr.mxu0 0.0
      %3672 = vmatpush1.xpose.msra.mxu0 0.0
      %3673 = vmatprep.subr.mxu0 0.0
      %3674 = vmatpush1.xpose.msra.mxu0 0.0
      %3675 = vmatprep.subr.mxu0 0.0
      %3676 = vmatpush1.xpose.msra.mxu0 0.0
      %3677 = vmatprep.subr.mxu0 0.0
      %3678 = vmatpush1.xpose.msra.mxu0 %v3645
      %3679 = vmatprep.subr.mxu0 0.0
      %3680 = vmatpush2.xpose.msra.mxu0 0.0
      %3681 = vmatprep.subr.mxu0 0.0
      %3682 = vmatpush2.xpose.msra.mxu0 0.0
      %3683 = vmatprep.subr.mxu0 0.0
      %3684 = vmatpush2.xpose.msra.mxu0 0.0
      %3685 = vmatprep.subr.mxu0 0.0
      %3686 = vmatpush2.xpose.msra.mxu0 0.0
      %3687 = vmatprep.subr.mxu0 0.0
      %3688 = vmatpush2.xpose.msra.mxu0 0.0
      %3689 = vmatprep.subr.mxu0 0.0
      %3690 = vmatpush2.xpose.msra.mxu0 0.0
      %3691 = vmatprep.subr.mxu0 0.0
      %3692 = vmatpush2.xpose.msra.mxu0 0.0
      %3693 = vmatprep.subr.mxu0 0.0
      %3694 = vmatpush2.xpose.msra.mxu0 0.0
      %3695 = vmatprep.subr.mxu0 0.0
      %3696 = vmatpush2.xpose.msra.mxu0 0.0
      %3697 = vmatprep.subr.mxu0 0.0
      %3698 = vmatpush2.xpose.msra.mxu0 0.0
      %3699 = vmatprep.subr.mxu0 0.0
      %3700 = vmatpush2.xpose.msra.mxu0 0.0
      %3701 = vmatprep.subr.mxu0 0.0
      %3702 = vmatpush2.xpose.msra.mxu0 0.0
      %3703 = vmatprep.subr.mxu0 0.0
      %3704 = vmatpush2.xpose.msra.mxu0 0.0
      %3705 = vmatprep.subr.mxu0 0.0
      %3706 = vmatpush2.xpose.msra.mxu0 0.0
      %3707 = vmatprep.subr.mxu0 0.0
      %3708 = vmatpush2.xpose.msra.mxu0 0.0
      %3709 = vmatprep.subr.mxu0 0.0
      %3710 = vmatpush2.xpose.msra.mxu0 0.0
      %3711 = vmatprep.mubr.f32.mxu0 0.0
      %3712 = vmatmul.mubr.f32.gmra.mxu0 %v3642
      %v3713 = vpop.f32.mrf.mxu0
      %v3714 = vadd.f32 0.0, %v3713
      %v3715 = vpop.f32.mrf.mxu0
      %3716 = vdwg.mxu0
      %v3718 = vsel %vm1680, %v2857, 0
      %v3721 = vsel %vm1680, %v3176, 0
      %3723 = vmatprep.subr.mxu0 0.0
      %3724 = vmatpush1.xpose.msra.mxu0 0.0
      %3725 = vmatprep.subr.mxu0 0.0
      %3726 = vmatpush1.xpose.msra.mxu0 0.0
      %3727 = vmatprep.subr.mxu0 0.0
      %3728 = vmatpush1.xpose.msra.mxu0 0.0
      %3729 = vmatprep.subr.mxu0 0.0
      %3730 = vmatpush1.xpose.msra.mxu0 0.0
      %3731 = vmatprep.subr.mxu0 0.0
      %3732 = vmatpush1.xpose.msra.mxu0 0.0
      %3733 = vmatprep.subr.mxu0 0.0
      %3734 = vmatpush1.xpose.msra.mxu0 0.0
      %3735 = vmatprep.subr.mxu0 0.0
      %3736 = vmatpush1.xpose.msra.mxu0 0.0
      %3737 = vmatprep.subr.mxu0 0.0
      %3738 = vmatpush1.xpose.msra.mxu0 0.0
      %3739 = vmatprep.subr.mxu0 0.0
      %3740 = vmatpush1.xpose.msra.mxu0 0.0
      %3741 = vmatprep.subr.mxu0 0.0
      %3742 = vmatpush1.xpose.msra.mxu0 0.0
      %3743 = vmatprep.subr.mxu0 0.0
      %3744 = vmatpush1.xpose.msra.mxu0 0.0
      %3745 = vmatprep.subr.mxu0 0.0
      %3746 = vmatpush1.xpose.msra.mxu0 0.0
      %3747 = vmatprep.subr.mxu0 0.0
      %3748 = vmatpush1.xpose.msra.mxu0 0.0
      %3749 = vmatprep.subr.mxu0 0.0
      %3750 = vmatpush1.xpose.msra.mxu0 0.0
      %3751 = vmatprep.subr.mxu0 0.0
      %3752 = vmatpush1.xpose.msra.mxu0 0.0
      %3753 = vmatprep.subr.mxu0 0.0
      %3754 = vmatpush1.xpose.msra.mxu0 %v3721
      %3755 = vmatprep.subr.mxu0 0.0
      %3756 = vmatpush2.xpose.msra.mxu0 0.0
      %3757 = vmatprep.subr.mxu0 0.0
      %3758 = vmatpush2.xpose.msra.mxu0 0.0
      %3759 = vmatprep.subr.mxu0 0.0
      %3760 = vmatpush2.xpose.msra.mxu0 0.0
      %3761 = vmatprep.subr.mxu0 0.0
      %3762 = vmatpush2.xpose.msra.mxu0 0.0
      %3763 = vmatprep.subr.mxu0 0.0
      %3764 = vmatpush2.xpose.msra.mxu0 0.0
      %3765 = vmatprep.subr.mxu0 0.0
      %3766 = vmatpush2.xpose.msra.mxu0 0.0
      %3767 = vmatprep.subr.mxu0 0.0
      %3768 = vmatpush2.xpose.msra.mxu0 0.0
      %3769 = vmatprep.subr.mxu0 0.0
      %3770 = vmatpush2.xpose.msra.mxu0 0.0
      %3771 = vmatprep.subr.mxu0 0.0
      %3772 = vmatpush2.xpose.msra.mxu0 0.0
      %3773 = vmatprep.subr.mxu0 0.0
      %3774 = vmatpush2.xpose.msra.mxu0 0.0
      %3775 = vmatprep.subr.mxu0 0.0
      %3776 = vmatpush2.xpose.msra.mxu0 0.0
      %3777 = vmatprep.subr.mxu0 0.0
      %3778 = vmatpush2.xpose.msra.mxu0 0.0
      %3779 = vmatprep.subr.mxu0 0.0
      %3780 = vmatpush2.xpose.msra.mxu0 0.0
      %3781 = vmatprep.subr.mxu0 0.0
      %3782 = vmatpush2.xpose.msra.mxu0 0.0
      %3783 = vmatprep.subr.mxu0 0.0
      %3784 = vmatpush2.xpose.msra.mxu0 0.0
      %3785 = vmatprep.subr.mxu0 0.0
      %3786 = vmatpush2.xpose.msra.mxu0 0.0
      %3787 = vmatprep.mubr.f32.mxu0 0.0
      %3788 = vmatmul.mubr.f32.gmra.mxu0 %v3718
      %v3789 = vpop.f32.mrf.mxu0
      %v3790 = vadd.f32 0.0, %v3789
      %v3791 = vpop.f32.mrf.mxu0
      %3792 = vdwg.mxu0
      %v3794 = vsel %vm1680, %v2930, 0
      %v3797 = vsel %vm1680, %v3249, 0
      %3799 = vmatprep.subr.mxu0 0.0
      %3800 = vmatpush1.xpose.msra.mxu0 0.0
      %3801 = vmatprep.subr.mxu0 0.0
      %3802 = vmatpush1.xpose.msra.mxu0 0.0
      %3803 = vmatprep.subr.mxu0 0.0
      %3804 = vmatpush1.xpose.msra.mxu0 0.0
      %3805 = vmatprep.subr.mxu0 0.0
      %3806 = vmatpush1.xpose.msra.mxu0 0.0
      %3807 = vmatprep.subr.mxu0 0.0
      %3808 = vmatpush1.xpose.msra.mxu0 0.0
      %3809 = vmatprep.subr.mxu0 0.0
      %3810 = vmatpush1.xpose.msra.mxu0 0.0
      %3811 = vmatprep.subr.mxu0 0.0
      %3812 = vmatpush1.xpose.msra.mxu0 0.0
      %3813 = vmatprep.subr.mxu0 0.0
      %3814 = vmatpush1.xpose.msra.mxu0 0.0
      %3815 = vmatprep.subr.mxu0 0.0
      %3816 = vmatpush1.xpose.msra.mxu0 0.0
      %3817 = vmatprep.subr.mxu0 0.0
      %3818 = vmatpush1.xpose.msra.mxu0 0.0
      %3819 = vmatprep.subr.mxu0 0.0
      %3820 = vmatpush1.xpose.msra.mxu0 0.0
      %3821 = vmatprep.subr.mxu0 0.0
      %3822 = vmatpush1.xpose.msra.mxu0 0.0
      %3823 = vmatprep.subr.mxu0 0.0
      %3824 = vmatpush1.xpose.msra.mxu0 0.0
      %3825 = vmatprep.subr.mxu0 0.0
      %3826 = vmatpush1.xpose.msra.mxu0 0.0
      %3827 = vmatprep.subr.mxu0 0.0
      %3828 = vmatpush1.xpose.msra.mxu0 0.0
      %3829 = vmatprep.subr.mxu0 0.0
      %3830 = vmatpush1.xpose.msra.mxu0 %v3797
      %3831 = vmatprep.subr.mxu0 0.0
      %3832 = vmatpush2.xpose.msra.mxu0 0.0
      %3833 = vmatprep.subr.mxu0 0.0
      %3834 = vmatpush2.xpose.msra.mxu0 0.0
      %3835 = vmatprep.subr.mxu0 0.0
      %3836 = vmatpush2.xpose.msra.mxu0 0.0
      %3837 = vmatprep.subr.mxu0 0.0
      %3838 = vmatpush2.xpose.msra.mxu0 0.0
      %3839 = vmatprep.subr.mxu0 0.0
      %3840 = vmatpush2.xpose.msra.mxu0 0.0
      %3841 = vmatprep.subr.mxu0 0.0
      %3842 = vmatpush2.xpose.msra.mxu0 0.0
      %3843 = vmatprep.subr.mxu0 0.0
      %3844 = vmatpush2.xpose.msra.mxu0 0.0
      %3845 = vmatprep.subr.mxu0 0.0
      %3846 = vmatpush2.xpose.msra.mxu0 0.0
      %3847 = vmatprep.subr.mxu0 0.0
      %3848 = vmatpush2.xpose.msra.mxu0 0.0
      %3849 = vmatprep.subr.mxu0 0.0
      %3850 = vmatpush2.xpose.msra.mxu0 0.0
      %3851 = vmatprep.subr.mxu0 0.0
      %3852 = vmatpush2.xpose.msra.mxu0 0.0
      %3853 = vmatprep.subr.mxu0 0.0
      %3854 = vmatpush2.xpose.msra.mxu0 0.0
      %3855 = vmatprep.subr.mxu0 0.0
      %3856 = vmatpush2.xpose.msra.mxu0 0.0
      %3857 = vmatprep.subr.mxu0 0.0
      %3858 = vmatpush2.xpose.msra.mxu0 0.0
      %3859 = vmatprep.subr.mxu0 0.0
      %3860 = vmatpush2.xpose.msra.mxu0 0.0
      %3861 = vmatprep.subr.mxu0 0.0
      %3862 = vmatpush2.xpose.msra.mxu0 0.0
      %3863 = vmatprep.mubr.f32.mxu0 0.0
      %3864 = vmatmul.mubr.f32.gmra.mxu0 %v3794
      %v3865 = vpop.f32.mrf.mxu0
      %v3866 = vadd.f32 0.0, %v3865
      %v3867 = vpop.f32.mrf.mxu0
      %3868 = vdwg.mxu0
      %v3870 = vsel %vm1680, %v3003, 0
      %v3873 = vsel %vm1680, %v3322, 0
      %3875 = vmatprep.subr.mxu0 0.0
      %3876 = vmatpush1.xpose.msra.mxu0 0.0
      %3877 = vmatprep.subr.mxu0 0.0
      %3878 = vmatpush1.xpose.msra.mxu0 0.0
      %3879 = vmatprep.subr.mxu0 0.0
      %3880 = vmatpush1.xpose.msra.mxu0 0.0
      %3881 = vmatprep.subr.mxu0 0.0
      %3882 = vmatpush1.xpose.msra.mxu0 0.0
      %3883 = vmatprep.subr.mxu0 0.0
      %3884 = vmatpush1.xpose.msra.mxu0 0.0
      %3885 = vmatprep.subr.mxu0 0.0
      %3886 = vmatpush1.xpose.msra.mxu0 0.0
      %3887 = vmatprep.subr.mxu0 0.0
      %3888 = vmatpush1.xpose.msra.mxu0 0.0
      %3889 = vmatprep.subr.mxu0 0.0
      %3890 = vmatpush1.xpose.msra.mxu0 0.0
      %3891 = vmatprep.subr.mxu0 0.0
      %3892 = vmatpush1.xpose.msra.mxu0 0.0
      %3893 = vmatprep.subr.mxu0 0.0
      %3894 = vmatpush1.xpose.msra.mxu0 0.0
      %3895 = vmatprep.subr.mxu0 0.0
      %3896 = vmatpush1.xpose.msra.mxu0 0.0
      %3897 = vmatprep.subr.mxu0 0.0
      %3898 = vmatpush1.xpose.msra.mxu0 0.0
      %3899 = vmatprep.subr.mxu0 0.0
      %3900 = vmatpush1.xpose.msra.mxu0 0.0
      %3901 = vmatprep.subr.mxu0 0.0
      %3902 = vmatpush1.xpose.msra.mxu0 0.0
      %3903 = vmatprep.subr.mxu0 0.0
      %3904 = vmatpush1.xpose.msra.mxu0 0.0
      %3905 = vmatprep.subr.mxu0 0.0
      %3906 = vmatpush1.xpose.msra.mxu0 %v3873
      %3907 = vmatprep.subr.mxu0 0.0
      %3908 = vmatpush2.xpose.msra.mxu0 0.0
      %3909 = vmatprep.subr.mxu0 0.0
      %3910 = vmatpush2.xpose.msra.mxu0 0.0
      %3911 = vmatprep.subr.mxu0 0.0
      %3912 = vmatpush2.xpose.msra.mxu0 0.0
      %3913 = vmatprep.subr.mxu0 0.0
      %3914 = vmatpush2.xpose.msra.mxu0 0.0
      %3915 = vmatprep.subr.mxu0 0.0
      %3916 = vmatpush2.xpose.msra.mxu0 0.0
      %3917 = vmatprep.subr.mxu0 0.0
      %3918 = vmatpush2.xpose.msra.mxu0 0.0
      %3919 = vmatprep.subr.mxu0 0.0
      %3920 = vmatpush2.xpose.msra.mxu0 0.0
      %3921 = vmatprep.subr.mxu0 0.0
      %3922 = vmatpush2.xpose.msra.mxu0 0.0
      %3923 = vmatprep.subr.mxu0 0.0
      %3924 = vmatpush2.xpose.msra.mxu0 0.0
      %3925 = vmatprep.subr.mxu0 0.0
      %3926 = vmatpush2.xpose.msra.mxu0 0.0
      %3927 = vmatprep.subr.mxu0 0.0
      %3928 = vmatpush2.xpose.msra.mxu0 0.0
      %3929 = vmatprep.subr.mxu0 0.0
      %3930 = vmatpush2.xpose.msra.mxu0 0.0
      %3931 = vmatprep.subr.mxu0 0.0
      %3932 = vmatpush2.xpose.msra.mxu0 0.0
      %3933 = vmatprep.subr.mxu0 0.0
      %3934 = vmatpush2.xpose.msra.mxu0 0.0
      %3935 = vmatprep.subr.mxu0 0.0
      %3936 = vmatpush2.xpose.msra.mxu0 0.0
      %3937 = vmatprep.subr.mxu0 0.0
      %3938 = vmatpush2.xpose.msra.mxu0 0.0
      %3939 = vmatprep.mubr.f32.mxu0 0.0
      %3940 = vmatmul.mubr.f32.gmra.mxu0 %v3870
      %v3941 = vpop.f32.mrf.mxu0
      %v3942 = vadd.f32 0.0, %v3941
      %v3943 = vpop.f32.mrf.mxu0
      %3944 = vdwg.mxu0
      %vm3945 = vcmask 39936
      %v3946 = vsel %vm3945, %v3714, -inf
      %3947 = vmax.xlane.f32.xlu0 %v3946
      %v3948 = vpop.xlane.xlu0 %3947
      %v3949 = vsel %vm3945, %v3790, -inf
      %3950 = vmax.xlane.f32.xlu0 %v3949
      %v3951 = vpop.xlane.xlu0 %3950
      %v3952 = vsel %vm3945, %v3866, -inf
      %3953 = vmax.xlane.f32.xlu0 %v3952
      %v3954 = vpop.xlane.xlu0 %3953
      %v3955 = vsel %vm3945, %v3942, -inf
      %3956 = vmax.xlane.f32.xlu0 %v3955
      %v3957 = vpop.xlane.xlu0 %3956
      %v3958 = vsub.f32 %v3714, %v3948
      %v3959 = vsub.f32 %v3790, %v3951
      %v3960 = vsub.f32 %v3866, %v3954
      %v3961 = vsub.f32 %v3942, %v3957
      %v3962 = vmul.f32 %v3958, 1.442695
      %v3963 = vpow.pop %v3962
      %v3964 = vmul.f32 %v3959, 1.442695
      %v3965 = vpow.pop %v3964
      %v3966 = vmul.f32 %v3960, 1.442695
      %v3967 = vpow.pop %v3966
      %v3968 = vmul.f32 %v3961, 1.442695
      %v3969 = vpow.pop %v3968
      %v3970 = vsel %vm3945, %v3963, 0.0
      %3971 = vadd.xlane.f32.xlu0 %v3970
      %v3972 = vpop.xlane.xlu0 %3971
      %v3973 = vsel %vm3945, %v3965, 0.0
      %3974 = vadd.xlane.f32.xlu0 %v3973
      %v3975 = vpop.xlane.xlu0 %3974
      %v3976 = vsel %vm3945, %v3967, 0.0
      %3977 = vadd.xlane.f32.xlu0 %v3976
      %v3978 = vpop.xlane.xlu0 %3977
      %v3979 = vsel %vm3945, %v3969, 0.0
      %3980 = vadd.xlane.f32.xlu0 %v3979
      %v3981 = vpop.xlane.xlu0 %3980
      %v3982 = vrcp.pop %v3972
      %v3983 = vrcp.pop %v3975
      %v3984 = vrcp.pop %v3978
      %v3985 = vrcp.pop %v3981
      %v3986 = vmul.f32 %v3963, %v3982
      %v3987 = vmul.f32 %v3965, %v3983
      %v3988 = vmul.f32 %v3967, %v3984
      %v3989 = vmul.f32 %v3969, %v3985
      %v3991 = vsel %vm3945, %v3986, 0
      %vm3993 = vcmask 1044480
      %v3995 = vsel %vm3993, %v3419, 0
      %3997 = vmatprep.subr.mxu0 0.0
      %3998 = vmatpush1.msra.mxu0 0.0
      %3999 = vmatprep.subr.mxu0 0.0
      %4000 = vmatpush1.msra.mxu0 0.0
      %4001 = vmatprep.subr.mxu0 0.0
      %4002 = vmatpush1.msra.mxu0 0.0
      %4003 = vmatprep.subr.mxu0 0.0
      %4004 = vmatpush1.msra.mxu0 0.0
      %4005 = vmatprep.subr.mxu0 0.0
      %4006 = vmatpush1.msra.mxu0 0.0
      %4007 = vmatprep.subr.mxu0 0.0
      %4008 = vmatpush1.msra.mxu0 0.0
      %4009 = vmatprep.subr.mxu0 0.0
      %4010 = vmatpush1.msra.mxu0 0.0
      %4011 = vmatprep.subr.mxu0 0.0
      %4012 = vmatpush1.msra.mxu0 0.0
      %4013 = vmatprep.subr.mxu0 0.0
      %4014 = vmatpush1.msra.mxu0 0.0
      %4015 = vmatprep.subr.mxu0 0.0
      %4016 = vmatpush1.msra.mxu0 0.0
      %4017 = vmatprep.subr.mxu0 0.0
      %4018 = vmatpush1.msra.mxu0 0.0
      %4019 = vmatprep.subr.mxu0 0.0
      %4020 = vmatpush1.msra.mxu0 0.0
      %4021 = vmatprep.subr.mxu0 0.0
      %4022 = vmatpush1.msra.mxu0 0.0
      %4023 = vmatprep.subr.mxu0 0.0
      %4024 = vmatpush1.msra.mxu0 0.0
      %4025 = vmatprep.subr.mxu0 0.0
      %4026 = vmatpush1.msra.mxu0 0.0
      %4027 = vmatprep.subr.mxu0 0.0
      %4028 = vmatpush1.msra.mxu0 %v3995
      %4029 = vmatprep.subr.mxu0 0.0
      %4030 = vmatpush2.msra.mxu0 0.0
      %4031 = vmatprep.subr.mxu0 0.0
      %4032 = vmatpush2.msra.mxu0 0.0
      %4033 = vmatprep.subr.mxu0 0.0
      %4034 = vmatpush2.msra.mxu0 0.0
      %4035 = vmatprep.subr.mxu0 0.0
      %4036 = vmatpush2.msra.mxu0 0.0
      %4037 = vmatprep.subr.mxu0 0.0
      %4038 = vmatpush2.msra.mxu0 0.0
      %4039 = vmatprep.subr.mxu0 0.0
      %4040 = vmatpush2.msra.mxu0 0.0
      %4041 = vmatprep.subr.mxu0 0.0
      %4042 = vmatpush2.msra.mxu0 0.0
      %4043 = vmatprep.subr.mxu0 0.0
      %4044 = vmatpush2.msra.mxu0 0.0
      %4045 = vmatprep.subr.mxu0 0.0
      %4046 = vmatpush2.msra.mxu0 0.0
      %4047 = vmatprep.subr.mxu0 0.0
      %4048 = vmatpush2.msra.mxu0 0.0
      %4049 = vmatprep.subr.mxu0 0.0
      %4050 = vmatpush2.msra.mxu0 0.0
      %4051 = vmatprep.subr.mxu0 0.0
      %4052 = vmatpush2.msra.mxu0 0.0
      %4053 = vmatprep.subr.mxu0 0.0
      %4054 = vmatpush2.msra.mxu0 0.0
      %4055 = vmatprep.subr.mxu0 0.0
      %4056 = vmatpush2.msra.mxu0 0.0
      %4057 = vmatprep.subr.mxu0 0.0
      %4058 = vmatpush2.msra.mxu0 0.0
      %4059 = vmatprep.subr.mxu0 0.0
      %4060 = vmatpush2.msra.mxu0 0.0
      %4061 = vmatprep.mubr.f32.mxu0 0.0
      %4062 = vmatmul.mubr.f32.gmra.mxu0 %v3991
      %v4063 = vpop.f32.mrf.mxu0
      %v4064 = vadd.f32 0.0, %v4063
      %v4065 = vpop.f32.mrf.mxu0
      %4066 = vdwg.mxu0
      %v4068 = vsel %vm3945, %v3987, 0
      %v4071 = vsel %vm3993, %v3492, 0
      %4073 = vmatprep.subr.mxu0 0.0
      %4074 = vmatpush1.msra.mxu0 0.0
      %4075 = vmatprep.subr.mxu0 0.0
      %4076 = vmatpush1.msra.mxu0 0.0
      %4077 = vmatprep.subr.mxu0 0.0
      %4078 = vmatpush1.msra.mxu0 0.0
      %4079 = vmatprep.subr.mxu0 0.0
      %4080 = vmatpush1.msra.mxu0 0.0
      %4081 = vmatprep.subr.mxu0 0.0
      %4082 = vmatpush1.msra.mxu0 0.0
      %4083 = vmatprep.subr.mxu0 0.0
      %4084 = vmatpush1.msra.mxu0 0.0
      %4085 = vmatprep.subr.mxu0 0.0
      %4086 = vmatpush1.msra.mxu0 0.0
      %4087 = vmatprep.subr.mxu0 0.0
      %4088 = vmatpush1.msra.mxu0 0.0
      %4089 = vmatprep.subr.mxu0 0.0
      %4090 = vmatpush1.msra.mxu0 0.0
      %4091 = vmatprep.subr.mxu0 0.0
      %4092 = vmatpush1.msra.mxu0 0.0
      %4093 = vmatprep.subr.mxu0 0.0
      %4094 = vmatpush1.msra.mxu0 0.0
      %4095 = vmatprep.subr.mxu0 0.0
      %4096 = vmatpush1.msra.mxu0 0.0
      %4097 = vmatprep.subr.mxu0 0.0
      %4098 = vmatpush1.msra.mxu0 0.0
      %4099 = vmatprep.subr.mxu0 0.0
      %4100 = vmatpush1.msra.mxu0 0.0
      %4101 = vmatprep.subr.mxu0 0.0
      %4102 = vmatpush1.msra.mxu0 0.0
      %4103 = vmatprep.subr.mxu0 0.0
      %4104 = vmatpush1.msra.mxu0 %v4071
      %4105 = vmatprep.subr.mxu0 0.0
      %4106 = vmatpush2.msra.mxu0 0.0
      %4107 = vmatprep.subr.mxu0 0.0
      %4108 = vmatpush2.msra.mxu0 0.0
      %4109 = vmatprep.subr.mxu0 0.0
      %4110 = vmatpush2.msra.mxu0 0.0
      %4111 = vmatprep.subr.mxu0 0.0
      %4112 = vmatpush2.msra.mxu0 0.0
      %4113 = vmatprep.subr.mxu0 0.0
      %4114 = vmatpush2.msra.mxu0 0.0
      %4115 = vmatprep.subr.mxu0 0.0
      %4116 = vmatpush2.msra.mxu0 0.0
      %4117 = vmatprep.subr.mxu0 0.0
      %4118 = vmatpush2.msra.mxu0 0.0
      %4119 = vmatprep.subr.mxu0 0.0
      %4120 = vmatpush2.msra.mxu0 0.0
      %4121 = vmatprep.subr.mxu0 0.0
      %4122 = vmatpush2.msra.mxu0 0.0
      %4123 = vmatprep.subr.mxu0 0.0
      %4124 = vmatpush2.msra.mxu0 0.0
      %4125 = vmatprep.subr.mxu0 0.0
      %4126 = vmatpush2.msra.mxu0 0.0
      %4127 = vmatprep.subr.mxu0 0.0
      %4128 = vmatpush2.msra.mxu0 0.0
      %4129 = vmatprep.subr.mxu0 0.0
      %4130 = vmatpush2.msra.mxu0 0.0
      %4131 = vmatprep.subr.mxu0 0.0
      %4132 = vmatpush2.msra.mxu0 0.0
      %4133 = vmatprep.subr.mxu0 0.0
      %4134 = vmatpush2.msra.mxu0 0.0
      %4135 = vmatprep.subr.mxu0 0.0
      %4136 = vmatpush2.msra.mxu0 0.0
      %4137 = vmatprep.mubr.f32.mxu0 0.0
      %4138 = vmatmul.mubr.f32.gmra.mxu0 %v4068
      %v4139 = vpop.f32.mrf.mxu0
      %v4140 = vadd.f32 0.0, %v4139
      %v4141 = vpop.f32.mrf.mxu0
      %4142 = vdwg.mxu0
      %v4144 = vsel %vm3945, %v3988, 0
      %v4147 = vsel %vm3993, %v3565, 0
      %4149 = vmatprep.subr.mxu0 0.0
      %4150 = vmatpush1.msra.mxu0 0.0
      %4151 = vmatprep.subr.mxu0 0.0
      %4152 = vmatpush1.msra.mxu0 0.0
      %4153 = vmatprep.subr.mxu0 0.0
      %4154 = vmatpush1.msra.mxu0 0.0
      %4155 = vmatprep.subr.mxu0 0.0
      %4156 = vmatpush1.msra.mxu0 0.0
      %4157 = vmatprep.subr.mxu0 0.0
      %4158 = vmatpush1.msra.mxu0 0.0
      %4159 = vmatprep.subr.mxu0 0.0
      %4160 = vmatpush1.msra.mxu0 0.0
      %4161 = vmatprep.subr.mxu0 0.0
      %4162 = vmatpush1.msra.mxu0 0.0
      %4163 = vmatprep.subr.mxu0 0.0
      %4164 = vmatpush1.msra.mxu0 0.0
      %4165 = vmatprep.subr.mxu0 0.0
      %4166 = vmatpush1.msra.mxu0 0.0
      %4167 = vmatprep.subr.mxu0 0.0
      %4168 = vmatpush1.msra.mxu0 0.0
      %4169 = vmatprep.subr.mxu0 0.0
      %4170 = vmatpush1.msra.mxu0 0.0
      %4171 = vmatprep.subr.mxu0 0.0
      %4172 = vmatpush1.msra.mxu0 0.0
      %4173 = vmatprep.subr.mxu0 0.0
      %4174 = vmatpush1.msra.mxu0 0.0
      %4175 = vmatprep.subr.mxu0 0.0
      %4176 = vmatpush1.msra.mxu0 0.0
      %4177 = vmatprep.subr.mxu0 0.0
      %4178 = vmatpush1.msra.mxu0 0.0
      %4179 = vmatprep.subr.mxu0 0.0
      %4180 = vmatpush1.msra.mxu0 %v4147
      %4181 = vmatprep.subr.mxu0 0.0
      %4182 = vmatpush2.msra.mxu0 0.0
      %4183 = vmatprep.subr.mxu0 0.0
      %4184 = vmatpush2.msra.mxu0 0.0
      %4185 = vmatprep.subr.mxu0 0.0
      %4186 = vmatpush2.msra.mxu0 0.0
      %4187 = vmatprep.subr.mxu0 0.0
      %4188 = vmatpush2.msra.mxu0 0.0
      %4189 = vmatprep.subr.mxu0 0.0
      %4190 = vmatpush2.msra.mxu0 0.0
      %4191 = vmatprep.subr.mxu0 0.0
      %4192 = vmatpush2.msra.mxu0 0.0
      %4193 = vmatprep.subr.mxu0 0.0
      %4194 = vmatpush2.msra.mxu0 0.0
      %4195 = vmatprep.subr.mxu0 0.0
      %4196 = vmatpush2.msra.mxu0 0.0
      %4197 = vmatprep.subr.mxu0 0.0
      %4198 = vmatpush2.msra.mxu0 0.0
      %4199 = vmatprep.subr.mxu0 0.0
      %4200 = vmatpush2.msra.mxu0 0.0
      %4201 = vmatprep.subr.mxu0 0.0
      %4202 = vmatpush2.msra.mxu0 0.0
      %4203 = vmatprep.subr.mxu0 0.0
      %4204 = vmatpush2.msra.mxu0 0.0
      %4205 = vmatprep.subr.mxu0 0.0
      %4206 = vmatpush2.msra.mxu0 0.0
      %4207 = vmatprep.subr.mxu0 0.0
      %4208 = vmatpush2.msra.mxu0 0.0
      %4209 = vmatprep.subr.mxu0 0.0
      %4210 = vmatpush2.msra.mxu0 0.0
      %4211 = vmatprep.subr.mxu0 0.0
      %4212 = vmatpush2.msra.mxu0 0.0
      %4213 = vmatprep.mubr.f32.mxu0 0.0
      %4214 = vmatmul.mubr.f32.gmra.mxu0 %v4144
      %v4215 = vpop.f32.mrf.mxu0
      %v4216 = vadd.f32 0.0, %v4215
      %v4217 = vpop.f32.mrf.mxu0
      %4218 = vdwg.mxu0
      %v4220 = vsel %vm3945, %v3989, 0
      %v4223 = vsel %vm3993, %v3638, 0
      %4225 = vmatprep.subr.mxu0 0.0
      %4226 = vmatpush1.msra.mxu0 0.0
      %4227 = vmatprep.subr.mxu0 0.0
      %4228 = vmatpush1.msra.mxu0 0.0
      %4229 = vmatprep.subr.mxu0 0.0
      %4230 = vmatpush1.msra.mxu0 0.0
      %4231 = vmatprep.subr.mxu0 0.0
      %4232 = vmatpush1.msra.mxu0 0.0
      %4233 = vmatprep.subr.mxu0 0.0
      %4234 = vmatpush1.msra.mxu0 0.0
      %4235 = vmatprep.subr.mxu0 0.0
      %4236 = vmatpush1.msra.mxu0 0.0
      %4237 = vmatprep.subr.mxu0 0.0
      %4238 = vmatpush1.msra.mxu0 0.0
      %4239 = vmatprep.subr.mxu0 0.0
      %4240 = vmatpush1.msra.mxu0 0.0
      %4241 = vmatprep.subr.mxu0 0.0
      %4242 = vmatpush1.msra.mxu0 0.0
      %4243 = vmatprep.subr.mxu0 0.0
      %4244 = vmatpush1.msra.mxu0 0.0
      %4245 = vmatprep.subr.mxu0 0.0
      %4246 = vmatpush1.msra.mxu0 0.0
      %4247 = vmatprep.subr.mxu0 0.0
      %4248 = vmatpush1.msra.mxu0 0.0
      %4249 = vmatprep.subr.mxu0 0.0
      %4250 = vmatpush1.msra.mxu0 0.0
      %4251 = vmatprep.subr.mxu0 0.0
      %4252 = vmatpush1.msra.mxu0 0.0
      %4253 = vmatprep.subr.mxu0 0.0
      %4254 = vmatpush1.msra.mxu0 0.0
      %4255 = vmatprep.subr.mxu0 0.0
      %4256 = vmatpush1.msra.mxu0 %v4223
      %4257 = vmatprep.subr.mxu0 0.0
      %4258 = vmatpush2.msra.mxu0 0.0
      %4259 = vmatprep.subr.mxu0 0.0
      %4260 = vmatpush2.msra.mxu0 0.0
      %4261 = vmatprep.subr.mxu0 0.0
      %4262 = vmatpush2.msra.mxu0 0.0
      %4263 = vmatprep.subr.mxu0 0.0
      %4264 = vmatpush2.msra.mxu0 0.0
      %4265 = vmatprep.subr.mxu0 0.0
      %4266 = vmatpush2.msra.mxu0 0.0
      %4267 = vmatprep.subr.mxu0 0.0
      %4268 = vmatpush2.msra.mxu0 0.0
      %4269 = vmatprep.subr.mxu0 0.0
      %4270 = vmatpush2.msra.mxu0 0.0
      %4271 = vmatprep.subr.mxu0 0.0
      %4272 = vmatpush2.msra.mxu0 0.0
      %4273 = vmatprep.subr.mxu0 0.0
      %4274 = vmatpush2.msra.mxu0 0.0
      %4275 = vmatprep.subr.mxu0 0.0
      %4276 = vmatpush2.msra.mxu0 0.0
      %4277 = vmatprep.subr.mxu0 0.0
      %4278 = vmatpush2.msra.mxu0 0.0
      %4279 = vmatprep.subr.mxu0 0.0
      %4280 = vmatpush2.msra.mxu0 0.0
      %4281 = vmatprep.subr.mxu0 0.0
      %4282 = vmatpush2.msra.mxu0 0.0
      %4283 = vmatprep.subr.mxu0 0.0
      %4284 = vmatpush2.msra.mxu0 0.0
      %4285 = vmatprep.subr.mxu0 0.0
      %4286 = vmatpush2.msra.mxu0 0.0
      %4287 = vmatprep.subr.mxu0 0.0
      %4288 = vmatpush2.msra.mxu0 0.0
      %4289 = vmatprep.mubr.f32.mxu0 0.0
      %4290 = vmatmul.mubr.f32.gmra.mxu0 %v4220
      %v4291 = vpop.f32.mrf.mxu0
      %v4292 = vadd.f32 0.0, %v4291
      %v4293 = vpop.f32.mrf.mxu0
      %4294 = vdwg.mxu0
      %v4296 = vsel %vm1680, %v4064, 0
      %4298 = vmatprep.subr.mxu0 0.0
      %4299 = vmatpush1.msra.mxu0 0.0
      %4300 = vmatprep.subr.mxu0 0.0
      %4301 = vmatpush1.msra.mxu0 0.0
      %4302 = vmatprep.subr.mxu0 0.0
      %4303 = vmatpush1.msra.mxu0 0.0
      %4304 = vmatprep.subr.mxu0 0.0
      %4305 = vmatpush1.msra.mxu0 0.0
      %4306 = vmatprep.subr.mxu0 0.0
      %4307 = vmatpush1.msra.mxu0 0.0
      %4308 = vmatprep.subr.mxu0 0.0
      %4309 = vmatpush1.msra.mxu0 0.0
      %4310 = vmatprep.subr.mxu0 0.0
      %4311 = vmatpush1.msra.mxu0 0.0
      %4312 = vmatprep.subr.mxu0 0.0
      %4313 = vmatpush1.msra.mxu0 0.0
      %4314 = vmatprep.subr.mxu0 0.0
      %4315 = vmatpush1.msra.mxu0 0.0
      %4316 = vmatprep.subr.mxu0 0.0
      %4317 = vmatpush1.msra.mxu0 0.0
      %4318 = vmatprep.subr.mxu0 0.0
      %4319 = vmatpush1.msra.mxu0 0.0
      %4320 = vmatprep.subr.mxu0 0.0
      %4321 = vmatpush1.msra.mxu0 0.0
      %4322 = vmatprep.subr.mxu0 0.0
      %4323 = vmatpush1.msra.mxu0 0.0
      %4324 = vmatprep.subr.mxu0 0.0
      %4325 = vmatpush1.msra.mxu0 0.0
      %4326 = vmatprep.subr.mxu0 0.0
      %4327 = vmatpush1.msra.mxu0 0.0
      %4328 = vmatprep.subr.mxu0 0.0
      %4329 = vmatpush1.msra.mxu0 %v2682
      %4330 = vmatprep.subr.mxu0 0.0
      %4331 = vmatpush2.msra.mxu0 0.0
      %4332 = vmatprep.subr.mxu0 0.0
      %4333 = vmatpush2.msra.mxu0 0.0
      %4334 = vmatprep.subr.mxu0 0.0
      %4335 = vmatpush2.msra.mxu0 0.0
      %4336 = vmatprep.subr.mxu0 0.0
      %4337 = vmatpush2.msra.mxu0 0.0
      %4338 = vmatprep.subr.mxu0 0.0
      %4339 = vmatpush2.msra.mxu0 0.0
      %4340 = vmatprep.subr.mxu0 0.0
      %4341 = vmatpush2.msra.mxu0 0.0
      %4342 = vmatprep.subr.mxu0 0.0
      %4343 = vmatpush2.msra.mxu0 0.0
      %4344 = vmatprep.subr.mxu0 0.0
      %4345 = vmatpush2.msra.mxu0 0.0
      %4346 = vmatprep.subr.mxu0 0.0
      %4347 = vmatpush2.msra.mxu0 0.0
      %4348 = vmatprep.subr.mxu0 0.0
      %4349 = vmatpush2.msra.mxu0 0.0
      %4350 = vmatprep.subr.mxu0 0.0
      %4351 = vmatpush2.msra.mxu0 0.0
      %4352 = vmatprep.subr.mxu0 0.0
      %4353 = vmatpush2.msra.mxu0 0.0
      %4354 = vmatprep.subr.mxu0 0.0
      %4355 = vmatpush2.msra.mxu0 0.0
      %4356 = vmatprep.subr.mxu0 0.0
      %4357 = vmatpush2.msra.mxu0 0.0
      %4358 = vmatprep.subr.mxu0 0.0
      %4359 = vmatpush2.msra.mxu0 0.0
      %4360 = vmatprep.subr.mxu0 0.0
      %4361 = vmatpush2.msra.mxu0 0.0
      %4362 = vmatprep.mubr.f32.mxu0 0.0
      %4363 = vmatmul.mubr.f32.gmra.mxu0 %v4296
      %v4364 = vpop.f32.mrf.mxu0
      %v4365 = vadd.f32 0.0, %v4364
      %v4366 = vpop.f32.mrf.mxu0
      %4367 = vdwg.mxu0
      %v4369 = vsel %vm1680, %v4140, 0
      %4371 = vmatprep.subr.mxu0 0.0
      %4372 = vmatpush1.msra.mxu0 0.0
      %4373 = vmatprep.subr.mxu0 0.0
      %4374 = vmatpush1.msra.mxu0 0.0
      %4375 = vmatprep.subr.mxu0 0.0
      %4376 = vmatpush1.msra.mxu0 0.0
      %4377 = vmatprep.subr.mxu0 0.0
      %4378 = vmatpush1.msra.mxu0 0.0
      %4379 = vmatprep.subr.mxu0 0.0
      %4380 = vmatpush1.msra.mxu0 0.0
      %4381 = vmatprep.subr.mxu0 0.0
      %4382 = vmatpush1.msra.mxu0 0.0
      %4383 = vmatprep.subr.mxu0 0.0
      %4384 = vmatpush1.msra.mxu0 0.0
      %4385 = vmatprep.subr.mxu0 0.0
      %4386 = vmatpush1.msra.mxu0 0.0
      %4387 = vmatprep.subr.mxu0 0.0
      %4388 = vmatpush1.msra.mxu0 0.0
      %4389 = vmatprep.subr.mxu0 0.0
      %4390 = vmatpush1.msra.mxu0 0.0
      %4391 = vmatprep.subr.mxu0 0.0
      %4392 = vmatpush1.msra.mxu0 0.0
      %4393 = vmatprep.subr.mxu0 0.0
      %4394 = vmatpush1.msra.mxu0 0.0
      %4395 = vmatprep.subr.mxu0 0.0
      %4396 = vmatpush1.msra.mxu0 0.0
      %4397 = vmatprep.subr.mxu0 0.0
      %4398 = vmatpush1.msra.mxu0 0.0
      %4399 = vmatprep.subr.mxu0 0.0
      %4400 = vmatpush1.msra.mxu0 0.0
      %4401 = vmatprep.subr.mxu0 0.0
      %4402 = vmatpush1.msra.mxu0 %v2683
      %4403 = vmatprep.subr.mxu0 0.0
      %4404 = vmatpush2.msra.mxu0 0.0
      %4405 = vmatprep.subr.mxu0 0.0
      %4406 = vmatpush2.msra.mxu0 0.0
      %4407 = vmatprep.subr.mxu0 0.0
      %4408 = vmatpush2.msra.mxu0 0.0
      %4409 = vmatprep.subr.mxu0 0.0
      %4410 = vmatpush2.msra.mxu0 0.0
      %4411 = vmatprep.subr.mxu0 0.0
      %4412 = vmatpush2.msra.mxu0 0.0
      %4413 = vmatprep.subr.mxu0 0.0
      %4414 = vmatpush2.msra.mxu0 0.0
      %4415 = vmatprep.subr.mxu0 0.0
      %4416 = vmatpush2.msra.mxu0 0.0
      %4417 = vmatprep.subr.mxu0 0.0
      %4418 = vmatpush2.msra.mxu0 0.0
      %4419 = vmatprep.subr.mxu0 0.0
      %4420 = vmatpush2.msra.mxu0 0.0
      %4421 = vmatprep.subr.mxu0 0.0
      %4422 = vmatpush2.msra.mxu0 0.0
      %4423 = vmatprep.subr.mxu0 0.0
      %4424 = vmatpush2.msra.mxu0 0.0
      %4425 = vmatprep.subr.mxu0 0.0
      %4426 = vmatpush2.msra.mxu0 0.0
      %4427 = vmatprep.subr.mxu0 0.0
      %4428 = vmatpush2.msra.mxu0 0.0
      %4429 = vmatprep.subr.mxu0 0.0
      %4430 = vmatpush2.msra.mxu0 0.0
      %4431 = vmatprep.subr.mxu0 0.0
      %4432 = vmatpush2.msra.mxu0 0.0
      %4433 = vmatprep.subr.mxu0 0.0
      %4434 = vmatpush2.msra.mxu0 0.0
      %4435 = vmatprep.mubr.f32.mxu0 0.0
      %4436 = vmatmul.mubr.f32.gmra.mxu0 %v4369
      %v4437 = vpop.f32.mrf.mxu0
      %v4438 = vadd.f32 0.0, %v4437
      %v4439 = vpop.f32.mrf.mxu0
      %4440 = vdwg.mxu0
      %v4442 = vsel %vm1680, %v4216, 0
      %4444 = vmatprep.subr.mxu0 0.0
      %4445 = vmatpush1.msra.mxu0 0.0
      %4446 = vmatprep.subr.mxu0 0.0
      %4447 = vmatpush1.msra.mxu0 0.0
      %4448 = vmatprep.subr.mxu0 0.0
      %4449 = vmatpush1.msra.mxu0 0.0
      %4450 = vmatprep.subr.mxu0 0.0
      %4451 = vmatpush1.msra.mxu0 0.0
      %4452 = vmatprep.subr.mxu0 0.0
      %4453 = vmatpush1.msra.mxu0 0.0
      %4454 = vmatprep.subr.mxu0 0.0
      %4455 = vmatpush1.msra.mxu0 0.0
      %4456 = vmatprep.subr.mxu0 0.0
      %4457 = vmatpush1.msra.mxu0 0.0
      %4458 = vmatprep.subr.mxu0 0.0
      %4459 = vmatpush1.msra.mxu0 0.0
      %4460 = vmatprep.subr.mxu0 0.0
      %4461 = vmatpush1.msra.mxu0 0.0
      %4462 = vmatprep.subr.mxu0 0.0
      %4463 = vmatpush1.msra.mxu0 0.0
      %4464 = vmatprep.subr.mxu0 0.0
      %4465 = vmatpush1.msra.mxu0 0.0
      %4466 = vmatprep.subr.mxu0 0.0
      %4467 = vmatpush1.msra.mxu0 0.0
      %4468 = vmatprep.subr.mxu0 0.0
      %4469 = vmatpush1.msra.mxu0 0.0
      %4470 = vmatprep.subr.mxu0 0.0
      %4471 = vmatpush1.msra.mxu0 0.0
      %4472 = vmatprep.subr.mxu0 0.0
      %4473 = vmatpush1.msra.mxu0 0.0
      %4474 = vmatprep.subr.mxu0 0.0
      %4475 = vmatpush1.msra.mxu0 %v2684
      %4476 = vmatprep.subr.mxu0 0.0
      %4477 = vmatpush2.msra.mxu0 0.0
      %4478 = vmatprep.subr.mxu0 0.0
      %4479 = vmatpush2.msra.mxu0 0.0
      %4480 = vmatprep.subr.mxu0 0.0
      %4481 = vmatpush2.msra.mxu0 0.0
      %4482 = vmatprep.subr.mxu0 0.0
      %4483 = vmatpush2.msra.mxu0 0.0
      %4484 = vmatprep.subr.mxu0 0.0
      %4485 = vmatpush2.msra.mxu0 0.0
      %4486 = vmatprep.subr.mxu0 0.0
      %4487 = vmatpush2.msra.mxu0 0.0
      %4488 = vmatprep.subr.mxu0 0.0
      %4489 = vmatpush2.msra.mxu0 0.0
      %4490 = vmatprep.subr.mxu0 0.0
      %4491 = vmatpush2.msra.mxu0 0.0
      %4492 = vmatprep.subr.mxu0 0.0
      %4493 = vmatpush2.msra.mxu0 0.0
      %4494 = vmatprep.subr.mxu0 0.0
      %4495 = vmatpush2.msra.mxu0 0.0
      %4496 = vmatprep.subr.mxu0 0.0
      %4497 = vmatpush2.msra.mxu0 0.0
      %4498 = vmatprep.subr.mxu0 0.0
      %4499 = vmatpush2.msra.mxu0 0.0
      %4500 = vmatprep.subr.mxu0 0.0
      %4501 = vmatpush2.msra.mxu0 0.0
      %4502 = vmatprep.subr.mxu0 0.0
      %4503 = vmatpush2.msra.mxu0 0.0
      %4504 = vmatprep.subr.mxu0 0.0
      %4505 = vmatpush2.msra.mxu0 0.0
      %4506 = vmatprep.subr.mxu0 0.0
      %4507 = vmatpush2.msra.mxu0 0.0
      %4508 = vmatprep.mubr.f32.mxu0 0.0
      %4509 = vmatmul.mubr.f32.gmra.mxu0 %v4442
      %v4510 = vpop.f32.mrf.mxu0
      %v4511 = vadd.f32 0.0, %v4510
      %v4512 = vpop.f32.mrf.mxu0
      %4513 = vdwg.mxu0
      %v4515 = vsel %vm1680, %v4292, 0
      %4517 = vmatprep.subr.mxu0 0.0
      %4518 = vmatpush1.msra.mxu0 0.0
      %4519 = vmatprep.subr.mxu0 0.0
      %4520 = vmatpush1.msra.mxu0 0.0
      %4521 = vmatprep.subr.mxu0 0.0
      %4522 = vmatpush1.msra.mxu0 0.0
      %4523 = vmatprep.subr.mxu0 0.0
      %4524 = vmatpush1.msra.mxu0 0.0
      %4525 = vmatprep.subr.mxu0 0.0
      %4526 = vmatpush1.msra.mxu0 0.0
      %4527 = vmatprep.subr.mxu0 0.0
      %4528 = vmatpush1.msra.mxu0 0.0
      %4529 = vmatprep.subr.mxu0 0.0
      %4530 = vmatpush1.msra.mxu0 0.0
      %4531 = vmatprep.subr.mxu0 0.0
      %4532 = vmatpush1.msra.mxu0 0.0
      %4533 = vmatprep.subr.mxu0 0.0
      %4534 = vmatpush1.msra.mxu0 0.0
      %4535 = vmatprep.subr.mxu0 0.0
      %4536 = vmatpush1.msra.mxu0 0.0
      %4537 = vmatprep.subr.mxu0 0.0
      %4538 = vmatpush1.msra.mxu0 0.0
      %4539 = vmatprep.subr.mxu0 0.0
      %4540 = vmatpush1.msra.mxu0 0.0
      %4541 = vmatprep.subr.mxu0 0.0
      %4542 = vmatpush1.msra.mxu0 0.0
      %4543 = vmatprep.subr.mxu0 0.0
      %4544 = vmatpush1.msra.mxu0 0.0
      %4545 = vmatprep.subr.mxu0 0.0
      %4546 = vmatpush1.msra.mxu0 0.0
      %4547 = vmatprep.subr.mxu0 0.0
      %4548 = vmatpush1.msra.mxu0 %v2685
      %4549 = vmatprep.subr.mxu0 0.0
      %4550 = vmatpush2.msra.mxu0 0.0
      %4551 = vmatprep.subr.mxu0 0.0
      %4552 = vmatpush2.msra.mxu0 0.0
      %4553 = vmatprep.subr.mxu0 0.0
      %4554 = vmatpush2.msra.mxu0 0.0
      %4555 = vmatprep.subr.mxu0 0.0
      %4556 = vmatpush2.msra.mxu0 0.0
      %4557 = vmatprep.subr.mxu0 0.0
      %4558 = vmatpush2.msra.mxu0 0.0
      %4559 = vmatprep.subr.mxu0 0.0
      %4560 = vmatpush2.msra.mxu0 0.0
      %4561 = vmatprep.subr.mxu0 0.0
      %4562 = vmatpush2.msra.mxu0 0.0
      %4563 = vmatprep.subr.mxu0 0.0
      %4564 = vmatpush2.msra.mxu0 0.0
      %4565 = vmatprep.subr.mxu0 0.0
      %4566 = vmatpush2.msra.mxu0 0.0
      %4567 = vmatprep.subr.mxu0 0.0
      %4568 = vmatpush2.msra.mxu0 0.0
      %4569 = vmatprep.subr.mxu0 0.0
      %4570 = vmatpush2.msra.mxu0 0.0
      %4571 = vmatprep.subr.mxu0 0.0
      %4572 = vmatpush2.msra.mxu0 0.0
      %4573 = vmatprep.subr.mxu0 0.0
      %4574 = vmatpush2.msra.mxu0 0.0
      %4575 = vmatprep.subr.mxu0 0.0
      %4576 = vmatpush2.msra.mxu0 0.0
      %4577 = vmatprep.subr.mxu0 0.0
      %4578 = vmatpush2.msra.mxu0 0.0
      %4579 = vmatprep.subr.mxu0 0.0
      %4580 = vmatpush2.msra.mxu0 0.0
      %4581 = vmatprep.mubr.f32.mxu0 0.0
      %4582 = vmatmul.mubr.f32.gmra.mxu0 %v4515
      %v4583 = vpop.f32.mrf.mxu0
      %v4584 = vadd.f32 0.0, %v4583
      %v4585 = vpop.f32.mrf.mxu0
      %4586 = vdwg.mxu0
      %v4587 = vsel %vm407, %v4365, 0.0
      %v4588 = vsel %vm407, %v4438, 0.0
      %v4589 = vadd.f32 %v4587, %v4588
      %v4590 = vsel %vm407, %v4511, 0.0
      %v4591 = vadd.f32 %v4589, %v4590
      %v4592 = vsel %vm407, %v4584, 0.0
      %v4593 = vadd.f32 %v4591, %v4592
      %v4594 = vlaneseq
      %v4595 = vshrl.u32 %v4594, 7
      %v4596 = vsub.s32 0, %v4595
      %v4597 = vrot.slane %v2686, %v4596
      %v4598 = vadd.f32 %v4593, %v4597
      %v4599 = vadd.f32 %v2625, %v4598
      %v4600 = vld [vmem:[%s3 + $0x110] sm:$0x1]
      %v4601 = vld [vmem:[%s3 + $0x118] sm:$0x1]
      %v4602 = vsel %vm407, %v4599, 0.0
      %4603 = vadd.xlane.f32.xlu0 %v4602
      %v4604 = vpop.xlane.xlu0 %4603
      %v4605 = vmul.f32 %v4604, %v674
      %v4606 = vsub.f32 %v4599, %v4605
      %v4607 = vmul.f32 %v4606, %v4606
      %v4608 = vsel %vm407, %v4607, 0.0
      %4609 = vadd.xlane.f32.xlu0 %v4608
      %v4610 = vpop.xlane.xlu0 %4609
      %v4611 = vmul.f32 %v4610, %v674
      %v4612 = vadd.f32 %v4611, 1e-05
      %v4613 = vrsqrt.pop %v4612
      %v4614 = vmul.f32 %v4606, %v4613
      %v4615 = vlaneseq
      %v4616 = vshrl.u32 %v4615, 7
      %v4617 = vsub.s32 0, %v4616
      %v4618 = vrot.slane %v4600, %v4617
      %v4619 = vmul.f32 %v4614, %v4618
      %v4620 = vlaneseq
      %v4621 = vshrl.u32 %v4620, 7
      %v4622 = vsub.s32 0, %v4621
      %v4623 = vrot.slane %v4601, %v4622
      %v4624 = vadd.f32 %v4619, %v4623
      %v4625 = vld [vmem:[%s4 + $0x28] sm:$0xff]
      %v4626 = vld [vmem:[%s4 + $0x30] sm:$0xff]
      %v4627 = vld [vmem:[%s4 + $0x38] sm:$0xff]
      %v4628 = vld [vmem:[%s4 + $0x40] sm:$0xff]
      %v4629 = vld [vmem:[%s4 + $0x48] sm:$0x1]
      %v4630 = vlaneseq
      %v4631 = vshrl.u32 %v4630, 7
      %v4632 = vsub.s32 0, %v4631
      %v4633 = vrot.slane %v4629, %v4632
      %v4635 = vsel %vm407, %v4624, 0
      %4637 = vmatprep.subr.mxu0 0.0
      %4638 = vmatpush1.msra.mxu0 0.0
      %4639 = vmatprep.subr.mxu0 0.0
      %4640 = vmatpush1.msra.mxu0 0.0
      %4641 = vmatprep.subr.mxu0 0.0
      %4642 = vmatpush1.msra.mxu0 0.0
      %4643 = vmatprep.subr.mxu0 0.0
      %4644 = vmatpush1.msra.mxu0 0.0
      %4645 = vmatprep.subr.mxu0 0.0
      %4646 = vmatpush1.msra.mxu0 0.0
      %4647 = vmatprep.subr.mxu0 0.0
      %4648 = vmatpush1.msra.mxu0 0.0
      %4649 = vmatprep.subr.mxu0 0.0
      %4650 = vmatpush1.msra.mxu0 0.0
      %4651 = vmatprep.subr.mxu0 0.0
      %4652 = vmatpush1.msra.mxu0 0.0
      %4653 = vmatprep.subr.mxu0 0.0
      %4654 = vmatpush1.msra.mxu0 0.0
      %4655 = vmatprep.subr.mxu0 0.0
      %4656 = vmatpush1.msra.mxu0 0.0
      %4657 = vmatprep.subr.mxu0 0.0
      %4658 = vmatpush1.msra.mxu0 0.0
      %4659 = vmatprep.subr.mxu0 0.0
      %4660 = vmatpush1.msra.mxu0 0.0
      %4661 = vmatprep.subr.mxu0 0.0
      %4662 = vmatpush1.msra.mxu0 %v4628
      %4663 = vmatprep.subr.mxu0 0.0
      %4664 = vmatpush1.msra.mxu0 %v4627
      %4665 = vmatprep.subr.mxu0 0.0
      %4666 = vmatpush1.msra.mxu0 %v4626
      %4667 = vmatprep.subr.mxu0 0.0
      %4668 = vmatpush1.msra.mxu0 %v4625
      %4669 = vmatprep.subr.mxu0 0.0
      %4670 = vmatpush2.msra.mxu0 0.0
      %4671 = vmatprep.subr.mxu0 0.0
      %4672 = vmatpush2.msra.mxu0 0.0
      %4673 = vmatprep.subr.mxu0 0.0
      %4674 = vmatpush2.msra.mxu0 0.0
      %4675 = vmatprep.subr.mxu0 0.0
      %4676 = vmatpush2.msra.mxu0 0.0
      %4677 = vmatprep.subr.mxu0 0.0
      %4678 = vmatpush2.msra.mxu0 0.0
      %4679 = vmatprep.subr.mxu0 0.0
      %4680 = vmatpush2.msra.mxu0 0.0
      %4681 = vmatprep.subr.mxu0 0.0
      %4682 = vmatpush2.msra.mxu0 0.0
      %4683 = vmatprep.subr.mxu0 0.0
      %4684 = vmatpush2.msra.mxu0 0.0
      %4685 = vmatprep.subr.mxu0 0.0
      %4686 = vmatpush2.msra.mxu0 0.0
      %4687 = vmatprep.subr.mxu0 0.0
      %4688 = vmatpush2.msra.mxu0 0.0
      %4689 = vmatprep.subr.mxu0 0.0
      %4690 = vmatpush2.msra.mxu0 0.0
      %4691 = vmatprep.subr.mxu0 0.0
      %4692 = vmatpush2.msra.mxu0 0.0
      %4693 = vmatprep.subr.mxu0 0.0
      %4694 = vmatpush2.msra.mxu0 0.0
      %4695 = vmatprep.subr.mxu0 0.0
      %4696 = vmatpush2.msra.mxu0 0.0
      %4697 = vmatprep.subr.mxu0 0.0
      %4698 = vmatpush2.msra.mxu0 0.0
      %4699 = vmatprep.subr.mxu0 0.0
      %4700 = vmatpush2.msra.mxu0 0.0
      %4701 = vmatprep.mubr.f32.mxu0 0.0
      %4702 = vmatmul.mubr.f32.gmra.mxu0 %v4635
      %v4703 = vpop.f32.mrf.mxu0
      %v4704 = vadd.f32 %v4633, %v4703
      %v4705 = vpop.f32.mrf.mxu0
      %4706 = vdwg.mxu0
      %v4707 = vmul.f32 %v4704, 0.5
      %v4708 = vmul.f32 %v4704, 0.044715
      %v4709 = vmul.f32 %v4708, %v4704
      %v4710 = vmul.f32 %v4709, %v4704
      %v4711 = vadd.f32 %v4704, %v4710
      %v4712 = vmul.f32 %v4711, 0.7978846
      %v4713 = vtanh.pop %v4712
      %v4714 = vadd.f32 %v4713, 1.0
      %v4715 = vmul.f32 %v4707, %v4714
      %v4716 = vld [vmem:[%s3 + $0x138] sm:$0xff]
      %v4717 = vld [vmem:[%s3 + $0x140] sm:$0xff]
      %v4718 = vld [vmem:[%s3 + $0x148] sm:$0xff]
      %v4719 = vld [vmem:[%s3 + $0x150] sm:$0xff]
      %v4720 = vld [vmem:[%s3 + $0x158] sm:$0xff]
      %v4721 = vld [vmem:[%s3 + $0x160] sm:$0xff]
      %v4722 = vld [vmem:[%s3 + $0x168] sm:$0xff]
      %v4723 = vld [vmem:[%s3 + $0x170] sm:$0xff]
      %v4724 = vld [vmem:[%s3 + $0x178] sm:$0xff]
      %v4725 = vld [vmem:[%s3 + $0x180] sm:$0xff]
      %v4726 = vld [vmem:[%s3 + $0x188] sm:$0xff]
      %v4727 = vld [vmem:[%s3 + $0x190] sm:$0xff]
      %v4728 = vld [vmem:[%s3 + $0x198] sm:$0xff]
      %v4729 = vld [vmem:[%s3 + $0x1a0] sm:$0xff]
      %v4730 = vld [vmem:[%s3 + $0x1a8] sm:$0xff]
      %v4731 = vld [vmem:[%s3 + $0x1b0] sm:$0xff]
      %4732 = vmatprep.subr.mxu0 0.0
      %4733 = vmatpush1.msra.mxu0 %v4731
      %4734 = vmatprep.subr.mxu0 0.0
      %4735 = vmatpush1.msra.mxu0 %v4730
      %4736 = vmatprep.subr.mxu0 0.0
      %4737 = vmatpush1.msra.mxu0 %v4729
      %4738 = vmatprep.subr.mxu0 0.0
      %4739 = vmatpush1.msra.mxu0 %v4728
      %4740 = vmatprep.subr.mxu0 0.0
      %4741 = vmatpush1.msra.mxu0 %v4727
      %4742 = vmatprep.subr.mxu0 0.0
      %4743 = vmatpush1.msra.mxu0 %v4726
      %4744 = vmatprep.subr.mxu0 0.0
      %4745 = vmatpush1.msra.mxu0 %v4725
      %4746 = vmatprep.subr.mxu0 0.0
      %4747 = vmatpush1.msra.mxu0 %v4724
      %4748 = vmatprep.subr.mxu0 0.0
      %4749 = vmatpush1.msra.mxu0 %v4723
      %4750 = vmatprep.subr.mxu0 0.0
      %4751 = vmatpush1.msra.mxu0 %v4722
      %4752 = vmatprep.subr.mxu0 0.0
      %4753 = vmatpush1.msra.mxu0 %v4721
      %4754 = vmatprep.subr.mxu0 0.0
      %4755 = vmatpush1.msra.mxu0 %v4720
      %4756 = vmatprep.subr.mxu0 0.0
      %4757 = vmatpush1.msra.mxu0 %v4719
      %4758 = vmatprep.subr.mxu0 0.0
      %4759 = vmatpush1.msra.mxu0 %v4718
      %4760 = vmatprep.subr.mxu0 0.0
      %4761 = vmatpush1.msra.mxu0 %v4717
      %4762 = vmatprep.subr.mxu0 0.0
      %4763 = vmatpush1.msra.mxu0 %v4716
      %4764 = vmatprep.subr.mxu0 0.0
      %4765 = vmatpush2.msra.mxu0 0.0
      %4766 = vmatprep.subr.mxu0 0.0
      %4767 = vmatpush2.msra.mxu0 0.0
      %4768 = vmatprep.subr.mxu0 0.0
      %4769 = vmatpush2.msra.mxu0 0.0
      %4770 = vmatprep.subr.mxu0 0.0
      %4771 = vmatpush2.msra.mxu0 0.0
      %4772 = vmatprep.subr.mxu0 0.0
      %4773 = vmatpush2.msra.mxu0 0.0
      %4774 = vmatprep.subr.mxu0 0.0
      %4775 = vmatpush2.msra.mxu0 0.0
      %4776 = vmatprep.subr.mxu0 0.0
      %4777 = vmatpush2.msra.mxu0 0.0
      %4778 = vmatprep.subr.mxu0 0.0
      %4779 = vmatpush2.msra.mxu0 0.0
      %4780 = vmatprep.subr.mxu0 0.0
      %4781 = vmatpush2.msra.mxu0 0.0
      %4782 = vmatprep.subr.mxu0 0.0
      %4783 = vmatpush2.msra.mxu0 0.0
      %4784 = vmatprep.subr.mxu0 0.0
      %4785 = vmatpush2.msra.mxu0 0.0
      %4786 = vmatprep.subr.mxu0 0.0
      %4787 = vmatpush2.msra.mxu0 0.0
      %4788 = vmatprep.subr.mxu0 0.0
      %4789 = vmatpush2.msra.mxu0 0.0
      %4790 = vmatprep.subr.mxu0 0.0
      %4791 = vmatpush2.msra.mxu0 0.0
      %4792 = vmatprep.subr.mxu0 0.0
      %4793 = vmatpush2.msra.mxu0 0.0
      %4794 = vmatprep.subr.mxu0 0.0
      %4795 = vmatpush2.msra.mxu0 0.0
      %4796 = vmatprep.mubr.f32.mxu0 0.0
      %4797 = vmatmul.mubr.f32.gmra.mxu0 %v4715
      %v4798 = vpop.f32.mrf.mxu0
      %v4799 = vadd.f32 0.0, %v4798
      %v4800 = vpop.f32.mrf.mxu0
      %4801 = vdwg.mxu0
      %v4802 = vadd.f32 %v4599, %v4799
      %v4803 = vld [vmem:[%s3 + $0x130] sm:$0x1]
      %v4804 = vlaneseq
      %v4805 = vshrl.u32 %v4804, 7
      %v4806 = vsub.s32 0, %v4805
      %v4807 = vrot.slane %v4803, %v4806
      %v4808 = vadd.f32 %v4802, %v4807
      %v4809 = vld [vmem:[%s3 + $0x1b8] sm:$0x1]
      %v4810 = vld [vmem:[%s3 + $0x1c0] sm:$0x1]
      %v4811 = vsel %vm407, %v4808, 0.0
      %4812 = vadd.xlane.f32.xlu0 %v4811
      %v4813 = vpop.xlane.xlu0 %4812
      %v4814 = vmul.f32 %v4813, %v674
      %v4815 = vsub.f32 %v4808, %v4814
      %v4816 = vmul.f32 %v4815, %v4815
      %v4817 = vsel %vm407, %v4816, 0.0
      %4818 = vadd.xlane.f32.xlu0 %v4817
      %v4819 = vpop.xlane.xlu0 %4818
      %v4820 = vmul.f32 %v4819, %v674
      %v4821 = vadd.f32 %v4820, 1e-05
      %v4822 = vrsqrt.pop %v4821
      %v4823 = vmul.f32 %v4815, %v4822
      %v4824 = vlaneseq
      %v4825 = vshrl.u32 %v4824, 7
      %v4826 = vsub.s32 0, %v4825
      %v4827 = vrot.slane %v4809, %v4826
      %v4828 = vmul.f32 %v4823, %v4827
      %v4829 = vlaneseq
      %v4830 = vshrl.u32 %v4829, 7
      %v4831 = vsub.s32 0, %v4830
      %v4832 = vrot.slane %v4810, %v4831
      %v4833 = vadd.f32 %v4828, %v4832
      %s4834 = scalar_lea.vmem %s5, 256
      %v4835 = vld [vmem:[%s4834] sm:$0xff]
      %v4836 = vld [vmem:[%s4834 + $0x8] sm:$0xff]
      %v4837 = vld [vmem:[%s4834 + $0x10] sm:$0xff]
      %v4838 = vld [vmem:[%s4834 + $0x18] sm:$0xff]
      %s4839 = scalar_lea.vmem %s6, 24
      %v4840 = vld [vmem:[%s4839] sm:$0x1]
      %v4841 = vld [vmem:[%s4839 + $0x1] sm:$0x1]
      %v4842 = vld [vmem:[%s4839 + $0x2] sm:$0x1]
      %v4843 = vld [vmem:[%s4839 + $0x3] sm:$0x1]
      %s4844 = scalar_lea.vmem %s5, 288
      %v4845 = vld [vmem:[%s4844] sm:$0xff]
      %v4846 = vld [vmem:[%s4844 + $0x8] sm:$0xff]
      %v4847 = vld [vmem:[%s4844 + $0x10] sm:$0xff]
      %v4848 = vld [vmem:[%s4844 + $0x18] sm:$0xff]
      %s4849 = scalar_lea.vmem %s6, 28
      %v4850 = vld [vmem:[%s4849] sm:$0x1]
      %v4851 = vld [vmem:[%s4849 + $0x1] sm:$0x1]
      %v4852 = vld [vmem:[%s4849 + $0x2] sm:$0x1]
      %v4853 = vld [vmem:[%s4849 + $0x3] sm:$0x1]
      %s4854 = scalar_lea.vmem %s5, 320
      %v4855 = vld [vmem:[%s4854] sm:$0xff]
      %v4856 = vld [vmem:[%s4854 + $0x8] sm:$0xff]
      %v4857 = vld [vmem:[%s4854 + $0x10] sm:$0xff]
      %v4858 = vld [vmem:[%s4854 + $0x18] sm:$0xff]
      %s4859 = scalar_lea.vmem %s6, 32
      %v4860 = vld [vmem:[%s4859] sm:$0x1]
      %v4861 = vld [vmem:[%s4859 + $0x1] sm:$0x1]
      %v4862 = vld [vmem:[%s4859 + $0x2] sm:$0x1]
      %v4863 = vld [vmem:[%s4859 + $0x3] sm:$0x1]
      %s4864 = scalar_lea.vmem %s5, 352
      %v4865 = vld [vmem:[%s4864] sm:$0xff]
      %v4866 = vld [vmem:[%s4864 + $0x8] sm:$0xff]
      %v4867 = vld [vmem:[%s4864 + $0x10] sm:$0xff]
      %v4868 = vld [vmem:[%s4864 + $0x18] sm:$0xff]
      %v4869 = vld [vmem:[%s3 + $0x1e8] sm:$0x1]
      %v4874 = vlaneseq
      %v4875 = vshrl.u32 %v4874, 7
      %v4876 = vsub.s32 0, %v4875
      %v4877 = vrot.slane %v4840, %v4876
      %v4878 = vlaneseq
      %v4879 = vshrl.u32 %v4878, 7
      %v4880 = vsub.s32 0, %v4879
      %v4881 = vrot.slane %v4841, %v4880
      %v4882 = vlaneseq
      %v4883 = vshrl.u32 %v4882, 7
      %v4884 = vsub.s32 0, %v4883
      %v4885 = vrot.slane %v4842, %v4884
      %v4886 = vlaneseq
      %v4887 = vshrl.u32 %v4886, 7
      %v4888 = vsub.s32 0, %v4887
      %v4889 = vrot.slane %v4843, %v4888
      %v4895 = vsel %vm407, %v4833, 0
      %v4898 = vsel %vm407, %v4835, 0
      %4900 = vmatprep.subr.mxu0 0.0
      %4901 = vmatpush1.xpose.msra.mxu0 0.0
      %4902 = vmatprep.subr.mxu0 0.0
      %4903 = vmatpush1.xpose.msra.mxu0 0.0
      %4904 = vmatprep.subr.mxu0 0.0
      %4905 = vmatpush1.xpose.msra.mxu0 0.0
      %4906 = vmatprep.subr.mxu0 0.0
      %4907 = vmatpush1.xpose.msra.mxu0 0.0
      %4908 = vmatprep.subr.mxu0 0.0
      %4909 = vmatpush1.xpose.msra.mxu0 0.0
      %4910 = vmatprep.subr.mxu0 0.0
      %4911 = vmatpush1.xpose.msra.mxu0 0.0
      %4912 = vmatprep.subr.mxu0 0.0
      %4913 = vmatpush1.xpose.msra.mxu0 0.0
      %4914 = vmatprep.subr.mxu0 0.0
      %4915 = vmatpush1.xpose.msra.mxu0 0.0
      %4916 = vmatprep.subr.mxu0 0.0
      %4917 = vmatpush1.xpose.msra.mxu0 0.0
      %4918 = vmatprep.subr.mxu0 0.0
      %4919 = vmatpush1.xpose.msra.mxu0 0.0
      %4920 = vmatprep.subr.mxu0 0.0
      %4921 = vmatpush1.xpose.msra.mxu0 0.0
      %4922 = vmatprep.subr.mxu0 0.0
      %4923 = vmatpush1.xpose.msra.mxu0 0.0
      %4924 = vmatprep.subr.mxu0 0.0
      %4925 = vmatpush1.xpose.msra.mxu0 0.0
      %4926 = vmatprep.subr.mxu0 0.0
      %4927 = vmatpush1.xpose.msra.mxu0 0.0
      %4928 = vmatprep.subr.mxu0 0.0
      %4929 = vmatpush1.xpose.msra.mxu0 0.0
      %4930 = vmatprep.subr.mxu0 0.0
      %4931 = vmatpush1.xpose.msra.mxu0 %v4898
      %4932 = vmatprep.subr.mxu0 0.0
      %4933 = vmatpush2.xpose.msra.mxu0 0.0
      %4934 = vmatprep.subr.mxu0 0.0
      %4935 = vmatpush2.xpose.msra.mxu0 0.0
      %4936 = vmatprep.subr.mxu0 0.0
      %4937 = vmatpush2.xpose.msra.mxu0 0.0
      %4938 = vmatprep.subr.mxu0 0.0
      %4939 = vmatpush2.xpose.msra.mxu0 0.0
      %4940 = vmatprep.subr.mxu0 0.0
      %4941 = vmatpush2.xpose.msra.mxu0 0.0
      %4942 = vmatprep.subr.mxu0 0.0
      %4943 = vmatpush2.xpose.msra.mxu0 0.0
      %4944 = vmatprep.subr.mxu0 0.0
      %4945 = vmatpush2.xpose.msra.mxu0 0.0
      %4946 = vmatprep.subr.mxu0 0.0
      %4947 = vmatpush2.xpose.msra.mxu0 0.0
      %4948 = vmatprep.subr.mxu0 0.0
      %4949 = vmatpush2.xpose.msra.mxu0 0.0
      %4950 = vmatprep.subr.mxu0 0.0
      %4951 = vmatpush2.xpose.msra.mxu0 0.0
      %4952 = vmatprep.subr.mxu0 0.0
      %4953 = vmatpush2.xpose.msra.mxu0 0.0
      %4954 = vmatprep.subr.mxu0 0.0
      %4955 = vmatpush2.xpose.msra.mxu0 0.0
      %4956 = vmatprep.subr.mxu0 0.0
      %4957 = vmatpush2.xpose.msra.mxu0 0.0
      %4958 = vmatprep.subr.mxu0 0.0
      %4959 = vmatpush2.xpose.msra.mxu0 0.0
      %4960 = vmatprep.subr.mxu0 0.0
      %4961 = vmatpush2.xpose.msra.mxu0 0.0
      %4962 = vmatprep.subr.mxu0 0.0
      %4963 = vmatpush2.xpose.msra.mxu0 0.0
      %4964 = vmatprep.mubr.f32.mxu0 0.0
      %4965 = vmatmul.mubr.f32.gmra.mxu0 %v4895
      %v4966 = vpop.f32.mrf.mxu0
      %v4967 = vadd.f32 %v4877, %v4966
      %v4968 = vpop.f32.mrf.mxu0
      %4969 = vdwg.mxu0
      %v4971 = vsel %vm407, %v4836, 0
      %4973 = vmatprep.subr.mxu0 0.0
      %4974 = vmatpush1.xpose.msra.mxu0 0.0
      %4975 = vmatprep.subr.mxu0 0.0
      %4976 = vmatpush1.xpose.msra.mxu0 0.0
      %4977 = vmatprep.subr.mxu0 0.0
      %4978 = vmatpush1.xpose.msra.mxu0 0.0
      %4979 = vmatprep.subr.mxu0 0.0
      %4980 = vmatpush1.xpose.msra.mxu0 0.0
      %4981 = vmatprep.subr.mxu0 0.0
      %4982 = vmatpush1.xpose.msra.mxu0 0.0
      %4983 = vmatprep.subr.mxu0 0.0
      %4984 = vmatpush1.xpose.msra.mxu0 0.0
      %4985 = vmatprep.subr.mxu0 0.0
      %4986 = vmatpush1.xpose.msra.mxu0 0.0
      %4987 = vmatprep.subr.mxu0 0.0
      %4988 = vmatpush1.xpose.msra.mxu0 0.0
      %4989 = vmatprep.subr.mxu0 0.0
      %4990 = vmatpush1.xpose.msra.mxu0 0.0
      %4991 = vmatprep.subr.mxu0 0.0
      %4992 = vmatpush1.xpose.msra.mxu0 0.0
      %4993 = vmatprep.subr.mxu0 0.0
      %4994 = vmatpush1.xpose.msra.mxu0 0.0
      %4995 = vmatprep.subr.mxu0 0.0
      %4996 = vmatpush1.xpose.msra.mxu0 0.0
      %4997 = vmatprep.subr.mxu0 0.0
      %4998 = vmatpush1.xpose.msra.mxu0 0.0
      %4999 = vmatprep.subr.mxu0 0.0
      %5000 = vmatpush1.xpose.msra.mxu0 0.0
      %5001 = vmatprep.subr.mxu0 0.0
      %5002 = vmatpush1.xpose.msra.mxu0 0.0
      %5003 = vmatprep.subr.mxu0 0.0
      %5004 = vmatpush1.xpose.msra.mxu0 %v4971
      %5005 = vmatprep.subr.mxu0 0.0
      %5006 = vmatpush2.xpose.msra.mxu0 0.0
      %5007 = vmatprep.subr.mxu0 0.0
      %5008 = vmatpush2.xpose.msra.mxu0 0.0
      %5009 = vmatprep.subr.mxu0 0.0
      %5010 = vmatpush2.xpose.msra.mxu0 0.0
      %5011 = vmatprep.subr.mxu0 0.0
      %5012 = vmatpush2.xpose.msra.mxu0 0.0
      %5013 = vmatprep.subr.mxu0 0.0
      %5014 = vmatpush2.xpose.msra.mxu0 0.0
      %5015 = vmatprep.subr.mxu0 0.0
      %5016 = vmatpush2.xpose.msra.mxu0 0.0
      %5017 = vmatprep.subr.mxu0 0.0
      %5018 = vmatpush2.xpose.msra.mxu0 0.0
      %5019 = vmatprep.subr.mxu0 0.0
      %5020 = vmatpush2.xpose.msra.mxu0 0.0
      %5021 = vmatprep.subr.mxu0 0.0
      %5022 = vmatpush2.xpose.msra.mxu0 0.0
      %5023 = vmatprep.subr.mxu0 0.0
      %5024 = vmatpush2.xpose.msra.mxu0 0.0
      %5025 = vmatprep.subr.mxu0 0.0
      %5026 = vmatpush2.xpose.msra.mxu0 0.0
      %5027 = vmatprep.subr.mxu0 0.0
      %5028 = vmatpush2.xpose.msra.mxu0 0.0
      %5029 = vmatprep.subr.mxu0 0.0
      %5030 = vmatpush2.xpose.msra.mxu0 0.0
      %5031 = vmatprep.subr.mxu0 0.0
      %5032 = vmatpush2.xpose.msra.mxu0 0.0
      %5033 = vmatprep.subr.mxu0 0.0
      %5034 = vmatpush2.xpose.msra.mxu0 0.0
      %5035 = vmatprep.subr.mxu0 0.0
      %5036 = vmatpush2.xpose.msra.mxu0 0.0
      %5037 = vmatprep.mubr.f32.mxu0 0.0
      %5038 = vmatmul.mubr.f32.gmra.mxu0 %v4895
      %v5039 = vpop.f32.mrf.mxu0
      %v5040 = vadd.f32 %v4881, %v5039
      %v5041 = vpop.f32.mrf.mxu0
      %5042 = vdwg.mxu0
      %v5044 = vsel %vm407, %v4837, 0
      %5046 = vmatprep.subr.mxu0 0.0
      %5047 = vmatpush1.xpose.msra.mxu0 0.0
      %5048 = vmatprep.subr.mxu0 0.0
      %5049 = vmatpush1.xpose.msra.mxu0 0.0
      %5050 = vmatprep.subr.mxu0 0.0
      %5051 = vmatpush1.xpose.msra.mxu0 0.0
      %5052 = vmatprep.subr.mxu0 0.0
      %5053 = vmatpush1.xpose.msra.mxu0 0.0
      %5054 = vmatprep.subr.mxu0 0.0
      %5055 = vmatpush1.xpose.msra.mxu0 0.0
      %5056 = vmatprep.subr.mxu0 0.0
      %5057 = vmatpush1.xpose.msra.mxu0 0.0
      %5058 = vmatprep.subr.mxu0 0.0
      %5059 = vmatpush1.xpose.msra.mxu0 0.0
      %5060 = vmatprep.subr.mxu0 0.0
      %5061 = vmatpush1.xpose.msra.mxu0 0.0
      %5062 = vmatprep.subr.mxu0 0.0
      %5063 = vmatpush1.xpose.msra.mxu0 0.0
      %5064 = vmatprep.subr.mxu0 0.0
      %5065 = vmatpush1.xpose.msra.mxu0 0.0
      %5066 = vmatprep.subr.mxu0 0.0
      %5067 = vmatpush1.xpose.msra.mxu0 0.0
      %5068 = vmatprep.subr.mxu0 0.0
      %5069 = vmatpush1.xpose.msra.mxu0 0.0
      %5070 = vmatprep.subr.mxu0 0.0
      %5071 = vmatpush1.xpose.msra.mxu0 0.0
      %5072 = vmatprep.subr.mxu0 0.0
      %5073 = vmatpush1.xpose.msra.mxu0 0.0
      %5074 = vmatprep.subr.mxu0 0.0
      %5075 = vmatpush1.xpose.msra.mxu0 0.0
      %5076 = vmatprep.subr.mxu0 0.0
      %5077 = vmatpush1.xpose.msra.mxu0 %v5044
      %5078 = vmatprep.subr.mxu0 0.0
      %5079 = vmatpush2.xpose.msra.mxu0 0.0
      %5080 = vmatprep.subr.mxu0 0.0
      %5081 = vmatpush2.xpose.msra.mxu0 0.0
      %5082 = vmatprep.subr.mxu0 0.0
      %5083 = vmatpush2.xpose.msra.mxu0 0.0
      %5084 = vmatprep.subr.mxu0 0.0
      %5085 = vmatpush2.xpose.msra.mxu0 0.0
      %5086 = vmatprep.subr.mxu0 0.0
      %5087 = vmatpush2.xpose.msra.mxu0 0.0
      %5088 = vmatprep.subr.mxu0 0.0
      %5089 = vmatpush2.xpose.msra.mxu0 0.0
      %5090 = vmatprep.subr.mxu0 0.0
      %5091 = vmatpush2.xpose.msra.mxu0 0.0
      %5092 = vmatprep.subr.mxu0 0.0
      %5093 = vmatpush2.xpose.msra.mxu0 0.0
      %5094 = vmatprep.subr.mxu0 0.0
      %5095 = vmatpush2.xpose.msra.mxu0 0.0
      %5096 = vmatprep.subr.mxu0 0.0
      %5097 = vmatpush2.xpose.msra.mxu0 0.0
      %5098 = vmatprep.subr.mxu0 0.0
      %5099 = vmatpush2.xpose.msra.mxu0 0.0
      %5100 = vmatprep.subr.mxu0 0.0
      %5101 = vmatpush2.xpose.msra.mxu0 0.0
      %5102 = vmatprep.subr.mxu0 0.0
      %5103 = vmatpush2.xpose.msra.mxu0 0.0
      %5104 = vmatprep.subr.mxu0 0.0
      %5105 = vmatpush2.xpose.msra.mxu0 0.0
      %5106 = vmatprep.subr.mxu0 0.0
      %5107 = vmatpush2.xpose.msra.mxu0 0.0
      %5108 = vmatprep.subr.mxu0 0.0
      %5109 = vmatpush2.xpose.msra.mxu0 0.0
      %5110 = vmatprep.mubr.f32.mxu0 0.0
      %5111 = vmatmul.mubr.f32.gmra.mxu0 %v4895
      %v5112 = vpop.f32.mrf.mxu0
      %v5113 = vadd.f32 %v4885, %v5112
      %v5114 = vpop.f32.mrf.mxu0
      %5115 = vdwg.mxu0
      %v5117 = vsel %vm407, %v4838, 0
      %5119 = vmatprep.subr.mxu0 0.0
      %5120 = vmatpush1.xpose.msra.mxu0 0.0
      %5121 = vmatprep.subr.mxu0 0.0
      %5122 = vmatpush1.xpose.msra.mxu0 0.0
      %5123 = vmatprep.subr.mxu0 0.0
      %5124 = vmatpush1.xpose.msra.mxu0 0.0
      %5125 = vmatprep.subr.mxu0 0.0
      %5126 = vmatpush1.xpose.msra.mxu0 0.0
      %5127 = vmatprep.subr.mxu0 0.0
      %5128 = vmatpush1.xpose.msra.mxu0 0.0
      %5129 = vmatprep.subr.mxu0 0.0
      %5130 = vmatpush1.xpose.msra.mxu0 0.0
      %5131 = vmatprep.subr.mxu0 0.0
      %5132 = vmatpush1.xpose.msra.mxu0 0.0
      %5133 = vmatprep.subr.mxu0 0.0
      %5134 = vmatpush1.xpose.msra.mxu0 0.0
      %5135 = vmatprep.subr.mxu0 0.0
      %5136 = vmatpush1.xpose.msra.mxu0 0.0
      %5137 = vmatprep.subr.mxu0 0.0
      %5138 = vmatpush1.xpose.msra.mxu0 0.0
      %5139 = vmatprep.subr.mxu0 0.0
      %5140 = vmatpush1.xpose.msra.mxu0 0.0
      %5141 = vmatprep.subr.mxu0 0.0
      %5142 = vmatpush1.xpose.msra.mxu0 0.0
      %5143 = vmatprep.subr.mxu0 0.0
      %5144 = vmatpush1.xpose.msra.mxu0 0.0
      %5145 = vmatprep.subr.mxu0 0.0
      %5146 = vmatpush1.xpose.msra.mxu0 0.0
      %5147 = vmatprep.subr.mxu0 0.0
      %5148 = vmatpush1.xpose.msra.mxu0 0.0
      %5149 = vmatprep.subr.mxu0 0.0
      %5150 = vmatpush1.xpose.msra.mxu0 %v5117
      %5151 = vmatprep.subr.mxu0 0.0
      %5152 = vmatpush2.xpose.msra.mxu0 0.0
      %5153 = vmatprep.subr.mxu0 0.0
      %5154 = vmatpush2.xpose.msra.mxu0 0.0
      %5155 = vmatprep.subr.mxu0 0.0
      %5156 = vmatpush2.xpose.msra.mxu0 0.0
      %5157 = vmatprep.subr.mxu0 0.0
      %5158 = vmatpush2.xpose.msra.mxu0 0.0
      %5159 = vmatprep.subr.mxu0 0.0
      %5160 = vmatpush2.xpose.msra.mxu0 0.0
      %5161 = vmatprep.subr.mxu0 0.0
      %5162 = vmatpush2.xpose.msra.mxu0 0.0
      %5163 = vmatprep.subr.mxu0 0.0
      %5164 = vmatpush2.xpose.msra.mxu0 0.0
      %5165 = vmatprep.subr.mxu0 0.0
      %5166 = vmatpush2.xpose.msra.mxu0 0.0
      %5167 = vmatprep.subr.mxu0 0.0
      %5168 = vmatpush2.xpose.msra.mxu0 0.0
      %5169 = vmatprep.subr.mxu0 0.0
      %5170 = vmatpush2.xpose.msra.mxu0 0.0
      %5171 = vmatprep.subr.mxu0 0.0
      %5172 = vmatpush2.xpose.msra.mxu0 0.0
      %5173 = vmatprep.subr.mxu0 0.0
      %5174 = vmatpush2.xpose.msra.mxu0 0.0
      %5175 = vmatprep.subr.mxu0 0.0
      %5176 = vmatpush2.xpose.msra.mxu0 0.0
      %5177 = vmatprep.subr.mxu0 0.0
      %5178 = vmatpush2.xpose.msra.mxu0 0.0
      %5179 = vmatprep.subr.mxu0 0.0
      %5180 = vmatpush2.xpose.msra.mxu0 0.0
      %5181 = vmatprep.subr.mxu0 0.0
      %5182 = vmatpush2.xpose.msra.mxu0 0.0
      %5183 = vmatprep.mubr.f32.mxu0 0.0
      %5184 = vmatmul.mubr.f32.gmra.mxu0 %v4895
      %v5185 = vpop.f32.mrf.mxu0
      %v5186 = vadd.f32 %v4889, %v5185
      %v5187 = vpop.f32.mrf.mxu0
      %5188 = vdwg.mxu0
      %v5193 = vlaneseq
      %v5194 = vshrl.u32 %v5193, 7
      %v5195 = vsub.s32 0, %v5194
      %v5196 = vrot.slane %v4850, %v5195
      %v5197 = vlaneseq
      %v5198 = vshrl.u32 %v5197, 7
      %v5199 = vsub.s32 0, %v5198
      %v5200 = vrot.slane %v4851, %v5199
      %v5201 = vlaneseq
      %v5202 = vshrl.u32 %v5201, 7
      %v5203 = vsub.s32 0, %v5202
      %v5204 = vrot.slane %v4852, %v5203
      %v5205 = vlaneseq
      %v5206 = vshrl.u32 %v5205, 7
      %v5207 = vsub.s32 0, %v5206
      %v5208 = vrot.slane %v4853, %v5207
      %v5214 = vsel %vm407, %v4845, 0
      %5216 = vmatprep.subr.mxu0 0.0
      %5217 = vmatpush1.xpose.msra.mxu0 0.0
      %5218 = vmatprep.subr.mxu0 0.0
      %5219 = vmatpush1.xpose.msra.mxu0 0.0
      %5220 = vmatprep.subr.mxu0 0.0
      %5221 = vmatpush1.xpose.msra.mxu0 0.0
      %5222 = vmatprep.subr.mxu0 0.0
      %5223 = vmatpush1.xpose.msra.mxu0 0.0
      %5224 = vmatprep.subr.mxu0 0.0
      %5225 = vmatpush1.xpose.msra.mxu0 0.0
      %5226 = vmatprep.subr.mxu0 0.0
      %5227 = vmatpush1.xpose.msra.mxu0 0.0
      %5228 = vmatprep.subr.mxu0 0.0
      %5229 = vmatpush1.xpose.msra.mxu0 0.0
      %5230 = vmatprep.subr.mxu0 0.0
      %5231 = vmatpush1.xpose.msra.mxu0 0.0
      %5232 = vmatprep.subr.mxu0 0.0
      %5233 = vmatpush1.xpose.msra.mxu0 0.0
      %5234 = vmatprep.subr.mxu0 0.0
      %5235 = vmatpush1.xpose.msra.mxu0 0.0
      %5236 = vmatprep.subr.mxu0 0.0
      %5237 = vmatpush1.xpose.msra.mxu0 0.0
      %5238 = vmatprep.subr.mxu0 0.0
      %5239 = vmatpush1.xpose.msra.mxu0 0.0
      %5240 = vmatprep.subr.mxu0 0.0
      %5241 = vmatpush1.xpose.msra.mxu0 0.0
      %5242 = vmatprep.subr.mxu0 0.0
      %5243 = vmatpush1.xpose.msra.mxu0 0.0
      %5244 = vmatprep.subr.mxu0 0.0
      %5245 = vmatpush1.xpose.msra.mxu0 0.0
      %5246 = vmatprep.subr.mxu0 0.0
      %5247 = vmatpush1.xpose.msra.mxu0 %v5214
      %5248 = vmatprep.subr.mxu0 0.0
      %5249 = vmatpush2.xpose.msra.mxu0 0.0
      %5250 = vmatprep.subr.mxu0 0.0
      %5251 = vmatpush2.xpose.msra.mxu0 0.0
      %5252 = vmatprep.subr.mxu0 0.0
      %5253 = vmatpush2.xpose.msra.mxu0 0.0
      %5254 = vmatprep.subr.mxu0 0.0
      %5255 = vmatpush2.xpose.msra.mxu0 0.0
      %5256 = vmatprep.subr.mxu0 0.0
      %5257 = vmatpush2.xpose.msra.mxu0 0.0
      %5258 = vmatprep.subr.mxu0 0.0
      %5259 = vmatpush2.xpose.msra.mxu0 0.0
      %5260 = vmatprep.subr.mxu0 0.0
      %5261 = vmatpush2.xpose.msra.mxu0 0.0
      %5262 = vmatprep.subr.mxu0 0.0
      %5263 = vmatpush2.xpose.msra.mxu0 0.0
      %5264 = vmatprep.subr.mxu0 0.0
      %5265 = vmatpush2.xpose.msra.mxu0 0.0
      %5266 = vmatprep.subr.mxu0 0.0
      %5267 = vmatpush2.xpose.msra.mxu0 0.0
      %5268 = vmatprep.subr.mxu0 0.0
      %5269 = vmatpush2.xpose.msra.mxu0 0.0
      %5270 = vmatprep.subr.mxu0 0.0
      %5271 = vmatpush2.xpose.msra.mxu0 0.0
      %5272 = vmatprep.subr.mxu0 0.0
      %5273 = vmatpush2.xpose.msra.mxu0 0.0
      %5274 = vmatprep.subr.mxu0 0.0
      %5275 = vmatpush2.xpose.msra.mxu0 0.0
      %5276 = vmatprep.subr.mxu0 0.0
      %5277 = vmatpush2.xpose.msra.mxu0 0.0
      %5278 = vmatprep.subr.mxu0 0.0
      %5279 = vmatpush2.xpose.msra.mxu0 0.0
      %5280 = vmatprep.mubr.f32.mxu0 0.0
      %5281 = vmatmul.mubr.f32.gmra.mxu0 %v4895
      %v5282 = vpop.f32.mrf.mxu0
      %v5283 = vadd.f32 %v5196, %v5282
      %v5284 = vpop.f32.mrf.mxu0
      %5285 = vdwg.mxu0
      %v5287 = vsel %vm407, %v4846, 0
      %5289 = vmatprep.subr.mxu0 0.0
      %5290 = vmatpush1.xpose.msra.mxu0 0.0
      %5291 = vmatprep.subr.mxu0 0.0
      %5292 = vmatpush1.xpose.msra.mxu0 0.0
      %5293 = vmatprep.subr.mxu0 0.0
      %5294 = vmatpush1.xpose.msra.mxu0 0.0
      %5295 = vmatprep.subr.mxu0 0.0
      %5296 = vmatpush1.xpose.msra.mxu0 0.0
      %5297 = vmatprep.subr.mxu0 0.0
      %5298 = vmatpush1.xpose.msra.mxu0 0.0
      %5299 = vmatprep.subr.mxu0 0.0
      %5300 = vmatpush1.xpose.msra.mxu0 0.0
      %5301 = vmatprep.subr.mxu0 0.0
      %5302 = vmatpush1.xpose.msra.mxu0 0.0
      %5303 = vmatprep.subr.mxu0 0.0
      %5304 = vmatpush1.xpose.msra.mxu0 0.0
      %5305 = vmatprep.subr.mxu0 0.0
      %5306 = vmatpush1.xpose.msra.mxu0 0.0
      %5307 = vmatprep.subr.mxu0 0.0
      %5308 = vmatpush1.xpose.msra.mxu0 0.0
      %5309 = vmatprep.subr.mxu0 0.0
      %5310 = vmatpush1.xpose.msra.mxu0 0.0
      %5311 = vmatprep.subr.mxu0 0.0
      %5312 = vmatpush1.xpose.msra.mxu0 0.0
      %5313 = vmatprep.subr.mxu0 0.0
      %5314 = vmatpush1.xpose.msra.mxu0 0.0
      %5315 = vmatprep.subr.mxu0 0.0
      %5316 = vmatpush1.xpose.msra.mxu0 0.0
      %5317 = vmatprep.subr.mxu0 0.0
      %5318 = vmatpush1.xpose.msra.mxu0 0.0
      %5319 = vmatprep.subr.mxu0 0.0
      %5320 = vmatpush1.xpose.msra.mxu0 %v5287
      %5321 = vmatprep.subr.mxu0 0.0
      %5322 = vmatpush2.xpose.msra.mxu0 0.0
      %5323 = vmatprep.subr.mxu0 0.0
      %5324 = vmatpush2.xpose.msra.mxu0 0.0
      %5325 = vmatprep.subr.mxu0 0.0
      %5326 = vmatpush2.xpose.msra.mxu0 0.0
      %5327 = vmatprep.subr.mxu0 0.0
      %5328 = vmatpush2.xpose.msra.mxu0 0.0
      %5329 = vmatprep.subr.mxu0 0.0
      %5330 = vmatpush2.xpose.msra.mxu0 0.0
      %5331 = vmatprep.subr.mxu0 0.0
      %5332 = vmatpush2.xpose.msra.mxu0 0.0
      %5333 = vmatprep.subr.mxu0 0.0
      %5334 = vmatpush2.xpose.msra.mxu0 0.0
      %5335 = vmatprep.subr.mxu0 0.0
      %5336 = vmatpush2.xpose.msra.mxu0 0.0
      %5337 = vmatprep.subr.mxu0 0.0
      %5338 = vmatpush2.xpose.msra.mxu0 0.0
      %5339 = vmatprep.subr.mxu0 0.0
      %5340 = vmatpush2.xpose.msra.mxu0 0.0
      %5341 = vmatprep.subr.mxu0 0.0
      %5342 = vmatpush2.xpose.msra.mxu0 0.0
      %5343 = vmatprep.subr.mxu0 0.0
      %5344 = vmatpush2.xpose.msra.mxu0 0.0
      %5345 = vmatprep.subr.mxu0 0.0
      %5346 = vmatpush2.xpose.msra.mxu0 0.0
      %5347 = vmatprep.subr.mxu0 0.0
      %5348 = vmatpush2.xpose.msra.mxu0 0.0
      %5349 = vmatprep.subr.mxu0 0.0
      %5350 = vmatpush2.xpose.msra.mxu0 0.0
      %5351 = vmatprep.subr.mxu0 0.0
      %5352 = vmatpush2.xpose.msra.mxu0 0.0
      %5353 = vmatprep.mubr.f32.mxu0 0.0
      %5354 = vmatmul.mubr.f32.gmra.mxu0 %v4895
      %v5355 = vpop.f32.mrf.mxu0
      %v5356 = vadd.f32 %v5200, %v5355
      %v5357 = vpop.f32.mrf.mxu0
      %5358 = vdwg.mxu0
      %v5360 = vsel %vm407, %v4847, 0
      %5362 = vmatprep.subr.mxu0 0.0
      %5363 = vmatpush1.xpose.msra.mxu0 0.0
      %5364 = vmatprep.subr.mxu0 0.0
      %5365 = vmatpush1.xpose.msra.mxu0 0.0
      %5366 = vmatprep.subr.mxu0 0.0
      %5367 = vmatpush1.xpose.msra.mxu0 0.0
      %5368 = vmatprep.subr.mxu0 0.0
      %5369 = vmatpush1.xpose.msra.mxu0 0.0
      %5370 = vmatprep.subr.mxu0 0.0
      %5371 = vmatpush1.xpose.msra.mxu0 0.0
      %5372 = vmatprep.subr.mxu0 0.0
      %5373 = vmatpush1.xpose.msra.mxu0 0.0
      %5374 = vmatprep.subr.mxu0 0.0
      %5375 = vmatpush1.xpose.msra.mxu0 0.0
      %5376 = vmatprep.subr.mxu0 0.0
      %5377 = vmatpush1.xpose.msra.mxu0 0.0
      %5378 = vmatprep.subr.mxu0 0.0
      %5379 = vmatpush1.xpose.msra.mxu0 0.0
      %5380 = vmatprep.subr.mxu0 0.0
      %5381 = vmatpush1.xpose.msra.mxu0 0.0
      %5382 = vmatprep.subr.mxu0 0.0
      %5383 = vmatpush1.xpose.msra.mxu0 0.0
      %5384 = vmatprep.subr.mxu0 0.0
      %5385 = vmatpush1.xpose.msra.mxu0 0.0
      %5386 = vmatprep.subr.mxu0 0.0
      %5387 = vmatpush1.xpose.msra.mxu0 0.0
      %5388 = vmatprep.subr.mxu0 0.0
      %5389 = vmatpush1.xpose.msra.mxu0 0.0
      %5390 = vmatprep.subr.mxu0 0.0
      %5391 = vmatpush1.xpose.msra.mxu0 0.0
      %5392 = vmatprep.subr.mxu0 0.0
      %5393 = vmatpush1.xpose.msra.mxu0 %v5360
      %5394 = vmatprep.subr.mxu0 0.0
      %5395 = vmatpush2.xpose.msra.mxu0 0.0
      %5396 = vmatprep.subr.mxu0 0.0
      %5397 = vmatpush2.xpose.msra.mxu0 0.0
      %5398 = vmatprep.subr.mxu0 0.0
      %5399 = vmatpush2.xpose.msra.mxu0 0.0
      %5400 = vmatprep.subr.mxu0 0.0
      %5401 = vmatpush2.xpose.msra.mxu0 0.0
      %5402 = vmatprep.subr.mxu0 0.0
      %5403 = vmatpush2.xpose.msra.mxu0 0.0
      %5404 = vmatprep.subr.mxu0 0.0
      %5405 = vmatpush2.xpose.msra.mxu0 0.0
      %5406 = vmatprep.subr.mxu0 0.0
      %5407 = vmatpush2.xpose.msra.mxu0 0.0
      %5408 = vmatprep.subr.mxu0 0.0
      %5409 = vmatpush2.xpose.msra.mxu0 0.0
      %5410 = vmatprep.subr.mxu0 0.0
      %5411 = vmatpush2.xpose.msra.mxu0 0.0
      %5412 = vmatprep.subr.mxu0 0.0
      %5413 = vmatpush2.xpose.msra.mxu0 0.0
      %5414 = vmatprep.subr.mxu0 0.0
      %5415 = vmatpush2.xpose.msra.mxu0 0.0
      %5416 = vmatprep.subr.mxu0 0.0
      %5417 = vmatpush2.xpose.msra.mxu0 0.0
      %5418 = vmatprep.subr.mxu0 0.0
      %5419 = vmatpush2.xpose.msra.mxu0 0.0
      %5420 = vmatprep.subr.mxu0 0.0
      %5421 = vmatpush2.xpose.msra.mxu0 0.0
      %5422 = vmatprep.subr.mxu0 0.0
      %5423 = vmatpush2.xpose.msra.mxu0 0.0
      %5424 = vmatprep.subr.mxu0 0.0
      %5425 = vmatpush2.xpose.msra.mxu0 0.0
      %5426 = vmatprep.mubr.f32.mxu0 0.0
      %5427 = vmatmul.mubr.f32.gmra.mxu0 %v4895
      %v5428 = vpop.f32.mrf.mxu0
      %v5429 = vadd.f32 %v5204, %v5428
      %v5430 = vpop.f32.mrf.mxu0
      %5431 = vdwg.mxu0
      %v5433 = vsel %vm407, %v4848, 0
      %5435 = vmatprep.subr.mxu0 0.0
      %5436 = vmatpush1.xpose.msra.mxu0 0.0
      %5437 = vmatprep.subr.mxu0 0.0
      %5438 = vmatpush1.xpose.msra.mxu0 0.0
      %5439 = vmatprep.subr.mxu0 0.0
      %5440 = vmatpush1.xpose.msra.mxu0 0.0
      %5441 = vmatprep.subr.mxu0 0.0
      %5442 = vmatpush1.xpose.msra.mxu0 0.0
      %5443 = vmatprep.subr.mxu0 0.0
      %5444 = vmatpush1.xpose.msra.mxu0 0.0
      %5445 = vmatprep.subr.mxu0 0.0
      %5446 = vmatpush1.xpose.msra.mxu0 0.0
      %5447 = vmatprep.subr.mxu0 0.0
      %5448 = vmatpush1.xpose.msra.mxu0 0.0
      %5449 = vmatprep.subr.mxu0 0.0
      %5450 = vmatpush1.xpose.msra.mxu0 0.0
      %5451 = vmatprep.subr.mxu0 0.0
      %5452 = vmatpush1.xpose.msra.mxu0 0.0
      %5453 = vmatprep.subr.mxu0 0.0
      %5454 = vmatpush1.xpose.msra.mxu0 0.0
      %5455 = vmatprep.subr.mxu0 0.0
      %5456 = vmatpush1.xpose.msra.mxu0 0.0
      %5457 = vmatprep.subr.mxu0 0.0
      %5458 = vmatpush1.xpose.msra.mxu0 0.0
      %5459 = vmatprep.subr.mxu0 0.0
      %5460 = vmatpush1.xpose.msra.mxu0 0.0
      %5461 = vmatprep.subr.mxu0 0.0
      %5462 = vmatpush1.xpose.msra.mxu0 0.0
      %5463 = vmatprep.subr.mxu0 0.0
      %5464 = vmatpush1.xpose.msra.mxu0 0.0
      %5465 = vmatprep.subr.mxu0 0.0
      %5466 = vmatpush1.xpose.msra.mxu0 %v5433
      %5467 = vmatprep.subr.mxu0 0.0
      %5468 = vmatpush2.xpose.msra.mxu0 0.0
      %5469 = vmatprep.subr.mxu0 0.0
      %5470 = vmatpush2.xpose.msra.mxu0 0.0
      %5471 = vmatprep.subr.mxu0 0.0
      %5472 = vmatpush2.xpose.msra.mxu0 0.0
      %5473 = vmatprep.subr.mxu0 0.0
      %5474 = vmatpush2.xpose.msra.mxu0 0.0
      %5475 = vmatprep.subr.mxu0 0.0
      %5476 = vmatpush2.xpose.msra.mxu0 0.0
      %5477 = vmatprep.subr.mxu0 0.0
      %5478 = vmatpush2.xpose.msra.mxu0 0.0
      %5479 = vmatprep.subr.mxu0 0.0
      %5480 = vmatpush2.xpose.msra.mxu0 0.0
      %5481 = vmatprep.subr.mxu0 0.0
      %5482 = vmatpush2.xpose.msra.mxu0 0.0
      %5483 = vmatprep.subr.mxu0 0.0
      %5484 = vmatpush2.xpose.msra.mxu0 0.0
      %5485 = vmatprep.subr.mxu0 0.0
      %5486 = vmatpush2.xpose.msra.mxu0 0.0
      %5487 = vmatprep.subr.mxu0 0.0
      %5488 = vmatpush2.xpose.msra.mxu0 0.0
      %5489 = vmatprep.subr.mxu0 0.0
      %5490 = vmatpush2.xpose.msra.mxu0 0.0
      %5491 = vmatprep.subr.mxu0 0.0
      %5492 = vmatpush2.xpose.msra.mxu0 0.0
      %5493 = vmatprep.subr.mxu0 0.0
      %5494 = vmatpush2.xpose.msra.mxu0 0.0
      %5495 = vmatprep.subr.mxu0 0.0
      %5496 = vmatpush2.xpose.msra.mxu0 0.0
      %5497 = vmatprep.subr.mxu0 0.0
      %5498 = vmatpush2.xpose.msra.mxu0 0.0
      %5499 = vmatprep.mubr.f32.mxu0 0.0
      %5500 = vmatmul.mubr.f32.gmra.mxu0 %v4895
      %v5501 = vpop.f32.mrf.mxu0
      %v5502 = vadd.f32 %v5208, %v5501
      %v5503 = vpop.f32.mrf.mxu0
      %5504 = vdwg.mxu0
      %v5509 = vlaneseq
      %v5510 = vshrl.u32 %v5509, 7
      %v5511 = vsub.s32 0, %v5510
      %v5512 = vrot.slane %v4860, %v5511
      %v5513 = vlaneseq
      %v5514 = vshrl.u32 %v5513, 7
      %v5515 = vsub.s32 0, %v5514
      %v5516 = vrot.slane %v4861, %v5515
      %v5517 = vlaneseq
      %v5518 = vshrl.u32 %v5517, 7
      %v5519 = vsub.s32 0, %v5518
      %v5520 = vrot.slane %v4862, %v5519
      %v5521 = vlaneseq
      %v5522 = vshrl.u32 %v5521, 7
      %v5523 = vsub.s32 0, %v5522
      %v5524 = vrot.slane %v4863, %v5523
      %v5530 = vsel %vm407, %v4855, 0
      %5532 = vmatprep.subr.mxu0 0.0
      %5533 = vmatpush1.xpose.msra.mxu0 0.0
      %5534 = vmatprep.subr.mxu0 0.0
      %5535 = vmatpush1.xpose.msra.mxu0 0.0
      %5536 = vmatprep.subr.mxu0 0.0
      %5537 = vmatpush1.xpose.msra.mxu0 0.0
      %5538 = vmatprep.subr.mxu0 0.0
      %5539 = vmatpush1.xpose.msra.mxu0 0.0
      %5540 = vmatprep.subr.mxu0 0.0
      %5541 = vmatpush1.xpose.msra.mxu0 0.0
      %5542 = vmatprep.subr.mxu0 0.0
      %5543 = vmatpush1.xpose.msra.mxu0 0.0
      %5544 = vmatprep.subr.mxu0 0.0
      %5545 = vmatpush1.xpose.msra.mxu0 0.0
      %5546 = vmatprep.subr.mxu0 0.0
      %5547 = vmatpush1.xpose.msra.mxu0 0.0
      %5548 = vmatprep.subr.mxu0 0.0
      %5549 = vmatpush1.xpose.msra.mxu0 0.0
      %5550 = vmatprep.subr.mxu0 0.0
      %5551 = vmatpush1.xpose.msra.mxu0 0.0
      %5552 = vmatprep.subr.mxu0 0.0
      %5553 = vmatpush1.xpose.msra.mxu0 0.0
      %5554 = vmatprep.subr.mxu0 0.0
      %5555 = vmatpush1.xpose.msra.mxu0 0.0
      %5556 = vmatprep.subr.mxu0 0.0
      %5557 = vmatpush1.xpose.msra.mxu0 0.0
      %5558 = vmatprep.subr.mxu0 0.0
      %5559 = vmatpush1.xpose.msra.mxu0 0.0
      %5560 = vmatprep.subr.mxu0 0.0
      %5561 = vmatpush1.xpose.msra.mxu0 0.0
      %5562 = vmatprep.subr.mxu0 0.0
      %5563 = vmatpush1.xpose.msra.mxu0 %v5530
      %5564 = vmatprep.subr.mxu0 0.0
      %5565 = vmatpush2.xpose.msra.mxu0 0.0
      %5566 = vmatprep.subr.mxu0 0.0
      %5567 = vmatpush2.xpose.msra.mxu0 0.0
      %5568 = vmatprep.subr.mxu0 0.0
      %5569 = vmatpush2.xpose.msra.mxu0 0.0
      %5570 = vmatprep.subr.mxu0 0.0
      %5571 = vmatpush2.xpose.msra.mxu0 0.0
      %5572 = vmatprep.subr.mxu0 0.0
      %5573 = vmatpush2.xpose.msra.mxu0 0.0
      %5574 = vmatprep.subr.mxu0 0.0
      %5575 = vmatpush2.xpose.msra.mxu0 0.0
      %5576 = vmatprep.subr.mxu0 0.0
      %5577 = vmatpush2.xpose.msra.mxu0 0.0
      %5578 = vmatprep.subr.mxu0 0.0
      %5579 = vmatpush2.xpose.msra.mxu0 0.0
      %5580 = vmatprep.subr.mxu0 0.0
      %5581 = vmatpush2.xpose.msra.mxu0 0.0
      %5582 = vmatprep.subr.mxu0 0.0
      %5583 = vmatpush2.xpose.msra.mxu0 0.0
      %5584 = vmatprep.subr.mxu0 0.0
      %5585 = vmatpush2.xpose.msra.mxu0 0.0
      %5586 = vmatprep.subr.mxu0 0.0
      %5587 = vmatpush2.xpose.msra.mxu0 0.0
      %5588 = vmatprep.subr.mxu0 0.0
      %5589 = vmatpush2.xpose.msra.mxu0 0.0
      %5590 = vmatprep.subr.mxu0 0.0
      %5591 = vmatpush2.xpose.msra.mxu0 0.0
      %5592 = vmatprep.subr.mxu0 0.0
      %5593 = vmatpush2.xpose.msra.mxu0 0.0
      %5594 = vmatprep.subr.mxu0 0.0
      %5595 = vmatpush2.xpose.msra.mxu0 0.0
      %5596 = vmatprep.mubr.f32.mxu0 0.0
      %5597 = vmatmul.mubr.f32.gmra.mxu0 %v4895
      %v5598 = vpop.f32.mrf.mxu0
      %v5599 = vadd.f32 %v5512, %v5598
      %v5600 = vpop.f32.mrf.mxu0
      %5601 = vdwg.mxu0
      %v5603 = vsel %vm407, %v4856, 0
      %5605 = vmatprep.subr.mxu0 0.0
      %5606 = vmatpush1.xpose.msra.mxu0 0.0
      %5607 = vmatprep.subr.mxu0 0.0
      %5608 = vmatpush1.xpose.msra.mxu0 0.0
      %5609 = vmatprep.subr.mxu0 0.0
      %5610 = vmatpush1.xpose.msra.mxu0 0.0
      %5611 = vmatprep.subr.mxu0 0.0
      %5612 = vmatpush1.xpose.msra.mxu0 0.0
      %5613 = vmatprep.subr.mxu0 0.0
      %5614 = vmatpush1.xpose.msra.mxu0 0.0
      %5615 = vmatprep.subr.mxu0 0.0
      %5616 = vmatpush1.xpose.msra.mxu0 0.0
      %5617 = vmatprep.subr.mxu0 0.0
      %5618 = vmatpush1.xpose.msra.mxu0 0.0
      %5619 = vmatprep.subr.mxu0 0.0
      %5620 = vmatpush1.xpose.msra.mxu0 0.0
      %5621 = vmatprep.subr.mxu0 0.0
      %5622 = vmatpush1.xpose.msra.mxu0 0.0
      %5623 = vmatprep.subr.mxu0 0.0
      %5624 = vmatpush1.xpose.msra.mxu0 0.0
      %5625 = vmatprep.subr.mxu0 0.0
      %5626 = vmatpush1.xpose.msra.mxu0 0.0
      %5627 = vmatprep.subr.mxu0 0.0
      %5628 = vmatpush1.xpose.msra.mxu0 0.0
      %5629 = vmatprep.subr.mxu0 0.0
      %5630 = vmatpush1.xpose.msra.mxu0 0.0
      %5631 = vmatprep.subr.mxu0 0.0
      %5632 = vmatpush1.xpose.msra.mxu0 0.0
      %5633 = vmatprep.subr.mxu0 0.0
      %5634 = vmatpush1.xpose.msra.mxu0 0.0
      %5635 = vmatprep.subr.mxu0 0.0
      %5636 = vmatpush1.xpose.msra.mxu0 %v5603
      %5637 = vmatprep.subr.mxu0 0.0
      %5638 = vmatpush2.xpose.msra.mxu0 0.0
      %5639 = vmatprep.subr.mxu0 0.0
      %5640 = vmatpush2.xpose.msra.mxu0 0.0
      %5641 = vmatprep.subr.mxu0 0.0
      %5642 = vmatpush2.xpose.msra.mxu0 0.0
      %5643 = vmatprep.subr.mxu0 0.0
      %5644 = vmatpush2.xpose.msra.mxu0 0.0
      %5645 = vmatprep.subr.mxu0 0.0
      %5646 = vmatpush2.xpose.msra.mxu0 0.0
      %5647 = vmatprep.subr.mxu0 0.0
      %5648 = vmatpush2.xpose.msra.mxu0 0.0
      %5649 = vmatprep.subr.mxu0 0.0
      %5650 = vmatpush2.xpose.msra.mxu0 0.0
      %5651 = vmatprep.subr.mxu0 0.0
      %5652 = vmatpush2.xpose.msra.mxu0 0.0
      %5653 = vmatprep.subr.mxu0 0.0
      %5654 = vmatpush2.xpose.msra.mxu0 0.0
      %5655 = vmatprep.subr.mxu0 0.0
      %5656 = vmatpush2.xpose.msra.mxu0 0.0
      %5657 = vmatprep.subr.mxu0 0.0
      %5658 = vmatpush2.xpose.msra.mxu0 0.0
      %5659 = vmatprep.subr.mxu0 0.0
      %5660 = vmatpush2.xpose.msra.mxu0 0.0
      %5661 = vmatprep.subr.mxu0 0.0
      %5662 = vmatpush2.xpose.msra.mxu0 0.0
      %5663 = vmatprep.subr.mxu0 0.0
      %5664 = vmatpush2.xpose.msra.mxu0 0.0
      %5665 = vmatprep.subr.mxu0 0.0
      %5666 = vmatpush2.xpose.msra.mxu0 0.0
      %5667 = vmatprep.subr.mxu0 0.0
      %5668 = vmatpush2.xpose.msra.mxu0 0.0
      %5669 = vmatprep.mubr.f32.mxu0 0.0
      %5670 = vmatmul.mubr.f32.gmra.mxu0 %v4895
      %v5671 = vpop.f32.mrf.mxu0
      %v5672 = vadd.f32 %v5516, %v5671
      %v5673 = vpop.f32.mrf.mxu0
      %5674 = vdwg.mxu0
      %v5676 = vsel %vm407, %v4857, 0
      %5678 = vmatprep.subr.mxu0 0.0
      %5679 = vmatpush1.xpose.msra.mxu0 0.0
      %5680 = vmatprep.subr.mxu0 0.0
      %5681 = vmatpush1.xpose.msra.mxu0 0.0
      %5682 = vmatprep.subr.mxu0 0.0
      %5683 = vmatpush1.xpose.msra.mxu0 0.0
      %5684 = vmatprep.subr.mxu0 0.0
      %5685 = vmatpush1.xpose.msra.mxu0 0.0
      %5686 = vmatprep.subr.mxu0 0.0
      %5687 = vmatpush1.xpose.msra.mxu0 0.0
      %5688 = vmatprep.subr.mxu0 0.0
      %5689 = vmatpush1.xpose.msra.mxu0 0.0
      %5690 = vmatprep.subr.mxu0 0.0
      %5691 = vmatpush1.xpose.msra.mxu0 0.0
      %5692 = vmatprep.subr.mxu0 0.0
      %5693 = vmatpush1.xpose.msra.mxu0 0.0
      %5694 = vmatprep.subr.mxu0 0.0
      %5695 = vmatpush1.xpose.msra.mxu0 0.0
      %5696 = vmatprep.subr.mxu0 0.0
      %5697 = vmatpush1.xpose.msra.mxu0 0.0
      %5698 = vmatprep.subr.mxu0 0.0
      %5699 = vmatpush1.xpose.msra.mxu0 0.0
      %5700 = vmatprep.subr.mxu0 0.0
      %5701 = vmatpush1.xpose.msra.mxu0 0.0
      %5702 = vmatprep.subr.mxu0 0.0
      %5703 = vmatpush1.xpose.msra.mxu0 0.0
      %5704 = vmatprep.subr.mxu0 0.0
      %5705 = vmatpush1.xpose.msra.mxu0 0.0
      %5706 = vmatprep.subr.mxu0 0.0
      %5707 = vmatpush1.xpose.msra.mxu0 0.0
      %5708 = vmatprep.subr.mxu0 0.0
      %5709 = vmatpush1.xpose.msra.mxu0 %v5676
      %5710 = vmatprep.subr.mxu0 0.0
      %5711 = vmatpush2.xpose.msra.mxu0 0.0
      %5712 = vmatprep.subr.mxu0 0.0
      %5713 = vmatpush2.xpose.msra.mxu0 0.0
      %5714 = vmatprep.subr.mxu0 0.0
      %5715 = vmatpush2.xpose.msra.mxu0 0.0
      %5716 = vmatprep.subr.mxu0 0.0
      %5717 = vmatpush2.xpose.msra.mxu0 0.0
      %5718 = vmatprep.subr.mxu0 0.0
      %5719 = vmatpush2.xpose.msra.mxu0 0.0
      %5720 = vmatprep.subr.mxu0 0.0
      %5721 = vmatpush2.xpose.msra.mxu0 0.0
      %5722 = vmatprep.subr.mxu0 0.0
      %5723 = vmatpush2.xpose.msra.mxu0 0.0
      %5724 = vmatprep.subr.mxu0 0.0
      %5725 = vmatpush2.xpose.msra.mxu0 0.0
      %5726 = vmatprep.subr.mxu0 0.0
      %5727 = vmatpush2.xpose.msra.mxu0 0.0
      %5728 = vmatprep.subr.mxu0 0.0
      %5729 = vmatpush2.xpose.msra.mxu0 0.0
      %5730 = vmatprep.subr.mxu0 0.0
      %5731 = vmatpush2.xpose.msra.mxu0 0.0
      %5732 = vmatprep.subr.mxu0 0.0
      %5733 = vmatpush2.xpose.msra.mxu0 0.0
      %5734 = vmatprep.subr.mxu0 0.0
      %5735 = vmatpush2.xpose.msra.mxu0 0.0
      %5736 = vmatprep.subr.mxu0 0.0
      %5737 = vmatpush2.xpose.msra.mxu0 0.0
      %5738 = vmatprep.subr.mxu0 0.0
      %5739 = vmatpush2.xpose.msra.mxu0 0.0
      %5740 = vmatprep.subr.mxu0 0.0
      %5741 = vmatpush2.xpose.msra.mxu0 0.0
      %5742 = vmatprep.mubr.f32.mxu0 0.0
      %5743 = vmatmul.mubr.f32.gmra.mxu0 %v4895
      %v5744 = vpop.f32.mrf.mxu0
      %v5745 = vadd.f32 %v5520, %v5744
      %v5746 = vpop.f32.mrf.mxu0
      %5747 = vdwg.mxu0
      %v5749 = vsel %vm407, %v4858, 0
      %5751 = vmatprep.subr.mxu0 0.0
      %5752 = vmatpush1.xpose.msra.mxu0 0.0
      %5753 = vmatprep.subr.mxu0 0.0
      %5754 = vmatpush1.xpose.msra.mxu0 0.0
      %5755 = vmatprep.subr.mxu0 0.0
      %5756 = vmatpush1.xpose.msra.mxu0 0.0
      %5757 = vmatprep.subr.mxu0 0.0
      %5758 = vmatpush1.xpose.msra.mxu0 0.0
      %5759 = vmatprep.subr.mxu0 0.0
      %5760 = vmatpush1.xpose.msra.mxu0 0.0
      %5761 = vmatprep.subr.mxu0 0.0
      %5762 = vmatpush1.xpose.msra.mxu0 0.0
      %5763 = vmatprep.subr.mxu0 0.0
      %5764 = vmatpush1.xpose.msra.mxu0 0.0
      %5765 = vmatprep.subr.mxu0 0.0
      %5766 = vmatpush1.xpose.msra.mxu0 0.0
      %5767 = vmatprep.subr.mxu0 0.0
      %5768 = vmatpush1.xpose.msra.mxu0 0.0
      %5769 = vmatprep.subr.mxu0 0.0
      %5770 = vmatpush1.xpose.msra.mxu0 0.0
      %5771 = vmatprep.subr.mxu0 0.0
      %5772 = vmatpush1.xpose.msra.mxu0 0.0
      %5773 = vmatprep.subr.mxu0 0.0
      %5774 = vmatpush1.xpose.msra.mxu0 0.0
      %5775 = vmatprep.subr.mxu0 0.0
      %5776 = vmatpush1.xpose.msra.mxu0 0.0
      %5777 = vmatprep.subr.mxu0 0.0
      %5778 = vmatpush1.xpose.msra.mxu0 0.0
      %5779 = vmatprep.subr.mxu0 0.0
      %5780 = vmatpush1.xpose.msra.mxu0 0.0
      %5781 = vmatprep.subr.mxu0 0.0
      %5782 = vmatpush1.xpose.msra.mxu0 %v5749
      %5783 = vmatprep.subr.mxu0 0.0
      %5784 = vmatpush2.xpose.msra.mxu0 0.0
      %5785 = vmatprep.subr.mxu0 0.0
      %5786 = vmatpush2.xpose.msra.mxu0 0.0
      %5787 = vmatprep.subr.mxu0 0.0
      %5788 = vmatpush2.xpose.msra.mxu0 0.0
      %5789 = vmatprep.subr.mxu0 0.0
      %5790 = vmatpush2.xpose.msra.mxu0 0.0
      %5791 = vmatprep.subr.mxu0 0.0
      %5792 = vmatpush2.xpose.msra.mxu0 0.0
      %5793 = vmatprep.subr.mxu0 0.0
      %5794 = vmatpush2.xpose.msra.mxu0 0.0
      %5795 = vmatprep.subr.mxu0 0.0
      %5796 = vmatpush2.xpose.msra.mxu0 0.0
      %5797 = vmatprep.subr.mxu0 0.0
      %5798 = vmatpush2.xpose.msra.mxu0 0.0
      %5799 = vmatprep.subr.mxu0 0.0
      %5800 = vmatpush2.xpose.msra.mxu0 0.0
      %5801 = vmatprep.subr.mxu0 0.0
      %5802 = vmatpush2.xpose.msra.mxu0 0.0
      %5803 = vmatprep.subr.mxu0 0.0
      %5804 = vmatpush2.xpose.msra.mxu0 0.0
      %5805 = vmatprep.subr.mxu0 0.0
      %5806 = vmatpush2.xpose.msra.mxu0 0.0
      %5807 = vmatprep.subr.mxu0 0.0
      %5808 = vmatpush2.xpose.msra.mxu0 0.0
      %5809 = vmatprep.subr.mxu0 0.0
      %5810 = vmatpush2.xpose.msra.mxu0 0.0
      %5811 = vmatprep.subr.mxu0 0.0
      %5812 = vmatpush2.xpose.msra.mxu0 0.0
      %5813 = vmatprep.subr.mxu0 0.0
      %5814 = vmatpush2.xpose.msra.mxu0 0.0
      %5815 = vmatprep.mubr.f32.mxu0 0.0
      %5816 = vmatmul.mubr.f32.gmra.mxu0 %v4895
      %v5817 = vpop.f32.mrf.mxu0
      %v5818 = vadd.f32 %v5524, %v5817
      %v5819 = vpop.f32.mrf.mxu0
      %5820 = vdwg.mxu0
      %v5822 = vsel %vm1680, %v4967, 0
      %v5825 = vsel %vm1680, %v5283, 0
      %5827 = vmatprep.subr.mxu0 0.0
      %5828 = vmatpush1.xpose.msra.mxu0 0.0
      %5829 = vmatprep.subr.mxu0 0.0
      %5830 = vmatpush1.xpose.msra.mxu0 0.0
      %5831 = vmatprep.subr.mxu0 0.0
      %5832 = vmatpush1.xpose.msra.mxu0 0.0
      %5833 = vmatprep.subr.mxu0 0.0
      %5834 = vmatpush1.xpose.msra.mxu0 0.0
      %5835 = vmatprep.subr.mxu0 0.0
      %5836 = vmatpush1.xpose.msra.mxu0 0.0
      %5837 = vmatprep.subr.mxu0 0.0
      %5838 = vmatpush1.xpose.msra.mxu0 0.0
      %5839 = vmatprep.subr.mxu0 0.0
      %5840 = vmatpush1.xpose.msra.mxu0 0.0
      %5841 = vmatprep.subr.mxu0 0.0
      %5842 = vmatpush1.xpose.msra.mxu0 0.0
      %5843 = vmatprep.subr.mxu0 0.0
      %5844 = vmatpush1.xpose.msra.mxu0 0.0
      %5845 = vmatprep.subr.mxu0 0.0
      %5846 = vmatpush1.xpose.msra.mxu0 0.0
      %5847 = vmatprep.subr.mxu0 0.0
      %5848 = vmatpush1.xpose.msra.mxu0 0.0
      %5849 = vmatprep.subr.mxu0 0.0
      %5850 = vmatpush1.xpose.msra.mxu0 0.0
      %5851 = vmatprep.subr.mxu0 0.0
      %5852 = vmatpush1.xpose.msra.mxu0 0.0
      %5853 = vmatprep.subr.mxu0 0.0
      %5854 = vmatpush1.xpose.msra.mxu0 0.0
      %5855 = vmatprep.subr.mxu0 0.0
      %5856 = vmatpush1.xpose.msra.mxu0 0.0
      %5857 = vmatprep.subr.mxu0 0.0
      %5858 = vmatpush1.xpose.msra.mxu0 %v5825
      %5859 = vmatprep.subr.mxu0 0.0
      %5860 = vmatpush2.xpose.msra.mxu0 0.0
      %5861 = vmatprep.subr.mxu0 0.0
      %5862 = vmatpush2.xpose.msra.mxu0 0.0
      %5863 = vmatprep.subr.mxu0 0.0
      %5864 = vmatpush2.xpose.msra.mxu0 0.0
      %5865 = vmatprep.subr.mxu0 0.0
      %5866 = vmatpush2.xpose.msra.mxu0 0.0
      %5867 = vmatprep.subr.mxu0 0.0
      %5868 = vmatpush2.xpose.msra.mxu0 0.0
      %5869 = vmatprep.subr.mxu0 0.0
      %5870 = vmatpush2.xpose.msra.mxu0 0.0
      %5871 = vmatprep.subr.mxu0 0.0
      %5872 = vmatpush2.xpose.msra.mxu0 0.0
      %5873 = vmatprep.subr.mxu0 0.0
      %5874 = vmatpush2.xpose.msra.mxu0 0.0
      %5875 = vmatprep.subr.mxu0 0.0
      %5876 = vmatpush2.xpose.msra.mxu0 0.0
      %5877 = vmatprep.subr.mxu0 0.0
      %5878 = vmatpush2.xpose.msra.mxu0 0.0
      %5879 = vmatprep.subr.mxu0 0.0
      %5880 = vmatpush2.xpose.msra.mxu0 0.0
      %5881 = vmatprep.subr.mxu0 0.0
      %5882 = vmatpush2.xpose.msra.mxu0 0.0
      %5883 = vmatprep.subr.mxu0 0.0
      %5884 = vmatpush2.xpose.msra.mxu0 0.0
      %5885 = vmatprep.subr.mxu0 0.0
      %5886 = vmatpush2.xpose.msra.mxu0 0.0
      %5887 = vmatprep.subr.mxu0 0.0
      %5888 = vmatpush2.xpose.msra.mxu0 0.0
      %5889 = vmatprep.subr.mxu0 0.0
      %5890 = vmatpush2.xpose.msra.mxu0 0.0
      %5891 = vmatprep.mubr.f32.mxu0 0.0
      %5892 = vmatmul.mubr.f32.gmra.mxu0 %v5822
      %v5893 = vpop.f32.mrf.mxu0
      %v5894 = vadd.f32 0.0, %v5893
      %v5895 = vpop.f32.mrf.mxu0
      %5896 = vdwg.mxu0
      %v5898 = vsel %vm1680, %v5040, 0
      %v5901 = vsel %vm1680, %v5356, 0
      %5903 = vmatprep.subr.mxu0 0.0
      %5904 = vmatpush1.xpose.msra.mxu0 0.0
      %5905 = vmatprep.subr.mxu0 0.0
      %5906 = vmatpush1.xpose.msra.mxu0 0.0
      %5907 = vmatprep.subr.mxu0 0.0
      %5908 = vmatpush1.xpose.msra.mxu0 0.0
      %5909 = vmatprep.subr.mxu0 0.0
      %5910 = vmatpush1.xpose.msra.mxu0 0.0
      %5911 = vmatprep.subr.mxu0 0.0
      %5912 = vmatpush1.xpose.msra.mxu0 0.0
      %5913 = vmatprep.subr.mxu0 0.0
      %5914 = vmatpush1.xpose.msra.mxu0 0.0
      %5915 = vmatprep.subr.mxu0 0.0
      %5916 = vmatpush1.xpose.msra.mxu0 0.0
      %5917 = vmatprep.subr.mxu0 0.0
      %5918 = vmatpush1.xpose.msra.mxu0 0.0
      %5919 = vmatprep.subr.mxu0 0.0
      %5920 = vmatpush1.xpose.msra.mxu0 0.0
      %5921 = vmatprep.subr.mxu0 0.0
      %5922 = vmatpush1.xpose.msra.mxu0 0.0
      %5923 = vmatprep.subr.mxu0 0.0
      %5924 = vmatpush1.xpose.msra.mxu0 0.0
      %5925 = vmatprep.subr.mxu0 0.0
      %5926 = vmatpush1.xpose.msra.mxu0 0.0
      %5927 = vmatprep.subr.mxu0 0.0
      %5928 = vmatpush1.xpose.msra.mxu0 0.0
      %5929 = vmatprep.subr.mxu0 0.0
      %5930 = vmatpush1.xpose.msra.mxu0 0.0
      %5931 = vmatprep.subr.mxu0 0.0
      %5932 = vmatpush1.xpose.msra.mxu0 0.0
      %5933 = vmatprep.subr.mxu0 0.0
      %5934 = vmatpush1.xpose.msra.mxu0 %v5901
      %5935 = vmatprep.subr.mxu0 0.0
      %5936 = vmatpush2.xpose.msra.mxu0 0.0
      %5937 = vmatprep.subr.mxu0 0.0
      %5938 = vmatpush2.xpose.msra.mxu0 0.0
      %5939 = vmatprep.subr.mxu0 0.0
      %5940 = vmatpush2.xpose.msra.mxu0 0.0
      %5941 = vmatprep.subr.mxu0 0.0
      %5942 = vmatpush2.xpose.msra.mxu0 0.0
      %5943 = vmatprep.subr.mxu0 0.0
      %5944 = vmatpush2.xpose.msra.mxu0 0.0
      %5945 = vmatprep.subr.mxu0 0.0
      %5946 = vmatpush2.xpose.msra.mxu0 0.0
      %5947 = vmatprep.subr.mxu0 0.0
      %5948 = vmatpush2.xpose.msra.mxu0 0.0
      %5949 = vmatprep.subr.mxu0 0.0
      %5950 = vmatpush2.xpose.msra.mxu0 0.0
      %5951 = vmatprep.subr.mxu0 0.0
      %5952 = vmatpush2.xpose.msra.mxu0 0.0
      %5953 = vmatprep.subr.mxu0 0.0
      %5954 = vmatpush2.xpose.msra.mxu0 0.0
      %5955 = vmatprep.subr.mxu0 0.0
      %5956 = vmatpush2.xpose.msra.mxu0 0.0
      %5957 = vmatprep.subr.mxu0 0.0
      %5958 = vmatpush2.xpose.msra.mxu0 0.0
      %5959 = vmatprep.subr.mxu0 0.0
      %5960 = vmatpush2.xpose.msra.mxu0 0.0
      %5961 = vmatprep.subr.mxu0 0.0
      %5962 = vmatpush2.xpose.msra.mxu0 0.0
      %5963 = vmatprep.subr.mxu0 0.0
      %5964 = vmatpush2.xpose.msra.mxu0 0.0
      %5965 = vmatprep.subr.mxu0 0.0
      %5966 = vmatpush2.xpose.msra.mxu0 0.0
      %5967 = vmatprep.mubr.f32.mxu0 0.0
      %5968 = vmatmul.mubr.f32.gmra.mxu0 %v5898
      %v5969 = vpop.f32.mrf.mxu0
      %v5970 = vadd.f32 0.0, %v5969
      %v5971 = vpop.f32.mrf.mxu0
      %5972 = vdwg.mxu0
      %v5974 = vsel %vm1680, %v5113, 0
      %v5977 = vsel %vm1680, %v5429, 0
      %5979 = vmatprep.subr.mxu0 0.0
      %5980 = vmatpush1.xpose.msra.mxu0 0.0
      %5981 = vmatprep.subr.mxu0 0.0
      %5982 = vmatpush1.xpose.msra.mxu0 0.0
      %5983 = vmatprep.subr.mxu0 0.0
      %5984 = vmatpush1.xpose.msra.mxu0 0.0
      %5985 = vmatprep.subr.mxu0 0.0
      %5986 = vmatpush1.xpose.msra.mxu0 0.0
      %5987 = vmatprep.subr.mxu0 0.0
      %5988 = vmatpush1.xpose.msra.mxu0 0.0
      %5989 = vmatprep.subr.mxu0 0.0
      %5990 = vmatpush1.xpose.msra.mxu0 0.0
      %5991 = vmatprep.subr.mxu0 0.0
      %5992 = vmatpush1.xpose.msra.mxu0 0.0
      %5993 = vmatprep.subr.mxu0 0.0
      %5994 = vmatpush1.xpose.msra.mxu0 0.0
      %5995 = vmatprep.subr.mxu0 0.0
      %5996 = vmatpush1.xpose.msra.mxu0 0.0
      %5997 = vmatprep.subr.mxu0 0.0
      %5998 = vmatpush1.xpose.msra.mxu0 0.0
      %5999 = vmatprep.subr.mxu0 0.0
      %6000 = vmatpush1.xpose.msra.mxu0 0.0
      %6001 = vmatprep.subr.mxu0 0.0
      %6002 = vmatpush1.xpose.msra.mxu0 0.0
      %6003 = vmatprep.subr.mxu0 0.0
      %6004 = vmatpush1.xpose.msra.mxu0 0.0
      %6005 = vmatprep.subr.mxu0 0.0
      %6006 = vmatpush1.xpose.msra.mxu0 0.0
      %6007 = vmatprep.subr.mxu0 0.0
      %6008 = vmatpush1.xpose.msra.mxu0 0.0
      %6009 = vmatprep.subr.mxu0 0.0
      %6010 = vmatpush1.xpose.msra.mxu0 %v5977
      %6011 = vmatprep.subr.mxu0 0.0
      %6012 = vmatpush2.xpose.msra.mxu0 0.0
      %6013 = vmatprep.subr.mxu0 0.0
      %6014 = vmatpush2.xpose.msra.mxu0 0.0
      %6015 = vmatprep.subr.mxu0 0.0
      %6016 = vmatpush2.xpose.msra.mxu0 0.0
      %6017 = vmatprep.subr.mxu0 0.0
      %6018 = vmatpush2.xpose.msra.mxu0 0.0
      %6019 = vmatprep.subr.mxu0 0.0
      %6020 = vmatpush2.xpose.msra.mxu0 0.0
      %6021 = vmatprep.subr.mxu0 0.0
      %6022 = vmatpush2.xpose.msra.mxu0 0.0
      %6023 = vmatprep.subr.mxu0 0.0
      %6024 = vmatpush2.xpose.msra.mxu0 0.0
      %6025 = vmatprep.subr.mxu0 0.0
      %6026 = vmatpush2.xpose.msra.mxu0 0.0
      %6027 = vmatprep.subr.mxu0 0.0
      %6028 = vmatpush2.xpose.msra.mxu0 0.0
      %6029 = vmatprep.subr.mxu0 0.0
      %6030 = vmatpush2.xpose.msra.mxu0 0.0
      %6031 = vmatprep.subr.mxu0 0.0
      %6032 = vmatpush2.xpose.msra.mxu0 0.0
      %6033 = vmatprep.subr.mxu0 0.0
      %6034 = vmatpush2.xpose.msra.mxu0 0.0
      %6035 = vmatprep.subr.mxu0 0.0
      %6036 = vmatpush2.xpose.msra.mxu0 0.0
      %6037 = vmatprep.subr.mxu0 0.0
      %6038 = vmatpush2.xpose.msra.mxu0 0.0
      %6039 = vmatprep.subr.mxu0 0.0
      %6040 = vmatpush2.xpose.msra.mxu0 0.0
      %6041 = vmatprep.subr.mxu0 0.0
      %6042 = vmatpush2.xpose.msra.mxu0 0.0
      %6043 = vmatprep.mubr.f32.mxu0 0.0
      %6044 = vmatmul.mubr.f32.gmra.mxu0 %v5974
      %v6045 = vpop.f32.mrf.mxu0
      %v6046 = vadd.f32 0.0, %v6045
      %v6047 = vpop.f32.mrf.mxu0
      %6048 = vdwg.mxu0
      %v6050 = vsel %vm1680, %v5186, 0
      %v6053 = vsel %vm1680, %v5502, 0
      %6055 = vmatprep.subr.mxu0 0.0
      %6056 = vmatpush1.xpose.msra.mxu0 0.0
      %6057 = vmatprep.subr.mxu0 0.0
      %6058 = vmatpush1.xpose.msra.mxu0 0.0
      %6059 = vmatprep.subr.mxu0 0.0
      %6060 = vmatpush1.xpose.msra.mxu0 0.0
      %6061 = vmatprep.subr.mxu0 0.0
      %6062 = vmatpush1.xpose.msra.mxu0 0.0
      %6063 = vmatprep.subr.mxu0 0.0
      %6064 = vmatpush1.xpose.msra.mxu0 0.0
      %6065 = vmatprep.subr.mxu0 0.0
      %6066 = vmatpush1.xpose.msra.mxu0 0.0
      %6067 = vmatprep.subr.mxu0 0.0
      %6068 = vmatpush1.xpose.msra.mxu0 0.0
      %6069 = vmatprep.subr.mxu0 0.0
      %6070 = vmatpush1.xpose.msra.mxu0 0.0
      %6071 = vmatprep.subr.mxu0 0.0
      %6072 = vmatpush1.xpose.msra.mxu0 0.0
      %6073 = vmatprep.subr.mxu0 0.0
      %6074 = vmatpush1.xpose.msra.mxu0 0.0
      %6075 = vmatprep.subr.mxu0 0.0
      %6076 = vmatpush1.xpose.msra.mxu0 0.0
      %6077 = vmatprep.subr.mxu0 0.0
      %6078 = vmatpush1.xpose.msra.mxu0 0.0
      %6079 = vmatprep.subr.mxu0 0.0
      %6080 = vmatpush1.xpose.msra.mxu0 0.0
      %6081 = vmatprep.subr.mxu0 0.0
      %6082 = vmatpush1.xpose.msra.mxu0 0.0
      %6083 = vmatprep.subr.mxu0 0.0
      %6084 = vmatpush1.xpose.msra.mxu0 0.0
      %6085 = vmatprep.subr.mxu0 0.0
      %6086 = vmatpush1.xpose.msra.mxu0 %v6053
      %6087 = vmatprep.subr.mxu0 0.0
      %6088 = vmatpush2.xpose.msra.mxu0 0.0
      %6089 = vmatprep.subr.mxu0 0.0
      %6090 = vmatpush2.xpose.msra.mxu0 0.0
      %6091 = vmatprep.subr.mxu0 0.0
      %6092 = vmatpush2.xpose.msra.mxu0 0.0
      %6093 = vmatprep.subr.mxu0 0.0
      %6094 = vmatpush2.xpose.msra.mxu0 0.0
      %6095 = vmatprep.subr.mxu0 0.0
      %6096 = vmatpush2.xpose.msra.mxu0 0.0
      %6097 = vmatprep.subr.mxu0 0.0
      %6098 = vmatpush2.xpose.msra.mxu0 0.0
      %6099 = vmatprep.subr.mxu0 0.0
      %6100 = vmatpush2.xpose.msra.mxu0 0.0
      %6101 = vmatprep.subr.mxu0 0.0
      %6102 = vmatpush2.xpose.msra.mxu0 0.0
      %6103 = vmatprep.subr.mxu0 0.0
      %6104 = vmatpush2.xpose.msra.mxu0 0.0
      %6105 = vmatprep.subr.mxu0 0.0
      %6106 = vmatpush2.xpose.msra.mxu0 0.0
      %6107 = vmatprep.subr.mxu0 0.0
      %6108 = vmatpush2.xpose.msra.mxu0 0.0
      %6109 = vmatprep.subr.mxu0 0.0
      %6110 = vmatpush2.xpose.msra.mxu0 0.0
      %6111 = vmatprep.subr.mxu0 0.0
      %6112 = vmatpush2.xpose.msra.mxu0 0.0
      %6113 = vmatprep.subr.mxu0 0.0
      %6114 = vmatpush2.xpose.msra.mxu0 0.0
      %6115 = vmatprep.subr.mxu0 0.0
      %6116 = vmatpush2.xpose.msra.mxu0 0.0
      %6117 = vmatprep.subr.mxu0 0.0
      %6118 = vmatpush2.xpose.msra.mxu0 0.0
      %6119 = vmatprep.mubr.f32.mxu0 0.0
      %6120 = vmatmul.mubr.f32.gmra.mxu0 %v6050
      %v6121 = vpop.f32.mrf.mxu0
      %v6122 = vadd.f32 0.0, %v6121
      %v6123 = vpop.f32.mrf.mxu0
      %6124 = vdwg.mxu0
      %v6125 = vsel %vm1680, %v5894, -inf
      %6126 = vmax.xlane.f32.xlu0 %v6125
      %v6127 = vpop.xlane.xlu0 %6126
      %v6128 = vsel %vm1680, %v5970, -inf
      %6129 = vmax.xlane.f32.xlu0 %v6128
      %v6130 = vpop.xlane.xlu0 %6129
      %v6131 = vsel %vm1680, %v6046, -inf
      %6132 = vmax.xlane.f32.xlu0 %v6131
      %v6133 = vpop.xlane.xlu0 %6132
      %v6134 = vsel %vm1680, %v6122, -inf
      %6135 = vmax.xlane.f32.xlu0 %v6134
      %v6136 = vpop.xlane.xlu0 %6135
      %v6137 = vsub.f32 %v5894, %v6127
      %v6138 = vsub.f32 %v5970, %v6130
      %v6139 = vsub.f32 %v6046, %v6133
      %v6140 = vsub.f32 %v6122, %v6136
      %v6141 = vmul.f32 %v6137, 1.442695
      %v6142 = vpow.pop %v6141
      %v6143 = vmul.f32 %v6138, 1.442695
      %v6144 = vpow.pop %v6143
      %v6145 = vmul.f32 %v6139, 1.442695
      %v6146 = vpow.pop %v6145
      %v6147 = vmul.f32 %v6140, 1.442695
      %v6148 = vpow.pop %v6147
      %v6149 = vsel %vm1680, %v6142, 0.0
      %6150 = vadd.xlane.f32.xlu0 %v6149
      %v6151 = vpop.xlane.xlu0 %6150
      %v6152 = vsel %vm1680, %v6144, 0.0
      %6153 = vadd.xlane.f32.xlu0 %v6152
      %v6154 = vpop.xlane.xlu0 %6153
      %v6155 = vsel %vm1680, %v6146, 0.0
      %6156 = vadd.xlane.f32.xlu0 %v6155
      %v6157 = vpop.xlane.xlu0 %6156
      %v6158 = vsel %vm1680, %v6148, 0.0
      %6159 = vadd.xlane.f32.xlu0 %v6158
      %v6160 = vpop.xlane.xlu0 %6159
      %v6161 = vrcp.pop %v6151
      %v6162 = vrcp.pop %v6154
      %v6163 = vrcp.pop %v6157
      %v6164 = vrcp.pop %v6160
      %v6165 = vmul.f32 %v6142, %v6161
      %v6166 = vmul.f32 %v6144, %v6162
      %v6167 = vmul.f32 %v6146, %v6163
      %v6168 = vmul.f32 %v6148, %v6164
      %v6170 = vsel %vm1680, %v6165, 0
      %6172 = vmatprep.subr.mxu0 0.0
      %6173 = vmatpush1.msra.mxu0 0.0
      %6174 = vmatprep.subr.mxu0 0.0
      %6175 = vmatpush1.msra.mxu0 0.0
      %6176 = vmatprep.subr.mxu0 0.0
      %6177 = vmatpush1.msra.mxu0 0.0
      %6178 = vmatprep.subr.mxu0 0.0
      %6179 = vmatpush1.msra.mxu0 0.0
      %6180 = vmatprep.subr.mxu0 0.0
      %6181 = vmatpush1.msra.mxu0 0.0
      %6182 = vmatprep.subr.mxu0 0.0
      %6183 = vmatpush1.msra.mxu0 0.0
      %6184 = vmatprep.subr.mxu0 0.0
      %6185 = vmatpush1.msra.mxu0 0.0
      %6186 = vmatprep.subr.mxu0 0.0
      %6187 = vmatpush1.msra.mxu0 0.0
      %6188 = vmatprep.subr.mxu0 0.0
      %6189 = vmatpush1.msra.mxu0 0.0
      %6190 = vmatprep.subr.mxu0 0.0
      %6191 = vmatpush1.msra.mxu0 0.0
      %6192 = vmatprep.subr.mxu0 0.0
      %6193 = vmatpush1.msra.mxu0 0.0
      %6194 = vmatprep.subr.mxu0 0.0
      %6195 = vmatpush1.msra.mxu0 0.0
      %6196 = vmatprep.subr.mxu0 0.0
      %6197 = vmatpush1.msra.mxu0 0.0
      %6198 = vmatprep.subr.mxu0 0.0
      %6199 = vmatpush1.msra.mxu0 0.0
      %6200 = vmatprep.subr.mxu0 0.0
      %6201 = vmatpush1.msra.mxu0 0.0
      %6202 = vmatprep.subr.mxu0 0.0
      %6203 = vmatpush1.msra.mxu0 %v5599
      %6204 = vmatprep.subr.mxu0 0.0
      %6205 = vmatpush2.msra.mxu0 0.0
      %6206 = vmatprep.subr.mxu0 0.0
      %6207 = vmatpush2.msra.mxu0 0.0
      %6208 = vmatprep.subr.mxu0 0.0
      %6209 = vmatpush2.msra.mxu0 0.0
      %6210 = vmatprep.subr.mxu0 0.0
      %6211 = vmatpush2.msra.mxu0 0.0
      %6212 = vmatprep.subr.mxu0 0.0
      %6213 = vmatpush2.msra.mxu0 0.0
      %6214 = vmatprep.subr.mxu0 0.0
      %6215 = vmatpush2.msra.mxu0 0.0
      %6216 = vmatprep.subr.mxu0 0.0
      %6217 = vmatpush2.msra.mxu0 0.0
      %6218 = vmatprep.subr.mxu0 0.0
      %6219 = vmatpush2.msra.mxu0 0.0
      %6220 = vmatprep.subr.mxu0 0.0
      %6221 = vmatpush2.msra.mxu0 0.0
      %6222 = vmatprep.subr.mxu0 0.0
      %6223 = vmatpush2.msra.mxu0 0.0
      %6224 = vmatprep.subr.mxu0 0.0
      %6225 = vmatpush2.msra.mxu0 0.0
      %6226 = vmatprep.subr.mxu0 0.0
      %6227 = vmatpush2.msra.mxu0 0.0
      %6228 = vmatprep.subr.mxu0 0.0
      %6229 = vmatpush2.msra.mxu0 0.0
      %6230 = vmatprep.subr.mxu0 0.0
      %6231 = vmatpush2.msra.mxu0 0.0
      %6232 = vmatprep.subr.mxu0 0.0
      %6233 = vmatpush2.msra.mxu0 0.0
      %6234 = vmatprep.subr.mxu0 0.0
      %6235 = vmatpush2.msra.mxu0 0.0
      %6236 = vmatprep.mubr.f32.mxu0 0.0
      %6237 = vmatmul.mubr.f32.gmra.mxu0 %v6170
      %v6238 = vpop.f32.mrf.mxu0
      %v6239 = vadd.f32 0.0, %v6238
      %v6240 = vpop.f32.mrf.mxu0
      %6241 = vdwg.mxu0
      %v6243 = vsel %vm1680, %v6166, 0
      %6245 = vmatprep.subr.mxu0 0.0
      %6246 = vmatpush1.msra.mxu0 0.0
      %6247 = vmatprep.subr.mxu0 0.0
      %6248 = vmatpush1.msra.mxu0 0.0
      %6249 = vmatprep.subr.mxu0 0.0
      %6250 = vmatpush1.msra.mxu0 0.0
      %6251 = vmatprep.subr.mxu0 0.0
      %6252 = vmatpush1.msra.mxu0 0.0
      %6253 = vmatprep.subr.mxu0 0.0
      %6254 = vmatpush1.msra.mxu0 0.0
      %6255 = vmatprep.subr.mxu0 0.0
      %6256 = vmatpush1.msra.mxu0 0.0
      %6257 = vmatprep.subr.mxu0 0.0
      %6258 = vmatpush1.msra.mxu0 0.0
      %6259 = vmatprep.subr.mxu0 0.0
      %6260 = vmatpush1.msra.mxu0 0.0
      %6261 = vmatprep.subr.mxu0 0.0
      %6262 = vmatpush1.msra.mxu0 0.0
      %6263 = vmatprep.subr.mxu0 0.0
      %6264 = vmatpush1.msra.mxu0 0.0
      %6265 = vmatprep.subr.mxu0 0.0
      %6266 = vmatpush1.msra.mxu0 0.0
      %6267 = vmatprep.subr.mxu0 0.0
      %6268 = vmatpush1.msra.mxu0 0.0
      %6269 = vmatprep.subr.mxu0 0.0
      %6270 = vmatpush1.msra.mxu0 0.0
      %6271 = vmatprep.subr.mxu0 0.0
      %6272 = vmatpush1.msra.mxu0 0.0
      %6273 = vmatprep.subr.mxu0 0.0
      %6274 = vmatpush1.msra.mxu0 0.0
      %6275 = vmatprep.subr.mxu0 0.0
      %6276 = vmatpush1.msra.mxu0 %v5672
      %6277 = vmatprep.subr.mxu0 0.0
      %6278 = vmatpush2.msra.mxu0 0.0
      %6279 = vmatprep.subr.mxu0 0.0
      %6280 = vmatpush2.msra.mxu0 0.0
      %6281 = vmatprep.subr.mxu0 0.0
      %6282 = vmatpush2.msra.mxu0 0.0
      %6283 = vmatprep.subr.mxu0 0.0
      %6284 = vmatpush2.msra.mxu0 0.0
      %6285 = vmatprep.subr.mxu0 0.0
      %6286 = vmatpush2.msra.mxu0 0.0
      %6287 = vmatprep.subr.mxu0 0.0
      %6288 = vmatpush2.msra.mxu0 0.0
      %6289 = vmatprep.subr.mxu0 0.0
      %6290 = vmatpush2.msra.mxu0 0.0
      %6291 = vmatprep.subr.mxu0 0.0
      %6292 = vmatpush2.msra.mxu0 0.0
      %6293 = vmatprep.subr.mxu0 0.0
      %6294 = vmatpush2.msra.mxu0 0.0
      %6295 = vmatprep.subr.mxu0 0.0
      %6296 = vmatpush2.msra.mxu0 0.0
      %6297 = vmatprep.subr.mxu0 0.0
      %6298 = vmatpush2.msra.mxu0 0.0
      %6299 = vmatprep.subr.mxu0 0.0
      %6300 = vmatpush2.msra.mxu0 0.0
      %6301 = vmatprep.subr.mxu0 0.0
      %6302 = vmatpush2.msra.mxu0 0.0
      %6303 = vmatprep.subr.mxu0 0.0
      %6304 = vmatpush2.msra.mxu0 0.0
      %6305 = vmatprep.subr.mxu0 0.0
      %6306 = vmatpush2.msra.mxu0 0.0
      %6307 = vmatprep.subr.mxu0 0.0
      %6308 = vmatpush2.msra.mxu0 0.0
      %6309 = vmatprep.mubr.f32.mxu0 0.0
      %6310 = vmatmul.mubr.f32.gmra.mxu0 %v6243
      %v6311 = vpop.f32.mrf.mxu0
      %v6312 = vadd.f32 0.0, %v6311
      %v6313 = vpop.f32.mrf.mxu0
      %6314 = vdwg.mxu0
      %v6316 = vsel %vm1680, %v6167, 0
      %6318 = vmatprep.subr.mxu0 0.0
      %6319 = vmatpush1.msra.mxu0 0.0
      %6320 = vmatprep.subr.mxu0 0.0
      %6321 = vmatpush1.msra.mxu0 0.0
      %6322 = vmatprep.subr.mxu0 0.0
      %6323 = vmatpush1.msra.mxu0 0.0
      %6324 = vmatprep.subr.mxu0 0.0
      %6325 = vmatpush1.msra.mxu0 0.0
      %6326 = vmatprep.subr.mxu0 0.0
      %6327 = vmatpush1.msra.mxu0 0.0
      %6328 = vmatprep.subr.mxu0 0.0
      %6329 = vmatpush1.msra.mxu0 0.0
      %6330 = vmatprep.subr.mxu0 0.0
      %6331 = vmatpush1.msra.mxu0 0.0
      %6332 = vmatprep.subr.mxu0 0.0
      %6333 = vmatpush1.msra.mxu0 0.0
      %6334 = vmatprep.subr.mxu0 0.0
      %6335 = vmatpush1.msra.mxu0 0.0
      %6336 = vmatprep.subr.mxu0 0.0
      %6337 = vmatpush1.msra.mxu0 0.0
      %6338 = vmatprep.subr.mxu0 0.0
      %6339 = vmatpush1.msra.mxu0 0.0
      %6340 = vmatprep.subr.mxu0 0.0
      %6341 = vmatpush1.msra.mxu0 0.0
      %6342 = vmatprep.subr.mxu0 0.0
      %6343 = vmatpush1.msra.mxu0 0.0
      %6344 = vmatprep.subr.mxu0 0.0
      %6345 = vmatpush1.msra.mxu0 0.0
      %6346 = vmatprep.subr.mxu0 0.0
      %6347 = vmatpush1.msra.mxu0 0.0
      %6348 = vmatprep.subr.mxu0 0.0
      %6349 = vmatpush1.msra.mxu0 %v5745
      %6350 = vmatprep.subr.mxu0 0.0
      %6351 = vmatpush2.msra.mxu0 0.0
      %6352 = vmatprep.subr.mxu0 0.0
      %6353 = vmatpush2.msra.mxu0 0.0
      %6354 = vmatprep.subr.mxu0 0.0
      %6355 = vmatpush2.msra.mxu0 0.0
      %6356 = vmatprep.subr.mxu0 0.0
      %6357 = vmatpush2.msra.mxu0 0.0
      %6358 = vmatprep.subr.mxu0 0.0
      %6359 = vmatpush2.msra.mxu0 0.0
      %6360 = vmatprep.subr.mxu0 0.0
      %6361 = vmatpush2.msra.mxu0 0.0
      %6362 = vmatprep.subr.mxu0 0.0
      %6363 = vmatpush2.msra.mxu0 0.0
      %6364 = vmatprep.subr.mxu0 0.0
      %6365 = vmatpush2.msra.mxu0 0.0
      %6366 = vmatprep.subr.mxu0 0.0
      %6367 = vmatpush2.msra.mxu0 0.0
      %6368 = vmatprep.subr.mxu0 0.0
      %6369 = vmatpush2.msra.mxu0 0.0
      %6370 = vmatprep.subr.mxu0 0.0
      %6371 = vmatpush2.msra.mxu0 0.0
      %6372 = vmatprep.subr.mxu0 0.0
      %6373 = vmatpush2.msra.mxu0 0.0
      %6374 = vmatprep.subr.mxu0 0.0
      %6375 = vmatpush2.msra.mxu0 0.0
      %6376 = vmatprep.subr.mxu0 0.0
      %6377 = vmatpush2.msra.mxu0 0.0
      %6378 = vmatprep.subr.mxu0 0.0
      %6379 = vmatpush2.msra.mxu0 0.0
      %6380 = vmatprep.subr.mxu0 0.0
      %6381 = vmatpush2.msra.mxu0 0.0
      %6382 = vmatprep.mubr.f32.mxu0 0.0
      %6383 = vmatmul.mubr.f32.gmra.mxu0 %v6316
      %v6384 = vpop.f32.mrf.mxu0
      %v6385 = vadd.f32 0.0, %v6384
      %v6386 = vpop.f32.mrf.mxu0
      %6387 = vdwg.mxu0
      %v6389 = vsel %vm1680, %v6168, 0
      %6391 = vmatprep.subr.mxu0 0.0
      %6392 = vmatpush1.msra.mxu0 0.0
      %6393 = vmatprep.subr.mxu0 0.0
      %6394 = vmatpush1.msra.mxu0 0.0
      %6395 = vmatprep.subr.mxu0 0.0
      %6396 = vmatpush1.msra.mxu0 0.0
      %6397 = vmatprep.subr.mxu0 0.0
      %6398 = vmatpush1.msra.mxu0 0.0
      %6399 = vmatprep.subr.mxu0 0.0
      %6400 = vmatpush1.msra.mxu0 0.0
      %6401 = vmatprep.subr.mxu0 0.0
      %6402 = vmatpush1.msra.mxu0 0.0
      %6403 = vmatprep.subr.mxu0 0.0
      %6404 = vmatpush1.msra.mxu0 0.0
      %6405 = vmatprep.subr.mxu0 0.0
      %6406 = vmatpush1.msra.mxu0 0.0
      %6407 = vmatprep.subr.mxu0 0.0
      %6408 = vmatpush1.msra.mxu0 0.0
      %6409 = vmatprep.subr.mxu0 0.0
      %6410 = vmatpush1.msra.mxu0 0.0
      %6411 = vmatprep.subr.mxu0 0.0
      %6412 = vmatpush1.msra.mxu0 0.0
      %6413 = vmatprep.subr.mxu0 0.0
      %6414 = vmatpush1.msra.mxu0 0.0
      %6415 = vmatprep.subr.mxu0 0.0
      %6416 = vmatpush1.msra.mxu0 0.0
      %6417 = vmatprep.subr.mxu0 0.0
      %6418 = vmatpush1.msra.mxu0 0.0
      %6419 = vmatprep.subr.mxu0 0.0
      %6420 = vmatpush1.msra.mxu0 0.0
      %6421 = vmatprep.subr.mxu0 0.0
      %6422 = vmatpush1.msra.mxu0 %v5818
      %6423 = vmatprep.subr.mxu0 0.0
      %6424 = vmatpush2.msra.mxu0 0.0
      %6425 = vmatprep.subr.mxu0 0.0
      %6426 = vmatpush2.msra.mxu0 0.0
      %6427 = vmatprep.subr.mxu0 0.0
      %6428 = vmatpush2.msra.mxu0 0.0
      %6429 = vmatprep.subr.mxu0 0.0
      %6430 = vmatpush2.msra.mxu0 0.0
      %6431 = vmatprep.subr.mxu0 0.0
      %6432 = vmatpush2.msra.mxu0 0.0
      %6433 = vmatprep.subr.mxu0 0.0
      %6434 = vmatpush2.msra.mxu0 0.0
      %6435 = vmatprep.subr.mxu0 0.0
      %6436 = vmatpush2.msra.mxu0 0.0
      %6437 = vmatprep.subr.mxu0 0.0
      %6438 = vmatpush2.msra.mxu0 0.0
      %6439 = vmatprep.subr.mxu0 0.0
      %6440 = vmatpush2.msra.mxu0 0.0
      %6441 = vmatprep.subr.mxu0 0.0
      %6442 = vmatpush2.msra.mxu0 0.0
      %6443 = vmatprep.subr.mxu0 0.0
      %6444 = vmatpush2.msra.mxu0 0.0
      %6445 = vmatprep.subr.mxu0 0.0
      %6446 = vmatpush2.msra.mxu0 0.0
      %6447 = vmatprep.subr.mxu0 0.0
      %6448 = vmatpush2.msra.mxu0 0.0
      %6449 = vmatprep.subr.mxu0 0.0
      %6450 = vmatpush2.msra.mxu0 0.0
      %6451 = vmatprep.subr.mxu0 0.0
      %6452 = vmatpush2.msra.mxu0 0.0
      %6453 = vmatprep.subr.mxu0 0.0
      %6454 = vmatpush2.msra.mxu0 0.0
      %6455 = vmatprep.mubr.f32.mxu0 0.0
      %6456 = vmatmul.mubr.f32.gmra.mxu0 %v6389
      %v6457 = vpop.f32.mrf.mxu0
      %v6458 = vadd.f32 0.0, %v6457
      %v6459 = vpop.f32.mrf.mxu0
      %6460 = vdwg.mxu0
      %v6462 = vsel %vm1680, %v6239, 0
      %6464 = vmatprep.subr.mxu0 0.0
      %6465 = vmatpush1.msra.mxu0 0.0
      %6466 = vmatprep.subr.mxu0 0.0
      %6467 = vmatpush1.msra.mxu0 0.0
      %6468 = vmatprep.subr.mxu0 0.0
      %6469 = vmatpush1.msra.mxu0 0.0
      %6470 = vmatprep.subr.mxu0 0.0
      %6471 = vmatpush1.msra.mxu0 0.0
      %6472 = vmatprep.subr.mxu0 0.0
      %6473 = vmatpush1.msra.mxu0 0.0
      %6474 = vmatprep.subr.mxu0 0.0
      %6475 = vmatpush1.msra.mxu0 0.0
      %6476 = vmatprep.subr.mxu0 0.0
      %6477 = vmatpush1.msra.mxu0 0.0
      %6478 = vmatprep.subr.mxu0 0.0
      %6479 = vmatpush1.msra.mxu0 0.0
      %6480 = vmatprep.subr.mxu0 0.0
      %6481 = vmatpush1.msra.mxu0 0.0
      %6482 = vmatprep.subr.mxu0 0.0
      %6483 = vmatpush1.msra.mxu0 0.0
      %6484 = vmatprep.subr.mxu0 0.0
      %6485 = vmatpush1.msra.mxu0 0.0
      %6486 = vmatprep.subr.mxu0 0.0
      %6487 = vmatpush1.msra.mxu0 0.0
      %6488 = vmatprep.subr.mxu0 0.0
      %6489 = vmatpush1.msra.mxu0 0.0
      %6490 = vmatprep.subr.mxu0 0.0
      %6491 = vmatpush1.msra.mxu0 0.0
      %6492 = vmatprep.subr.mxu0 0.0
      %6493 = vmatpush1.msra.mxu0 0.0
      %6494 = vmatprep.subr.mxu0 0.0
      %6495 = vmatpush1.msra.mxu0 %v4865
      %6496 = vmatprep.subr.mxu0 0.0
      %6497 = vmatpush2.msra.mxu0 0.0
      %6498 = vmatprep.subr.mxu0 0.0
      %6499 = vmatpush2.msra.mxu0 0.0
      %6500 = vmatprep.subr.mxu0 0.0
      %6501 = vmatpush2.msra.mxu0 0.0
      %6502 = vmatprep.subr.mxu0 0.0
      %6503 = vmatpush2.msra.mxu0 0.0
      %6504 = vmatprep.subr.mxu0 0.0
      %6505 = vmatpush2.msra.mxu0 0.0
      %6506 = vmatprep.subr.mxu0 0.0
      %6507 = vmatpush2.msra.mxu0 0.0
      %6508 = vmatprep.subr.mxu0 0.0
      %6509 = vmatpush2.msra.mxu0 0.0
      %6510 = vmatprep.subr.mxu0 0.0
      %6511 = vmatpush2.msra.mxu0 0.0
      %6512 = vmatprep.subr.mxu0 0.0
      %6513 = vmatpush2.msra.mxu0 0.0
      %6514 = vmatprep.subr.mxu0 0.0
      %6515 = vmatpush2.msra.mxu0 0.0
      %6516 = vmatprep.subr.mxu0 0.0
      %6517 = vmatpush2.msra.mxu0 0.0
      %6518 = vmatprep.subr.mxu0 0.0
      %6519 = vmatpush2.msra.mxu0 0.0
      %6520 = vmatprep.subr.mxu0 0.0
      %6521 = vmatpush2.msra.mxu0 0.0
      %6522 = vmatprep.subr.mxu0 0.0
      %6523 = vmatpush2.msra.mxu0 0.0
      %6524 = vmatprep.subr.mxu0 0.0
      %6525 = vmatpush2.msra.mxu0 0.0
      %6526 = vmatprep.subr.mxu0 0.0
      %6527 = vmatpush2.msra.mxu0 0.0
      %6528 = vmatprep.mubr.f32.mxu0 0.0
      %6529 = vmatmul.mubr.f32.gmra.mxu0 %v6462
      %v6530 = vpop.f32.mrf.mxu0
      %v6531 = vadd.f32 0.0, %v6530
      %v6532 = vpop.f32.mrf.mxu0
      %6533 = vdwg.mxu0
      %v6535 = vsel %vm1680, %v6312, 0
      %6537 = vmatprep.subr.mxu0 0.0
      %6538 = vmatpush1.msra.mxu0 0.0
      %6539 = vmatprep.subr.mxu0 0.0
      %6540 = vmatpush1.msra.mxu0 0.0
      %6541 = vmatprep.subr.mxu0 0.0
      %6542 = vmatpush1.msra.mxu0 0.0
      %6543 = vmatprep.subr.mxu0 0.0
      %6544 = vmatpush1.msra.mxu0 0.0
      %6545 = vmatprep.subr.mxu0 0.0
      %6546 = vmatpush1.msra.mxu0 0.0
      %6547 = vmatprep.subr.mxu0 0.0
      %6548 = vmatpush1.msra.mxu0 0.0
      %6549 = vmatprep.subr.mxu0 0.0
      %6550 = vmatpush1.msra.mxu0 0.0
      %6551 = vmatprep.subr.mxu0 0.0
      %6552 = vmatpush1.msra.mxu0 0.0
      %6553 = vmatprep.subr.mxu0 0.0
      %6554 = vmatpush1.msra.mxu0 0.0
      %6555 = vmatprep.subr.mxu0 0.0
      %6556 = vmatpush1.msra.mxu0 0.0
      %6557 = vmatprep.subr.mxu0 0.0
      %6558 = vmatpush1.msra.mxu0 0.0
      %6559 = vmatprep.subr.mxu0 0.0
      %6560 = vmatpush1.msra.mxu0 0.0
      %6561 = vmatprep.subr.mxu0 0.0
      %6562 = vmatpush1.msra.mxu0 0.0
      %6563 = vmatprep.subr.mxu0 0.0
      %6564 = vmatpush1.msra.mxu0 0.0
      %6565 = vmatprep.subr.mxu0 0.0
      %6566 = vmatpush1.msra.mxu0 0.0
      %6567 = vmatprep.subr.mxu0 0.0
      %6568 = vmatpush1.msra.mxu0 %v4866
      %6569 = vmatprep.subr.mxu0 0.0
      %6570 = vmatpush2.msra.mxu0 0.0
      %6571 = vmatprep.subr.mxu0 0.0
      %6572 = vmatpush2.msra.mxu0 0.0
      %6573 = vmatprep.subr.mxu0 0.0
      %6574 = vmatpush2.msra.mxu0 0.0
      %6575 = vmatprep.subr.mxu0 0.0
      %6576 = vmatpush2.msra.mxu0 0.0
      %6577 = vmatprep.subr.mxu0 0.0
      %6578 = vmatpush2.msra.mxu0 0.0
      %6579 = vmatprep.subr.mxu0 0.0
      %6580 = vmatpush2.msra.mxu0 0.0
      %6581 = vmatprep.subr.mxu0 0.0
      %6582 = vmatpush2.msra.mxu0 0.0
      %6583 = vmatprep.subr.mxu0 0.0
      %6584 = vmatpush2.msra.mxu0 0.0
      %6585 = vmatprep.subr.mxu0 0.0
      %6586 = vmatpush2.msra.mxu0 0.0
      %6587 = vmatprep.subr.mxu0 0.0
      %6588 = vmatpush2.msra.mxu0 0.0
      %6589 = vmatprep.subr.mxu0 0.0
      %6590 = vmatpush2.msra.mxu0 0.0
      %6591 = vmatprep.subr.mxu0 0.0
      %6592 = vmatpush2.msra.mxu0 0.0
      %6593 = vmatprep.subr.mxu0 0.0
      %6594 = vmatpush2.msra.mxu0 0.0
      %6595 = vmatprep.subr.mxu0 0.0
      %6596 = vmatpush2.msra.mxu0 0.0
      %6597 = vmatprep.subr.mxu0 0.0
      %6598 = vmatpush2.msra.mxu0 0.0
      %6599 = vmatprep.subr.mxu0 0.0
      %6600 = vmatpush2.msra.mxu0 0.0
      %6601 = vmatprep.mubr.f32.mxu0 0.0
      %6602 = vmatmul.mubr.f32.gmra.mxu0 %v6535
      %v6603 = vpop.f32.mrf.mxu0
      %v6604 = vadd.f32 0.0, %v6603
      %v6605 = vpop.f32.mrf.mxu0
      %6606 = vdwg.mxu0
      %v6608 = vsel %vm1680, %v6385, 0
      %6610 = vmatprep.subr.mxu0 0.0
      %6611 = vmatpush1.msra.mxu0 0.0
      %6612 = vmatprep.subr.mxu0 0.0
      %6613 = vmatpush1.msra.mxu0 0.0
      %6614 = vmatprep.subr.mxu0 0.0
      %6615 = vmatpush1.msra.mxu0 0.0
      %6616 = vmatprep.subr.mxu0 0.0
      %6617 = vmatpush1.msra.mxu0 0.0
      %6618 = vmatprep.subr.mxu0 0.0
      %6619 = vmatpush1.msra.mxu0 0.0
      %6620 = vmatprep.subr.mxu0 0.0
      %6621 = vmatpush1.msra.mxu0 0.0
      %6622 = vmatprep.subr.mxu0 0.0
      %6623 = vmatpush1.msra.mxu0 0.0
      %6624 = vmatprep.subr.mxu0 0.0
      %6625 = vmatpush1.msra.mxu0 0.0
      %6626 = vmatprep.subr.mxu0 0.0
      %6627 = vmatpush1.msra.mxu0 0.0
      %6628 = vmatprep.subr.mxu0 0.0
      %6629 = vmatpush1.msra.mxu0 0.0
      %6630 = vmatprep.subr.mxu0 0.0
      %6631 = vmatpush1.msra.mxu0 0.0
      %6632 = vmatprep.subr.mxu0 0.0
      %6633 = vmatpush1.msra.mxu0 0.0
      %6634 = vmatprep.subr.mxu0 0.0
      %6635 = vmatpush1.msra.mxu0 0.0
      %6636 = vmatprep.subr.mxu0 0.0
      %6637 = vmatpush1.msra.mxu0 0.0
      %6638 = vmatprep.subr.mxu0 0.0
      %6639 = vmatpush1.msra.mxu0 0.0
      %6640 = vmatprep.subr.mxu0 0.0
      %6641 = vmatpush1.msra.mxu0 %v4867
      %6642 = vmatprep.subr.mxu0 0.0
      %6643 = vmatpush2.msra.mxu0 0.0
      %6644 = vmatprep.subr.mxu0 0.0
      %6645 = vmatpush2.msra.mxu0 0.0
      %6646 = vmatprep.subr.mxu0 0.0
      %6647 = vmatpush2.msra.mxu0 0.0
      %6648 = vmatprep.subr.mxu0 0.0
      %6649 = vmatpush2.msra.mxu0 0.0
      %6650 = vmatprep.subr.mxu0 0.0
      %6651 = vmatpush2.msra.mxu0 0.0
      %6652 = vmatprep.subr.mxu0 0.0
      %6653 = vmatpush2.msra.mxu0 0.0
      %6654 = vmatprep.subr.mxu0 0.0
      %6655 = vmatpush2.msra.mxu0 0.0
      %6656 = vmatprep.subr.mxu0 0.0
      %6657 = vmatpush2.msra.mxu0 0.0
      %6658 = vmatprep.subr.mxu0 0.0
      %6659 = vmatpush2.msra.mxu0 0.0
      %6660 = vmatprep.subr.mxu0 0.0
      %6661 = vmatpush2.msra.mxu0 0.0
      %6662 = vmatprep.subr.mxu0 0.0
      %6663 = vmatpush2.msra.mxu0 0.0
      %6664 = vmatprep.subr.mxu0 0.0
      %6665 = vmatpush2.msra.mxu0 0.0
      %6666 = vmatprep.subr.mxu0 0.0
      %6667 = vmatpush2.msra.mxu0 0.0
      %6668 = vmatprep.subr.mxu0 0.0
      %6669 = vmatpush2.msra.mxu0 0.0
      %6670 = vmatprep.subr.mxu0 0.0
      %6671 = vmatpush2.msra.mxu0 0.0
      %6672 = vmatprep.subr.mxu0 0.0
      %6673 = vmatpush2.msra.mxu0 0.0
      %6674 = vmatprep.mubr.f32.mxu0 0.0
      %6675 = vmatmul.mubr.f32.gmra.mxu0 %v6608
      %v6676 = vpop.f32.mrf.mxu0
      %v6677 = vadd.f32 0.0, %v6676
      %v6678 = vpop.f32.mrf.mxu0
      %6679 = vdwg.mxu0
      %v6681 = vsel %vm1680, %v6458, 0
      %6683 = vmatprep.subr.mxu0 0.0
      %6684 = vmatpush1.msra.mxu0 0.0
      %6685 = vmatprep.subr.mxu0 0.0
      %6686 = vmatpush1.msra.mxu0 0.0
      %6687 = vmatprep.subr.mxu0 0.0
      %6688 = vmatpush1.msra.mxu0 0.0
      %6689 = vmatprep.subr.mxu0 0.0
      %6690 = vmatpush1.msra.mxu0 0.0
      %6691 = vmatprep.subr.mxu0 0.0
      %6692 = vmatpush1.msra.mxu0 0.0
      %6693 = vmatprep.subr.mxu0 0.0
      %6694 = vmatpush1.msra.mxu0 0.0
      %6695 = vmatprep.subr.mxu0 0.0
      %6696 = vmatpush1.msra.mxu0 0.0
      %6697 = vmatprep.subr.mxu0 0.0
      %6698 = vmatpush1.msra.mxu0 0.0
      %6699 = vmatprep.subr.mxu0 0.0
      %6700 = vmatpush1.msra.mxu0 0.0
      %6701 = vmatprep.subr.mxu0 0.0
      %6702 = vmatpush1.msra.mxu0 0.0
      %6703 = vmatprep.subr.mxu0 0.0
      %6704 = vmatpush1.msra.mxu0 0.0
      %6705 = vmatprep.subr.mxu0 0.0
      %6706 = vmatpush1.msra.mxu0 0.0
      %6707 = vmatprep.subr.mxu0 0.0
      %6708 = vmatpush1.msra.mxu0 0.0
      %6709 = vmatprep.subr.mxu0 0.0
      %6710 = vmatpush1.msra.mxu0 0.0
      %6711 = vmatprep.subr.mxu0 0.0
      %6712 = vmatpush1.msra.mxu0 0.0
      %6713 = vmatprep.subr.mxu0 0.0
      %6714 = vmatpush1.msra.mxu0 %v4868
      %6715 = vmatprep.subr.mxu0 0.0
      %6716 = vmatpush2.msra.mxu0 0.0
      %6717 = vmatprep.subr.mxu0 0.0
      %6718 = vmatpush2.msra.mxu0 0.0
      %6719 = vmatprep.subr.mxu0 0.0
      %6720 = vmatpush2.msra.mxu0 0.0
      %6721 = vmatprep.subr.mxu0 0.0
      %6722 = vmatpush2.msra.mxu0 0.0
      %6723 = vmatprep.subr.mxu0 0.0
      %6724 = vmatpush2.msra.mxu0 0.0
      %6725 = vmatprep.subr.mxu0 0.0
      %6726 = vmatpush2.msra.mxu0 0.0
      %6727 = vmatprep.subr.mxu0 0.0
      %6728 = vmatpush2.msra.mxu0 0.0
      %6729 = vmatprep.subr.mxu0 0.0
      %6730 = vmatpush2.msra.mxu0 0.0
      %6731 = vmatprep.subr.mxu0 0.0
      %6732 = vmatpush2.msra.mxu0 0.0
      %6733 = vmatprep.subr.mxu0 0.0
      %6734 = vmatpush2.msra.mxu0 0.0
      %6735 = vmatprep.subr.mxu0 0.0
      %6736 = vmatpush2.msra.mxu0 0.0
      %6737 = vmatprep.subr.mxu0 0.0
      %6738 = vmatpush2.msra.mxu0 0.0
      %6739 = vmatprep.subr.mxu0 0.0
      %6740 = vmatpush2.msra.mxu0 0.0
      %6741 = vmatprep.subr.mxu0 0.0
      %6742 = vmatpush2.msra.mxu0 0.0
      %6743 = vmatprep.subr.mxu0 0.0
      %6744 = vmatpush2.msra.mxu0 0.0
      %6745 = vmatprep.subr.mxu0 0.0
      %6746 = vmatpush2.msra.mxu0 0.0
      %6747 = vmatprep.mubr.f32.mxu0 0.0
      %6748 = vmatmul.mubr.f32.gmra.mxu0 %v6681
      %v6749 = vpop.f32.mrf.mxu0
      %v6750 = vadd.f32 0.0, %v6749
      %v6751 = vpop.f32.mrf.mxu0
      %6752 = vdwg.mxu0
      %v6753 = vsel %vm407, %v6531, 0.0
      %v6754 = vsel %vm407, %v6604, 0.0
      %v6755 = vadd.f32 %v6753, %v6754
      %v6756 = vsel %vm407, %v6677, 0.0
      %v6757 = vadd.f32 %v6755, %v6756
      %v6758 = vsel %vm407, %v6750, 0.0
      %v6759 = vadd.f32 %v6757, %v6758
      %v6760 = vlaneseq
      %v6761 = vshrl.u32 %v6760, 7
      %v6762 = vsub.s32 0, %v6761
      %v6763 = vrot.slane %v4869, %v6762
      %v6764 = vadd.f32 %v6759, %v6763
      %v6765 = vadd.f32 %v4808, %v6764
      %v6766 = vld [vmem:[%s3 + $0x1c8] sm:$0x1]
      %v6767 = vld [vmem:[%s3 + $0x1d0] sm:$0x1]
      %v6768 = vsel %vm407, %v6765, 0.0
      %6769 = vadd.xlane.f32.xlu0 %v6768
      %v6770 = vpop.xlane.xlu0 %6769
      %v6771 = vmul.f32 %v6770, %v674
      %v6772 = vsub.f32 %v6765, %v6771
      %v6773 = vmul.f32 %v6772, %v6772
      %v6774 = vsel %vm407, %v6773, 0.0
      %6775 = vadd.xlane.f32.xlu0 %v6774
      %v6776 = vpop.xlane.xlu0 %6775
      %v6777 = vmul.f32 %v6776, %v674
      %v6778 = vadd.f32 %v6777, 1e-05
      %v6779 = vrsqrt.pop %v6778
      %v6780 = vmul.f32 %v6772, %v6779
      %v6781 = vlaneseq
      %v6782 = vshrl.u32 %v6781, 7
      %v6783 = vsub.s32 0, %v6782
      %v6784 = vrot.slane %v6766, %v6783
      %v6785 = vmul.f32 %v6780, %v6784
      %v6786 = vlaneseq
      %v6787 = vshrl.u32 %v6786, 7
      %v6788 = vsub.s32 0, %v6787
      %v6789 = vrot.slane %v6767, %v6788
      %v6790 = vadd.f32 %v6785, %v6789
      %s6791 = scalar_lea.vmem %s5, 384
      %v6792 = vld [vmem:[%s6791] sm:$0xff]
      %v6793 = vld [vmem:[%s6791 + $0x8] sm:$0xff]
      %v6794 = vld [vmem:[%s6791 + $0x10] sm:$0xff]
      %v6795 = vld [vmem:[%s6791 + $0x18] sm:$0xff]
      %s6796 = scalar_lea.vmem %s6, 36
      %v6797 = vld [vmem:[%s6796] sm:$0x1]
      %v6798 = vld [vmem:[%s6796 + $0x1] sm:$0x1]
      %v6799 = vld [vmem:[%s6796 + $0x2] sm:$0x1]
      %v6800 = vld [vmem:[%s6796 + $0x3] sm:$0x1]
      %s6801 = scalar_lea.vmem %s5, 416
      %v6802 = vld [vmem:[%s6801] sm:$0xff]
      %v6803 = vld [vmem:[%s6801 + $0x8] sm:$0xff]
      %v6804 = vld [vmem:[%s6801 + $0x10] sm:$0xff]
      %v6805 = vld [vmem:[%s6801 + $0x18] sm:$0xff]
      %s6806 = scalar_lea.vmem %s6, 40
      %v6807 = vld [vmem:[%s6806] sm:$0x1]
      %v6808 = vld [vmem:[%s6806 + $0x1] sm:$0x1]
      %v6809 = vld [vmem:[%s6806 + $0x2] sm:$0x1]
      %v6810 = vld [vmem:[%s6806 + $0x3] sm:$0x1]
      %s6811 = scalar_lea.vmem %s5, 448
      %v6812 = vld [vmem:[%s6811] sm:$0xff]
      %v6813 = vld [vmem:[%s6811 + $0x8] sm:$0xff]
      %v6814 = vld [vmem:[%s6811 + $0x10] sm:$0xff]
      %v6815 = vld [vmem:[%s6811 + $0x18] sm:$0xff]
      %s6816 = scalar_lea.vmem %s6, 44
      %v6817 = vld [vmem:[%s6816] sm:$0x1]
      %v6818 = vld [vmem:[%s6816 + $0x1] sm:$0x1]
      %v6819 = vld [vmem:[%s6816 + $0x2] sm:$0x1]
      %v6820 = vld [vmem:[%s6816 + $0x3] sm:$0x1]
      %s6821 = scalar_lea.vmem %s5, 480
      %v6822 = vld [vmem:[%s6821] sm:$0xff]
      %v6823 = vld [vmem:[%s6821 + $0x8] sm:$0xff]
      %v6824 = vld [vmem:[%s6821 + $0x10] sm:$0xff]
      %v6825 = vld [vmem:[%s6821 + $0x18] sm:$0xff]
      %v6826 = vld [vmem:[%s3 + $0x1f0] sm:$0x1]
      %v6831 = vlaneseq
      %v6832 = vshrl.u32 %v6831, 7
      %v6833 = vsub.s32 0, %v6832
      %v6834 = vrot.slane %v6797, %v6833
      %v6835 = vlaneseq
      %v6836 = vshrl.u32 %v6835, 7
      %v6837 = vsub.s32 0, %v6836
      %v6838 = vrot.slane %v6798, %v6837
      %v6839 = vlaneseq
      %v6840 = vshrl.u32 %v6839, 7
      %v6841 = vsub.s32 0, %v6840
      %v6842 = vrot.slane %v6799, %v6841
      %v6843 = vlaneseq
      %v6844 = vshrl.u32 %v6843, 7
      %v6845 = vsub.s32 0, %v6844
      %v6846 = vrot.slane %v6800, %v6845
      %v6852 = vsel %vm407, %v6790, 0
      %v6855 = vsel %vm407, %v6792, 0
      %6857 = vmatprep.subr.mxu0 0.0
      %6858 = vmatpush1.xpose.msra.mxu0 0.0
      %6859 = vmatprep.subr.mxu0 0.0
      %6860 = vmatpush1.xpose.msra.mxu0 0.0
      %6861 = vmatprep.subr.mxu0 0.0
      %6862 = vmatpush1.xpose.msra.mxu0 0.0
      %6863 = vmatprep.subr.mxu0 0.0
      %6864 = vmatpush1.xpose.msra.mxu0 0.0
      %6865 = vmatprep.subr.mxu0 0.0
      %6866 = vmatpush1.xpose.msra.mxu0 0.0
      %6867 = vmatprep.subr.mxu0 0.0
      %6868 = vmatpush1.xpose.msra.mxu0 0.0
      %6869 = vmatprep.subr.mxu0 0.0
      %6870 = vmatpush1.xpose.msra.mxu0 0.0
      %6871 = vmatprep.subr.mxu0 0.0
      %6872 = vmatpush1.xpose.msra.mxu0 0.0
      %6873 = vmatprep.subr.mxu0 0.0
      %6874 = vmatpush1.xpose.msra.mxu0 0.0
      %6875 = vmatprep.subr.mxu0 0.0
      %6876 = vmatpush1.xpose.msra.mxu0 0.0
      %6877 = vmatprep.subr.mxu0 0.0
      %6878 = vmatpush1.xpose.msra.mxu0 0.0
      %6879 = vmatprep.subr.mxu0 0.0
      %6880 = vmatpush1.xpose.msra.mxu0 0.0
      %6881 = vmatprep.subr.mxu0 0.0
      %6882 = vmatpush1.xpose.msra.mxu0 0.0
      %6883 = vmatprep.subr.mxu0 0.0
      %6884 = vmatpush1.xpose.msra.mxu0 0.0
      %6885 = vmatprep.subr.mxu0 0.0
      %6886 = vmatpush1.xpose.msra.mxu0 0.0
      %6887 = vmatprep.subr.mxu0 0.0
      %6888 = vmatpush1.xpose.msra.mxu0 %v6855
      %6889 = vmatprep.subr.mxu0 0.0
      %6890 = vmatpush2.xpose.msra.mxu0 0.0
      %6891 = vmatprep.subr.mxu0 0.0
      %6892 = vmatpush2.xpose.msra.mxu0 0.0
      %6893 = vmatprep.subr.mxu0 0.0
      %6894 = vmatpush2.xpose.msra.mxu0 0.0
      %6895 = vmatprep.subr.mxu0 0.0
      %6896 = vmatpush2.xpose.msra.mxu0 0.0
      %6897 = vmatprep.subr.mxu0 0.0
      %6898 = vmatpush2.xpose.msra.mxu0 0.0
      %6899 = vmatprep.subr.mxu0 0.0
      %6900 = vmatpush2.xpose.msra.mxu0 0.0
      %6901 = vmatprep.subr.mxu0 0.0
      %6902 = vmatpush2.xpose.msra.mxu0 0.0
      %6903 = vmatprep.subr.mxu0 0.0
      %6904 = vmatpush2.xpose.msra.mxu0 0.0
      %6905 = vmatprep.subr.mxu0 0.0
      %6906 = vmatpush2.xpose.msra.mxu0 0.0
      %6907 = vmatprep.subr.mxu0 0.0
      %6908 = vmatpush2.xpose.msra.mxu0 0.0
      %6909 = vmatprep.subr.mxu0 0.0
      %6910 = vmatpush2.xpose.msra.mxu0 0.0
      %6911 = vmatprep.subr.mxu0 0.0
      %6912 = vmatpush2.xpose.msra.mxu0 0.0
      %6913 = vmatprep.subr.mxu0 0.0
      %6914 = vmatpush2.xpose.msra.mxu0 0.0
      %6915 = vmatprep.subr.mxu0 0.0
      %6916 = vmatpush2.xpose.msra.mxu0 0.0
      %6917 = vmatprep.subr.mxu0 0.0
      %6918 = vmatpush2.xpose.msra.mxu0 0.0
      %6919 = vmatprep.subr.mxu0 0.0
      %6920 = vmatpush2.xpose.msra.mxu0 0.0
      %6921 = vmatprep.mubr.f32.mxu0 0.0
      %6922 = vmatmul.mubr.f32.gmra.mxu0 %v6852
      %v6923 = vpop.f32.mrf.mxu0
      %v6924 = vadd.f32 %v6834, %v6923
      %v6925 = vpop.f32.mrf.mxu0
      %6926 = vdwg.mxu0
      %v6928 = vsel %vm407, %v6793, 0
      %6930 = vmatprep.subr.mxu0 0.0
      %6931 = vmatpush1.xpose.msra.mxu0 0.0
      %6932 = vmatprep.subr.mxu0 0.0
      %6933 = vmatpush1.xpose.msra.mxu0 0.0
      %6934 = vmatprep.subr.mxu0 0.0
      %6935 = vmatpush1.xpose.msra.mxu0 0.0
      %6936 = vmatprep.subr.mxu0 0.0
      %6937 = vmatpush1.xpose.msra.mxu0 0.0
      %6938 = vmatprep.subr.mxu0 0.0
      %6939 = vmatpush1.xpose.msra.mxu0 0.0
      %6940 = vmatprep.subr.mxu0 0.0
      %6941 = vmatpush1.xpose.msra.mxu0 0.0
      %6942 = vmatprep.subr.mxu0 0.0
      %6943 = vmatpush1.xpose.msra.mxu0 0.0
      %6944 = vmatprep.subr.mxu0 0.0
      %6945 = vmatpush1.xpose.msra.mxu0 0.0
      %6946 = vmatprep.subr.mxu0 0.0
      %6947 = vmatpush1.xpose.msra.mxu0 0.0
      %6948 = vmatprep.subr.mxu0 0.0
      %6949 = vmatpush1.xpose.msra.mxu0 0.0
      %6950 = vmatprep.subr.mxu0 0.0
      %6951 = vmatpush1.xpose.msra.mxu0 0.0
      %6952 = vmatprep.subr.mxu0 0.0
      %6953 = vmatpush1.xpose.msra.mxu0 0.0
      %6954 = vmatprep.subr.mxu0 0.0
      %6955 = vmatpush1.xpose.msra.mxu0 0.0
      %6956 = vmatprep.subr.mxu0 0.0
      %6957 = vmatpush1.xpose.msra.mxu0 0.0
      %6958 = vmatprep.subr.mxu0 0.0
      %6959 = vmatpush1.xpose.msra.mxu0 0.0
      %6960 = vmatprep.subr.mxu0 0.0
      %6961 = vmatpush1.xpose.msra.mxu0 %v6928
      %6962 = vmatprep.subr.mxu0 0.0
      %6963 = vmatpush2.xpose.msra.mxu0 0.0
      %6964 = vmatprep.subr.mxu0 0.0
      %6965 = vmatpush2.xpose.msra.mxu0 0.0
      %6966 = vmatprep.subr.mxu0 0.0
      %6967 = vmatpush2.xpose.msra.mxu0 0.0
      %6968 = vmatprep.subr.mxu0 0.0
      %6969 = vmatpush2.xpose.msra.mxu0 0.0
      %6970 = vmatprep.subr.mxu0 0.0
      %6971 = vmatpush2.xpose.msra.mxu0 0.0
      %6972 = vmatprep.subr.mxu0 0.0
      %6973 = vmatpush2.xpose.msra.mxu0 0.0
      %6974 = vmatprep.subr.mxu0 0.0
      %6975 = vmatpush2.xpose.msra.mxu0 0.0
      %6976 = vmatprep.subr.mxu0 0.0
      %6977 = vmatpush2.xpose.msra.mxu0 0.0
      %6978 = vmatprep.subr.mxu0 0.0
      %6979 = vmatpush2.xpose.msra.mxu0 0.0
      %6980 = vmatprep.subr.mxu0 0.0
      %6981 = vmatpush2.xpose.msra.mxu0 0.0
      %6982 = vmatprep.subr.mxu0 0.0
      %6983 = vmatpush2.xpose.msra.mxu0 0.0
      %6984 = vmatprep.subr.mxu0 0.0
      %6985 = vmatpush2.xpose.msra.mxu0 0.0
      %6986 = vmatprep.subr.mxu0 0.0
      %6987 = vmatpush2.xpose.msra.mxu0 0.0
      %6988 = vmatprep.subr.mxu0 0.0
      %6989 = vmatpush2.xpose.msra.mxu0 0.0
      %6990 = vmatprep.subr.mxu0 0.0
      %6991 = vmatpush2.xpose.msra.mxu0 0.0
      %6992 = vmatprep.subr.mxu0 0.0
      %6993 = vmatpush2.xpose.msra.mxu0 0.0
      %6994 = vmatprep.mubr.f32.mxu0 0.0
      %6995 = vmatmul.mubr.f32.gmra.mxu0 %v6852
      %v6996 = vpop.f32.mrf.mxu0
      %v6997 = vadd.f32 %v6838, %v6996
      %v6998 = vpop.f32.mrf.mxu0
      %6999 = vdwg.mxu0
      %v7001 = vsel %vm407, %v6794, 0
      %7003 = vmatprep.subr.mxu0 0.0
      %7004 = vmatpush1.xpose.msra.mxu0 0.0
      %7005 = vmatprep.subr.mxu0 0.0
      %7006 = vmatpush1.xpose.msra.mxu0 0.0
      %7007 = vmatprep.subr.mxu0 0.0
      %7008 = vmatpush1.xpose.msra.mxu0 0.0
      %7009 = vmatprep.subr.mxu0 0.0
      %7010 = vmatpush1.xpose.msra.mxu0 0.0
      %7011 = vmatprep.subr.mxu0 0.0
      %7012 = vmatpush1.xpose.msra.mxu0 0.0
      %7013 = vmatprep.subr.mxu0 0.0
      %7014 = vmatpush1.xpose.msra.mxu0 0.0
      %7015 = vmatprep.subr.mxu0 0.0
      %7016 = vmatpush1.xpose.msra.mxu0 0.0
      %7017 = vmatprep.subr.mxu0 0.0
      %7018 = vmatpush1.xpose.msra.mxu0 0.0
      %7019 = vmatprep.subr.mxu0 0.0
      %7020 = vmatpush1.xpose.msra.mxu0 0.0
      %7021 = vmatprep.subr.mxu0 0.0
      %7022 = vmatpush1.xpose.msra.mxu0 0.0
      %7023 = vmatprep.subr.mxu0 0.0
      %7024 = vmatpush1.xpose.msra.mxu0 0.0
      %7025 = vmatprep.subr.mxu0 0.0
      %7026 = vmatpush1.xpose.msra.mxu0 0.0
      %7027 = vmatprep.subr.mxu0 0.0
      %7028 = vmatpush1.xpose.msra.mxu0 0.0
      %7029 = vmatprep.subr.mxu0 0.0
      %7030 = vmatpush1.xpose.msra.mxu0 0.0
      %7031 = vmatprep.subr.mxu0 0.0
      %7032 = vmatpush1.xpose.msra.mxu0 0.0
      %7033 = vmatprep.subr.mxu0 0.0
      %7034 = vmatpush1.xpose.msra.mxu0 %v7001
      %7035 = vmatprep.subr.mxu0 0.0
      %7036 = vmatpush2.xpose.msra.mxu0 0.0
      %7037 = vmatprep.subr.mxu0 0.0
      %7038 = vmatpush2.xpose.msra.mxu0 0.0
      %7039 = vmatprep.subr.mxu0 0.0
      %7040 = vmatpush2.xpose.msra.mxu0 0.0
      %7041 = vmatprep.subr.mxu0 0.0
      %7042 = vmatpush2.xpose.msra.mxu0 0.0
      %7043 = vmatprep.subr.mxu0 0.0
      %7044 = vmatpush2.xpose.msra.mxu0 0.0
      %7045 = vmatprep.subr.mxu0 0.0
      %7046 = vmatpush2.xpose.msra.mxu0 0.0
      %7047 = vmatprep.subr.mxu0 0.0
      %7048 = vmatpush2.xpose.msra.mxu0 0.0
      %7049 = vmatprep.subr.mxu0 0.0
      %7050 = vmatpush2.xpose.msra.mxu0 0.0
      %7051 = vmatprep.subr.mxu0 0.0
      %7052 = vmatpush2.xpose.msra.mxu0 0.0
      %7053 = vmatprep.subr.mxu0 0.0
      %7054 = vmatpush2.xpose.msra.mxu0 0.0
      %7055 = vmatprep.subr.mxu0 0.0
      %7056 = vmatpush2.xpose.msra.mxu0 0.0
      %7057 = vmatprep.subr.mxu0 0.0
      %7058 = vmatpush2.xpose.msra.mxu0 0.0
      %7059 = vmatprep.subr.mxu0 0.0
      %7060 = vmatpush2.xpose.msra.mxu0 0.0
      %7061 = vmatprep.subr.mxu0 0.0
      %7062 = vmatpush2.xpose.msra.mxu0 0.0
      %7063 = vmatprep.subr.mxu0 0.0
      %7064 = vmatpush2.xpose.msra.mxu0 0.0
      %7065 = vmatprep.subr.mxu0 0.0
      %7066 = vmatpush2.xpose.msra.mxu0 0.0
      %7067 = vmatprep.mubr.f32.mxu0 0.0
      %7068 = vmatmul.mubr.f32.gmra.mxu0 %v6852
      %v7069 = vpop.f32.mrf.mxu0
      %v7070 = vadd.f32 %v6842, %v7069
      %v7071 = vpop.f32.mrf.mxu0
      %7072 = vdwg.mxu0
      %v7074 = vsel %vm407, %v6795, 0
      %7076 = vmatprep.subr.mxu0 0.0
      %7077 = vmatpush1.xpose.msra.mxu0 0.0
      %7078 = vmatprep.subr.mxu0 0.0
      %7079 = vmatpush1.xpose.msra.mxu0 0.0
      %7080 = vmatprep.subr.mxu0 0.0
      %7081 = vmatpush1.xpose.msra.mxu0 0.0
      %7082 = vmatprep.subr.mxu0 0.0
      %7083 = vmatpush1.xpose.msra.mxu0 0.0
      %7084 = vmatprep.subr.mxu0 0.0
      %7085 = vmatpush1.xpose.msra.mxu0 0.0
      %7086 = vmatprep.subr.mxu0 0.0
      %7087 = vmatpush1.xpose.msra.mxu0 0.0
      %7088 = vmatprep.subr.mxu0 0.0
      %7089 = vmatpush1.xpose.msra.mxu0 0.0
      %7090 = vmatprep.subr.mxu0 0.0
      %7091 = vmatpush1.xpose.msra.mxu0 0.0
      %7092 = vmatprep.subr.mxu0 0.0
      %7093 = vmatpush1.xpose.msra.mxu0 0.0
      %7094 = vmatprep.subr.mxu0 0.0
      %7095 = vmatpush1.xpose.msra.mxu0 0.0
      %7096 = vmatprep.subr.mxu0 0.0
      %7097 = vmatpush1.xpose.msra.mxu0 0.0
      %7098 = vmatprep.subr.mxu0 0.0
      %7099 = vmatpush1.xpose.msra.mxu0 0.0
      %7100 = vmatprep.subr.mxu0 0.0
      %7101 = vmatpush1.xpose.msra.mxu0 0.0
      %7102 = vmatprep.subr.mxu0 0.0
      %7103 = vmatpush1.xpose.msra.mxu0 0.0
      %7104 = vmatprep.subr.mxu0 0.0
      %7105 = vmatpush1.xpose.msra.mxu0 0.0
      %7106 = vmatprep.subr.mxu0 0.0
      %7107 = vmatpush1.xpose.msra.mxu0 %v7074
      %7108 = vmatprep.subr.mxu0 0.0
      %7109 = vmatpush2.xpose.msra.mxu0 0.0
      %7110 = vmatprep.subr.mxu0 0.0
      %7111 = vmatpush2.xpose.msra.mxu0 0.0
      %7112 = vmatprep.subr.mxu0 0.0
      %7113 = vmatpush2.xpose.msra.mxu0 0.0
      %7114 = vmatprep.subr.mxu0 0.0
      %7115 = vmatpush2.xpose.msra.mxu0 0.0
      %7116 = vmatprep.subr.mxu0 0.0
      %7117 = vmatpush2.xpose.msra.mxu0 0.0
      %7118 = vmatprep.subr.mxu0 0.0
      %7119 = vmatpush2.xpose.msra.mxu0 0.0
      %7120 = vmatprep.subr.mxu0 0.0
      %7121 = vmatpush2.xpose.msra.mxu0 0.0
      %7122 = vmatprep.subr.mxu0 0.0
      %7123 = vmatpush2.xpose.msra.mxu0 0.0
      %7124 = vmatprep.subr.mxu0 0.0
      %7125 = vmatpush2.xpose.msra.mxu0 0.0
      %7126 = vmatprep.subr.mxu0 0.0
      %7127 = vmatpush2.xpose.msra.mxu0 0.0
      %7128 = vmatprep.subr.mxu0 0.0
      %7129 = vmatpush2.xpose.msra.mxu0 0.0
      %7130 = vmatprep.subr.mxu0 0.0
      %7131 = vmatpush2.xpose.msra.mxu0 0.0
      %7132 = vmatprep.subr.mxu0 0.0
      %7133 = vmatpush2.xpose.msra.mxu0 0.0
      %7134 = vmatprep.subr.mxu0 0.0
      %7135 = vmatpush2.xpose.msra.mxu0 0.0
      %7136 = vmatprep.subr.mxu0 0.0
      %7137 = vmatpush2.xpose.msra.mxu0 0.0
      %7138 = vmatprep.subr.mxu0 0.0
      %7139 = vmatpush2.xpose.msra.mxu0 0.0
      %7140 = vmatprep.mubr.f32.mxu0 0.0
      %7141 = vmatmul.mubr.f32.gmra.mxu0 %v6852
      %v7142 = vpop.f32.mrf.mxu0
      %v7143 = vadd.f32 %v6846, %v7142
      %v7144 = vpop.f32.mrf.mxu0
      %7145 = vdwg.mxu0
      %v7150 = vlaneseq
      %v7151 = vshrl.u32 %v7150, 7
      %v7152 = vsub.s32 0, %v7151
      %v7153 = vrot.slane %v6807, %v7152
      %v7154 = vlaneseq
      %v7155 = vshrl.u32 %v7154, 7
      %v7156 = vsub.s32 0, %v7155
      %v7157 = vrot.slane %v6808, %v7156
      %v7158 = vlaneseq
      %v7159 = vshrl.u32 %v7158, 7
      %v7160 = vsub.s32 0, %v7159
      %v7161 = vrot.slane %v6809, %v7160
      %v7162 = vlaneseq
      %v7163 = vshrl.u32 %v7162, 7
      %v7164 = vsub.s32 0, %v7163
      %v7165 = vrot.slane %v6810, %v7164
      %v7171 = vsel %vm407, %v6802, 0
      %7173 = vmatprep.subr.mxu0 0.0
      %7174 = vmatpush1.xpose.msra.mxu0 0.0
      %7175 = vmatprep.subr.mxu0 0.0
      %7176 = vmatpush1.xpose.msra.mxu0 0.0
      %7177 = vmatprep.subr.mxu0 0.0
      %7178 = vmatpush1.xpose.msra.mxu0 0.0
      %7179 = vmatprep.subr.mxu0 0.0
      %7180 = vmatpush1.xpose.msra.mxu0 0.0
      %7181 = vmatprep.subr.mxu0 0.0
      %7182 = vmatpush1.xpose.msra.mxu0 0.0
      %7183 = vmatprep.subr.mxu0 0.0
      %7184 = vmatpush1.xpose.msra.mxu0 0.0
      %7185 = vmatprep.subr.mxu0 0.0
      %7186 = vmatpush1.xpose.msra.mxu0 0.0
      %7187 = vmatprep.subr.mxu0 0.0
      %7188 = vmatpush1.xpose.msra.mxu0 0.0
      %7189 = vmatprep.subr.mxu0 0.0
      %7190 = vmatpush1.xpose.msra.mxu0 0.0
      %7191 = vmatprep.subr.mxu0 0.0
      %7192 = vmatpush1.xpose.msra.mxu0 0.0
      %7193 = vmatprep.subr.mxu0 0.0
      %7194 = vmatpush1.xpose.msra.mxu0 0.0
      %7195 = vmatprep.subr.mxu0 0.0
      %7196 = vmatpush1.xpose.msra.mxu0 0.0
      %7197 = vmatprep.subr.mxu0 0.0
      %7198 = vmatpush1.xpose.msra.mxu0 0.0
      %7199 = vmatprep.subr.mxu0 0.0
      %7200 = vmatpush1.xpose.msra.mxu0 0.0
      %7201 = vmatprep.subr.mxu0 0.0
      %7202 = vmatpush1.xpose.msra.mxu0 0.0
      %7203 = vmatprep.subr.mxu0 0.0
      %7204 = vmatpush1.xpose.msra.mxu0 %v7171
      %7205 = vmatprep.subr.mxu0 0.0
      %7206 = vmatpush2.xpose.msra.mxu0 0.0
      %7207 = vmatprep.subr.mxu0 0.0
      %7208 = vmatpush2.xpose.msra.mxu0 0.0
      %7209 = vmatprep.subr.mxu0 0.0
      %7210 = vmatpush2.xpose.msra.mxu0 0.0
      %7211 = vmatprep.subr.mxu0 0.0
      %7212 = vmatpush2.xpose.msra.mxu0 0.0
      %7213 = vmatprep.subr.mxu0 0.0
      %7214 = vmatpush2.xpose.msra.mxu0 0.0
      %7215 = vmatprep.subr.mxu0 0.0
      %7216 = vmatpush2.xpose.msra.mxu0 0.0
      %7217 = vmatprep.subr.mxu0 0.0
      %7218 = vmatpush2.xpose.msra.mxu0 0.0
      %7219 = vmatprep.subr.mxu0 0.0
      %7220 = vmatpush2.xpose.msra.mxu0 0.0
      %7221 = vmatprep.subr.mxu0 0.0
      %7222 = vmatpush2.xpose.msra.mxu0 0.0
      %7223 = vmatprep.subr.mxu0 0.0
      %7224 = vmatpush2.xpose.msra.mxu0 0.0
      %7225 = vmatprep.subr.mxu0 0.0
      %7226 = vmatpush2.xpose.msra.mxu0 0.0
      %7227 = vmatprep.subr.mxu0 0.0
      %7228 = vmatpush2.xpose.msra.mxu0 0.0
      %7229 = vmatprep.subr.mxu0 0.0
      %7230 = vmatpush2.xpose.msra.mxu0 0.0
      %7231 = vmatprep.subr.mxu0 0.0
      %7232 = vmatpush2.xpose.msra.mxu0 0.0
      %7233 = vmatprep.subr.mxu0 0.0
      %7234 = vmatpush2.xpose.msra.mxu0 0.0
      %7235 = vmatprep.subr.mxu0 0.0
      %7236 = vmatpush2.xpose.msra.mxu0 0.0
      %7237 = vmatprep.mubr.f32.mxu0 0.0
      %7238 = vmatmul.mubr.f32.gmra.mxu0 %v3031
      %v7239 = vpop.f32.mrf.mxu0
      %v7240 = vadd.f32 %v7153, %v7239
      %v7241 = vpop.f32.mrf.mxu0
      %7242 = vdwg.mxu0
      %v7244 = vsel %vm407, %v6803, 0
      %7246 = vmatprep.subr.mxu0 0.0
      %7247 = vmatpush1.xpose.msra.mxu0 0.0
      %7248 = vmatprep.subr.mxu0 0.0
      %7249 = vmatpush1.xpose.msra.mxu0 0.0
      %7250 = vmatprep.subr.mxu0 0.0
      %7251 = vmatpush1.xpose.msra.mxu0 0.0
      %7252 = vmatprep.subr.mxu0 0.0
      %7253 = vmatpush1.xpose.msra.mxu0 0.0
      %7254 = vmatprep.subr.mxu0 0.0
      %7255 = vmatpush1.xpose.msra.mxu0 0.0
      %7256 = vmatprep.subr.mxu0 0.0
      %7257 = vmatpush1.xpose.msra.mxu0 0.0
      %7258 = vmatprep.subr.mxu0 0.0
      %7259 = vmatpush1.xpose.msra.mxu0 0.0
      %7260 = vmatprep.subr.mxu0 0.0
      %7261 = vmatpush1.xpose.msra.mxu0 0.0
      %7262 = vmatprep.subr.mxu0 0.0
      %7263 = vmatpush1.xpose.msra.mxu0 0.0
      %7264 = vmatprep.subr.mxu0 0.0
      %7265 = vmatpush1.xpose.msra.mxu0 0.0
      %7266 = vmatprep.subr.mxu0 0.0
      %7267 = vmatpush1.xpose.msra.mxu0 0.0
      %7268 = vmatprep.subr.mxu0 0.0
      %7269 = vmatpush1.xpose.msra.mxu0 0.0
      %7270 = vmatprep.subr.mxu0 0.0
      %7271 = vmatpush1.xpose.msra.mxu0 0.0
      %7272 = vmatprep.subr.mxu0 0.0
      %7273 = vmatpush1.xpose.msra.mxu0 0.0
      %7274 = vmatprep.subr.mxu0 0.0
      %7275 = vmatpush1.xpose.msra.mxu0 0.0
      %7276 = vmatprep.subr.mxu0 0.0
      %7277 = vmatpush1.xpose.msra.mxu0 %v7244
      %7278 = vmatprep.subr.mxu0 0.0
      %7279 = vmatpush2.xpose.msra.mxu0 0.0
      %7280 = vmatprep.subr.mxu0 0.0
      %7281 = vmatpush2.xpose.msra.mxu0 0.0
      %7282 = vmatprep.subr.mxu0 0.0
      %7283 = vmatpush2.xpose.msra.mxu0 0.0
      %7284 = vmatprep.subr.mxu0 0.0
      %7285 = vmatpush2.xpose.msra.mxu0 0.0
      %7286 = vmatprep.subr.mxu0 0.0
      %7287 = vmatpush2.xpose.msra.mxu0 0.0
      %7288 = vmatprep.subr.mxu0 0.0
      %7289 = vmatpush2.xpose.msra.mxu0 0.0
      %7290 = vmatprep.subr.mxu0 0.0
      %7291 = vmatpush2.xpose.msra.mxu0 0.0
      %7292 = vmatprep.subr.mxu0 0.0
      %7293 = vmatpush2.xpose.msra.mxu0 0.0
      %7294 = vmatprep.subr.mxu0 0.0
      %7295 = vmatpush2.xpose.msra.mxu0 0.0
      %7296 = vmatprep.subr.mxu0 0.0
      %7297 = vmatpush2.xpose.msra.mxu0 0.0
      %7298 = vmatprep.subr.mxu0 0.0
      %7299 = vmatpush2.xpose.msra.mxu0 0.0
      %7300 = vmatprep.subr.mxu0 0.0
      %7301 = vmatpush2.xpose.msra.mxu0 0.0
      %7302 = vmatprep.subr.mxu0 0.0
      %7303 = vmatpush2.xpose.msra.mxu0 0.0
      %7304 = vmatprep.subr.mxu0 0.0
      %7305 = vmatpush2.xpose.msra.mxu0 0.0
      %7306 = vmatprep.subr.mxu0 0.0
      %7307 = vmatpush2.xpose.msra.mxu0 0.0
      %7308 = vmatprep.subr.mxu0 0.0
      %7309 = vmatpush2.xpose.msra.mxu0 0.0
      %7310 = vmatprep.mubr.f32.mxu0 0.0
      %7311 = vmatmul.mubr.f32.gmra.mxu0 %v3031
      %v7312 = vpop.f32.mrf.mxu0
      %v7313 = vadd.f32 %v7157, %v7312
      %v7314 = vpop.f32.mrf.mxu0
      %7315 = vdwg.mxu0
      %v7317 = vsel %vm407, %v6804, 0
      %7319 = vmatprep.subr.mxu0 0.0
      %7320 = vmatpush1.xpose.msra.mxu0 0.0
      %7321 = vmatprep.subr.mxu0 0.0
      %7322 = vmatpush1.xpose.msra.mxu0 0.0
      %7323 = vmatprep.subr.mxu0 0.0
      %7324 = vmatpush1.xpose.msra.mxu0 0.0
      %7325 = vmatprep.subr.mxu0 0.0
      %7326 = vmatpush1.xpose.msra.mxu0 0.0
      %7327 = vmatprep.subr.mxu0 0.0
      %7328 = vmatpush1.xpose.msra.mxu0 0.0
      %7329 = vmatprep.subr.mxu0 0.0
      %7330 = vmatpush1.xpose.msra.mxu0 0.0
      %7331 = vmatprep.subr.mxu0 0.0
      %7332 = vmatpush1.xpose.msra.mxu0 0.0
      %7333 = vmatprep.subr.mxu0 0.0
      %7334 = vmatpush1.xpose.msra.mxu0 0.0
      %7335 = vmatprep.subr.mxu0 0.0
      %7336 = vmatpush1.xpose.msra.mxu0 0.0
      %7337 = vmatprep.subr.mxu0 0.0
      %7338 = vmatpush1.xpose.msra.mxu0 0.0
      %7339 = vmatprep.subr.mxu0 0.0
      %7340 = vmatpush1.xpose.msra.mxu0 0.0
      %7341 = vmatprep.subr.mxu0 0.0
      %7342 = vmatpush1.xpose.msra.mxu0 0.0
      %7343 = vmatprep.subr.mxu0 0.0
      %7344 = vmatpush1.xpose.msra.mxu0 0.0
      %7345 = vmatprep.subr.mxu0 0.0
      %7346 = vmatpush1.xpose.msra.mxu0 0.0
      %7347 = vmatprep.subr.mxu0 0.0
      %7348 = vmatpush1.xpose.msra.mxu0 0.0
      %7349 = vmatprep.subr.mxu0 0.0
      %7350 = vmatpush1.xpose.msra.mxu0 %v7317
      %7351 = vmatprep.subr.mxu0 0.0
      %7352 = vmatpush2.xpose.msra.mxu0 0.0
      %7353 = vmatprep.subr.mxu0 0.0
      %7354 = vmatpush2.xpose.msra.mxu0 0.0
      %7355 = vmatprep.subr.mxu0 0.0
      %7356 = vmatpush2.xpose.msra.mxu0 0.0
      %7357 = vmatprep.subr.mxu0 0.0
      %7358 = vmatpush2.xpose.msra.mxu0 0.0
      %7359 = vmatprep.subr.mxu0 0.0
      %7360 = vmatpush2.xpose.msra.mxu0 0.0
      %7361 = vmatprep.subr.mxu0 0.0
      %7362 = vmatpush2.xpose.msra.mxu0 0.0
      %7363 = vmatprep.subr.mxu0 0.0
      %7364 = vmatpush2.xpose.msra.mxu0 0.0
      %7365 = vmatprep.subr.mxu0 0.0
      %7366 = vmatpush2.xpose.msra.mxu0 0.0
      %7367 = vmatprep.subr.mxu0 0.0
      %7368 = vmatpush2.xpose.msra.mxu0 0.0
      %7369 = vmatprep.subr.mxu0 0.0
      %7370 = vmatpush2.xpose.msra.mxu0 0.0
      %7371 = vmatprep.subr.mxu0 0.0
      %7372 = vmatpush2.xpose.msra.mxu0 0.0
      %7373 = vmatprep.subr.mxu0 0.0
      %7374 = vmatpush2.xpose.msra.mxu0 0.0
      %7375 = vmatprep.subr.mxu0 0.0
      %7376 = vmatpush2.xpose.msra.mxu0 0.0
      %7377 = vmatprep.subr.mxu0 0.0
      %7378 = vmatpush2.xpose.msra.mxu0 0.0
      %7379 = vmatprep.subr.mxu0 0.0
      %7380 = vmatpush2.xpose.msra.mxu0 0.0
      %7381 = vmatprep.subr.mxu0 0.0
      %7382 = vmatpush2.xpose.msra.mxu0 0.0
      %7383 = vmatprep.mubr.f32.mxu0 0.0
      %7384 = vmatmul.mubr.f32.gmra.mxu0 %v3031
      %v7385 = vpop.f32.mrf.mxu0
      %v7386 = vadd.f32 %v7161, %v7385
      %v7387 = vpop.f32.mrf.mxu0
      %7388 = vdwg.mxu0
      %v7390 = vsel %vm407, %v6805, 0
      %7392 = vmatprep.subr.mxu0 0.0
      %7393 = vmatpush1.xpose.msra.mxu0 0.0
      %7394 = vmatprep.subr.mxu0 0.0
      %7395 = vmatpush1.xpose.msra.mxu0 0.0
      %7396 = vmatprep.subr.mxu0 0.0
      %7397 = vmatpush1.xpose.msra.mxu0 0.0
      %7398 = vmatprep.subr.mxu0 0.0
      %7399 = vmatpush1.xpose.msra.mxu0 0.0
      %7400 = vmatprep.subr.mxu0 0.0
      %7401 = vmatpush1.xpose.msra.mxu0 0.0
      %7402 = vmatprep.subr.mxu0 0.0
      %7403 = vmatpush1.xpose.msra.mxu0 0.0
      %7404 = vmatprep.subr.mxu0 0.0
      %7405 = vmatpush1.xpose.msra.mxu0 0.0
      %7406 = vmatprep.subr.mxu0 0.0
      %7407 = vmatpush1.xpose.msra.mxu0 0.0
      %7408 = vmatprep.subr.mxu0 0.0
      %7409 = vmatpush1.xpose.msra.mxu0 0.0
      %7410 = vmatprep.subr.mxu0 0.0
      %7411 = vmatpush1.xpose.msra.mxu0 0.0
      %7412 = vmatprep.subr.mxu0 0.0
      %7413 = vmatpush1.xpose.msra.mxu0 0.0
      %7414 = vmatprep.subr.mxu0 0.0
      %7415 = vmatpush1.xpose.msra.mxu0 0.0
      %7416 = vmatprep.subr.mxu0 0.0
      %7417 = vmatpush1.xpose.msra.mxu0 0.0
      %7418 = vmatprep.subr.mxu0 0.0
      %7419 = vmatpush1.xpose.msra.mxu0 0.0
      %7420 = vmatprep.subr.mxu0 0.0
      %7421 = vmatpush1.xpose.msra.mxu0 0.0
      %7422 = vmatprep.subr.mxu0 0.0
      %7423 = vmatpush1.xpose.msra.mxu0 %v7390
      %7424 = vmatprep.subr.mxu0 0.0
      %7425 = vmatpush2.xpose.msra.mxu0 0.0
      %7426 = vmatprep.subr.mxu0 0.0
      %7427 = vmatpush2.xpose.msra.mxu0 0.0
      %7428 = vmatprep.subr.mxu0 0.0
      %7429 = vmatpush2.xpose.msra.mxu0 0.0
      %7430 = vmatprep.subr.mxu0 0.0
      %7431 = vmatpush2.xpose.msra.mxu0 0.0
      %7432 = vmatprep.subr.mxu0 0.0
      %7433 = vmatpush2.xpose.msra.mxu0 0.0
      %7434 = vmatprep.subr.mxu0 0.0
      %7435 = vmatpush2.xpose.msra.mxu0 0.0
      %7436 = vmatprep.subr.mxu0 0.0
      %7437 = vmatpush2.xpose.msra.mxu0 0.0
      %7438 = vmatprep.subr.mxu0 0.0
      %7439 = vmatpush2.xpose.msra.mxu0 0.0
      %7440 = vmatprep.subr.mxu0 0.0
      %7441 = vmatpush2.xpose.msra.mxu0 0.0
      %7442 = vmatprep.subr.mxu0 0.0
      %7443 = vmatpush2.xpose.msra.mxu0 0.0
      %7444 = vmatprep.subr.mxu0 0.0
      %7445 = vmatpush2.xpose.msra.mxu0 0.0
      %7446 = vmatprep.subr.mxu0 0.0
      %7447 = vmatpush2.xpose.msra.mxu0 0.0
      %7448 = vmatprep.subr.mxu0 0.0
      %7449 = vmatpush2.xpose.msra.mxu0 0.0
      %7450 = vmatprep.subr.mxu0 0.0
      %7451 = vmatpush2.xpose.msra.mxu0 0.0
      %7452 = vmatprep.subr.mxu0 0.0
      %7453 = vmatpush2.xpose.msra.mxu0 0.0
      %7454 = vmatprep.subr.mxu0 0.0
      %7455 = vmatpush2.xpose.msra.mxu0 0.0
      %7456 = vmatprep.mubr.f32.mxu0 0.0
      %7457 = vmatmul.mubr.f32.gmra.mxu0 %v3031
      %v7458 = vpop.f32.mrf.mxu0
      %v7459 = vadd.f32 %v7165, %v7458
      %v7460 = vpop.f32.mrf.mxu0
      %7461 = vdwg.mxu0
      %v7466 = vlaneseq
      %v7467 = vshrl.u32 %v7466, 7
      %v7468 = vsub.s32 0, %v7467
      %v7469 = vrot.slane %v6817, %v7468
      %v7470 = vlaneseq
      %v7471 = vshrl.u32 %v7470, 7
      %v7472 = vsub.s32 0, %v7471
      %v7473 = vrot.slane %v6818, %v7472
      %v7474 = vlaneseq
      %v7475 = vshrl.u32 %v7474, 7
      %v7476 = vsub.s32 0, %v7475
      %v7477 = vrot.slane %v6819, %v7476
      %v7478 = vlaneseq
      %v7479 = vshrl.u32 %v7478, 7
      %v7480 = vsub.s32 0, %v7479
      %v7481 = vrot.slane %v6820, %v7480
      %v7487 = vsel %vm407, %v6812, 0
      %7489 = vmatprep.subr.mxu0 0.0
      %7490 = vmatpush1.xpose.msra.mxu0 0.0
      %7491 = vmatprep.subr.mxu0 0.0
      %7492 = vmatpush1.xpose.msra.mxu0 0.0
      %7493 = vmatprep.subr.mxu0 0.0
      %7494 = vmatpush1.xpose.msra.mxu0 0.0
      %7495 = vmatprep.subr.mxu0 0.0
      %7496 = vmatpush1.xpose.msra.mxu0 0.0
      %7497 = vmatprep.subr.mxu0 0.0
      %7498 = vmatpush1.xpose.msra.mxu0 0.0
      %7499 = vmatprep.subr.mxu0 0.0
      %7500 = vmatpush1.xpose.msra.mxu0 0.0
      %7501 = vmatprep.subr.mxu0 0.0
      %7502 = vmatpush1.xpose.msra.mxu0 0.0
      %7503 = vmatprep.subr.mxu0 0.0
      %7504 = vmatpush1.xpose.msra.mxu0 0.0
      %7505 = vmatprep.subr.mxu0 0.0
      %7506 = vmatpush1.xpose.msra.mxu0 0.0
      %7507 = vmatprep.subr.mxu0 0.0
      %7508 = vmatpush1.xpose.msra.mxu0 0.0
      %7509 = vmatprep.subr.mxu0 0.0
      %7510 = vmatpush1.xpose.msra.mxu0 0.0
      %7511 = vmatprep.subr.mxu0 0.0
      %7512 = vmatpush1.xpose.msra.mxu0 0.0
      %7513 = vmatprep.subr.mxu0 0.0
      %7514 = vmatpush1.xpose.msra.mxu0 0.0
      %7515 = vmatprep.subr.mxu0 0.0
      %7516 = vmatpush1.xpose.msra.mxu0 0.0
      %7517 = vmatprep.subr.mxu0 0.0
      %7518 = vmatpush1.xpose.msra.mxu0 0.0
      %7519 = vmatprep.subr.mxu0 0.0
      %7520 = vmatpush1.xpose.msra.mxu0 %v7487
      %7521 = vmatprep.subr.mxu0 0.0
      %7522 = vmatpush2.xpose.msra.mxu0 0.0
      %7523 = vmatprep.subr.mxu0 0.0
      %7524 = vmatpush2.xpose.msra.mxu0 0.0
      %7525 = vmatprep.subr.mxu0 0.0
      %7526 = vmatpush2.xpose.msra.mxu0 0.0
      %7527 = vmatprep.subr.mxu0 0.0
      %7528 = vmatpush2.xpose.msra.mxu0 0.0
      %7529 = vmatprep.subr.mxu0 0.0
      %7530 = vmatpush2.xpose.msra.mxu0 0.0
      %7531 = vmatprep.subr.mxu0 0.0
      %7532 = vmatpush2.xpose.msra.mxu0 0.0
      %7533 = vmatprep.subr.mxu0 0.0
      %7534 = vmatpush2.xpose.msra.mxu0 0.0
      %7535 = vmatprep.subr.mxu0 0.0
      %7536 = vmatpush2.xpose.msra.mxu0 0.0
      %7537 = vmatprep.subr.mxu0 0.0
      %7538 = vmatpush2.xpose.msra.mxu0 0.0
      %7539 = vmatprep.subr.mxu0 0.0
      %7540 = vmatpush2.xpose.msra.mxu0 0.0
      %7541 = vmatprep.subr.mxu0 0.0
      %7542 = vmatpush2.xpose.msra.mxu0 0.0
      %7543 = vmatprep.subr.mxu0 0.0
      %7544 = vmatpush2.xpose.msra.mxu0 0.0
      %7545 = vmatprep.subr.mxu0 0.0
      %7546 = vmatpush2.xpose.msra.mxu0 0.0
      %7547 = vmatprep.subr.mxu0 0.0
      %7548 = vmatpush2.xpose.msra.mxu0 0.0
      %7549 = vmatprep.subr.mxu0 0.0
      %7550 = vmatpush2.xpose.msra.mxu0 0.0
      %7551 = vmatprep.subr.mxu0 0.0
      %7552 = vmatpush2.xpose.msra.mxu0 0.0
      %7553 = vmatprep.mubr.f32.mxu0 0.0
      %7554 = vmatmul.mubr.f32.gmra.mxu0 %v3031
      %v7555 = vpop.f32.mrf.mxu0
      %v7556 = vadd.f32 %v7469, %v7555
      %v7557 = vpop.f32.mrf.mxu0
      %7558 = vdwg.mxu0
      %v7560 = vsel %vm407, %v6813, 0
      %7562 = vmatprep.subr.mxu0 0.0
      %7563 = vmatpush1.xpose.msra.mxu0 0.0
      %7564 = vmatprep.subr.mxu0 0.0
      %7565 = vmatpush1.xpose.msra.mxu0 0.0
      %7566 = vmatprep.subr.mxu0 0.0
      %7567 = vmatpush1.xpose.msra.mxu0 0.0
      %7568 = vmatprep.subr.mxu0 0.0
      %7569 = vmatpush1.xpose.msra.mxu0 0.0
      %7570 = vmatprep.subr.mxu0 0.0
      %7571 = vmatpush1.xpose.msra.mxu0 0.0
      %7572 = vmatprep.subr.mxu0 0.0
      %7573 = vmatpush1.xpose.msra.mxu0 0.0
      %7574 = vmatprep.subr.mxu0 0.0
      %7575 = vmatpush1.xpose.msra.mxu0 0.0
      %7576 = vmatprep.subr.mxu0 0.0
      %7577 = vmatpush1.xpose.msra.mxu0 0.0
      %7578 = vmatprep.subr.mxu0 0.0
      %7579 = vmatpush1.xpose.msra.mxu0 0.0
      %7580 = vmatprep.subr.mxu0 0.0
      %7581 = vmatpush1.xpose.msra.mxu0 0.0
      %7582 = vmatprep.subr.mxu0 0.0
      %7583 = vmatpush1.xpose.msra.mxu0 0.0
      %7584 = vmatprep.subr.mxu0 0.0
      %7585 = vmatpush1.xpose.msra.mxu0 0.0
      %7586 = vmatprep.subr.mxu0 0.0
      %7587 = vmatpush1.xpose.msra.mxu0 0.0
      %7588 = vmatprep.subr.mxu0 0.0
      %7589 = vmatpush1.xpose.msra.mxu0 0.0
      %7590 = vmatprep.subr.mxu0 0.0
      %7591 = vmatpush1.xpose.msra.mxu0 0.0
      %7592 = vmatprep.subr.mxu0 0.0
      %7593 = vmatpush1.xpose.msra.mxu0 %v7560
      %7594 = vmatprep.subr.mxu0 0.0
      %7595 = vmatpush2.xpose.msra.mxu0 0.0
      %7596 = vmatprep.subr.mxu0 0.0
      %7597 = vmatpush2.xpose.msra.mxu0 0.0
      %7598 = vmatprep.subr.mxu0 0.0
      %7599 = vmatpush2.xpose.msra.mxu0 0.0
      %7600 = vmatprep.subr.mxu0 0.0
      %7601 = vmatpush2.xpose.msra.mxu0 0.0
      %7602 = vmatprep.subr.mxu0 0.0
      %7603 = vmatpush2.xpose.msra.mxu0 0.0
      %7604 = vmatprep.subr.mxu0 0.0
      %7605 = vmatpush2.xpose.msra.mxu0 0.0
      %7606 = vmatprep.subr.mxu0 0.0
      %7607 = vmatpush2.xpose.msra.mxu0 0.0
      %7608 = vmatprep.subr.mxu0 0.0
      %7609 = vmatpush2.xpose.msra.mxu0 0.0
      %7610 = vmatprep.subr.mxu0 0.0
      %7611 = vmatpush2.xpose.msra.mxu0 0.0
      %7612 = vmatprep.subr.mxu0 0.0
      %7613 = vmatpush2.xpose.msra.mxu0 0.0
      %7614 = vmatprep.subr.mxu0 0.0
      %7615 = vmatpush2.xpose.msra.mxu0 0.0
      %7616 = vmatprep.subr.mxu0 0.0
      %7617 = vmatpush2.xpose.msra.mxu0 0.0
      %7618 = vmatprep.subr.mxu0 0.0
      %7619 = vmatpush2.xpose.msra.mxu0 0.0
      %7620 = vmatprep.subr.mxu0 0.0
      %7621 = vmatpush2.xpose.msra.mxu0 0.0
      %7622 = vmatprep.subr.mxu0 0.0
      %7623 = vmatpush2.xpose.msra.mxu0 0.0
      %7624 = vmatprep.subr.mxu0 0.0
      %7625 = vmatpush2.xpose.msra.mxu0 0.0
      %7626 = vmatprep.mubr.f32.mxu0 0.0
      %7627 = vmatmul.mubr.f32.gmra.mxu0 %v3031
      %v7628 = vpop.f32.mrf.mxu0
      %v7629 = vadd.f32 %v7473, %v7628
      %v7630 = vpop.f32.mrf.mxu0
      %7631 = vdwg.mxu0
      %v7633 = vsel %vm407, %v6814, 0
      %7635 = vmatprep.subr.mxu0 0.0
      %7636 = vmatpush1.xpose.msra.mxu0 0.0
      %7637 = vmatprep.subr.mxu0 0.0
      %7638 = vmatpush1.xpose.msra.mxu0 0.0
      %7639 = vmatprep.subr.mxu0 0.0
      %7640 = vmatpush1.xpose.msra.mxu0 0.0
      %7641 = vmatprep.subr.mxu0 0.0
      %7642 = vmatpush1.xpose.msra.mxu0 0.0
      %7643 = vmatprep.subr.mxu0 0.0
      %7644 = vmatpush1.xpose.msra.mxu0 0.0
      %7645 = vmatprep.subr.mxu0 0.0
      %7646 = vmatpush1.xpose.msra.mxu0 0.0
      %7647 = vmatprep.subr.mxu0 0.0
      %7648 = vmatpush1.xpose.msra.mxu0 0.0
      %7649 = vmatprep.subr.mxu0 0.0
      %7650 = vmatpush1.xpose.msra.mxu0 0.0
      %7651 = vmatprep.subr.mxu0 0.0
      %7652 = vmatpush1.xpose.msra.mxu0 0.0
      %7653 = vmatprep.subr.mxu0 0.0
      %7654 = vmatpush1.xpose.msra.mxu0 0.0
      %7655 = vmatprep.subr.mxu0 0.0
      %7656 = vmatpush1.xpose.msra.mxu0 0.0
      %7657 = vmatprep.subr.mxu0 0.0
      %7658 = vmatpush1.xpose.msra.mxu0 0.0
      %7659 = vmatprep.subr.mxu0 0.0
      %7660 = vmatpush1.xpose.msra.mxu0 0.0
      %7661 = vmatprep.subr.mxu0 0.0
      %7662 = vmatpush1.xpose.msra.mxu0 0.0
      %7663 = vmatprep.subr.mxu0 0.0
      %7664 = vmatpush1.xpose.msra.mxu0 0.0
      %7665 = vmatprep.subr.mxu0 0.0
      %7666 = vmatpush1.xpose.msra.mxu0 %v7633
      %7667 = vmatprep.subr.mxu0 0.0
      %7668 = vmatpush2.xpose.msra.mxu0 0.0
      %7669 = vmatprep.subr.mxu0 0.0
      %7670 = vmatpush2.xpose.msra.mxu0 0.0
      %7671 = vmatprep.subr.mxu0 0.0
      %7672 = vmatpush2.xpose.msra.mxu0 0.0
      %7673 = vmatprep.subr.mxu0 0.0
      %7674 = vmatpush2.xpose.msra.mxu0 0.0
      %7675 = vmatprep.subr.mxu0 0.0
      %7676 = vmatpush2.xpose.msra.mxu0 0.0
      %7677 = vmatprep.subr.mxu0 0.0
      %7678 = vmatpush2.xpose.msra.mxu0 0.0
      %7679 = vmatprep.subr.mxu0 0.0
      %7680 = vmatpush2.xpose.msra.mxu0 0.0
      %7681 = vmatprep.subr.mxu0 0.0
      %7682 = vmatpush2.xpose.msra.mxu0 0.0
      %7683 = vmatprep.subr.mxu0 0.0
      %7684 = vmatpush2.xpose.msra.mxu0 0.0
      %7685 = vmatprep.subr.mxu0 0.0
      %7686 = vmatpush2.xpose.msra.mxu0 0.0
      %7687 = vmatprep.subr.mxu0 0.0
      %7688 = vmatpush2.xpose.msra.mxu0 0.0
      %7689 = vmatprep.subr.mxu0 0.0
      %7690 = vmatpush2.xpose.msra.mxu0 0.0
      %7691 = vmatprep.subr.mxu0 0.0
      %7692 = vmatpush2.xpose.msra.mxu0 0.0
      %7693 = vmatprep.subr.mxu0 0.0
      %7694 = vmatpush2.xpose.msra.mxu0 0.0
      %7695 = vmatprep.subr.mxu0 0.0
      %7696 = vmatpush2.xpose.msra.mxu0 0.0
      %7697 = vmatprep.subr.mxu0 0.0
      %7698 = vmatpush2.xpose.msra.mxu0 0.0
      %7699 = vmatprep.mubr.f32.mxu0 0.0
      %7700 = vmatmul.mubr.f32.gmra.mxu0 %v3031
      %v7701 = vpop.f32.mrf.mxu0
      %v7702 = vadd.f32 %v7477, %v7701
      %v7703 = vpop.f32.mrf.mxu0
      %7704 = vdwg.mxu0
      %v7706 = vsel %vm407, %v6815, 0
      %7708 = vmatprep.subr.mxu0 0.0
      %7709 = vmatpush1.xpose.msra.mxu0 0.0
      %7710 = vmatprep.subr.mxu0 0.0
      %7711 = vmatpush1.xpose.msra.mxu0 0.0
      %7712 = vmatprep.subr.mxu0 0.0
      %7713 = vmatpush1.xpose.msra.mxu0 0.0
      %7714 = vmatprep.subr.mxu0 0.0
      %7715 = vmatpush1.xpose.msra.mxu0 0.0
      %7716 = vmatprep.subr.mxu0 0.0
      %7717 = vmatpush1.xpose.msra.mxu0 0.0
      %7718 = vmatprep.subr.mxu0 0.0
      %7719 = vmatpush1.xpose.msra.mxu0 0.0
      %7720 = vmatprep.subr.mxu0 0.0
      %7721 = vmatpush1.xpose.msra.mxu0 0.0
      %7722 = vmatprep.subr.mxu0 0.0
      %7723 = vmatpush1.xpose.msra.mxu0 0.0
      %7724 = vmatprep.subr.mxu0 0.0
      %7725 = vmatpush1.xpose.msra.mxu0 0.0
      %7726 = vmatprep.subr.mxu0 0.0
      %7727 = vmatpush1.xpose.msra.mxu0 0.0
      %7728 = vmatprep.subr.mxu0 0.0
      %7729 = vmatpush1.xpose.msra.mxu0 0.0
      %7730 = vmatprep.subr.mxu0 0.0
      %7731 = vmatpush1.xpose.msra.mxu0 0.0
      %7732 = vmatprep.subr.mxu0 0.0
      %7733 = vmatpush1.xpose.msra.mxu0 0.0
      %7734 = vmatprep.subr.mxu0 0.0
      %7735 = vmatpush1.xpose.msra.mxu0 0.0
      %7736 = vmatprep.subr.mxu0 0.0
      %7737 = vmatpush1.xpose.msra.mxu0 0.0
      %7738 = vmatprep.subr.mxu0 0.0
      %7739 = vmatpush1.xpose.msra.mxu0 %v7706
      %7740 = vmatprep.subr.mxu0 0.0
      %7741 = vmatpush2.xpose.msra.mxu0 0.0
      %7742 = vmatprep.subr.mxu0 0.0
      %7743 = vmatpush2.xpose.msra.mxu0 0.0
      %7744 = vmatprep.subr.mxu0 0.0
      %7745 = vmatpush2.xpose.msra.mxu0 0.0
      %7746 = vmatprep.subr.mxu0 0.0
      %7747 = vmatpush2.xpose.msra.mxu0 0.0
      %7748 = vmatprep.subr.mxu0 0.0
      %7749 = vmatpush2.xpose.msra.mxu0 0.0
      %7750 = vmatprep.subr.mxu0 0.0
      %7751 = vmatpush2.xpose.msra.mxu0 0.0
      %7752 = vmatprep.subr.mxu0 0.0
      %7753 = vmatpush2.xpose.msra.mxu0 0.0
      %7754 = vmatprep.subr.mxu0 0.0
      %7755 = vmatpush2.xpose.msra.mxu0 0.0
      %7756 = vmatprep.subr.mxu0 0.0
      %7757 = vmatpush2.xpose.msra.mxu0 0.0
      %7758 = vmatprep.subr.mxu0 0.0
      %7759 = vmatpush2.xpose.msra.mxu0 0.0
      %7760 = vmatprep.subr.mxu0 0.0
      %7761 = vmatpush2.xpose.msra.mxu0 0.0
      %7762 = vmatprep.subr.mxu0 0.0
      %7763 = vmatpush2.xpose.msra.mxu0 0.0
      %7764 = vmatprep.subr.mxu0 0.0
      %7765 = vmatpush2.xpose.msra.mxu0 0.0
      %7766 = vmatprep.subr.mxu0 0.0
      %7767 = vmatpush2.xpose.msra.mxu0 0.0
      %7768 = vmatprep.subr.mxu0 0.0
      %7769 = vmatpush2.xpose.msra.mxu0 0.0
      %7770 = vmatprep.subr.mxu0 0.0
      %7771 = vmatpush2.xpose.msra.mxu0 0.0
      %7772 = vmatprep.mubr.f32.mxu0 0.0
      %7773 = vmatmul.mubr.f32.gmra.mxu0 %v3031
      %v7774 = vpop.f32.mrf.mxu0
      %v7775 = vadd.f32 %v7481, %v7774
      %v7776 = vpop.f32.mrf.mxu0
      %7777 = vdwg.mxu0
      %v7779 = vsel %vm1680, %v6924, 0
      %v7782 = vsel %vm1680, %v7240, 0
      %7784 = vmatprep.subr.mxu0 0.0
      %7785 = vmatpush1.xpose.msra.mxu0 0.0
      %7786 = vmatprep.subr.mxu0 0.0
      %7787 = vmatpush1.xpose.msra.mxu0 0.0
      %7788 = vmatprep.subr.mxu0 0.0
      %7789 = vmatpush1.xpose.msra.mxu0 0.0
      %7790 = vmatprep.subr.mxu0 0.0
      %7791 = vmatpush1.xpose.msra.mxu0 0.0
      %7792 = vmatprep.subr.mxu0 0.0
      %7793 = vmatpush1.xpose.msra.mxu0 0.0
      %7794 = vmatprep.subr.mxu0 0.0
      %7795 = vmatpush1.xpose.msra.mxu0 0.0
      %7796 = vmatprep.subr.mxu0 0.0
      %7797 = vmatpush1.xpose.msra.mxu0 0.0
      %7798 = vmatprep.subr.mxu0 0.0
      %7799 = vmatpush1.xpose.msra.mxu0 0.0
      %7800 = vmatprep.subr.mxu0 0.0
      %7801 = vmatpush1.xpose.msra.mxu0 0.0
      %7802 = vmatprep.subr.mxu0 0.0
      %7803 = vmatpush1.xpose.msra.mxu0 0.0
      %7804 = vmatprep.subr.mxu0 0.0
      %7805 = vmatpush1.xpose.msra.mxu0 0.0
      %7806 = vmatprep.subr.mxu0 0.0
      %7807 = vmatpush1.xpose.msra.mxu0 0.0
      %7808 = vmatprep.subr.mxu0 0.0
      %7809 = vmatpush1.xpose.msra.mxu0 0.0
      %7810 = vmatprep.subr.mxu0 0.0
      %7811 = vmatpush1.xpose.msra.mxu0 0.0
      %7812 = vmatprep.subr.mxu0 0.0
      %7813 = vmatpush1.xpose.msra.mxu0 0.0
      %7814 = vmatprep.subr.mxu0 0.0
      %7815 = vmatpush1.xpose.msra.mxu0 %v7782
      %7816 = vmatprep.subr.mxu0 0.0
      %7817 = vmatpush2.xpose.msra.mxu0 0.0
      %7818 = vmatprep.subr.mxu0 0.0
      %7819 = vmatpush2.xpose.msra.mxu0 0.0
      %7820 = vmatprep.subr.mxu0 0.0
      %7821 = vmatpush2.xpose.msra.mxu0 0.0
      %7822 = vmatprep.subr.mxu0 0.0
      %7823 = vmatpush2.xpose.msra.mxu0 0.0
      %7824 = vmatprep.subr.mxu0 0.0
      %7825 = vmatpush2.xpose.msra.mxu0 0.0
      %7826 = vmatprep.subr.mxu0 0.0
      %7827 = vmatpush2.xpose.msra.mxu0 0.0
      %7828 = vmatprep.subr.mxu0 0.0
      %7829 = vmatpush2.xpose.msra.mxu0 0.0
      %7830 = vmatprep.subr.mxu0 0.0
      %7831 = vmatpush2.xpose.msra.mxu0 0.0
      %7832 = vmatprep.subr.mxu0 0.0
      %7833 = vmatpush2.xpose.msra.mxu0 0.0
      %7834 = vmatprep.subr.mxu0 0.0
      %7835 = vmatpush2.xpose.msra.mxu0 0.0
      %7836 = vmatprep.subr.mxu0 0.0
      %7837 = vmatpush2.xpose.msra.mxu0 0.0
      %7838 = vmatprep.subr.mxu0 0.0
      %7839 = vmatpush2.xpose.msra.mxu0 0.0
      %7840 = vmatprep.subr.mxu0 0.0
      %7841 = vmatpush2.xpose.msra.mxu0 0.0
      %7842 = vmatprep.subr.mxu0 0.0
      %7843 = vmatpush2.xpose.msra.mxu0 0.0
      %7844 = vmatprep.subr.mxu0 0.0
      %7845 = vmatpush2.xpose.msra.mxu0 0.0
      %7846 = vmatprep.subr.mxu0 0.0
      %7847 = vmatpush2.xpose.msra.mxu0 0.0
      %7848 = vmatprep.mubr.f32.mxu0 0.0
      %7849 = vmatmul.mubr.f32.gmra.mxu0 %v7779
      %v7850 = vpop.f32.mrf.mxu0
      %v7851 = vadd.f32 0.0, %v7850
      %v7852 = vpop.f32.mrf.mxu0
      %7853 = vdwg.mxu0
      %v7855 = vsel %vm1680, %v6997, 0
      %v7858 = vsel %vm1680, %v7313, 0
      %7860 = vmatprep.subr.mxu0 0.0
      %7861 = vmatpush1.xpose.msra.mxu0 0.0
      %7862 = vmatprep.subr.mxu0 0.0
      %7863 = vmatpush1.xpose.msra.mxu0 0.0
      %7864 = vmatprep.subr.mxu0 0.0
      %7865 = vmatpush1.xpose.msra.mxu0 0.0
      %7866 = vmatprep.subr.mxu0 0.0
      %7867 = vmatpush1.xpose.msra.mxu0 0.0
      %7868 = vmatprep.subr.mxu0 0.0
      %7869 = vmatpush1.xpose.msra.mxu0 0.0
      %7870 = vmatprep.subr.mxu0 0.0
      %7871 = vmatpush1.xpose.msra.mxu0 0.0
      %7872 = vmatprep.subr.mxu0 0.0
      %7873 = vmatpush1.xpose.msra.mxu0 0.0
      %7874 = vmatprep.subr.mxu0 0.0
      %7875 = vmatpush1.xpose.msra.mxu0 0.0
      %7876 = vmatprep.subr.mxu0 0.0
      %7877 = vmatpush1.xpose.msra.mxu0 0.0
      %7878 = vmatprep.subr.mxu0 0.0
      %7879 = vmatpush1.xpose.msra.mxu0 0.0
      %7880 = vmatprep.subr.mxu0 0.0
      %7881 = vmatpush1.xpose.msra.mxu0 0.0
      %7882 = vmatprep.subr.mxu0 0.0
      %7883 = vmatpush1.xpose.msra.mxu0 0.0
      %7884 = vmatprep.subr.mxu0 0.0
      %7885 = vmatpush1.xpose.msra.mxu0 0.0
      %7886 = vmatprep.subr.mxu0 0.0
      %7887 = vmatpush1.xpose.msra.mxu0 0.0
      %7888 = vmatprep.subr.mxu0 0.0
      %7889 = vmatpush1.xpose.msra.mxu0 0.0
      %7890 = vmatprep.subr.mxu0 0.0
      %7891 = vmatpush1.xpose.msra.mxu0 %v7858
      %7892 = vmatprep.subr.mxu0 0.0
      %7893 = vmatpush2.xpose.msra.mxu0 0.0
      %7894 = vmatprep.subr.mxu0 0.0
      %7895 = vmatpush2.xpose.msra.mxu0 0.0
      %7896 = vmatprep.subr.mxu0 0.0
      %7897 = vmatpush2.xpose.msra.mxu0 0.0
      %7898 = vmatprep.subr.mxu0 0.0
      %7899 = vmatpush2.xpose.msra.mxu0 0.0
      %7900 = vmatprep.subr.mxu0 0.0
      %7901 = vmatpush2.xpose.msra.mxu0 0.0
      %7902 = vmatprep.subr.mxu0 0.0
      %7903 = vmatpush2.xpose.msra.mxu0 0.0
      %7904 = vmatprep.subr.mxu0 0.0
      %7905 = vmatpush2.xpose.msra.mxu0 0.0
      %7906 = vmatprep.subr.mxu0 0.0
      %7907 = vmatpush2.xpose.msra.mxu0 0.0
      %7908 = vmatprep.subr.mxu0 0.0
      %7909 = vmatpush2.xpose.msra.mxu0 0.0
      %7910 = vmatprep.subr.mxu0 0.0
      %7911 = vmatpush2.xpose.msra.mxu0 0.0
      %7912 = vmatprep.subr.mxu0 0.0
      %7913 = vmatpush2.xpose.msra.mxu0 0.0
      %7914 = vmatprep.subr.mxu0 0.0
      %7915 = vmatpush2.xpose.msra.mxu0 0.0
      %7916 = vmatprep.subr.mxu0 0.0
      %7917 = vmatpush2.xpose.msra.mxu0 0.0
      %7918 = vmatprep.subr.mxu0 0.0
      %7919 = vmatpush2.xpose.msra.mxu0 0.0
      %7920 = vmatprep.subr.mxu0 0.0
      %7921 = vmatpush2.xpose.msra.mxu0 0.0
      %7922 = vmatprep.subr.mxu0 0.0
      %7923 = vmatpush2.xpose.msra.mxu0 0.0
      %7924 = vmatprep.mubr.f32.mxu0 0.0
      %7925 = vmatmul.mubr.f32.gmra.mxu0 %v7855
      %v7926 = vpop.f32.mrf.mxu0
      %v7927 = vadd.f32 0.0, %v7926
      %v7928 = vpop.f32.mrf.mxu0
      %7929 = vdwg.mxu0
      %v7931 = vsel %vm1680, %v7070, 0
      %v7934 = vsel %vm1680, %v7386, 0
      %7936 = vmatprep.subr.mxu0 0.0
      %7937 = vmatpush1.xpose.msra.mxu0 0.0
      %7938 = vmatprep.subr.mxu0 0.0
      %7939 = vmatpush1.xpose.msra.mxu0 0.0
      %7940 = vmatprep.subr.mxu0 0.0
      %7941 = vmatpush1.xpose.msra.mxu0 0.0
      %7942 = vmatprep.subr.mxu0 0.0
      %7943 = vmatpush1.xpose.msra.mxu0 0.0
      %7944 = vmatprep.subr.mxu0 0.0
      %7945 = vmatpush1.xpose.msra.mxu0 0.0
      %7946 = vmatprep.subr.mxu0 0.0
      %7947 = vmatpush1.xpose.msra.mxu0 0.0
      %7948 = vmatprep.subr.mxu0 0.0
      %7949 = vmatpush1.xpose.msra.mxu0 0.0
      %7950 = vmatprep.subr.mxu0 0.0
      %7951 = vmatpush1.xpose.msra.mxu0 0.0
      %7952 = vmatprep.subr.mxu0 0.0
      %7953 = vmatpush1.xpose.msra.mxu0 0.0
      %7954 = vmatprep.subr.mxu0 0.0
      %7955 = vmatpush1.xpose.msra.mxu0 0.0
      %7956 = vmatprep.subr.mxu0 0.0
      %7957 = vmatpush1.xpose.msra.mxu0 0.0
      %7958 = vmatprep.subr.mxu0 0.0
      %7959 = vmatpush1.xpose.msra.mxu0 0.0
      %7960 = vmatprep.subr.mxu0 0.0
      %7961 = vmatpush1.xpose.msra.mxu0 0.0
      %7962 = vmatprep.subr.mxu0 0.0
      %7963 = vmatpush1.xpose.msra.mxu0 0.0
      %7964 = vmatprep.subr.mxu0 0.0
      %7965 = vmatpush1.xpose.msra.mxu0 0.0
      %7966 = vmatprep.subr.mxu0 0.0
      %7967 = vmatpush1.xpose.msra.mxu0 %v7934
      %7968 = vmatprep.subr.mxu0 0.0
      %7969 = vmatpush2.xpose.msra.mxu0 0.0
      %7970 = vmatprep.subr.mxu0 0.0
      %7971 = vmatpush2.xpose.msra.mxu0 0.0
      %7972 = vmatprep.subr.mxu0 0.0
      %7973 = vmatpush2.xpose.msra.mxu0 0.0
      %7974 = vmatprep.subr.mxu0 0.0
      %7975 = vmatpush2.xpose.msra.mxu0 0.0
      %7976 = vmatprep.subr.mxu0 0.0
      %7977 = vmatpush2.xpose.msra.mxu0 0.0
      %7978 = vmatprep.subr.mxu0 0.0
      %7979 = vmatpush2.xpose.msra.mxu0 0.0
      %7980 = vmatprep.subr.mxu0 0.0
      %7981 = vmatpush2.xpose.msra.mxu0 0.0
      %7982 = vmatprep.subr.mxu0 0.0
      %7983 = vmatpush2.xpose.msra.mxu0 0.0
      %7984 = vmatprep.subr.mxu0 0.0
      %7985 = vmatpush2.xpose.msra.mxu0 0.0
      %7986 = vmatprep.subr.mxu0 0.0
      %7987 = vmatpush2.xpose.msra.mxu0 0.0
      %7988 = vmatprep.subr.mxu0 0.0
      %7989 = vmatpush2.xpose.msra.mxu0 0.0
      %7990 = vmatprep.subr.mxu0 0.0
      %7991 = vmatpush2.xpose.msra.mxu0 0.0
      %7992 = vmatprep.subr.mxu0 0.0
      %7993 = vmatpush2.xpose.msra.mxu0 0.0
      %7994 = vmatprep.subr.mxu0 0.0
      %7995 = vmatpush2.xpose.msra.mxu0 0.0
      %7996 = vmatprep.subr.mxu0 0.0
      %7997 = vmatpush2.xpose.msra.mxu0 0.0
      %7998 = vmatprep.subr.mxu0 0.0
      %7999 = vmatpush2.xpose.msra.mxu0 0.0
      %8000 = vmatprep.mubr.f32.mxu0 0.0
      %8001 = vmatmul.mubr.f32.gmra.mxu0 %v7931
      %v8002 = vpop.f32.mrf.mxu0
      %v8003 = vadd.f32 0.0, %v8002
      %v8004 = vpop.f32.mrf.mxu0
      %8005 = vdwg.mxu0
      %v8007 = vsel %vm1680, %v7143, 0
      %v8010 = vsel %vm1680, %v7459, 0
      %8012 = vmatprep.subr.mxu0 0.0
      %8013 = vmatpush1.xpose.msra.mxu0 0.0
      %8014 = vmatprep.subr.mxu0 0.0
      %8015 = vmatpush1.xpose.msra.mxu0 0.0
      %8016 = vmatprep.subr.mxu0 0.0
      %8017 = vmatpush1.xpose.msra.mxu0 0.0
      %8018 = vmatprep.subr.mxu0 0.0
      %8019 = vmatpush1.xpose.msra.mxu0 0.0
      %8020 = vmatprep.subr.mxu0 0.0
      %8021 = vmatpush1.xpose.msra.mxu0 0.0
      %8022 = vmatprep.subr.mxu0 0.0
      %8023 = vmatpush1.xpose.msra.mxu0 0.0
      %8024 = vmatprep.subr.mxu0 0.0
      %8025 = vmatpush1.xpose.msra.mxu0 0.0
      %8026 = vmatprep.subr.mxu0 0.0
      %8027 = vmatpush1.xpose.msra.mxu0 0.0
      %8028 = vmatprep.subr.mxu0 0.0
      %8029 = vmatpush1.xpose.msra.mxu0 0.0
      %8030 = vmatprep.subr.mxu0 0.0
      %8031 = vmatpush1.xpose.msra.mxu0 0.0
      %8032 = vmatprep.subr.mxu0 0.0
      %8033 = vmatpush1.xpose.msra.mxu0 0.0
      %8034 = vmatprep.subr.mxu0 0.0
      %8035 = vmatpush1.xpose.msra.mxu0 0.0
      %8036 = vmatprep.subr.mxu0 0.0
      %8037 = vmatpush1.xpose.msra.mxu0 0.0
      %8038 = vmatprep.subr.mxu0 0.0
      %8039 = vmatpush1.xpose.msra.mxu0 0.0
      %8040 = vmatprep.subr.mxu0 0.0
      %8041 = vmatpush1.xpose.msra.mxu0 0.0
      %8042 = vmatprep.subr.mxu0 0.0
      %8043 = vmatpush1.xpose.msra.mxu0 %v8010
      %8044 = vmatprep.subr.mxu0 0.0
      %8045 = vmatpush2.xpose.msra.mxu0 0.0
      %8046 = vmatprep.subr.mxu0 0.0
      %8047 = vmatpush2.xpose.msra.mxu0 0.0
      %8048 = vmatprep.subr.mxu0 0.0
      %8049 = vmatpush2.xpose.msra.mxu0 0.0
      %8050 = vmatprep.subr.mxu0 0.0
      %8051 = vmatpush2.xpose.msra.mxu0 0.0
      %8052 = vmatprep.subr.mxu0 0.0
      %8053 = vmatpush2.xpose.msra.mxu0 0.0
      %8054 = vmatprep.subr.mxu0 0.0
      %8055 = vmatpush2.xpose.msra.mxu0 0.0
      %8056 = vmatprep.subr.mxu0 0.0
      %8057 = vmatpush2.xpose.msra.mxu0 0.0
      %8058 = vmatprep.subr.mxu0 0.0
      %8059 = vmatpush2.xpose.msra.mxu0 0.0
      %8060 = vmatprep.subr.mxu0 0.0
      %8061 = vmatpush2.xpose.msra.mxu0 0.0
      %8062 = vmatprep.subr.mxu0 0.0
      %8063 = vmatpush2.xpose.msra.mxu0 0.0
      %8064 = vmatprep.subr.mxu0 0.0
      %8065 = vmatpush2.xpose.msra.mxu0 0.0
      %8066 = vmatprep.subr.mxu0 0.0
      %8067 = vmatpush2.xpose.msra.mxu0 0.0
      %8068 = vmatprep.subr.mxu0 0.0
      %8069 = vmatpush2.xpose.msra.mxu0 0.0
      %8070 = vmatprep.subr.mxu0 0.0
      %8071 = vmatpush2.xpose.msra.mxu0 0.0
      %8072 = vmatprep.subr.mxu0 0.0
      %8073 = vmatpush2.xpose.msra.mxu0 0.0
      %8074 = vmatprep.subr.mxu0 0.0
      %8075 = vmatpush2.xpose.msra.mxu0 0.0
      %8076 = vmatprep.mubr.f32.mxu0 0.0
      %8077 = vmatmul.mubr.f32.gmra.mxu0 %v8007
      %v8078 = vpop.f32.mrf.mxu0
      %v8079 = vadd.f32 0.0, %v8078
      %v8080 = vpop.f32.mrf.mxu0
      %8081 = vdwg.mxu0
      %v8082 = vsel %vm3945, %v7851, -inf
      %8083 = vmax.xlane.f32.xlu0 %v8082
      %v8084 = vpop.xlane.xlu0 %8083
      %v8085 = vsel %vm3945, %v7927, -inf
      %8086 = vmax.xlane.f32.xlu0 %v8085
      %v8087 = vpop.xlane.xlu0 %8086
      %v8088 = vsel %vm3945, %v8003, -inf
      %8089 = vmax.xlane.f32.xlu0 %v8088
      %v8090 = vpop.xlane.xlu0 %8089
      %v8091 = vsel %vm3945, %v8079, -inf
      %8092 = vmax.xlane.f32.xlu0 %v8091
      %v8093 = vpop.xlane.xlu0 %8092
      %v8094 = vsub.f32 %v7851, %v8084
      %v8095 = vsub.f32 %v7927, %v8087
      %v8096 = vsub.f32 %v8003, %v8090
      %v8097 = vsub.f32 %v8079, %v8093
      %v8098 = vmul.f32 %v8094, 1.442695
      %v8099 = vpow.pop %v8098
      %v8100 = vmul.f32 %v8095, 1.442695
      %v8101 = vpow.pop %v8100
      %v8102 = vmul.f32 %v8096, 1.442695
      %v8103 = vpow.pop %v8102
      %v8104 = vmul.f32 %v8097, 1.442695
      %v8105 = vpow.pop %v8104
      %v8106 = vsel %vm3945, %v8099, 0.0
      %8107 = vadd.xlane.f32.xlu0 %v8106
      %v8108 = vpop.xlane.xlu0 %8107
      %v8109 = vsel %vm3945, %v8101, 0.0
      %8110 = vadd.xlane.f32.xlu0 %v8109
      %v8111 = vpop.xlane.xlu0 %8110
      %v8112 = vsel %vm3945, %v8103, 0.0
      %8113 = vadd.xlane.f32.xlu0 %v8112
      %v8114 = vpop.xlane.xlu0 %8113
      %v8115 = vsel %vm3945, %v8105, 0.0
      %8116 = vadd.xlane.f32.xlu0 %v8115
      %v8117 = vpop.xlane.xlu0 %8116
      %v8118 = vrcp.pop %v8108
      %v8119 = vrcp.pop %v8111
      %v8120 = vrcp.pop %v8114
      %v8121 = vrcp.pop %v8117
      %v8122 = vmul.f32 %v8099, %v8118
      %v8123 = vmul.f32 %v8101, %v8119
      %v8124 = vmul.f32 %v8103, %v8120
      %v8125 = vmul.f32 %v8105, %v8121
      %v8127 = vsel %vm3945, %v8122, 0
      %v8130 = vsel %vm3993, %v7556, 0
      %8132 = vmatprep.subr.mxu0 0.0
      %8133 = vmatpush1.msra.mxu0 0.0
      %8134 = vmatprep.subr.mxu0 0.0
      %8135 = vmatpush1.msra.mxu0 0.0
      %8136 = vmatprep.subr.mxu0 0.0
      %8137 = vmatpush1.msra.mxu0 0.0
      %8138 = vmatprep.subr.mxu0 0.0
      %8139 = vmatpush1.msra.mxu0 0.0
      %8140 = vmatprep.subr.mxu0 0.0
      %8141 = vmatpush1.msra.mxu0 0.0
      %8142 = vmatprep.subr.mxu0 0.0
      %8143 = vmatpush1.msra.mxu0 0.0
      %8144 = vmatprep.subr.mxu0 0.0
      %8145 = vmatpush1.msra.mxu0 0.0
      %8146 = vmatprep.subr.mxu0 0.0
      %8147 = vmatpush1.msra.mxu0 0.0
      %8148 = vmatprep.subr.mxu0 0.0
      %8149 = vmatpush1.msra.mxu0 0.0
      %8150 = vmatprep.subr.mxu0 0.0
      %8151 = vmatpush1.msra.mxu0 0.0
      %8152 = vmatprep.subr.mxu0 0.0
      %8153 = vmatpush1.msra.mxu0 0.0
      %8154 = vmatprep.subr.mxu0 0.0
      %8155 = vmatpush1.msra.mxu0 0.0
      %8156 = vmatprep.subr.mxu0 0.0
      %8157 = vmatpush1.msra.mxu0 0.0
      %8158 = vmatprep.subr.mxu0 0.0
      %8159 = vmatpush1.msra.mxu0 0.0
      %8160 = vmatprep.subr.mxu0 0.0
      %8161 = vmatpush1.msra.mxu0 0.0
      %8162 = vmatprep.subr.mxu0 0.0
      %8163 = vmatpush1.msra.mxu0 %v8130
      %8164 = vmatprep.subr.mxu0 0.0
      %8165 = vmatpush2.msra.mxu0 0.0
      %8166 = vmatprep.subr.mxu0 0.0
      %8167 = vmatpush2.msra.mxu0 0.0
      %8168 = vmatprep.subr.mxu0 0.0
      %8169 = vmatpush2.msra.mxu0 0.0
      %8170 = vmatprep.subr.mxu0 0.0
      %8171 = vmatpush2.msra.mxu0 0.0
      %8172 = vmatprep.subr.mxu0 0.0
      %8173 = vmatpush2.msra.mxu0 0.0
      %8174 = vmatprep.subr.mxu0 0.0
      %8175 = vmatpush2.msra.mxu0 0.0
      %8176 = vmatprep.subr.mxu0 0.0
      %8177 = vmatpush2.msra.mxu0 0.0
      %8178 = vmatprep.subr.mxu0 0.0
      %8179 = vmatpush2.msra.mxu0 0.0
      %8180 = vmatprep.subr.mxu0 0.0
      %8181 = vmatpush2.msra.mxu0 0.0
      %8182 = vmatprep.subr.mxu0 0.0
      %8183 = vmatpush2.msra.mxu0 0.0
      %8184 = vmatprep.subr.mxu0 0.0
      %8185 = vmatpush2.msra.mxu0 0.0
      %8186 = vmatprep.subr.mxu0 0.0
      %8187 = vmatpush2.msra.mxu0 0.0
      %8188 = vmatprep.subr.mxu0 0.0
      %8189 = vmatpush2.msra.mxu0 0.0
      %8190 = vmatprep.subr.mxu0 0.0
      %8191 = vmatpush2.msra.mxu0 0.0
      %8192 = vmatprep.subr.mxu0 0.0
      %8193 = vmatpush2.msra.mxu0 0.0
      %8194 = vmatprep.subr.mxu0 0.0
      %8195 = vmatpush2.msra.mxu0 0.0
      %8196 = vmatprep.mubr.f32.mxu0 0.0
      %8197 = vmatmul.mubr.f32.gmra.mxu0 %v8127
      %v8198 = vpop.f32.mrf.mxu0
      %v8199 = vadd.f32 0.0, %v8198
      %v8200 = vpop.f32.mrf.mxu0
      %8201 = vdwg.mxu0
      %v8203 = vsel %vm3945, %v8123, 0
      %v8206 = vsel %vm3993, %v7629, 0
      %8208 = vmatprep.subr.mxu0 0.0
      %8209 = vmatpush1.msra.mxu0 0.0
      %8210 = vmatprep.subr.mxu0 0.0
      %8211 = vmatpush1.msra.mxu0 0.0
      %8212 = vmatprep.subr.mxu0 0.0
      %8213 = vmatpush1.msra.mxu0 0.0
      %8214 = vmatprep.subr.mxu0 0.0
      %8215 = vmatpush1.msra.mxu0 0.0
      %8216 = vmatprep.subr.mxu0 0.0
      %8217 = vmatpush1.msra.mxu0 0.0
      %8218 = vmatprep.subr.mxu0 0.0
      %8219 = vmatpush1.msra.mxu0 0.0
      %8220 = vmatprep.subr.mxu0 0.0
      %8221 = vmatpush1.msra.mxu0 0.0
      %8222 = vmatprep.subr.mxu0 0.0
      %8223 = vmatpush1.msra.mxu0 0.0
      %8224 = vmatprep.subr.mxu0 0.0
      %8225 = vmatpush1.msra.mxu0 0.0
      %8226 = vmatprep.subr.mxu0 0.0
      %8227 = vmatpush1.msra.mxu0 0.0
      %8228 = vmatprep.subr.mxu0 0.0
      %8229 = vmatpush1.msra.mxu0 0.0
      %8230 = vmatprep.subr.mxu0 0.0
      %8231 = vmatpush1.msra.mxu0 0.0
      %8232 = vmatprep.subr.mxu0 0.0
      %8233 = vmatpush1.msra.mxu0 0.0
      %8234 = vmatprep.subr.mxu0 0.0
      %8235 = vmatpush1.msra.mxu0 0.0
      %8236 = vmatprep.subr.mxu0 0.0
      %8237 = vmatpush1.msra.mxu0 0.0
      %8238 = vmatprep.subr.mxu0 0.0
      %8239 = vmatpush1.msra.mxu0 %v8206
      %8240 = vmatprep.subr.mxu0 0.0
      %8241 = vmatpush2.msra.mxu0 0.0
      %8242 = vmatprep.subr.mxu0 0.0
      %8243 = vmatpush2.msra.mxu0 0.0
      %8244 = vmatprep.subr.mxu0 0.0
      %8245 = vmatpush2.msra.mxu0 0.0
      %8246 = vmatprep.subr.mxu0 0.0
      %8247 = vmatpush2.msra.mxu0 0.0
      %8248 = vmatprep.subr.mxu0 0.0
      %8249 = vmatpush2.msra.mxu0 0.0
      %8250 = vmatprep.subr.mxu0 0.0
      %8251 = vmatpush2.msra.mxu0 0.0
      %8252 = vmatprep.subr.mxu0 0.0
      %8253 = vmatpush2.msra.mxu0 0.0
      %8254 = vmatprep.subr.mxu0 0.0
      %8255 = vmatpush2.msra.mxu0 0.0
      %8256 = vmatprep.subr.mxu0 0.0
      %8257 = vmatpush2.msra.mxu0 0.0
      %8258 = vmatprep.subr.mxu0 0.0
      %8259 = vmatpush2.msra.mxu0 0.0
      %8260 = vmatprep.subr.mxu0 0.0
      %8261 = vmatpush2.msra.mxu0 0.0
      %8262 = vmatprep.subr.mxu0 0.0
      %8263 = vmatpush2.msra.mxu0 0.0
      %8264 = vmatprep.subr.mxu0 0.0
      %8265 = vmatpush2.msra.mxu0 0.0
      %8266 = vmatprep.subr.mxu0 0.0
      %8267 = vmatpush2.msra.mxu0 0.0
      %8268 = vmatprep.subr.mxu0 0.0
      %8269 = vmatpush2.msra.mxu0 0.0
      %8270 = vmatprep.subr.mxu0 0.0
      %8271 = vmatpush2.msra.mxu0 0.0
      %8272 = vmatprep.mubr.f32.mxu0 0.0
      %8273 = vmatmul.mubr.f32.gmra.mxu0 %v8203
      %v8274 = vpop.f32.mrf.mxu0
      %v8275 = vadd.f32 0.0, %v8274
      %v8276 = vpop.f32.mrf.mxu0
      %8277 = vdwg.mxu0
      %v8279 = vsel %vm3945, %v8124, 0
      %v8282 = vsel %vm3993, %v7702, 0
      %8284 = vmatprep.subr.mxu0 0.0
      %8285 = vmatpush1.msra.mxu0 0.0
      %8286 = vmatprep.subr.mxu0 0.0
      %8287 = vmatpush1.msra.mxu0 0.0
      %8288 = vmatprep.subr.mxu0 0.0
      %8289 = vmatpush1.msra.mxu0 0.0
      %8290 = vmatprep.subr.mxu0 0.0
      %8291 = vmatpush1.msra.mxu0 0.0
      %8292 = vmatprep.subr.mxu0 0.0
      %8293 = vmatpush1.msra.mxu0 0.0
      %8294 = vmatprep.subr.mxu0 0.0
      %8295 = vmatpush1.msra.mxu0 0.0
      %8296 = vmatprep.subr.mxu0 0.0
      %8297 = vmatpush1.msra.mxu0 0.0
      %8298 = vmatprep.subr.mxu0 0.0
      %8299 = vmatpush1.msra.mxu0 0.0
      %8300 = vmatprep.subr.mxu0 0.0
      %8301 = vmatpush1.msra.mxu0 0.0
      %8302 = vmatprep.subr.mxu0 0.0
      %8303 = vmatpush1.msra.mxu0 0.0
      %8304 = vmatprep.subr.mxu0 0.0
      %8305 = vmatpush1.msra.mxu0 0.0
      %8306 = vmatprep.subr.mxu0 0.0
      %8307 = vmatpush1.msra.mxu0 0.0
      %8308 = vmatprep.subr.mxu0 0.0
      %8309 = vmatpush1.msra.mxu0 0.0
      %8310 = vmatprep.subr.mxu0 0.0
      %8311 = vmatpush1.msra.mxu0 0.0
      %8312 = vmatprep.subr.mxu0 0.0
      %8313 = vmatpush1.msra.mxu0 0.0
      %8314 = vmatprep.subr.mxu0 0.0
      %8315 = vmatpush1.msra.mxu0 %v8282
      %8316 = vmatprep.subr.mxu0 0.0
      %8317 = vmatpush2.msra.mxu0 0.0
      %8318 = vmatprep.subr.mxu0 0.0
      %8319 = vmatpush2.msra.mxu0 0.0
      %8320 = vmatprep.subr.mxu0 0.0
      %8321 = vmatpush2.msra.mxu0 0.0
      %8322 = vmatprep.subr.mxu0 0.0
      %8323 = vmatpush2.msra.mxu0 0.0
      %8324 = vmatprep.subr.mxu0 0.0
      %8325 = vmatpush2.msra.mxu0 0.0
      %8326 = vmatprep.subr.mxu0 0.0
      %8327 = vmatpush2.msra.mxu0 0.0
      %8328 = vmatprep.subr.mxu0 0.0
      %8329 = vmatpush2.msra.mxu0 0.0
      %8330 = vmatprep.subr.mxu0 0.0
      %8331 = vmatpush2.msra.mxu0 0.0
      %8332 = vmatprep.subr.mxu0 0.0
      %8333 = vmatpush2.msra.mxu0 0.0
      %8334 = vmatprep.subr.mxu0 0.0
      %8335 = vmatpush2.msra.mxu0 0.0
      %8336 = vmatprep.subr.mxu0 0.0
      %8337 = vmatpush2.msra.mxu0 0.0
      %8338 = vmatprep.subr.mxu0 0.0
      %8339 = vmatpush2.msra.mxu0 0.0
      %8340 = vmatprep.subr.mxu0 0.0
      %8341 = vmatpush2.msra.mxu0 0.0
      %8342 = vmatprep.subr.mxu0 0.0
      %8343 = vmatpush2.msra.mxu0 0.0
      %8344 = vmatprep.subr.mxu0 0.0
      %8345 = vmatpush2.msra.mxu0 0.0
      %8346 = vmatprep.subr.mxu0 0.0
      %8347 = vmatpush2.msra.mxu0 0.0
      %8348 = vmatprep.mubr.f32.mxu0 0.0
      %8349 = vmatmul.mubr.f32.gmra.mxu0 %v8279
      %v8350 = vpop.f32.mrf.mxu0
      %v8351 = vadd.f32 0.0, %v8350
      %v8352 = vpop.f32.mrf.mxu0
      %8353 = vdwg.mxu0
      %v8355 = vsel %vm3945, %v8125, 0
      %v8358 = vsel %vm3993, %v7775, 0
      %8360 = vmatprep.subr.mxu0 0.0
      %8361 = vmatpush1.msra.mxu0 0.0
      %8362 = vmatprep.subr.mxu0 0.0
      %8363 = vmatpush1.msra.mxu0 0.0
      %8364 = vmatprep.subr.mxu0 0.0
      %8365 = vmatpush1.msra.mxu0 0.0
      %8366 = vmatprep.subr.mxu0 0.0
      %8367 = vmatpush1.msra.mxu0 0.0
      %8368 = vmatprep.subr.mxu0 0.0
      %8369 = vmatpush1.msra.mxu0 0.0
      %8370 = vmatprep.subr.mxu0 0.0
      %8371 = vmatpush1.msra.mxu0 0.0
      %8372 = vmatprep.subr.mxu0 0.0
      %8373 = vmatpush1.msra.mxu0 0.0
      %8374 = vmatprep.subr.mxu0 0.0
      %8375 = vmatpush1.msra.mxu0 0.0
      %8376 = vmatprep.subr.mxu0 0.0
      %8377 = vmatpush1.msra.mxu0 0.0
      %8378 = vmatprep.subr.mxu0 0.0
      %8379 = vmatpush1.msra.mxu0 0.0
      %8380 = vmatprep.subr.mxu0 0.0
      %8381 = vmatpush1.msra.mxu0 0.0
      %8382 = vmatprep.subr.mxu0 0.0
      %8383 = vmatpush1.msra.mxu0 0.0
      %8384 = vmatprep.subr.mxu0 0.0
      %8385 = vmatpush1.msra.mxu0 0.0
      %8386 = vmatprep.subr.mxu0 0.0
      %8387 = vmatpush1.msra.mxu0 0.0
      %8388 = vmatprep.subr.mxu0 0.0
      %8389 = vmatpush1.msra.mxu0 0.0
      %8390 = vmatprep.subr.mxu0 0.0
      %8391 = vmatpush1.msra.mxu0 %v8358
      %8392 = vmatprep.subr.mxu0 0.0
      %8393 = vmatpush2.msra.mxu0 0.0
      %8394 = vmatprep.subr.mxu0 0.0
      %8395 = vmatpush2.msra.mxu0 0.0
      %8396 = vmatprep.subr.mxu0 0.0
      %8397 = vmatpush2.msra.mxu0 0.0
      %8398 = vmatprep.subr.mxu0 0.0
      %8399 = vmatpush2.msra.mxu0 0.0
      %8400 = vmatprep.subr.mxu0 0.0
      %8401 = vmatpush2.msra.mxu0 0.0
      %8402 = vmatprep.subr.mxu0 0.0
      %8403 = vmatpush2.msra.mxu0 0.0
      %8404 = vmatprep.subr.mxu0 0.0
      %8405 = vmatpush2.msra.mxu0 0.0
      %8406 = vmatprep.subr.mxu0 0.0
      %8407 = vmatpush2.msra.mxu0 0.0
      %8408 = vmatprep.subr.mxu0 0.0
      %8409 = vmatpush2.msra.mxu0 0.0
      %8410 = vmatprep.subr.mxu0 0.0
      %8411 = vmatpush2.msra.mxu0 0.0
      %8412 = vmatprep.subr.mxu0 0.0
      %8413 = vmatpush2.msra.mxu0 0.0
      %8414 = vmatprep.subr.mxu0 0.0
      %8415 = vmatpush2.msra.mxu0 0.0
      %8416 = vmatprep.subr.mxu0 0.0
      %8417 = vmatpush2.msra.mxu0 0.0
      %8418 = vmatprep.subr.mxu0 0.0
      %8419 = vmatpush2.msra.mxu0 0.0
      %8420 = vmatprep.subr.mxu0 0.0
      %8421 = vmatpush2.msra.mxu0 0.0
      %8422 = vmatprep.subr.mxu0 0.0
      %8423 = vmatpush2.msra.mxu0 0.0
      %8424 = vmatprep.mubr.f32.mxu0 0.0
      %8425 = vmatmul.mubr.f32.gmra.mxu0 %v8355
      %v8426 = vpop.f32.mrf.mxu0
      %v8427 = vadd.f32 0.0, %v8426
      %v8428 = vpop.f32.mrf.mxu0
      %8429 = vdwg.mxu0
      %v8431 = vsel %vm1680, %v8199, 0
      %8433 = vmatprep.subr.mxu0 0.0
      %8434 = vmatpush1.msra.mxu0 0.0
      %8435 = vmatprep.subr.mxu0 0.0
      %8436 = vmatpush1.msra.mxu0 0.0
      %8437 = vmatprep.subr.mxu0 0.0
      %8438 = vmatpush1.msra.mxu0 0.0
      %8439 = vmatprep.subr.mxu0 0.0
      %8440 = vmatpush1.msra.mxu0 0.0
      %8441 = vmatprep.subr.mxu0 0.0
      %8442 = vmatpush1.msra.mxu0 0.0
      %8443 = vmatprep.subr.mxu0 0.0
      %8444 = vmatpush1.msra.mxu0 0.0
      %8445 = vmatprep.subr.mxu0 0.0
      %8446 = vmatpush1.msra.mxu0 0.0
      %8447 = vmatprep.subr.mxu0 0.0
      %8448 = vmatpush1.msra.mxu0 0.0
      %8449 = vmatprep.subr.mxu0 0.0
      %8450 = vmatpush1.msra.mxu0 0.0
      %8451 = vmatprep.subr.mxu0 0.0
      %8452 = vmatpush1.msra.mxu0 0.0
      %8453 = vmatprep.subr.mxu0 0.0
      %8454 = vmatpush1.msra.mxu0 0.0
      %8455 = vmatprep.subr.mxu0 0.0
      %8456 = vmatpush1.msra.mxu0 0.0
      %8457 = vmatprep.subr.mxu0 0.0
      %8458 = vmatpush1.msra.mxu0 0.0
      %8459 = vmatprep.subr.mxu0 0.0
      %8460 = vmatpush1.msra.mxu0 0.0
      %8461 = vmatprep.subr.mxu0 0.0
      %8462 = vmatpush1.msra.mxu0 0.0
      %8463 = vmatprep.subr.mxu0 0.0
      %8464 = vmatpush1.msra.mxu0 %v6822
      %8465 = vmatprep.subr.mxu0 0.0
      %8466 = vmatpush2.msra.mxu0 0.0
      %8467 = vmatprep.subr.mxu0 0.0
      %8468 = vmatpush2.msra.mxu0 0.0
      %8469 = vmatprep.subr.mxu0 0.0
      %8470 = vmatpush2.msra.mxu0 0.0
      %8471 = vmatprep.subr.mxu0 0.0
      %8472 = vmatpush2.msra.mxu0 0.0
      %8473 = vmatprep.subr.mxu0 0.0
      %8474 = vmatpush2.msra.mxu0 0.0
      %8475 = vmatprep.subr.mxu0 0.0
      %8476 = vmatpush2.msra.mxu0 0.0
      %8477 = vmatprep.subr.mxu0 0.0
      %8478 = vmatpush2.msra.mxu0 0.0
      %8479 = vmatprep.subr.mxu0 0.0
      %8480 = vmatpush2.msra.mxu0 0.0
      %8481 = vmatprep.subr.mxu0 0.0
      %8482 = vmatpush2.msra.mxu0 0.0
      %8483 = vmatprep.subr.mxu0 0.0
      %8484 = vmatpush2.msra.mxu0 0.0
      %8485 = vmatprep.subr.mxu0 0.0
      %8486 = vmatpush2.msra.mxu0 0.0
      %8487 = vmatprep.subr.mxu0 0.0
      %8488 = vmatpush2.msra.mxu0 0.0
      %8489 = vmatprep.subr.mxu0 0.0
      %8490 = vmatpush2.msra.mxu0 0.0
      %8491 = vmatprep.subr.mxu0 0.0
      %8492 = vmatpush2.msra.mxu0 0.0
      %8493 = vmatprep.subr.mxu0 0.0
      %8494 = vmatpush2.msra.mxu0 0.0
      %8495 = vmatprep.subr.mxu0 0.0
      %8496 = vmatpush2.msra.mxu0 0.0
      %8497 = vmatprep.mubr.f32.mxu0 0.0
      %8498 = vmatmul.mubr.f32.gmra.mxu0 %v8431
      %v8499 = vpop.f32.mrf.mxu0
      %v8500 = vadd.f32 0.0, %v8499
      %v8501 = vpop.f32.mrf.mxu0
      %8502 = vdwg.mxu0
      %v8504 = vsel %vm1680, %v8275, 0
      %8506 = vmatprep.subr.mxu0 0.0
      %8507 = vmatpush1.msra.mxu0 0.0
      %8508 = vmatprep.subr.mxu0 0.0
      %8509 = vmatpush1.msra.mxu0 0.0
      %8510 = vmatprep.subr.mxu0 0.0
      %8511 = vmatpush1.msra.mxu0 0.0
      %8512 = vmatprep.subr.mxu0 0.0
      %8513 = vmatpush1.msra.mxu0 0.0
      %8514 = vmatprep.subr.mxu0 0.0
      %8515 = vmatpush1.msra.mxu0 0.0
      %8516 = vmatprep.subr.mxu0 0.0
      %8517 = vmatpush1.msra.mxu0 0.0
      %8518 = vmatprep.subr.mxu0 0.0
      %8519 = vmatpush1.msra.mxu0 0.0
      %8520 = vmatprep.subr.mxu0 0.0
      %8521 = vmatpush1.msra.mxu0 0.0
      %8522 = vmatprep.subr.mxu0 0.0
      %8523 = vmatpush1.msra.mxu0 0.0
      %8524 = vmatprep.subr.mxu0 0.0
      %8525 = vmatpush1.msra.mxu0 0.0
      %8526 = vmatprep.subr.mxu0 0.0
      %8527 = vmatpush1.msra.mxu0 0.0
      %8528 = vmatprep.subr.mxu0 0.0
      %8529 = vmatpush1.msra.mxu0 0.0
      %8530 = vmatprep.subr.mxu0 0.0
      %8531 = vmatpush1.msra.mxu0 0.0
      %8532 = vmatprep.subr.mxu0 0.0
      %8533 = vmatpush1.msra.mxu0 0.0
      %8534 = vmatprep.subr.mxu0 0.0
      %8535 = vmatpush1.msra.mxu0 0.0
      %8536 = vmatprep.subr.mxu0 0.0
      %8537 = vmatpush1.msra.mxu0 %v6823
      %8538 = vmatprep.subr.mxu0 0.0
      %8539 = vmatpush2.msra.mxu0 0.0
      %8540 = vmatprep.subr.mxu0 0.0
      %8541 = vmatpush2.msra.mxu0 0.0
      %8542 = vmatprep.subr.mxu0 0.0
      %8543 = vmatpush2.msra.mxu0 0.0
      %8544 = vmatprep.subr.mxu0 0.0
      %8545 = vmatpush2.msra.mxu0 0.0
      %8546 = vmatprep.subr.mxu0 0.0
      %8547 = vmatpush2.msra.mxu0 0.0
      %8548 = vmatprep.subr.mxu0 0.0
      %8549 = vmatpush2.msra.mxu0 0.0
      %8550 = vmatprep.subr.mxu0 0.0
      %8551 = vmatpush2.msra.mxu0 0.0
      %8552 = vmatprep.subr.mxu0 0.0
      %8553 = vmatpush2.msra.mxu0 0.0
      %8554 = vmatprep.subr.mxu0 0.0
      %8555 = vmatpush2.msra.mxu0 0.0
      %8556 = vmatprep.subr.mxu0 0.0
      %8557 = vmatpush2.msra.mxu0 0.0
      %8558 = vmatprep.subr.mxu0 0.0
      %8559 = vmatpush2.msra.mxu0 0.0
      %8560 = vmatprep.subr.mxu0 0.0
      %8561 = vmatpush2.msra.mxu0 0.0
      %8562 = vmatprep.subr.mxu0 0.0
      %8563 = vmatpush2.msra.mxu0 0.0
      %8564 = vmatprep.subr.mxu0 0.0
      %8565 = vmatpush2.msra.mxu0 0.0
      %8566 = vmatprep.subr.mxu0 0.0
      %8567 = vmatpush2.msra.mxu0 0.0
      %8568 = vmatprep.subr.mxu0 0.0
      %8569 = vmatpush2.msra.mxu0 0.0
      %8570 = vmatprep.mubr.f32.mxu0 0.0
      %8571 = vmatmul.mubr.f32.gmra.mxu0 %v8504
      %v8572 = vpop.f32.mrf.mxu0
      %v8573 = vadd.f32 0.0, %v8572
      %v8574 = vpop.f32.mrf.mxu0
      %8575 = vdwg.mxu0
      %v8577 = vsel %vm1680, %v8351, 0
      %8579 = vmatprep.subr.mxu0 0.0
      %8580 = vmatpush1.msra.mxu0 0.0
      %8581 = vmatprep.subr.mxu0 0.0
      %8582 = vmatpush1.msra.mxu0 0.0
      %8583 = vmatprep.subr.mxu0 0.0
      %8584 = vmatpush1.msra.mxu0 0.0
      %8585 = vmatprep.subr.mxu0 0.0
      %8586 = vmatpush1.msra.mxu0 0.0
      %8587 = vmatprep.subr.mxu0 0.0
      %8588 = vmatpush1.msra.mxu0 0.0
      %8589 = vmatprep.subr.mxu0 0.0
      %8590 = vmatpush1.msra.mxu0 0.0
      %8591 = vmatprep.subr.mxu0 0.0
      %8592 = vmatpush1.msra.mxu0 0.0
      %8593 = vmatprep.subr.mxu0 0.0
      %8594 = vmatpush1.msra.mxu0 0.0
      %8595 = vmatprep.subr.mxu0 0.0
      %8596 = vmatpush1.msra.mxu0 0.0
      %8597 = vmatprep.subr.mxu0 0.0
      %8598 = vmatpush1.msra.mxu0 0.0
      %8599 = vmatprep.subr.mxu0 0.0
      %8600 = vmatpush1.msra.mxu0 0.0
      %8601 = vmatprep.subr.mxu0 0.0
      %8602 = vmatpush1.msra.mxu0 0.0
      %8603 = vmatprep.subr.mxu0 0.0
      %8604 = vmatpush1.msra.mxu0 0.0
      %8605 = vmatprep.subr.mxu0 0.0
      %8606 = vmatpush1.msra.mxu0 0.0
      %8607 = vmatprep.subr.mxu0 0.0
      %8608 = vmatpush1.msra.mxu0 0.0
      %8609 = vmatprep.subr.mxu0 0.0
      %8610 = vmatpush1.msra.mxu0 %v6824
      %8611 = vmatprep.subr.mxu0 0.0
      %8612 = vmatpush2.msra.mxu0 0.0
      %8613 = vmatprep.subr.mxu0 0.0
      %8614 = vmatpush2.msra.mxu0 0.0
      %8615 = vmatprep.subr.mxu0 0.0
      %8616 = vmatpush2.msra.mxu0 0.0
      %8617 = vmatprep.subr.mxu0 0.0
      %8618 = vmatpush2.msra.mxu0 0.0
      %8619 = vmatprep.subr.mxu0 0.0
      %8620 = vmatpush2.msra.mxu0 0.0
      %8621 = vmatprep.subr.mxu0 0.0
      %8622 = vmatpush2.msra.mxu0 0.0
      %8623 = vmatprep.subr.mxu0 0.0
      %8624 = vmatpush2.msra.mxu0 0.0
      %8625 = vmatprep.subr.mxu0 0.0
      %8626 = vmatpush2.msra.mxu0 0.0
      %8627 = vmatprep.subr.mxu0 0.0
      %8628 = vmatpush2.msra.mxu0 0.0
      %8629 = vmatprep.subr.mxu0 0.0
      %8630 = vmatpush2.msra.mxu0 0.0
      %8631 = vmatprep.subr.mxu0 0.0
      %8632 = vmatpush2.msra.mxu0 0.0
      %8633 = vmatprep.subr.mxu0 0.0
      %8634 = vmatpush2.msra.mxu0 0.0
      %8635 = vmatprep.subr.mxu0 0.0
      %8636 = vmatpush2.msra.mxu0 0.0
      %8637 = vmatprep.subr.mxu0 0.0
      %8638 = vmatpush2.msra.mxu0 0.0
      %8639 = vmatprep.subr.mxu0 0.0
      %8640 = vmatpush2.msra.mxu0 0.0
      %8641 = vmatprep.subr.mxu0 0.0
      %8642 = vmatpush2.msra.mxu0 0.0
      %8643 = vmatprep.mubr.f32.mxu0 0.0
      %8644 = vmatmul.mubr.f32.gmra.mxu0 %v8577
      %v8645 = vpop.f32.mrf.mxu0
      %v8646 = vadd.f32 0.0, %v8645
      %v8647 = vpop.f32.mrf.mxu0
      %8648 = vdwg.mxu0
      %v8650 = vsel %vm1680, %v8427, 0
      %8652 = vmatprep.subr.mxu0 0.0
      %8653 = vmatpush1.msra.mxu0 0.0
      %8654 = vmatprep.subr.mxu0 0.0
      %8655 = vmatpush1.msra.mxu0 0.0
      %8656 = vmatprep.subr.mxu0 0.0
      %8657 = vmatpush1.msra.mxu0 0.0
      %8658 = vmatprep.subr.mxu0 0.0
      %8659 = vmatpush1.msra.mxu0 0.0
      %8660 = vmatprep.subr.mxu0 0.0
      %8661 = vmatpush1.msra.mxu0 0.0
      %8662 = vmatprep.subr.mxu0 0.0
      %8663 = vmatpush1.msra.mxu0 0.0
      %8664 = vmatprep.subr.mxu0 0.0
      %8665 = vmatpush1.msra.mxu0 0.0
      %8666 = vmatprep.subr.mxu0 0.0
      %8667 = vmatpush1.msra.mxu0 0.0
      %8668 = vmatprep.subr.mxu0 0.0
      %8669 = vmatpush1.msra.mxu0 0.0
      %8670 = vmatprep.subr.mxu0 0.0
      %8671 = vmatpush1.msra.mxu0 0.0
      %8672 = vmatprep.subr.mxu0 0.0
      %8673 = vmatpush1.msra.mxu0 0.0
      %8674 = vmatprep.subr.mxu0 0.0
      %8675 = vmatpush1.msra.mxu0 0.0
      %8676 = vmatprep.subr.mxu0 0.0
      %8677 = vmatpush1.msra.mxu0 0.0
      %8678 = vmatprep.subr.mxu0 0.0
      %8679 = vmatpush1.msra.mxu0 0.0
      %8680 = vmatprep.subr.mxu0 0.0
      %8681 = vmatpush1.msra.mxu0 0.0
      %8682 = vmatprep.subr.mxu0 0.0
      %8683 = vmatpush1.msra.mxu0 %v6825
      %8684 = vmatprep.subr.mxu0 0.0
      %8685 = vmatpush2.msra.mxu0 0.0
      %8686 = vmatprep.subr.mxu0 0.0
      %8687 = vmatpush2.msra.mxu0 0.0
      %8688 = vmatprep.subr.mxu0 0.0
      %8689 = vmatpush2.msra.mxu0 0.0
      %8690 = vmatprep.subr.mxu0 0.0
      %8691 = vmatpush2.msra.mxu0 0.0
      %8692 = vmatprep.subr.mxu0 0.0
      %8693 = vmatpush2.msra.mxu0 0.0
      %8694 = vmatprep.subr.mxu0 0.0
      %8695 = vmatpush2.msra.mxu0 0.0
      %8696 = vmatprep.subr.mxu0 0.0
      %8697 = vmatpush2.msra.mxu0 0.0
      %8698 = vmatprep.subr.mxu0 0.0
      %8699 = vmatpush2.msra.mxu0 0.0
      %8700 = vmatprep.subr.mxu0 0.0
      %8701 = vmatpush2.msra.mxu0 0.0
      %8702 = vmatprep.subr.mxu0 0.0
      %8703 = vmatpush2.msra.mxu0 0.0
      %8704 = vmatprep.subr.mxu0 0.0
      %8705 = vmatpush2.msra.mxu0 0.0
      %8706 = vmatprep.subr.mxu0 0.0
      %8707 = vmatpush2.msra.mxu0 0.0
      %8708 = vmatprep.subr.mxu0 0.0
      %8709 = vmatpush2.msra.mxu0 0.0
      %8710 = vmatprep.subr.mxu0 0.0
      %8711 = vmatpush2.msra.mxu0 0.0
      %8712 = vmatprep.subr.mxu0 0.0
      %8713 = vmatpush2.msra.mxu0 0.0
      %8714 = vmatprep.subr.mxu0 0.0
      %8715 = vmatpush2.msra.mxu0 0.0
      %8716 = vmatprep.mubr.f32.mxu0 0.0
      %8717 = vmatmul.mubr.f32.gmra.mxu0 %v8650
      %v8718 = vpop.f32.mrf.mxu0
      %v8719 = vadd.f32 0.0, %v8718
      %v8720 = vpop.f32.mrf.mxu0
      %8721 = vdwg.mxu0
      %v8722 = vsel %vm407, %v8500, 0.0
      %v8723 = vsel %vm407, %v8573, 0.0
      %v8724 = vadd.f32 %v8722, %v8723
      %v8725 = vsel %vm407, %v8646, 0.0
      %v8726 = vadd.f32 %v8724, %v8725
      %v8727 = vsel %vm407, %v8719, 0.0
      %v8728 = vadd.f32 %v8726, %v8727
      %v8729 = vlaneseq
      %v8730 = vshrl.u32 %v8729, 7
      %v8731 = vsub.s32 0, %v8730
      %v8732 = vrot.slane %v6826, %v8731
      %v8733 = vadd.f32 %v8728, %v8732
      %v8734 = vadd.f32 %v6765, %v8733
      %v8735 = vld [vmem:[%s3 + $0x1d8] sm:$0x1]
      %v8736 = vld [vmem:[%s3 + $0x1e0] sm:$0x1]
      %v8737 = vsel %vm407, %v8734, 0.0
      %8738 = vadd.xlane.f32.xlu0 %v8737
      %v8739 = vpop.xlane.xlu0 %8738
      %v8740 = vmul.f32 %v8739, %v674
      %v8741 = vsub.f32 %v8734, %v8740
      %v8742 = vmul.f32 %v8741, %v8741
      %v8743 = vsel %vm407, %v8742, 0.0
      %8744 = vadd.xlane.f32.xlu0 %v8743
      %v8745 = vpop.xlane.xlu0 %8744
      %v8746 = vmul.f32 %v8745, %v674
      %v8747 = vadd.f32 %v8746, 1e-05
      %v8748 = vrsqrt.pop %v8747
      %v8749 = vmul.f32 %v8741, %v8748
      %v8750 = vlaneseq
      %v8751 = vshrl.u32 %v8750, 7
      %v8752 = vsub.s32 0, %v8751
      %v8753 = vrot.slane %v8735, %v8752
      %v8754 = vmul.f32 %v8749, %v8753
      %v8755 = vlaneseq
      %v8756 = vshrl.u32 %v8755, 7
      %v8757 = vsub.s32 0, %v8756
      %v8758 = vrot.slane %v8736, %v8757
      %v8759 = vadd.f32 %v8754, %v8758
      %v8760 = vld [vmem:[%s4 + $0x50] sm:$0xff]
      %v8761 = vld [vmem:[%s4 + $0x58] sm:$0xff]
      %v8762 = vld [vmem:[%s4 + $0x60] sm:$0xff]
      %v8763 = vld [vmem:[%s4 + $0x68] sm:$0xff]
      %v8764 = vld [vmem:[%s4 + $0x70] sm:$0x1]
      %v8765 = vlaneseq
      %v8766 = vshrl.u32 %v8765, 7
      %v8767 = vsub.s32 0, %v8766
      %v8768 = vrot.slane %v8764, %v8767
      %v8770 = vsel %vm407, %v8759, 0
      %8772 = vmatprep.subr.mxu0 0.0
      %8773 = vmatpush1.msra.mxu0 0.0
      %8774 = vmatprep.subr.mxu0 0.0
      %8775 = vmatpush1.msra.mxu0 0.0
      %8776 = vmatprep.subr.mxu0 0.0
      %8777 = vmatpush1.msra.mxu0 0.0
      %8778 = vmatprep.subr.mxu0 0.0
      %8779 = vmatpush1.msra.mxu0 0.0
      %8780 = vmatprep.subr.mxu0 0.0
      %8781 = vmatpush1.msra.mxu0 0.0
      %8782 = vmatprep.subr.mxu0 0.0
      %8783 = vmatpush1.msra.mxu0 0.0
      %8784 = vmatprep.subr.mxu0 0.0
      %8785 = vmatpush1.msra.mxu0 0.0
      %8786 = vmatprep.subr.mxu0 0.0
      %8787 = vmatpush1.msra.mxu0 0.0
      %8788 = vmatprep.subr.mxu0 0.0
      %8789 = vmatpush1.msra.mxu0 0.0
      %8790 = vmatprep.subr.mxu0 0.0
      %8791 = vmatpush1.msra.mxu0 0.0
      %8792 = vmatprep.subr.mxu0 0.0
      %8793 = vmatpush1.msra.mxu0 0.0
      %8794 = vmatprep.subr.mxu0 0.0
      %8795 = vmatpush1.msra.mxu0 0.0
      %8796 = vmatprep.subr.mxu0 0.0
      %8797 = vmatpush1.msra.mxu0 %v8763
      %8798 = vmatprep.subr.mxu0 0.0
      %8799 = vmatpush1.msra.mxu0 %v8762
      %8800 = vmatprep.subr.mxu0 0.0
      %8801 = vmatpush1.msra.mxu0 %v8761
      %8802 = vmatprep.subr.mxu0 0.0
      %8803 = vmatpush1.msra.mxu0 %v8760
      %8804 = vmatprep.subr.mxu0 0.0
      %8805 = vmatpush2.msra.mxu0 0.0
      %8806 = vmatprep.subr.mxu0 0.0
      %8807 = vmatpush2.msra.mxu0 0.0
      %8808 = vmatprep.subr.mxu0 0.0
      %8809 = vmatpush2.msra.mxu0 0.0
      %8810 = vmatprep.subr.mxu0 0.0
      %8811 = vmatpush2.msra.mxu0 0.0
      %8812 = vmatprep.subr.mxu0 0.0
      %8813 = vmatpush2.msra.mxu0 0.0
      %8814 = vmatprep.subr.mxu0 0.0
      %8815 = vmatpush2.msra.mxu0 0.0
      %8816 = vmatprep.subr.mxu0 0.0
      %8817 = vmatpush2.msra.mxu0 0.0
      %8818 = vmatprep.subr.mxu0 0.0
      %8819 = vmatpush2.msra.mxu0 0.0
      %8820 = vmatprep.subr.mxu0 0.0
      %8821 = vmatpush2.msra.mxu0 0.0
      %8822 = vmatprep.subr.mxu0 0.0
      %8823 = vmatpush2.msra.mxu0 0.0
      %8824 = vmatprep.subr.mxu0 0.0
      %8825 = vmatpush2.msra.mxu0 0.0
      %8826 = vmatprep.subr.mxu0 0.0
      %8827 = vmatpush2.msra.mxu0 0.0
      %8828 = vmatprep.subr.mxu0 0.0
      %8829 = vmatpush2.msra.mxu0 0.0
      %8830 = vmatprep.subr.mxu0 0.0
      %8831 = vmatpush2.msra.mxu0 0.0
      %8832 = vmatprep.subr.mxu0 0.0
      %8833 = vmatpush2.msra.mxu0 0.0
      %8834 = vmatprep.subr.mxu0 0.0
      %8835 = vmatpush2.msra.mxu0 0.0
      %8836 = vmatprep.mubr.f32.mxu0 0.0
      %8837 = vmatmul.mubr.f32.gmra.mxu0 %v8770
      %v8838 = vpop.f32.mrf.mxu0
      %v8839 = vadd.f32 %v8768, %v8838
      %v8840 = vpop.f32.mrf.mxu0
      %8841 = vdwg.mxu0
      %v8842 = vmul.f32 %v8839, 0.5
      %v8843 = vmul.f32 %v8839, 0.044715
      %v8844 = vmul.f32 %v8843, %v8839
      %v8845 = vmul.f32 %v8844, %v8839
      %v8846 = vadd.f32 %v8839, %v8845
      %v8847 = vmul.f32 %v8846, 0.7978846
      %v8848 = vtanh.pop %v8847
      %v8849 = vadd.f32 %v8848, 1.0
      %v8850 = vmul.f32 %v8842, %v8849
      %v8851 = vld [vmem:[%s3 + $0x200] sm:$0xff]
      %v8852 = vld [vmem:[%s3 + $0x208] sm:$0xff]
      %v8853 = vld [vmem:[%s3 + $0x210] sm:$0xff]
      %v8854 = vld [vmem:[%s3 + $0x218] sm:$0xff]
      %v8855 = vld [vmem:[%s3 + $0x220] sm:$0xff]
      %v8856 = vld [vmem:[%s3 + $0x228] sm:$0xff]
      %v8857 = vld [vmem:[%s3 + $0x230] sm:$0xff]
      %v8858 = vld [vmem:[%s3 + $0x238] sm:$0xff]
      %v8859 = vld [vmem:[%s3 + $0x240] sm:$0xff]
      %v8860 = vld [vmem:[%s3 + $0x248] sm:$0xff]
      %v8861 = vld [vmem:[%s3 + $0x250] sm:$0xff]
      %v8862 = vld [vmem:[%s3 + $0x258] sm:$0xff]
      %v8863 = vld [vmem:[%s3 + $0x260] sm:$0xff]
      %v8864 = vld [vmem:[%s3 + $0x268] sm:$0xff]
      %v8865 = vld [vmem:[%s3 + $0x270] sm:$0xff]
      %v8866 = vld [vmem:[%s3 + $0x278] sm:$0xff]
      %8867 = vmatprep.subr.mxu0 0.0
      %8868 = vmatpush1.msra.mxu0 %v8866
      %8869 = vmatprep.subr.mxu0 0.0
      %8870 = vmatpush1.msra.mxu0 %v8865
      %8871 = vmatprep.subr.mxu0 0.0
      %8872 = vmatpush1.msra.mxu0 %v8864
      %8873 = vmatprep.subr.mxu0 0.0
      %8874 = vmatpush1.msra.mxu0 %v8863
      %8875 = vmatprep.subr.mxu0 0.0
      %8876 = vmatpush1.msra.mxu0 %v8862
      %8877 = vmatprep.subr.mxu0 0.0
      %8878 = vmatpush1.msra.mxu0 %v8861
      %8879 = vmatprep.subr.mxu0 0.0
      %8880 = vmatpush1.msra.mxu0 %v8860
      %8881 = vmatprep.subr.mxu0 0.0
      %8882 = vmatpush1.msra.mxu0 %v8859
      %8883 = vmatprep.subr.mxu0 0.0
      %8884 = vmatpush1.msra.mxu0 %v8858
      %8885 = vmatprep.subr.mxu0 0.0
      %8886 = vmatpush1.msra.mxu0 %v8857
      %8887 = vmatprep.subr.mxu0 0.0
      %8888 = vmatpush1.msra.mxu0 %v8856
      %8889 = vmatprep.subr.mxu0 0.0
      %8890 = vmatpush1.msra.mxu0 %v8855
      %8891 = vmatprep.subr.mxu0 0.0
      %8892 = vmatpush1.msra.mxu0 %v8854
      %8893 = vmatprep.subr.mxu0 0.0
      %8894 = vmatpush1.msra.mxu0 %v8853
      %8895 = vmatprep.subr.mxu0 0.0
      %8896 = vmatpush1.msra.mxu0 %v8852
      %8897 = vmatprep.subr.mxu0 0.0
      %8898 = vmatpush1.msra.mxu0 %v8851
      %8899 = vmatprep.subr.mxu0 0.0
      %8900 = vmatpush2.msra.mxu0 0.0
      %8901 = vmatprep.subr.mxu0 0.0
      %8902 = vmatpush2.msra.mxu0 0.0
      %8903 = vmatprep.subr.mxu0 0.0
      %8904 = vmatpush2.msra.mxu0 0.0
      %8905 = vmatprep.subr.mxu0 0.0
      %8906 = vmatpush2.msra.mxu0 0.0
      %8907 = vmatprep.subr.mxu0 0.0
      %8908 = vmatpush2.msra.mxu0 0.0
      %8909 = vmatprep.subr.mxu0 0.0
      %8910 = vmatpush2.msra.mxu0 0.0
      %8911 = vmatprep.subr.mxu0 0.0
      %8912 = vmatpush2.msra.mxu0 0.0
      %8913 = vmatprep.subr.mxu0 0.0
      %8914 = vmatpush2.msra.mxu0 0.0
      %8915 = vmatprep.subr.mxu0 0.0
      %8916 = vmatpush2.msra.mxu0 0.0
      %8917 = vmatprep.subr.mxu0 0.0
      %8918 = vmatpush2.msra.mxu0 0.0
      %8919 = vmatprep.subr.mxu0 0.0
      %8920 = vmatpush2.msra.mxu0 0.0
      %8921 = vmatprep.subr.mxu0 0.0
      %8922 = vmatpush2.msra.mxu0 0.0
      %8923 = vmatprep.subr.mxu0 0.0
      %8924 = vmatpush2.msra.mxu0 0.0
      %8925 = vmatprep.subr.mxu0 0.0
      %8926 = vmatpush2.msra.mxu0 0.0
      %8927 = vmatprep.subr.mxu0 0.0
      %8928 = vmatpush2.msra.mxu0 0.0
      %8929 = vmatprep.subr.mxu0 0.0
      %8930 = vmatpush2.msra.mxu0 0.0
      %8931 = vmatprep.mubr.f32.mxu0 0.0
      %8932 = vmatmul.mubr.f32.gmra.mxu0 %v8850
      %v8933 = vpop.f32.mrf.mxu0
      %v8934 = vadd.f32 0.0, %v8933
      %v8935 = vpop.f32.mrf.mxu0
      %8936 = vdwg.mxu0
      %v8937 = vadd.f32 %v8734, %v8934
      %v8938 = vld [vmem:[%s3 + $0x1f8] sm:$0x1]
      %v8939 = vlaneseq
      %v8940 = vshrl.u32 %v8939, 7
      %v8941 = vsub.s32 0, %v8940
      %v8942 = vrot.slane %v8938, %v8941
      %v8943 = vadd.f32 %v8937, %v8942
      %v8944 = vld [vmem:[%s3 + $0xb8] sm:$0x1]
      %v8945 = vld [vmem:[%s3 + $0xc0] sm:$0x1]
      %v8946 = vsel %vm407, %v8943, 0.0
      %8947 = vadd.xlane.f32.xlu0 %v8946
      %v8948 = vpop.xlane.xlu0 %8947
      %v8949 = vmul.f32 %v8948, %v674
      %v8950 = vsub.f32 %v8943, %v8949
      %v8951 = vmul.f32 %v8950, %v8950
      %v8952 = vsel %vm407, %v8951, 0.0
      %8953 = vadd.xlane.f32.xlu0 %v8952
      %v8954 = vpop.xlane.xlu0 %8953
      %v8955 = vmul.f32 %v8954, %v674
      %v8956 = vadd.f32 %v8955, 1e-05
      %v8957 = vrsqrt.pop %v8956
      %v8958 = vmul.f32 %v8950, %v8957
      %v8959 = vlaneseq
      %v8960 = vshrl.u32 %v8959, 7
      %v8961 = vsub.s32 0, %v8960
      %v8962 = vrot.slane %v8944, %v8961
      %v8963 = vmul.f32 %v8958, %v8962
      %v8964 = vlaneseq
      %v8965 = vshrl.u32 %v8964, 7
      %v8966 = vsub.s32 0, %v8965
      %v8967 = vrot.slane %v8945, %v8966
      %v8968 = vadd.f32 %v8963, %v8967
      %v8969 = vld [vmem:[%s3 + $0xc8] sm:$0xff]
      %v8970 = vld [vmem:[%s3 + $0xd0] sm:$0xff]
      %v8971 = vld [vmem:[%s3 + $0xd8] sm:$0xff]
      %v8972 = vld [vmem:[%s3 + $0xe0] sm:$0xff]
      %v8973 = vld [vmem:[%s3 + $0xe8] sm:$0x1]
      %v8974 = vlaneseq
      %v8975 = vshrl.u32 %v8974, 7
      %v8976 = vsub.s32 0, %v8975
      %v8977 = vrot.slane %v8973, %v8976
      %v8979 = vsel %vm407, %v8968, 0
      %8981 = vmatprep.subr.mxu0 0.0
      %8982 = vmatpush1.msra.mxu0 0.0
      %8983 = vmatprep.subr.mxu0 0.0
      %8984 = vmatpush1.msra.mxu0 0.0
      %8985 = vmatprep.subr.mxu0 0.0
      %8986 = vmatpush1.msra.mxu0 0.0
      %8987 = vmatprep.subr.mxu0 0.0
      %8988 = vmatpush1.msra.mxu0 0.0
      %8989 = vmatprep.subr.mxu0 0.0
      %8990 = vmatpush1.msra.mxu0 0.0
      %8991 = vmatprep.subr.mxu0 0.0
      %8992 = vmatpush1.msra.mxu0 0.0
      %8993 = vmatprep.subr.mxu0 0.0
      %8994 = vmatpush1.msra.mxu0 0.0
      %8995 = vmatprep.subr.mxu0 0.0
      %8996 = vmatpush1.msra.mxu0 0.0
      %8997 = vmatprep.subr.mxu0 0.0
      %8998 = vmatpush1.msra.mxu0 0.0
      %8999 = vmatprep.subr.mxu0 0.0
      %9000 = vmatpush1.msra.mxu0 0.0
      %9001 = vmatprep.subr.mxu0 0.0
      %9002 = vmatpush1.msra.mxu0 0.0
      %9003 = vmatprep.subr.mxu0 0.0
      %9004 = vmatpush1.msra.mxu0 0.0
      %9005 = vmatprep.subr.mxu0 0.0
      %9006 = vmatpush1.msra.mxu0 %v8972
      %9007 = vmatprep.subr.mxu0 0.0
      %9008 = vmatpush1.msra.mxu0 %v8971
      %9009 = vmatprep.subr.mxu0 0.0
      %9010 = vmatpush1.msra.mxu0 %v8970
      %9011 = vmatprep.subr.mxu0 0.0
      %9012 = vmatpush1.msra.mxu0 %v8969
      %9013 = vmatprep.subr.mxu0 0.0
      %9014 = vmatpush2.msra.mxu0 0.0
      %9015 = vmatprep.subr.mxu0 0.0
      %9016 = vmatpush2.msra.mxu0 0.0
      %9017 = vmatprep.subr.mxu0 0.0
      %9018 = vmatpush2.msra.mxu0 0.0
      %9019 = vmatprep.subr.mxu0 0.0
      %9020 = vmatpush2.msra.mxu0 0.0
      %9021 = vmatprep.subr.mxu0 0.0
      %9022 = vmatpush2.msra.mxu0 0.0
      %9023 = vmatprep.subr.mxu0 0.0
      %9024 = vmatpush2.msra.mxu0 0.0
      %9025 = vmatprep.subr.mxu0 0.0
      %9026 = vmatpush2.msra.mxu0 0.0
      %9027 = vmatprep.subr.mxu0 0.0
      %9028 = vmatpush2.msra.mxu0 0.0
      %9029 = vmatprep.subr.mxu0 0.0
      %9030 = vmatpush2.msra.mxu0 0.0
      %9031 = vmatprep.subr.mxu0 0.0
      %9032 = vmatpush2.msra.mxu0 0.0
      %9033 = vmatprep.subr.mxu0 0.0
      %9034 = vmatpush2.msra.mxu0 0.0
      %9035 = vmatprep.subr.mxu0 0.0
      %9036 = vmatpush2.msra.mxu0 0.0
      %9037 = vmatprep.subr.mxu0 0.0
      %9038 = vmatpush2.msra.mxu0 0.0
      %9039 = vmatprep.subr.mxu0 0.0
      %9040 = vmatpush2.msra.mxu0 0.0
      %9041 = vmatprep.subr.mxu0 0.0
      %9042 = vmatpush2.msra.mxu0 0.0
      %9043 = vmatprep.subr.mxu0 0.0
      %9044 = vmatpush2.msra.mxu0 0.0
      %9045 = vmatprep.mubr.f32.mxu0 0.0
      %9046 = vmatmul.mubr.f32.gmra.mxu0 %v8979
      %v9047 = vpop.f32.mrf.mxu0
      %v9048 = vadd.f32 %v8977, %v9047
      %v9049 = vpop.f32.mrf.mxu0
      %9050 = vdwg.mxu0
      %9051 = vst.msk [vmem:[%s304] sm:$0xff] %vm407, %v9048
      %p9052 = scmp.lt.s32.totalorder %s18, 1
      %s9053 = scalar_select %p9052, %s18, 1
      %s9054 = smul.addr %s9053, 8
      %s9055 = scalar_lea.vmem %s7, %s9054
      // Predicated region
      $region49: #{_lambda_.1} parent=47 // pred_check
        %p9056 = pneg %p198
      $region50: #{_lambda_.1} parent=47 // pred_check_branch
        %9058 = sbr.rel (%p9056) target = $region52
      $region51: #{_lambda_.1} parent=47 // pred_region
        _
      $region52: #{_lambda_.1} parent=47 // pred_fallthru
        _
    $region48: #{_lambda_.1} parent=5 // pred_fallthru
      _
    %p9059 = scmp.le.s32.totalorder 2, %s13
    // Predicated region
    $region53: #{_lambda_.1} parent=5 // pred_check
      %p9060 = pneg %p9059
    $region54: #{_lambda_.1} parent=5 // pred_check_branch
      %9062 = sbr.rel (%p9060) target = $region56
    $region55: #{_lambda_.1} parent=5 // pred_region
      %s9063 = ssub.s32 %s13, 2
      // Predicated region
      $region57: #{_lambda_.1} parent=55 // pred_check
        %p9064 = pneg %p204
      $region58: #{_lambda_.1} parent=55 // pred_check_branch
        %9066 = sbr.rel (%p9064) target = $region60
      $region59: #{_lambda_.1} parent=55 // pred_region
        %p9067 = scmp.lt.s32.totalorder %s19, 1
        %s9068 = scalar_select %p9067, %s19, 1
        %s9069 = smul.addr %s9068, 8
        %s9070 = scalar_lea.vmem %s7, %s9069
      $region60: #{_lambda_.1} parent=55 // pred_fallthru
        _
    $region56: #{_lambda_.1} parent=5 // pred_fallthru
      _
  $region6: #{_lambda_.1} parent=0 // loop_footer
    %s17 = sadd.s32 1, %s13
  $region7: #{_lambda_.1} parent=0 // loop_footer_branch
    %12 = sbr.rel target = $region3
  $region8: #{_lambda_.1} parent=0 // loop_exit
    _

</llo_original>
